<compile_context>
chip_gen: v7x
topology: tpu7x:2x2x1
jax: 0.10.0
libtpu: 0.0.40
codegen_flags: <defaults>
</compile_context>

<pallas_src>
import functools

import jax
import jax.numpy as jnp
from jax.experimental import pallas as pl
from jax.experimental.pallas import tpu as pltpu

BN_EPS = 1e-5
LANE = 128
NEG_INF = -1e30


# ----------------------------- Pallas kernel -------------------------------- #

def _wavenet_kernel(x_ref, wconv0_ref, wconv_rest_ref, scale_ref, shift_ref,
                    wqkv_ref, bqkv_ref, wout_ref, bout_ref, o_ref,
                    xpad_ref, act_ref, *,
                    dc, r_pad, w_valid, wp, pad, n_layers):
    """Whole WaveNet stack for one batch row; activation stays in VMEM throughout."""
    # lane-validity masks, computed once per batch row (tiny, (1, Wp))
    lane = jax.lax.broadcasted_iota(jnp.int32, (1, wp), 1)
    valid = lane < w_valid
    mul_mask = valid.astype(jnp.float32)              # 1 on valid lanes, 0 on padding
    key_mask = jnp.where(valid, 0.0, NEG_INF)         # additive mask for padded keys

    # stage this batch row into the halo'd scratch (zeros outside [pad, pad+wp))
    xpad_ref[...] = jnp.zeros_like(xpad_ref)
    xpad_ref[:, pad:pad + wp] = x_ref[0]
    act_ref[...] = jnp.zeros_like(act_ref)

    out = None
    for l in range(n_layers):                          # static unroll (8 layers)
        d = 2 ** l
        if l == 0:
            src = xpad_ref
            w0, w1, w2 = wconv0_ref[0], wconv0_ref[1], wconv0_ref[2]
        else:
            src = act_ref
            w0 = wconv_rest_ref[l - 1, 0]
            w1 = wconv_rest_ref[l - 1, 1]
            w2 = wconv_rest_ref[l - 1, 2]

        # dilated Conv1d(k=3): 3 accumulating MXU matmuls on shifted windows of the
        # halo'd activation (halo is zero => PyTorch zero-padding semantics).
        x_l = src[:, pad - d:pad - d + wp]
        x_c = src[:, pad:pad + wp]
        x_r = src[:, pad + d:pad + d + wp]
        acc = jnp.dot(w0, x_l, preferred_element_type=jnp.float32)
        acc += jnp.dot(w1, x_c, preferred_element_type=jnp.float32)
        acc += jnp.dot(w2, x_r, preferred_element_type=jnp.float32)

        # folded BatchNorm (eval stats + conv bias) and gated activation
        acc = acc * scale_ref[l] + shift_ref[l]
        y = jnp.tanh(acc[:dc]) * jax.nn.sigmoid(acc[dc:])       # (dc, Wp) f32
        y = y * mul_mask                                         # zero padded lanes
        yb = y.astype(jnp.bfloat16)

        # fused q/k/v 1x1-conv projection (single MXU matmul); attn_scale is folded
        # into the q rows/bias on the host side.
        qkv = jnp.dot(wqkv_ref[l], yb,
                      preferred_element_type=jnp.float32) + bqkv_ref[l]
        q = qkv[:r_pad]                                          # (r_pad, Wp)
        k = qkv[r_pad:2 * r_pad]                                 # (r_pad, Wp)
        v = qkv[2 * r_pad:] * mul_mask                           # (dc, Wp); padded
        # value/query lanes zeroed so they cannot leak into valid output columns.

        # scores[i, j] = sum_r q[r, i] * k[r, j]   (i = query pos, j = key pos)
        scores = jax.lax.dot_general(
            q.astype(jnp.bfloat16), k.astype(jnp.bfloat16),
            (((0,), (0,)), ((), ())),
            preferred_element_type=jnp.float32)                  # (Wp, Wp)
        scores = scores + key_mask                               # mask padded keys
        scores = scores - jnp.max(scores, axis=-1, keepdims=True)
        p = jnp.exp(scores)
        attn = p * pl.reciprocal(jnp.sum(p, axis=-1, keepdims=True), approx=True)

        # context[c, j] = sum_i v[c, i] * attn[i, j]   (matches torch.bmm(value, attn))
        ctx = jnp.dot(v.astype(jnp.bfloat16), attn.astype(jnp.bfloat16),
                      preferred_element_type=jnp.float32)        # (dc, Wp)
        out = (ctx + y) * mul_mask

        if l < n_layers - 1:
            act_ref[:, pad:pad + wp] = out.astype(jnp.bfloat16)  # stays in VMEM

    # final Conv1d(dc -> 1, k=1) head, fused (activation never hits HBM)
    o_ref[0] = jnp.dot(wout_ref[...], out.astype(jnp.bfloat16),
                       preferred_element_type=jnp.float32) + bout_ref[...]


# ------------------------------ JAX wrapper --------------------------------- #

def wavenet_forward(x, params):
    B, cin0, width = x.shape
    layers = params['layers']
    n_layers = len(layers)
    dc = layers[0]['wv'].shape[0]                     # static (from shape), jit-safe
    r = layers[0]['wq'].shape[0]
    r_pad = max(8, ((r + 7) // 8) * 8)                # sublane-aligned q/k sections
    attn_scale = float(r) ** (-0.5)

    dilations = [2 ** i for i in range(n_layers)]     # static, matches the nn.Module
    pad = max(LANE, pl.cdiv(max(dilations), LANE) * LANE)   # halo (lane aligned)
    wp = max(LANE, pl.cdiv(width, LANE) * LANE)             # lane-dense width
    wext = wp + 2 * pad

    xp = jnp.pad(x, ((0, 0), (0, 0), (0, wp - width))).astype(jnp.bfloat16)

    # ---- pack per-layer weights (<1 MB total; VMEM resident for the whole stack) ----
    wconv0 = jnp.transpose(layers[0]['conv_w'], (2, 0, 1)).astype(jnp.bfloat16)
    wconv_rest = jnp.stack(
        [jnp.transpose(l['conv_w'], (2, 0, 1)) for l in layers[1:]]
    ).astype(jnp.bfloat16)                                     # (L-1, 3, 2dc, dc)

    scales, shifts, wqkvs, bqkvs = [], [], [], []
    for layer in layers:
        s = layer['bn_gamma'] / jnp.sqrt(layer['bn_var'] + BN_EPS)
        sh = layer['bn_beta'] - layer['bn_mean'] * s + layer['conv_b'] * s
        scales.append(s[:, None])
        shifts.append(sh[:, None])
        w = jnp.zeros((2 * r_pad + dc, dc), jnp.float32)
        w = w.at[:r].set(attn_scale * layer['wq'])             # attn_scale folded in
        w = w.at[r_pad:r_pad + r].set(layer['wk'])
        w = w.at[2 * r_pad:].set(layer['wv'])
        b = jnp.zeros((2 * r_pad + dc, 1), jnp.float32)
        b = b.at[:r, 0].set(attn_scale * layer['bq'])
        b = b.at[r_pad:r_pad + r, 0].set(layer['bk'])
        b = b.at[2 * r_pad:, 0].set(layer['bv'])
        wqkvs.append(w)
        bqkvs.append(b)
    scale_all = jnp.stack(scales)                              # (L, 2dc, 1) f32
    shift_all = jnp.stack(shifts)                              # (L, 2dc, 1) f32
    wqkv_all = jnp.stack(wqkvs).astype(jnp.bfloat16)           # (L, 2r_pad+dc, dc)
    bqkv_all = jnp.stack(bqkvs)                                # (L, 2r_pad+dc, 1) f32
    w_out = params['w_out'].astype(jnp.bfloat16)               # (1, dc)
    b_out = params['b_out'].reshape(1, 1)                      # (1, 1) f32

    kernel = functools.partial(
        _wavenet_kernel, dc=dc, r_pad=r_pad, w_valid=width, wp=wp, pad=pad,
        n_layers=n_layers)

    out = pl.pallas_call(
        kernel,
        out_shape=jax.ShapeDtypeStruct((B, 1, wp), jnp.float32),
        grid=(B,),
        in_specs=[
            pl.BlockSpec((1, cin0, wp), lambda b: (b, 0, 0)),               # x
            pl.BlockSpec((3, 2 * dc, cin0), lambda b: (0, 0, 0)),           # conv0
            pl.BlockSpec((n_layers - 1, 3, 2 * dc, dc),
                         lambda b: (0, 0, 0, 0)),                           # conv 1..L-1
            pl.BlockSpec((n_layers, 2 * dc, 1), lambda b: (0, 0, 0)),       # bn scale
            pl.BlockSpec((n_layers, 2 * dc, 1), lambda b: (0, 0, 0)),       # bn shift
            pl.BlockSpec((n_layers, 2 * r_pad + dc, dc), lambda b: (0, 0, 0)),  # wqkv
            pl.BlockSpec((n_layers, 2 * r_pad + dc, 1), lambda b: (0, 0, 0)),   # bqkv
            pl.BlockSpec((1, dc), lambda b: (0, 0)),                        # head w
            pl.BlockSpec((1, 1), lambda b: (0, 0)),                         # head b
        ],
        out_specs=pl.BlockSpec((1, 1, wp), lambda b: (b, 0, 0)),
        scratch_shapes=[
            pltpu.VMEM((cin0, wext), jnp.bfloat16),   # halo'd input (layer 0)
            pltpu.VMEM((dc, wext), jnp.bfloat16),     # halo'd activation (layers 1+)
        ],
        compiler_params=pltpu.CompilerParams(
            dimension_semantics=("parallel",),        # batch rows -> 2 TCs on v7x
            vmem_limit_bytes=64 * 1024 * 1024),
    )(xp, wconv0, wconv_rest, scale_all, shift_all, wqkv_all, bqkv_all,
      w_out, b_out)
    return out[:, :, :width]


# --------------------------- pure-JAX reference ----------------------------- #

def reference_forward(x, params):
    layers = params['layers']
    dc = layers[0]['wv'].shape[0]
    dilations = [2 ** i for i in range(len(layers))]
    for layer, d in zip(layers, dilations):
        B, cin, width = x.shape
        xpad = jnp.pad(x, ((0, 0), (0, 0), (d, d)))
        conv = jnp.zeros((B, 2 * dc, width), jnp.float32)
        for t in range(3):
            conv = conv + jnp.einsum('oc,bcw->bow', layer['conv_w'][:, :, t],
                                     xpad[:, :, t * d: t * d + width])
        conv = conv + layer['conv_b'][None, :, None]
        s = layer['bn_gamma'] / jnp.sqrt(layer['bn_var'] + BN_EPS)
        conv = (conv - layer['bn_mean'][None, :, None]) * s[None, :, None] \
            + layer['bn_beta'][None, :, None]
        filt, gate = conv[:, :dc], conv[:, dc:]
        x = jnp.tanh(filt) * jax.nn.sigmoid(gate)
        r = layer['wq'].shape[0]
        q = jnp.einsum('rc,bcw->brw', layer['wq'], x) + layer['bq'][None, :, None]
        k = jnp.einsum('rc,bcw->brw', layer['wk'], x) + layer['bk'][None, :, None]
        v = jnp.einsum('oc,bcw->bow', layer['wv'], x) + layer['bv'][None, :, None]
        scores = jnp.einsum('bri,brj->bij', q, k) * (float(r) ** (-0.5))
        attn = jax.nn.softmax(scores, axis=-1)
        x = jnp.einsum('bcw,bwv->bcv', v, attn) + x
    return jnp.einsum('oc,bcw->bow', params['w_out'], x) + params['b_out'][None, :, None]


# ------------------------------ param setup --------------------------------- #

def init_params(key, input_channels, dc):
    dilations = [2 ** i for i in range(8)]
    layers = []
    r = dc // 8
    for i, d in enumerate(dilations):
        cin = input_channels if i == 0 else dc
        key, *ks = jax.random.split(key, 12)
        layers.append(dict(
            conv_w=0.1 * jax.random.normal(ks[0], (2 * dc, cin, 3), jnp.float32),
            conv_b=0.1 * jax.random.normal(ks[1], (2 * dc,), jnp.float32),
            bn_gamma=1.0 + 0.1 * jax.random.normal(ks[2], (2 * dc,), jnp.float32),
            bn_beta=0.1 * jax.random.normal(ks[3], (2 * dc,), jnp.float32),
            bn_mean=0.1 * jax.random.normal(ks[4], (2 * dc,), jnp.float32),
            bn_var=jax.random.uniform(ks[5], (2 * dc,), jnp.float32, 0.5, 1.5),
            wq=0.1 * jax.random.normal(ks[6], (r, dc), jnp.float32),
            bq=0.1 * jax.random.normal(ks[7], (r,), jnp.float32),
            wk=0.1 * jax.random.normal(ks[8], (r, dc), jnp.float32),
            bk=0.1 * jax.random.normal(ks[9], (r,), jnp.float32),
            wv=0.1 * jax.random.normal(ks[10], (dc, dc), jnp.float32),
            bv=0.1 * jax.random.normal(jax.random.fold_in(ks[10], 1), (dc,), jnp.float32),
        ))
    key, k1, k2 = jax.random.split(key, 3)
    return dict(
        layers=layers,
        w_out=0.1 * jax.random.normal(k1, (1, dc), jnp.float32),
        b_out=0.1 * jax.random.normal(k2, (1,), jnp.float32),
    )


if __name__ == "__main__":
    B, input_channels, dilation_channels, W = 2, 4, 32, 16
    key = jax.random.PRNGKey(0)
    key, kx = jax.random.split(key)
    x = jax.random.normal(kx, (B, input_channels, W), jnp.float32)
    params = init_params(key, input_channels, dilation_channels)

    out = jax.jit(wavenet_forward)(x, params)
    out = jax.block_until_ready(out)

    ref = reference_forward(x, params)
    assert out.shape == (B, 1, W), out.shape
    # bf16 MXU operands (f32 accumulate) -> widened tolerance vs the f32 reference.
    assert jnp.allclose(out, ref, rtol=5e-2, atol=5e-2), "mismatch vs reference"
    print("KERNEL_OK")
</pallas_src>

<mosaic_0001>
module attributes {stable_mosaic.version = 11 : i64} {
  func.func @_wavenet_kernel(%arg0: i32, %arg1: memref<1x4x128xbf16, #tpu.memory_space<vmem>>, %arg2: memref<3x64x4xbf16, #tpu.memory_space<vmem>>, %arg3: memref<7x3x64x32xbf16, #tpu.memory_space<vmem>>, %arg4: memref<8x64x1xf32, #tpu.memory_space<vmem>>, %arg5: memref<8x64x1xf32, #tpu.memory_space<vmem>>, %arg6: memref<8x48x32xbf16, #tpu.memory_space<vmem>>, %arg7: memref<8x48x1xf32, #tpu.memory_space<vmem>>, %arg8: memref<1x32xbf16, #tpu.memory_space<vmem>>, %arg9: memref<1x1xf32, #tpu.memory_space<vmem>>, %arg10: memref<1x1x128xf32, #tpu.memory_space<vmem>>, %arg11: memref<4x384xbf16, #tpu.memory_space<vmem>>, %arg12: memref<32x384xbf16, #tpu.memory_space<vmem>>) attributes {dimension_semantics = [#tpu.dimension_semantics<parallel>], iteration_bounds = array<i64: 2>, scalar_prefetch = 0 : i64, scratch_operands = 2 : i64, tpu.core_type = #tpu.core_type<tc>, window_params = [{transform_indices = @transform_0, window_bounds = array<i64: 1, 4, 128>}, {pipeline_mode = #tpu.pipeline_mode<synchronous>, transform_indices = @transform_1, window_bounds = array<i64: 3, 64, 4>}, {pipeline_mode = #tpu.pipeline_mode<synchronous>, transform_indices = @transform_2, window_bounds = array<i64: 7, 3, 64, 32>}, {pipeline_mode = #tpu.pipeline_mode<synchronous>, transform_indices = @transform_3, window_bounds = array<i64: 8, 64, 1>}, {pipeline_mode = #tpu.pipeline_mode<synchronous>, transform_indices = @transform_4, window_bounds = array<i64: 8, 64, 1>}, {pipeline_mode = #tpu.pipeline_mode<synchronous>, transform_indices = @transform_5, window_bounds = array<i64: 8, 48, 32>}, {pipeline_mode = #tpu.pipeline_mode<synchronous>, transform_indices = @transform_6, window_bounds = array<i64: 8, 48, 1>}, {pipeline_mode = #tpu.pipeline_mode<synchronous>, transform_indices = @transform_7, window_bounds = array<i64: 1, 32>}, {pipeline_mode = #tpu.pipeline_mode<synchronous>, transform_indices = @transform_8, window_bounds = array<i64: 1, 1>}, {transform_indices = @transform_9, window_bounds = array<i64: 1, 1, 128>}]} {
    %0 = tpu.iota {dimensions = array<i32: 1>} : vector<1x128xi32>
    %c16_i32 = arith.constant 16 : i32
    %1 = vector.broadcast %c16_i32 : i32 to vector<1x128xi32>
    %2 = arith.cmpi slt, %0, %1 : vector<1x128xi32>
    %3 = arith.extui %2 : vector<1x128xi1> to vector<1x128xi32>
    %4 = arith.sitofp %3 : vector<1x128xi32> to vector<1x128xf32>
    %cst = arith.constant 0.000000e+00 : f32
    %cst_0 = arith.constant -1.000000e+30 : f32
    %5 = vector.broadcast %cst : f32 to vector<1x128xf32>
    %6 = vector.broadcast %cst_0 : f32 to vector<1x128xf32>
    %7 = arith.select %2, %5, %6 : vector<1x128xi1>, vector<1x128xf32>
    %cst_1 = arith.constant 0.000000e+00 : bf16
    %8 = vector.broadcast %cst_1 : bf16 to vector<4x384xbf16>
    %c0 = arith.constant 0 : index
    %c0_2 = arith.constant 0 : index
    %9 = vector.load %arg11[%c0, %c0_2] : memref<4x384xbf16, #tpu.memory_space<vmem>>, vector<4x384xbf16>
    tpu.vector_store %arg11[%c0, %c0_2], %8 {strides = array<i32>} : memref<4x384xbf16, #tpu.memory_space<vmem>>, vector<4x384xbf16>,
    %c0_3 = arith.constant 0 : index
    %c0_4 = arith.constant 0 : index
    %c0_5 = arith.constant 0 : index
    %10 = vector.load %arg1[%c0_3, %c0_4, %c0_5] : memref<1x4x128xbf16, #tpu.memory_space<vmem>>, vector<1x4x128xbf16>
    %11 = vector.shape_cast %10 : vector<1x4x128xbf16> to vector<4x128xbf16>
    %c0_6 = arith.constant 0 : index
    %c128 = arith.constant 128 : index
    %12 = vector.load %arg11[%c0_6, %c128] : memref<4x384xbf16, #tpu.memory_space<vmem>>, vector<4x128xbf16>
    tpu.vector_store %arg11[%c0_6, %c128], %11 {strides = array<i32>} : memref<4x384xbf16, #tpu.memory_space<vmem>>, vector<4x128xbf16>,
    %cst_7 = arith.constant 0.000000e+00 : bf16
    %13 = vector.broadcast %cst_7 : bf16 to vector<32x384xbf16>
    %c0_8 = arith.constant 0 : index
    %c0_9 = arith.constant 0 : index
    %14 = vector.load %arg12[%c0_8, %c0_9] : memref<32x384xbf16, #tpu.memory_space<vmem>>, vector<32x384xbf16>
    tpu.vector_store %arg12[%c0_8, %c0_9], %13 {strides = array<i32>} : memref<32x384xbf16, #tpu.memory_space<vmem>>, vector<32x384xbf16>,
    %c0_10 = arith.constant 0 : index
    %c0_11 = arith.constant 0 : index
    %c0_12 = arith.constant 0 : index
    %15 = vector.load %arg2[%c0_10, %c0_11, %c0_12] : memref<3x64x4xbf16, #tpu.memory_space<vmem>>, vector<1x64x4xbf16>
    %16 = vector.shape_cast %15 : vector<1x64x4xbf16> to vector<64x4xbf16>
    %c1 = arith.constant 1 : index
    %c0_13 = arith.constant 0 : index
    %c0_14 = arith.constant 0 : index
    %17 = vector.load %arg2[%c1, %c0_13, %c0_14] : memref<3x64x4xbf16, #tpu.memory_space<vmem>>, vector<1x64x4xbf16>
    %18 = vector.shape_cast %17 : vector<1x64x4xbf16> to vector<64x4xbf16>
    %c2 = arith.constant 2 : index
    %c0_15 = arith.constant 0 : index
    %c0_16 = arith.constant 0 : index
    %19 = vector.load %arg2[%c2, %c0_15, %c0_16] : memref<3x64x4xbf16, #tpu.memory_space<vmem>>, vector<1x64x4xbf16>
    %20 = vector.shape_cast %19 : vector<1x64x4xbf16> to vector<64x4xbf16>
    %c0_17 = arith.constant 0 : index
    %c127 = arith.constant 127 : index
    %21 = vector.load %arg11[%c0_17, %c127] : memref<4x384xbf16, #tpu.memory_space<vmem>>, vector<4x128xbf16>
    %c0_18 = arith.constant 0 : index
    %c128_19 = arith.constant 128 : index
    %22 = vector.load %arg11[%c0_18, %c128_19] : memref<4x384xbf16, #tpu.memory_space<vmem>>, vector<4x128xbf16>
    %c0_20 = arith.constant 0 : index
    %c129 = arith.constant 129 : index
    %23 = vector.load %arg11[%c0_20, %c129] : memref<4x384xbf16, #tpu.memory_space<vmem>>, vector<4x128xbf16>
    %cst_21 = arith.constant dense<0.000000e+00> : vector<64x128xf32>
    %24 = tpu.matmul %16, %21, %cst_21 {dimension_numbers = #tpu.dot_dimension_numbers<[1], [0], [0], [1], [0, 0, 1, 1], [], []>} : vector<64x4xbf16>, vector<4x128xbf16>, vector<64x128xf32> -> vector<64x128xf32>
    %cst_22 = arith.constant dense<0.000000e+00> : vector<64x128xf32>
    %25 = tpu.matmul %18, %22, %cst_22 {dimension_numbers = #tpu.dot_dimension_numbers<[1], [0], [0], [1], [0, 0, 1, 1], [], []>} : vector<64x4xbf16>, vector<4x128xbf16>, vector<64x128xf32> -> vector<64x128xf32>
    %26 = arith.addf %24, %25 : vector<64x128xf32>
    %cst_23 = arith.constant dense<0.000000e+00> : vector<64x128xf32>
    %27 = tpu.matmul %20, %23, %cst_23 {dimension_numbers = #tpu.dot_dimension_numbers<[1], [0], [0], [1], [0, 0, 1, 1], [], []>} : vector<64x4xbf16>, vector<4x128xbf16>, vector<64x128xf32> -> vector<64x128xf32>
    %28 = arith.addf %26, %27 : vector<64x128xf32>
    %c0_24 = arith.constant 0 : index
    %c0_25 = arith.constant 0 : index
    %c0_26 = arith.constant 0 : index
    %29 = vector.load %arg4[%c0_24, %c0_25, %c0_26] : memref<8x64x1xf32, #tpu.memory_space<vmem>>, vector<1x64x1xf32>
    %30 = vector.shape_cast %29 : vector<1x64x1xf32> to vector<64x1xf32>
    %31 = vector.broadcast %30 : vector<64x1xf32> to vector<64x128xf32>
    %32 = arith.mulf %28, %31 : vector<64x128xf32>
    %c0_27 = arith.constant 0 : index
    %c0_28 = arith.constant 0 : index
    %c0_29 = arith.constant 0 : index
    %33 = vector.load %arg5[%c0_27, %c0_28, %c0_29] : memref<8x64x1xf32, #tpu.memory_space<vmem>>, vector<1x64x1xf32>
    %34 = vector.shape_cast %33 : vector<1x64x1xf32> to vector<64x1xf32>
    %35 = vector.broadcast %34 : vector<64x1xf32> to vector<64x128xf32>
    %36 = arith.addf %32, %35 : vector<64x128xf32>
    %37 = vector.extract_strided_slice %36 {offsets = [0, 0], sizes = [32, 128], strides = [1, 1]} : vector<64x128xf32> to vector<32x128xf32>
    %38 = math.tanh %37 : vector<32x128xf32>
    %39 = vector.extract_strided_slice %36 {offsets = [32, 0], sizes = [32, 128], strides = [1, 1]} : vector<64x128xf32> to vector<32x128xf32>
    %40 = arith.negf %39 : vector<32x128xf32>
    %41 = math.exp %40 : vector<32x128xf32>
    %cst_30 = arith.constant 1.000000e+00 : f32
    %42 = vector.broadcast %cst_30 : f32 to vector<32x128xf32>
    %43 = arith.addf %42, %41 : vector<32x128xf32>
    %44 = arith.divf %42, %43 : vector<32x128xf32>
    %45 = arith.mulf %38, %44 : vector<32x128xf32>
    %46 = vector.broadcast %4 : vector<1x128xf32> to vector<32x128xf32>
    %47 = arith.mulf %45, %46 : vector<32x128xf32>
    %48 = arith.truncf %47 : vector<32x128xf32> to vector<32x128xbf16>
    %c0_31 = arith.constant 0 : index
    %c0_32 = arith.constant 0 : index
    %c0_33 = arith.constant 0 : index
    %49 = vector.load %arg6[%c0_31, %c0_32, %c0_33] : memref<8x48x32xbf16, #tpu.memory_space<vmem>>, vector<1x48x32xbf16>
    %50 = vector.shape_cast %49 : vector<1x48x32xbf16> to vector<48x32xbf16>
    %cst_34 = arith.constant dense<0.000000e+00> : vector<48x128xf32>
    %51 = tpu.matmul %50, %48, %cst_34 {dimension_numbers = #tpu.dot_dimension_numbers<[1], [0], [0], [1], [0, 0, 1, 1], [], []>} : vector<48x32xbf16>, vector<32x128xbf16>, vector<48x128xf32> -> vector<48x128xf32>
    %c0_35 = arith.constant 0 : index
    %c0_36 = arith.constant 0 : index
    %c0_37 = arith.constant 0 : index
    %52 = vector.load %arg7[%c0_35, %c0_36, %c0_37] : memref<8x48x1xf32, #tpu.memory_space<vmem>>, vector<1x48x1xf32>
    %53 = vector.shape_cast %52 : vector<1x48x1xf32> to vector<48x1xf32>
    %54 = vector.broadcast %53 : vector<48x1xf32> to vector<48x128xf32>
    %55 = arith.addf %51, %54 : vector<48x128xf32>
    %56 = vector.extract_strided_slice %55 {offsets = [0, 0], sizes = [8, 128], strides = [1, 1]} : vector<48x128xf32> to vector<8x128xf32>
    %57 = vector.extract_strided_slice %55 {offsets = [8, 0], sizes = [8, 128], strides = [1, 1]} : vector<48x128xf32> to vector<8x128xf32>
    %58 = vector.extract_strided_slice %55 {offsets = [16, 0], sizes = [32, 128], strides = [1, 1]} : vector<48x128xf32> to vector<32x128xf32>
    %59 = vector.broadcast %4 : vector<1x128xf32> to vector<32x128xf32>
    %60 = arith.mulf %58, %59 : vector<32x128xf32>
    %61 = arith.truncf %56 : vector<8x128xf32> to vector<8x128xbf16>
    %62 = arith.truncf %57 : vector<8x128xf32> to vector<8x128xbf16>
    %cst_38 = arith.constant dense<0.000000e+00> : vector<128x128xf32>
    %63 = tpu.matmul %61, %62, %cst_38 {dimension_numbers = #tpu.dot_dimension_numbers<[0], [0], [1], [1], [0, 1, 1, 1], [], []>} : vector<8x128xbf16>, vector<8x128xbf16>, vector<128x128xf32> -> vector<128x128xf32>
    %64 = vector.broadcast %7 : vector<1x128xf32> to vector<128x128xf32>
    %65 = arith.addf %63, %64 : vector<128x128xf32>
    %cst_39 = arith.constant dense<0xFF800000> : vector<128xf32>
    %66 = vector.multi_reduction <maximumf>, %65, %cst_39 [1] : vector<128x128xf32> to vector<128xf32>
    %67 = vector.shape_cast %66 : vector<128xf32> to vector<128x1xf32>
    %68 = vector.broadcast %67 : vector<128x1xf32> to vector<128x128xf32>
    %69 = arith.subf %65, %68 : vector<128x128xf32>
    %70 = math.exp %69 : vector<128x128xf32>
    %cst_40 = arith.constant dense<0.000000e+00> : vector<128xf32>
    %71 = vector.multi_reduction <add>, %70, %cst_40 [1] : vector<128x128xf32> to vector<128xf32>
    %72 = vector.shape_cast %71 : vector<128xf32> to vector<128x1xf32>
    %73 = tpu.reciprocal %72 {approx = true} : vector<128x1xf32> -> vector<128x1xf32>
    %74 = vector.broadcast %73 : vector<128x1xf32> to vector<128x128xf32>
    %75 = arith.mulf %70, %74 : vector<128x128xf32>
    %76 = arith.truncf %60 : vector<32x128xf32> to vector<32x128xbf16>
    %77 = arith.truncf %75 : vector<128x128xf32> to vector<128x128xbf16>
    %cst_41 = arith.constant dense<0.000000e+00> : vector<32x128xf32>
    %78 = tpu.matmul %76, %77, %cst_41 {dimension_numbers = #tpu.dot_dimension_numbers<[1], [0], [0], [1], [0, 0, 1, 1], [], []>} : vector<32x128xbf16>, vector<128x128xbf16>, vector<32x128xf32> -> vector<32x128xf32>
    %79 = arith.addf %78, %47 : vector<32x128xf32>
    %80 = vector.broadcast %4 : vector<1x128xf32> to vector<32x128xf32>
    %81 = arith.mulf %79, %80 : vector<32x128xf32>
    %82 = arith.truncf %81 : vector<32x128xf32> to vector<32x128xbf16>
    %c0_42 = arith.constant 0 : index
    %c128_43 = arith.constant 128 : index
    %83 = vector.load %arg12[%c0_42, %c128_43] : memref<32x384xbf16, #tpu.memory_space<vmem>>, vector<32x128xbf16>
    tpu.vector_store %arg12[%c0_42, %c128_43], %82 {strides = array<i32>} : memref<32x384xbf16, #tpu.memory_space<vmem>>, vector<32x128xbf16>,
    %c0_44 = arith.constant 0 : index
    %c0_45 = arith.constant 0 : index
    %c0_46 = arith.constant 0 : index
    %c0_47 = arith.constant 0 : index
    %84 = vector.load %arg3[%c0_44, %c0_45, %c0_46, %c0_47] : memref<7x3x64x32xbf16, #tpu.memory_space<vmem>>, vector<1x1x64x32xbf16>
    %85 = vector.shape_cast %84 : vector<1x1x64x32xbf16> to vector<64x32xbf16>
    %c0_48 = arith.constant 0 : index
    %c1_49 = arith.constant 1 : index
    %c0_50 = arith.constant 0 : index
    %c0_51 = arith.constant 0 : index
    %86 = vector.load %arg3[%c0_48, %c1_49, %c0_50, %c0_51] : memref<7x3x64x32xbf16, #tpu.memory_space<vmem>>, vector<1x1x64x32xbf16>
    %87 = vector.shape_cast %86 : vector<1x1x64x32xbf16> to vector<64x32xbf16>
    %c0_52 = arith.constant 0 : index
    %c2_53 = arith.constant 2 : index
    %c0_54 = arith.constant 0 : index
    %c0_55 = arith.constant 0 : index
    %88 = vector.load %arg3[%c0_52, %c2_53, %c0_54, %c0_55] : memref<7x3x64x32xbf16, #tpu.memory_space<vmem>>, vector<1x1x64x32xbf16>
    %89 = vector.shape_cast %88 : vector<1x1x64x32xbf16> to vector<64x32xbf16>
    %c0_56 = arith.constant 0 : index
    %c126 = arith.constant 126 : index
    %90 = vector.load %arg12[%c0_56, %c126] : memref<32x384xbf16, #tpu.memory_space<vmem>>, vector<32x128xbf16>
    %c0_57 = arith.constant 0 : index
    %c128_58 = arith.constant 128 : index
    %91 = vector.load %arg12[%c0_57, %c128_58] : memref<32x384xbf16, #tpu.memory_space<vmem>>, vector<32x128xbf16>
    %c0_59 = arith.constant 0 : index
    %c130 = arith.constant 130 : index
    %92 = vector.load %arg12[%c0_59, %c130] : memref<32x384xbf16, #tpu.memory_space<vmem>>, vector<32x128xbf16>
    %cst_60 = arith.constant dense<0.000000e+00> : vector<64x128xf32>
    %93 = tpu.matmul %85, %90, %cst_60 {dimension_numbers = #tpu.dot_dimension_numbers<[1], [0], [0], [1], [0, 0, 1, 1], [], []>} : vector<64x32xbf16>, vector<32x128xbf16>, vector<64x128xf32> -> vector<64x128xf32>
    %cst_61 = arith.constant dense<0.000000e+00> : vector<64x128xf32>
    %94 = tpu.matmul %87, %91, %cst_61 {dimension_numbers = #tpu.dot_dimension_numbers<[1], [0], [0], [1], [0, 0, 1, 1], [], []>} : vector<64x32xbf16>, vector<32x128xbf16>, vector<64x128xf32> -> vector<64x128xf32>
    %95 = arith.addf %93, %94 : vector<64x128xf32>
    %cst_62 = arith.constant dense<0.000000e+00> : vector<64x128xf32>
    %96 = tpu.matmul %89, %92, %cst_62 {dimension_numbers = #tpu.dot_dimension_numbers<[1], [0], [0], [1], [0, 0, 1, 1], [], []>} : vector<64x32xbf16>, vector<32x128xbf16>, vector<64x128xf32> -> vector<64x128xf32>
    %97 = arith.addf %95, %96 : vector<64x128xf32>
    %c1_63 = arith.constant 1 : index
    %c0_64 = arith.constant 0 : index
    %c0_65 = arith.constant 0 : index
    %98 = vector.load %arg4[%c1_63, %c0_64, %c0_65] : memref<8x64x1xf32, #tpu.memory_space<vmem>>, vector<1x64x1xf32>
    %99 = vector.shape_cast %98 : vector<1x64x1xf32> to vector<64x1xf32>
    %100 = vector.broadcast %99 : vector<64x1xf32> to vector<64x128xf32>
    %101 = arith.mulf %97, %100 : vector<64x128xf32>
    %c1_66 = arith.constant 1 : index
    %c0_67 = arith.constant 0 : index
    %c0_68 = arith.constant 0 : index
    %102 = vector.load %arg5[%c1_66, %c0_67, %c0_68] : memref<8x64x1xf32, #tpu.memory_space<vmem>>, vector<1x64x1xf32>
    %103 = vector.shape_cast %102 : vector<1x64x1xf32> to vector<64x1xf32>
    %104 = vector.broadcast %103 : vector<64x1xf32> to vector<64x128xf32>
    %105 = arith.addf %101, %104 : vector<64x128xf32>
    %106 = vector.extract_strided_slice %105 {offsets = [0, 0], sizes = [32, 128], strides = [1, 1]} : vector<64x128xf32> to vector<32x128xf32>
    %107 = math.tanh %106 : vector<32x128xf32>
    %108 = vector.extract_strided_slice %105 {offsets = [32, 0], sizes = [32, 128], strides = [1, 1]} : vector<64x128xf32> to vector<32x128xf32>
    %109 = arith.negf %108 : vector<32x128xf32>
    %110 = math.exp %109 : vector<32x128xf32>
    %cst_69 = arith.constant 1.000000e+00 : f32
    %111 = vector.broadcast %cst_69 : f32 to vector<32x128xf32>
    %112 = arith.addf %111, %110 : vector<32x128xf32>
    %113 = arith.divf %111, %112 : vector<32x128xf32>
    %114 = arith.mulf %107, %113 : vector<32x128xf32>
    %115 = vector.broadcast %4 : vector<1x128xf32> to vector<32x128xf32>
    %116 = arith.mulf %114, %115 : vector<32x128xf32>
    %117 = arith.truncf %116 : vector<32x128xf32> to vector<32x128xbf16>
    %c1_70 = arith.constant 1 : index
    %c0_71 = arith.constant 0 : index
    %c0_72 = arith.constant 0 : index
    %118 = vector.load %arg6[%c1_70, %c0_71, %c0_72] : memref<8x48x32xbf16, #tpu.memory_space<vmem>>, vector<1x48x32xbf16>
    %119 = vector.shape_cast %118 : vector<1x48x32xbf16> to vector<48x32xbf16>
    %cst_73 = arith.constant dense<0.000000e+00> : vector<48x128xf32>
    %120 = tpu.matmul %119, %117, %cst_73 {dimension_numbers = #tpu.dot_dimension_numbers<[1], [0], [0], [1], [0, 0, 1, 1], [], []>} : vector<48x32xbf16>, vector<32x128xbf16>, vector<48x128xf32> -> vector<48x128xf32>
    %c1_74 = arith.constant 1 : index
    %c0_75 = arith.constant 0 : index
    %c0_76 = arith.constant 0 : index
    %121 = vector.load %arg7[%c1_74, %c0_75, %c0_76] : memref<8x48x1xf32, #tpu.memory_space<vmem>>, vector<1x48x1xf32>
    %122 = vector.shape_cast %121 : vector<1x48x1xf32> to vector<48x1xf32>
    %123 = vector.broadcast %122 : vector<48x1xf32> to vector<48x128xf32>
    %124 = arith.addf %120, %123 : vector<48x128xf32>
    %125 = vector.extract_strided_slice %124 {offsets = [0, 0], sizes = [8, 128], strides = [1, 1]} : vector<48x128xf32> to vector<8x128xf32>
    %126 = vector.extract_strided_slice %124 {offsets = [8, 0], sizes = [8, 128], strides = [1, 1]} : vector<48x128xf32> to vector<8x128xf32>
    %127 = vector.extract_strided_slice %124 {offsets = [16, 0], sizes = [32, 128], strides = [1, 1]} : vector<48x128xf32> to vector<32x128xf32>
    %128 = vector.broadcast %4 : vector<1x128xf32> to vector<32x128xf32>
    %129 = arith.mulf %127, %128 : vector<32x128xf32>
    %130 = arith.truncf %125 : vector<8x128xf32> to vector<8x128xbf16>
    %131 = arith.truncf %126 : vector<8x128xf32> to vector<8x128xbf16>
    %cst_77 = arith.constant dense<0.000000e+00> : vector<128x128xf32>
    %132 = tpu.matmul %130, %131, %cst_77 {dimension_numbers = #tpu.dot_dimension_numbers<[0], [0], [1], [1], [0, 1, 1, 1], [], []>} : vector<8x128xbf16>, vector<8x128xbf16>, vector<128x128xf32> -> vector<128x128xf32>
    %133 = vector.broadcast %7 : vector<1x128xf32> to vector<128x128xf32>
    %134 = arith.addf %132, %133 : vector<128x128xf32>
    %cst_78 = arith.constant dense<0xFF800000> : vector<128xf32>
    %135 = vector.multi_reduction <maximumf>, %134, %cst_78 [1] : vector<128x128xf32> to vector<128xf32>
    %136 = vector.shape_cast %135 : vector<128xf32> to vector<128x1xf32>
    %137 = vector.broadcast %136 : vector<128x1xf32> to vector<128x128xf32>
    %138 = arith.subf %134, %137 : vector<128x128xf32>
    %139 = math.exp %138 : vector<128x128xf32>
    %cst_79 = arith.constant dense<0.000000e+00> : vector<128xf32>
    %140 = vector.multi_reduction <add>, %139, %cst_79 [1] : vector<128x128xf32> to vector<128xf32>
    %141 = vector.shape_cast %140 : vector<128xf32> to vector<128x1xf32>
    %142 = tpu.reciprocal %141 {approx = true} : vector<128x1xf32> -> vector<128x1xf32>
    %143 = vector.broadcast %142 : vector<128x1xf32> to vector<128x128xf32>
    %144 = arith.mulf %139, %143 : vector<128x128xf32>
    %145 = arith.truncf %129 : vector<32x128xf32> to vector<32x128xbf16>
    %146 = arith.truncf %144 : vector<128x128xf32> to vector<128x128xbf16>
    %cst_80 = arith.constant dense<0.000000e+00> : vector<32x128xf32>
    %147 = tpu.matmul %145, %146, %cst_80 {dimension_numbers = #tpu.dot_dimension_numbers<[1], [0], [0], [1], [0, 0, 1, 1], [], []>} : vector<32x128xbf16>, vector<128x128xbf16>, vector<32x128xf32> -> vector<32x128xf32>
    %148 = arith.addf %147, %116 : vector<32x128xf32>
    %149 = vector.broadcast %4 : vector<1x128xf32> to vector<32x128xf32>
    %150 = arith.mulf %148, %149 : vector<32x128xf32>
    %151 = arith.truncf %150 : vector<32x128xf32> to vector<32x128xbf16>
    %c0_81 = arith.constant 0 : index
    %c128_82 = arith.constant 128 : index
    %152 = vector.load %arg12[%c0_81, %c128_82] : memref<32x384xbf16, #tpu.memory_space<vmem>>, vector<32x128xbf16>
    tpu.vector_store %arg12[%c0_81, %c128_82], %151 {strides = array<i32>} : memref<32x384xbf16, #tpu.memory_space<vmem>>, vector<32x128xbf16>,
    %c1_83 = arith.constant 1 : index
    %c0_84 = arith.constant 0 : index
    %c0_85 = arith.constant 0 : index
    %c0_86 = arith.constant 0 : index
    %153 = vector.load %arg3[%c1_83, %c0_84, %c0_85, %c0_86] : memref<7x3x64x32xbf16, #tpu.memory_space<vmem>>, vector<1x1x64x32xbf16>
    %154 = vector.shape_cast %153 : vector<1x1x64x32xbf16> to vector<64x32xbf16>
    %c1_87 = arith.constant 1 : index
    %c1_88 = arith.constant 1 : index
    %c0_89 = arith.constant 0 : index
    %c0_90 = arith.constant 0 : index
    %155 = vector.load %arg3[%c1_87, %c1_88, %c0_89, %c0_90] : memref<7x3x64x32xbf16, #tpu.memory_space<vmem>>, vector<1x1x64x32xbf16>
    %156 = vector.shape_cast %155 : vector<1x1x64x32xbf16> to vector<64x32xbf16>
    %c1_91 = arith.constant 1 : index
    %c2_92 = arith.constant 2 : index
    %c0_93 = arith.constant 0 : index
    %c0_94 = arith.constant 0 : index
    %157 = vector.load %arg3[%c1_91, %c2_92, %c0_93, %c0_94] : memref<7x3x64x32xbf16, #tpu.memory_space<vmem>>, vector<1x1x64x32xbf16>
    %158 = vector.shape_cast %157 : vector<1x1x64x32xbf16> to vector<64x32xbf16>
    %c0_95 = arith.constant 0 : index
    %c124 = arith.constant 124 : index
    %159 = vector.load %arg12[%c0_95, %c124] : memref<32x384xbf16, #tpu.memory_space<vmem>>, vector<32x128xbf16>
    %c0_96 = arith.constant 0 : index
    %c128_97 = arith.constant 128 : index
    %160 = vector.load %arg12[%c0_96, %c128_97] : memref<32x384xbf16, #tpu.memory_space<vmem>>, vector<32x128xbf16>
    %c0_98 = arith.constant 0 : index
    %c132 = arith.constant 132 : index
    %161 = vector.load %arg12[%c0_98, %c132] : memref<32x384xbf16, #tpu.memory_space<vmem>>, vector<32x128xbf16>
    %cst_99 = arith.constant dense<0.000000e+00> : vector<64x128xf32>
    %162 = tpu.matmul %154, %159, %cst_99 {dimension_numbers = #tpu.dot_dimension_numbers<[1], [0], [0], [1], [0, 0, 1, 1], [], []>} : vector<64x32xbf16>, vector<32x128xbf16>, vector<64x128xf32> -> vector<64x128xf32>
    %cst_100 = arith.constant dense<0.000000e+00> : vector<64x128xf32>
    %163 = tpu.matmul %156, %160, %cst_100 {dimension_numbers = #tpu.dot_dimension_numbers<[1], [0], [0], [1], [0, 0, 1, 1], [], []>} : vector<64x32xbf16>, vector<32x128xbf16>, vector<64x128xf32> -> vector<64x128xf32>
    %164 = arith.addf %162, %163 : vector<64x128xf32>
    %cst_101 = arith.constant dense<0.000000e+00> : vector<64x128xf32>
    %165 = tpu.matmul %158, %161, %cst_101 {dimension_numbers = #tpu.dot_dimension_numbers<[1], [0], [0], [1], [0, 0, 1, 1], [], []>} : vector<64x32xbf16>, vector<32x128xbf16>, vector<64x128xf32> -> vector<64x128xf32>
    %166 = arith.addf %164, %165 : vector<64x128xf32>
    %c2_102 = arith.constant 2 : index
    %c0_103 = arith.constant 0 : index
    %c0_104 = arith.constant 0 : index
    %167 = vector.load %arg4[%c2_102, %c0_103, %c0_104] : memref<8x64x1xf32, #tpu.memory_space<vmem>>, vector<1x64x1xf32>
    %168 = vector.shape_cast %167 : vector<1x64x1xf32> to vector<64x1xf32>
    %169 = vector.broadcast %168 : vector<64x1xf32> to vector<64x128xf32>
    %170 = arith.mulf %166, %169 : vector<64x128xf32>
    %c2_105 = arith.constant 2 : index
    %c0_106 = arith.constant 0 : index
    %c0_107 = arith.constant 0 : index
    %171 = vector.load %arg5[%c2_105, %c0_106, %c0_107] : memref<8x64x1xf32, #tpu.memory_space<vmem>>, vector<1x64x1xf32>
    %172 = vector.shape_cast %171 : vector<1x64x1xf32> to vector<64x1xf32>
    %173 = vector.broadcast %172 : vector<64x1xf32> to vector<64x128xf32>
    %174 = arith.addf %170, %173 : vector<64x128xf32>
    %175 = vector.extract_strided_slice %174 {offsets = [0, 0], sizes = [32, 128], strides = [1, 1]} : vector<64x128xf32> to vector<32x128xf32>
    %176 = math.tanh %175 : vector<32x128xf32>
    %177 = vector.extract_strided_slice %174 {offsets = [32, 0], sizes = [32, 128], strides = [1, 1]} : vector<64x128xf32> to vector<32x128xf32>
    %178 = arith.negf %177 : vector<32x128xf32>
    %179 = math.exp %178 : vector<32x128xf32>
    %cst_108 = arith.constant 1.000000e+00 : f32
    %180 = vector.broadcast %cst_108 : f32 to vector<32x128xf32>
    %181 = arith.addf %180, %179 : vector<32x128xf32>
    %182 = arith.divf %180, %181 : vector<32x128xf32>
    %183 = arith.mulf %176, %182 : vector<32x128xf32>
    %184 = vector.broadcast %4 : vector<1x128xf32> to vector<32x128xf32>
    %185 = arith.mulf %183, %184 : vector<32x128xf32>
    %186 = arith.truncf %185 : vector<32x128xf32> to vector<32x128xbf16>
    %c2_109 = arith.constant 2 : index
    %c0_110 = arith.constant 0 : index
    %c0_111 = arith.constant 0 : index
    %187 = vector.load %arg6[%c2_109, %c0_110, %c0_111] : memref<8x48x32xbf16, #tpu.memory_space<vmem>>, vector<1x48x32xbf16>
    %188 = vector.shape_cast %187 : vector<1x48x32xbf16> to vector<48x32xbf16>
    %cst_112 = arith.constant dense<0.000000e+00> : vector<48x128xf32>
    %189 = tpu.matmul %188, %186, %cst_112 {dimension_numbers = #tpu.dot_dimension_numbers<[1], [0], [0], [1], [0, 0, 1, 1], [], []>} : vector<48x32xbf16>, vector<32x128xbf16>, vector<48x128xf32> -> vector<48x128xf32>
    %c2_113 = arith.constant 2 : index
    %c0_114 = arith.constant 0 : index
    %c0_115 = arith.constant 0 : index
    %190 = vector.load %arg7[%c2_113, %c0_114, %c0_115] : memref<8x48x1xf32, #tpu.memory_space<vmem>>, vector<1x48x1xf32>
    %191 = vector.shape_cast %190 : vector<1x48x1xf32> to vector<48x1xf32>
    %192 = vector.broadcast %191 : vector<48x1xf32> to vector<48x128xf32>
    %193 = arith.addf %189, %192 : vector<48x128xf32>
    %194 = vector.extract_strided_slice %193 {offsets = [0, 0], sizes = [8, 128], strides = [1, 1]} : vector<48x128xf32> to vector<8x128xf32>
    %195 = vector.extract_strided_slice %193 {offsets = [8, 0], sizes = [8, 128], strides = [1, 1]} : vector<48x128xf32> to vector<8x128xf32>
    %196 = vector.extract_strided_slice %193 {offsets = [16, 0], sizes = [32, 128], strides = [1, 1]} : vector<48x128xf32> to vector<32x128xf32>
    %197 = vector.broadcast %4 : vector<1x128xf32> to vector<32x128xf32>
    %198 = arith.mulf %196, %197 : vector<32x128xf32>
    %199 = arith.truncf %194 : vector<8x128xf32> to vector<8x128xbf16>
    %200 = arith.truncf %195 : vector<8x128xf32> to vector<8x128xbf16>
    %cst_116 = arith.constant dense<0.000000e+00> : vector<128x128xf32>
    %201 = tpu.matmul %199, %200, %cst_116 {dimension_numbers = #tpu.dot_dimension_numbers<[0], [0], [1], [1], [0, 1, 1, 1], [], []>} : vector<8x128xbf16>, vector<8x128xbf16>, vector<128x128xf32> -> vector<128x128xf32>
    %202 = vector.broadcast %7 : vector<1x128xf32> to vector<128x128xf32>
    %203 = arith.addf %201, %202 : vector<128x128xf32>
    %cst_117 = arith.constant dense<0xFF800000> : vector<128xf32>
    %204 = vector.multi_reduction <maximumf>, %203, %cst_117 [1] : vector<128x128xf32> to vector<128xf32>
    %205 = vector.shape_cast %204 : vector<128xf32> to vector<128x1xf32>
    %206 = vector.broadcast %205 : vector<128x1xf32> to vector<128x128xf32>
    %207 = arith.subf %203, %206 : vector<128x128xf32>
    %208 = math.exp %207 : vector<128x128xf32>
    %cst_118 = arith.constant dense<0.000000e+00> : vector<128xf32>
    %209 = vector.multi_reduction <add>, %208, %cst_118 [1] : vector<128x128xf32> to vector<128xf32>
    %210 = vector.shape_cast %209 : vector<128xf32> to vector<128x1xf32>
    %211 = tpu.reciprocal %210 {approx = true} : vector<128x1xf32> -> vector<128x1xf32>
    %212 = vector.broadcast %211 : vector<128x1xf32> to vector<128x128xf32>
    %213 = arith.mulf %208, %212 : vector<128x128xf32>
    %214 = arith.truncf %198 : vector<32x128xf32> to vector<32x128xbf16>
    %215 = arith.truncf %213 : vector<128x128xf32> to vector<128x128xbf16>
    %cst_119 = arith.constant dense<0.000000e+00> : vector<32x128xf32>
    %216 = tpu.matmul %214, %215, %cst_119 {dimension_numbers = #tpu.dot_dimension_numbers<[1], [0], [0], [1], [0, 0, 1, 1], [], []>} : vector<32x128xbf16>, vector<128x128xbf16>, vector<32x128xf32> -> vector<32x128xf32>
    %217 = arith.addf %216, %185 : vector<32x128xf32>
    %218 = vector.broadcast %4 : vector<1x128xf32> to vector<32x128xf32>
    %219 = arith.mulf %217, %218 : vector<32x128xf32>
    %220 = arith.truncf %219 : vector<32x128xf32> to vector<32x128xbf16>
    %c0_120 = arith.constant 0 : index
    %c128_121 = arith.constant 128 : index
    %221 = vector.load %arg12[%c0_120, %c128_121] : memref<32x384xbf16, #tpu.memory_space<vmem>>, vector<32x128xbf16>
    tpu.vector_store %arg12[%c0_120, %c128_121], %220 {strides = array<i32>} : memref<32x384xbf16, #tpu.memory_space<vmem>>, vector<32x128xbf16>,
    %c2_122 = arith.constant 2 : index
    %c0_123 = arith.constant 0 : index
    %c0_124 = arith.constant 0 : index
    %c0_125 = arith.constant 0 : index
    %222 = vector.load %arg3[%c2_122, %c0_123, %c0_124, %c0_125] : memref<7x3x64x32xbf16, #tpu.memory_space<vmem>>, vector<1x1x64x32xbf16>
    %223 = vector.shape_cast %222 : vector<1x1x64x32xbf16> to vector<64x32xbf16>
    %c2_126 = arith.constant 2 : index
    %c1_127 = arith.constant 1 : index
    %c0_128 = arith.constant 0 : index
    %c0_129 = arith.constant 0 : index
    %224 = vector.load %arg3[%c2_126, %c1_127, %c0_128, %c0_129] : memref<7x3x64x32xbf16, #tpu.memory_space<vmem>>, vector<1x1x64x32xbf16>
    %225 = vector.shape_cast %224 : vector<1x1x64x32xbf16> to vector<64x32xbf16>
    %c2_130 = arith.constant 2 : index
    %c2_131 = arith.constant 2 : index
    %c0_132 = arith.constant 0 : index
    %c0_133 = arith.constant 0 : index
    %226 = vector.load %arg3[%c2_130, %c2_131, %c0_132, %c0_133] : memref<7x3x64x32xbf16, #tpu.memory_space<vmem>>, vector<1x1x64x32xbf16>
    %227 = vector.shape_cast %226 : vector<1x1x64x32xbf16> to vector<64x32xbf16>
    %c0_134 = arith.constant 0 : index
    %c120 = arith.constant 120 : index
    %228 = vector.load %arg12[%c0_134, %c120] : memref<32x384xbf16, #tpu.memory_space<vmem>>, vector<32x128xbf16>
    %c0_135 = arith.constant 0 : index
    %c128_136 = arith.constant 128 : index
    %229 = vector.load %arg12[%c0_135, %c128_136] : memref<32x384xbf16, #tpu.memory_space<vmem>>, vector<32x128xbf16>
    %c0_137 = arith.constant 0 : index
    %c136 = arith.constant 136 : index
    %230 = vector.load %arg12[%c0_137, %c136] : memref<32x384xbf16, #tpu.memory_space<vmem>>, vector<32x128xbf16>
    %cst_138 = arith.constant dense<0.000000e+00> : vector<64x128xf32>
    %231 = tpu.matmul %223, %228, %cst_138 {dimension_numbers = #tpu.dot_dimension_numbers<[1], [0], [0], [1], [0, 0, 1, 1], [], []>} : vector<64x32xbf16>, vector<32x128xbf16>, vector<64x128xf32> -> vector<64x128xf32>
    %cst_139 = arith.constant dense<0.000000e+00> : vector<64x128xf32>
    %232 = tpu.matmul %225, %229, %cst_139 {dimension_numbers = #tpu.dot_dimension_numbers<[1], [0], [0], [1], [0, 0, 1, 1], [], []>} : vector<64x32xbf16>, vector<32x128xbf16>, vector<64x128xf32> -> vector<64x128xf32>
    %233 = arith.addf %231, %232 : vector<64x128xf32>
    %cst_140 = arith.constant dense<0.000000e+00> : vector<64x128xf32>
    %234 = tpu.matmul %227, %230, %cst_140 {dimension_numbers = #tpu.dot_dimension_numbers<[1], [0], [0], [1], [0, 0, 1, 1], [], []>} : vector<64x32xbf16>, vector<32x128xbf16>, vector<64x128xf32> -> vector<64x128xf32>
    %235 = arith.addf %233, %234 : vector<64x128xf32>
    %c3 = arith.constant 3 : index
    %c0_141 = arith.constant 0 : index
    %c0_142 = arith.constant 0 : index
    %236 = vector.load %arg4[%c3, %c0_141, %c0_142] : memref<8x64x1xf32, #tpu.memory_space<vmem>>, vector<1x64x1xf32>
    %237 = vector.shape_cast %236 : vector<1x64x1xf32> to vector<64x1xf32>
    %238 = vector.broadcast %237 : vector<64x1xf32> to vector<64x128xf32>
    %239 = arith.mulf %235, %238 : vector<64x128xf32>
    %c3_143 = arith.constant 3 : index
    %c0_144 = arith.constant 0 : index
    %c0_145 = arith.constant 0 : index
    %240 = vector.load %arg5[%c3_143, %c0_144, %c0_145] : memref<8x64x1xf32, #tpu.memory_space<vmem>>, vector<1x64x1xf32>
    %241 = vector.shape_cast %240 : vector<1x64x1xf32> to vector<64x1xf32>
    %242 = vector.broadcast %241 : vector<64x1xf32> to vector<64x128xf32>
    %243 = arith.addf %239, %242 : vector<64x128xf32>
    %244 = vector.extract_strided_slice %243 {offsets = [0, 0], sizes = [32, 128], strides = [1, 1]} : vector<64x128xf32> to vector<32x128xf32>
    %245 = math.tanh %244 : vector<32x128xf32>
    %246 = vector.extract_strided_slice %243 {offsets = [32, 0], sizes = [32, 128], strides = [1, 1]} : vector<64x128xf32> to vector<32x128xf32>
    %247 = arith.negf %246 : vector<32x128xf32>
    %248 = math.exp %247 : vector<32x128xf32>
    %cst_146 = arith.constant 1.000000e+00 : f32
    %249 = vector.broadcast %cst_146 : f32 to vector<32x128xf32>
    %250 = arith.addf %249, %248 : vector<32x128xf32>
    %251 = arith.divf %249, %250 : vector<32x128xf32>
    %252 = arith.mulf %245, %251 : vector<32x128xf32>
    %253 = vector.broadcast %4 : vector<1x128xf32> to vector<32x128xf32>
    %254 = arith.mulf %252, %253 : vector<32x128xf32>
    %255 = arith.truncf %254 : vector<32x128xf32> to vector<32x128xbf16>
    %c3_147 = arith.constant 3 : index
    %c0_148 = arith.constant 0 : index
    %c0_149 = arith.constant 0 : index
    %256 = vector.load %arg6[%c3_147, %c0_148, %c0_149] : memref<8x48x32xbf16, #tpu.memory_space<vmem>>, vector<1x48x32xbf16>
    %257 = vector.shape_cast %256 : vector<1x48x32xbf16> to vector<48x32xbf16>
    %cst_150 = arith.constant dense<0.000000e+00> : vector<48x128xf32>
    %258 = tpu.matmul %257, %255, %cst_150 {dimension_numbers = #tpu.dot_dimension_numbers<[1], [0], [0], [1], [0, 0, 1, 1], [], []>} : vector<48x32xbf16>, vector<32x128xbf16>, vector<48x128xf32> -> vector<48x128xf32>
    %c3_151 = arith.constant 3 : index
    %c0_152 = arith.constant 0 : index
    %c0_153 = arith.constant 0 : index
    %259 = vector.load %arg7[%c3_151, %c0_152, %c0_153] : memref<8x48x1xf32, #tpu.memory_space<vmem>>, vector<1x48x1xf32>
    %260 = vector.shape_cast %259 : vector<1x48x1xf32> to vector<48x1xf32>
    %261 = vector.broadcast %260 : vector<48x1xf32> to vector<48x128xf32>
    %262 = arith.addf %258, %261 : vector<48x128xf32>
    %263 = vector.extract_strided_slice %262 {offsets = [0, 0], sizes = [8, 128], strides = [1, 1]} : vector<48x128xf32> to vector<8x128xf32>
    %264 = vector.extract_strided_slice %262 {offsets = [8, 0], sizes = [8, 128], strides = [1, 1]} : vector<48x128xf32> to vector<8x128xf32>
    %265 = vector.extract_strided_slice %262 {offsets = [16, 0], sizes = [32, 128], strides = [1, 1]} : vector<48x128xf32> to vector<32x128xf32>
    %266 = vector.broadcast %4 : vector<1x128xf32> to vector<32x128xf32>
    %267 = arith.mulf %265, %266 : vector<32x128xf32>
    %268 = arith.truncf %263 : vector<8x128xf32> to vector<8x128xbf16>
    %269 = arith.truncf %264 : vector<8x128xf32> to vector<8x128xbf16>
    %cst_154 = arith.constant dense<0.000000e+00> : vector<128x128xf32>
    %270 = tpu.matmul %268, %269, %cst_154 {dimension_numbers = #tpu.dot_dimension_numbers<[0], [0], [1], [1], [0, 1, 1, 1], [], []>} : vector<8x128xbf16>, vector<8x128xbf16>, vector<128x128xf32> -> vector<128x128xf32>
    %271 = vector.broadcast %7 : vector<1x128xf32> to vector<128x128xf32>
    %272 = arith.addf %270, %271 : vector<128x128xf32>
    %cst_155 = arith.constant dense<0xFF800000> : vector<128xf32>
    %273 = vector.multi_reduction <maximumf>, %272, %cst_155 [1] : vector<128x128xf32> to vector<128xf32>
    %274 = vector.shape_cast %273 : vector<128xf32> to vector<128x1xf32>
    %275 = vector.broadcast %274 : vector<128x1xf32> to vector<128x128xf32>
    %276 = arith.subf %272, %275 : vector<128x128xf32>
    %277 = math.exp %276 : vector<128x128xf32>
    %cst_156 = arith.constant dense<0.000000e+00> : vector<128xf32>
    %278 = vector.multi_reduction <add>, %277, %cst_156 [1] : vector<128x128xf32> to vector<128xf32>
    %279 = vector.shape_cast %278 : vector<128xf32> to vector<128x1xf32>
    %280 = tpu.reciprocal %279 {approx = true} : vector<128x1xf32> -> vector<128x1xf32>
    %281 = vector.broadcast %280 : vector<128x1xf32> to vector<128x128xf32>
    %282 = arith.mulf %277, %281 : vector<128x128xf32>
    %283 = arith.truncf %267 : vector<32x128xf32> to vector<32x128xbf16>
    %284 = arith.truncf %282 : vector<128x128xf32> to vector<128x128xbf16>
    %cst_157 = arith.constant dense<0.000000e+00> : vector<32x128xf32>
    %285 = tpu.matmul %283, %284, %cst_157 {dimension_numbers = #tpu.dot_dimension_numbers<[1], [0], [0], [1], [0, 0, 1, 1], [], []>} : vector<32x128xbf16>, vector<128x128xbf16>, vector<32x128xf32> -> vector<32x128xf32>
    %286 = arith.addf %285, %254 : vector<32x128xf32>
    %287 = vector.broadcast %4 : vector<1x128xf32> to vector<32x128xf32>
    %288 = arith.mulf %286, %287 : vector<32x128xf32>
    %289 = arith.truncf %288 : vector<32x128xf32> to vector<32x128xbf16>
    %c0_158 = arith.constant 0 : index
    %c128_159 = arith.constant 128 : index
    %290 = vector.load %arg12[%c0_158, %c128_159] : memref<32x384xbf16, #tpu.memory_space<vmem>>, vector<32x128xbf16>
    tpu.vector_store %arg12[%c0_158, %c128_159], %289 {strides = array<i32>} : memref<32x384xbf16, #tpu.memory_space<vmem>>, vector<32x128xbf16>,
    %c3_160 = arith.constant 3 : index
    %c0_161 = arith.constant 0 : index
    %c0_162 = arith.constant 0 : index
    %c0_163 = arith.constant 0 : index
    %291 = vector.load %arg3[%c3_160, %c0_161, %c0_162, %c0_163] : memref<7x3x64x32xbf16, #tpu.memory_space<vmem>>, vector<1x1x64x32xbf16>
    %292 = vector.shape_cast %291 : vector<1x1x64x32xbf16> to vector<64x32xbf16>
    %c3_164 = arith.constant 3 : index
    %c1_165 = arith.constant 1 : index
    %c0_166 = arith.constant 0 : index
    %c0_167 = arith.constant 0 : index
    %293 = vector.load %arg3[%c3_164, %c1_165, %c0_166, %c0_167] : memref<7x3x64x32xbf16, #tpu.memory_space<vmem>>, vector<1x1x64x32xbf16>
    %294 = vector.shape_cast %293 : vector<1x1x64x32xbf16> to vector<64x32xbf16>
    %c3_168 = arith.constant 3 : index
    %c2_169 = arith.constant 2 : index
    %c0_170 = arith.constant 0 : index
    %c0_171 = arith.constant 0 : index
    %295 = vector.load %arg3[%c3_168, %c2_169, %c0_170, %c0_171] : memref<7x3x64x32xbf16, #tpu.memory_space<vmem>>, vector<1x1x64x32xbf16>
    %296 = vector.shape_cast %295 : vector<1x1x64x32xbf16> to vector<64x32xbf16>
    %c0_172 = arith.constant 0 : index
    %c112 = arith.constant 112 : index
    %297 = vector.load %arg12[%c0_172, %c112] : memref<32x384xbf16, #tpu.memory_space<vmem>>, vector<32x128xbf16>
    %c0_173 = arith.constant 0 : index
    %c128_174 = arith.constant 128 : index
    %298 = vector.load %arg12[%c0_173, %c128_174] : memref<32x384xbf16, #tpu.memory_space<vmem>>, vector<32x128xbf16>
    %c0_175 = arith.constant 0 : index
    %c144 = arith.constant 144 : index
    %299 = vector.load %arg12[%c0_175, %c144] : memref<32x384xbf16, #tpu.memory_space<vmem>>, vector<32x128xbf16>
    %cst_176 = arith.constant dense<0.000000e+00> : vector<64x128xf32>
    %300 = tpu.matmul %292, %297, %cst_176 {dimension_numbers = #tpu.dot_dimension_numbers<[1], [0], [0], [1], [0, 0, 1, 1], [], []>} : vector<64x32xbf16>, vector<32x128xbf16>, vector<64x128xf32> -> vector<64x128xf32>
    %cst_177 = arith.constant dense<0.000000e+00> : vector<64x128xf32>
    %301 = tpu.matmul %294, %298, %cst_177 {dimension_numbers = #tpu.dot_dimension_numbers<[1], [0], [0], [1], [0, 0, 1, 1], [], []>} : vector<64x32xbf16>, vector<32x128xbf16>, vector<64x128xf32> -> vector<64x128xf32>
    %302 = arith.addf %300, %301 : vector<64x128xf32>
    %cst_178 = arith.constant dense<0.000000e+00> : vector<64x128xf32>
    %303 = tpu.matmul %296, %299, %cst_178 {dimension_numbers = #tpu.dot_dimension_numbers<[1], [0], [0], [1], [0, 0, 1, 1], [], []>} : vector<64x32xbf16>, vector<32x128xbf16>, vector<64x128xf32> -> vector<64x128xf32>
    %304 = arith.addf %302, %303 : vector<64x128xf32>
    %c4 = arith.constant 4 : index
    %c0_179 = arith.constant 0 : index
    %c0_180 = arith.constant 0 : index
    %305 = vector.load %arg4[%c4, %c0_179, %c0_180] : memref<8x64x1xf32, #tpu.memory_space<vmem>>, vector<1x64x1xf32>
    %306 = vector.shape_cast %305 : vector<1x64x1xf32> to vector<64x1xf32>
    %307 = vector.broadcast %306 : vector<64x1xf32> to vector<64x128xf32>
    %308 = arith.mulf %304, %307 : vector<64x128xf32>
    %c4_181 = arith.constant 4 : index
    %c0_182 = arith.constant 0 : index
    %c0_183 = arith.constant 0 : index
    %309 = vector.load %arg5[%c4_181, %c0_182, %c0_183] : memref<8x64x1xf32, #tpu.memory_space<vmem>>, vector<1x64x1xf32>
    %310 = vector.shape_cast %309 : vector<1x64x1xf32> to vector<64x1xf32>
    %311 = vector.broadcast %310 : vector<64x1xf32> to vector<64x128xf32>
    %312 = arith.addf %308, %311 : vector<64x128xf32>
    %313 = vector.extract_strided_slice %312 {offsets = [0, 0], sizes = [32, 128], strides = [1, 1]} : vector<64x128xf32> to vector<32x128xf32>
    %314 = math.tanh %313 : vector<32x128xf32>
    %315 = vector.extract_strided_slice %312 {offsets = [32, 0], sizes = [32, 128], strides = [1, 1]} : vector<64x128xf32> to vector<32x128xf32>
    %316 = arith.negf %315 : vector<32x128xf32>
    %317 = math.exp %316 : vector<32x128xf32>
    %cst_184 = arith.constant 1.000000e+00 : f32
    %318 = vector.broadcast %cst_184 : f32 to vector<32x128xf32>
    %319 = arith.addf %318, %317 : vector<32x128xf32>
    %320 = arith.divf %318, %319 : vector<32x128xf32>
    %321 = arith.mulf %314, %320 : vector<32x128xf32>
    %322 = vector.broadcast %4 : vector<1x128xf32> to vector<32x128xf32>
    %323 = arith.mulf %321, %322 : vector<32x128xf32>
    %324 = arith.truncf %323 : vector<32x128xf32> to vector<32x128xbf16>
    %c4_185 = arith.constant 4 : index
    %c0_186 = arith.constant 0 : index
    %c0_187 = arith.constant 0 : index
    %325 = vector.load %arg6[%c4_185, %c0_186, %c0_187] : memref<8x48x32xbf16, #tpu.memory_space<vmem>>, vector<1x48x32xbf16>
    %326 = vector.shape_cast %325 : vector<1x48x32xbf16> to vector<48x32xbf16>
    %cst_188 = arith.constant dense<0.000000e+00> : vector<48x128xf32>
    %327 = tpu.matmul %326, %324, %cst_188 {dimension_numbers = #tpu.dot_dimension_numbers<[1], [0], [0], [1], [0, 0, 1, 1], [], []>} : vector<48x32xbf16>, vector<32x128xbf16>, vector<48x128xf32> -> vector<48x128xf32>
    %c4_189 = arith.constant 4 : index
    %c0_190 = arith.constant 0 : index
    %c0_191 = arith.constant 0 : index
    %328 = vector.load %arg7[%c4_189, %c0_190, %c0_191] : memref<8x48x1xf32, #tpu.memory_space<vmem>>, vector<1x48x1xf32>
    %329 = vector.shape_cast %328 : vector<1x48x1xf32> to vector<48x1xf32>
    %330 = vector.broadcast %329 : vector<48x1xf32> to vector<48x128xf32>
    %331 = arith.addf %327, %330 : vector<48x128xf32>
    %332 = vector.extract_strided_slice %331 {offsets = [0, 0], sizes = [8, 128], strides = [1, 1]} : vector<48x128xf32> to vector<8x128xf32>
    %333 = vector.extract_strided_slice %331 {offsets = [8, 0], sizes = [8, 128], strides = [1, 1]} : vector<48x128xf32> to vector<8x128xf32>
    %334 = vector.extract_strided_slice %331 {offsets = [16, 0], sizes = [32, 128], strides = [1, 1]} : vector<48x128xf32> to vector<32x128xf32>
    %335 = vector.broadcast %4 : vector<1x128xf32> to vector<32x128xf32>
    %336 = arith.mulf %334, %335 : vector<32x128xf32>
    %337 = arith.truncf %332 : vector<8x128xf32> to vector<8x128xbf16>
    %338 = arith.truncf %333 : vector<8x128xf32> to vector<8x128xbf16>
    %cst_192 = arith.constant dense<0.000000e+00> : vector<128x128xf32>
    %339 = tpu.matmul %337, %338, %cst_192 {dimension_numbers = #tpu.dot_dimension_numbers<[0], [0], [1], [1], [0, 1, 1, 1], [], []>} : vector<8x128xbf16>, vector<8x128xbf16>, vector<128x128xf32> -> vector<128x128xf32>
    %340 = vector.broadcast %7 : vector<1x128xf32> to vector<128x128xf32>
    %341 = arith.addf %339, %340 : vector<128x128xf32>
    %cst_193 = arith.constant dense<0xFF800000> : vector<128xf32>
    %342 = vector.multi_reduction <maximumf>, %341, %cst_193 [1] : vector<128x128xf32> to vector<128xf32>
    %343 = vector.shape_cast %342 : vector<128xf32> to vector<128x1xf32>
    %344 = vector.broadcast %343 : vector<128x1xf32> to vector<128x128xf32>
    %345 = arith.subf %341, %344 : vector<128x128xf32>
    %346 = math.exp %345 : vector<128x128xf32>
    %cst_194 = arith.constant dense<0.000000e+00> : vector<128xf32>
    %347 = vector.multi_reduction <add>, %346, %cst_194 [1] : vector<128x128xf32> to vector<128xf32>
    %348 = vector.shape_cast %347 : vector<128xf32> to vector<128x1xf32>
    %349 = tpu.reciprocal %348 {approx = true} : vector<128x1xf32> -> vector<128x1xf32>
    %350 = vector.broadcast %349 : vector<128x1xf32> to vector<128x128xf32>
    %351 = arith.mulf %346, %350 : vector<128x128xf32>
    %352 = arith.truncf %336 : vector<32x128xf32> to vector<32x128xbf16>
    %353 = arith.truncf %351 : vector<128x128xf32> to vector<128x128xbf16>
    %cst_195 = arith.constant dense<0.000000e+00> : vector<32x128xf32>
    %354 = tpu.matmul %352, %353, %cst_195 {dimension_numbers = #tpu.dot_dimension_numbers<[1], [0], [0], [1], [0, 0, 1, 1], [], []>} : vector<32x128xbf16>, vector<128x128xbf16>, vector<32x128xf32> -> vector<32x128xf32>
    %355 = arith.addf %354, %323 : vector<32x128xf32>
    %356 = vector.broadcast %4 : vector<1x128xf32> to vector<32x128xf32>
    %357 = arith.mulf %355, %356 : vector<32x128xf32>
    %358 = arith.truncf %357 : vector<32x128xf32> to vector<32x128xbf16>
    %c0_196 = arith.constant 0 : index
    %c128_197 = arith.constant 128 : index
    %359 = vector.load %arg12[%c0_196, %c128_197] : memref<32x384xbf16, #tpu.memory_space<vmem>>, vector<32x128xbf16>
    tpu.vector_store %arg12[%c0_196, %c128_197], %358 {strides = array<i32>} : memref<32x384xbf16, #tpu.memory_space<vmem>>, vector<32x128xbf16>,
    %c4_198 = arith.constant 4 : index
    %c0_199 = arith.constant 0 : index
    %c0_200 = arith.constant 0 : index
    %c0_201 = arith.constant 0 : index
    %360 = vector.load %arg3[%c4_198, %c0_199, %c0_200, %c0_201] : memref<7x3x64x32xbf16, #tpu.memory_space<vmem>>, vector<1x1x64x32xbf16>
    %361 = vector.shape_cast %360 : vector<1x1x64x32xbf16> to vector<64x32xbf16>
    %c4_202 = arith.constant 4 : index
    %c1_203 = arith.constant 1 : index
    %c0_204 = arith.constant 0 : index
    %c0_205 = arith.constant 0 : index
    %362 = vector.load %arg3[%c4_202, %c1_203, %c0_204, %c0_205] : memref<7x3x64x32xbf16, #tpu.memory_space<vmem>>, vector<1x1x64x32xbf16>
    %363 = vector.shape_cast %362 : vector<1x1x64x32xbf16> to vector<64x32xbf16>
    %c4_206 = arith.constant 4 : index
    %c2_207 = arith.constant 2 : index
    %c0_208 = arith.constant 0 : index
    %c0_209 = arith.constant 0 : index
    %364 = vector.load %arg3[%c4_206, %c2_207, %c0_208, %c0_209] : memref<7x3x64x32xbf16, #tpu.memory_space<vmem>>, vector<1x1x64x32xbf16>
    %365 = vector.shape_cast %364 : vector<1x1x64x32xbf16> to vector<64x32xbf16>
    %c0_210 = arith.constant 0 : index
    %c96 = arith.constant 96 : index
    %366 = vector.load %arg12[%c0_210, %c96] : memref<32x384xbf16, #tpu.memory_space<vmem>>, vector<32x128xbf16>
    %c0_211 = arith.constant 0 : index
    %c128_212 = arith.constant 128 : index
    %367 = vector.load %arg12[%c0_211, %c128_212] : memref<32x384xbf16, #tpu.memory_space<vmem>>, vector<32x128xbf16>
    %c0_213 = arith.constant 0 : index
    %c160 = arith.constant 160 : index
    %368 = vector.load %arg12[%c0_213, %c160] : memref<32x384xbf16, #tpu.memory_space<vmem>>, vector<32x128xbf16>
    %cst_214 = arith.constant dense<0.000000e+00> : vector<64x128xf32>
    %369 = tpu.matmul %361, %366, %cst_214 {dimension_numbers = #tpu.dot_dimension_numbers<[1], [0], [0], [1], [0, 0, 1, 1], [], []>} : vector<64x32xbf16>, vector<32x128xbf16>, vector<64x128xf32> -> vector<64x128xf32>
    %cst_215 = arith.constant dense<0.000000e+00> : vector<64x128xf32>
    %370 = tpu.matmul %363, %367, %cst_215 {dimension_numbers = #tpu.dot_dimension_numbers<[1], [0], [0], [1], [0, 0, 1, 1], [], []>} : vector<64x32xbf16>, vector<32x128xbf16>, vector<64x128xf32> -> vector<64x128xf32>
    %371 = arith.addf %369, %370 : vector<64x128xf32>
    %cst_216 = arith.constant dense<0.000000e+00> : vector<64x128xf32>
    %372 = tpu.matmul %365, %368, %cst_216 {dimension_numbers = #tpu.dot_dimension_numbers<[1], [0], [0], [1], [0, 0, 1, 1], [], []>} : vector<64x32xbf16>, vector<32x128xbf16>, vector<64x128xf32> -> vector<64x128xf32>
    %373 = arith.addf %371, %372 : vector<64x128xf32>
    %c5 = arith.constant 5 : index
    %c0_217 = arith.constant 0 : index
    %c0_218 = arith.constant 0 : index
    %374 = vector.load %arg4[%c5, %c0_217, %c0_218] : memref<8x64x1xf32, #tpu.memory_space<vmem>>, vector<1x64x1xf32>
    %375 = vector.shape_cast %374 : vector<1x64x1xf32> to vector<64x1xf32>
    %376 = vector.broadcast %375 : vector<64x1xf32> to vector<64x128xf32>
    %377 = arith.mulf %373, %376 : vector<64x128xf32>
    %c5_219 = arith.constant 5 : index
    %c0_220 = arith.constant 0 : index
    %c0_221 = arith.constant 0 : index
    %378 = vector.load %arg5[%c5_219, %c0_220, %c0_221] : memref<8x64x1xf32, #tpu.memory_space<vmem>>, vector<1x64x1xf32>
    %379 = vector.shape_cast %378 : vector<1x64x1xf32> to vector<64x1xf32>
    %380 = vector.broadcast %379 : vector<64x1xf32> to vector<64x128xf32>
    %381 = arith.addf %377, %380 : vector<64x128xf32>
    %382 = vector.extract_strided_slice %381 {offsets = [0, 0], sizes = [32, 128], strides = [1, 1]} : vector<64x128xf32> to vector<32x128xf32>
    %383 = math.tanh %382 : vector<32x128xf32>
    %384 = vector.extract_strided_slice %381 {offsets = [32, 0], sizes = [32, 128], strides = [1, 1]} : vector<64x128xf32> to vector<32x128xf32>
    %385 = arith.negf %384 : vector<32x128xf32>
    %386 = math.exp %385 : vector<32x128xf32>
    %cst_222 = arith.constant 1.000000e+00 : f32
    %387 = vector.broadcast %cst_222 : f32 to vector<32x128xf32>
    %388 = arith.addf %387, %386 : vector<32x128xf32>
    %389 = arith.divf %387, %388 : vector<32x128xf32>
    %390 = arith.mulf %383, %389 : vector<32x128xf32>
    %391 = vector.broadcast %4 : vector<1x128xf32> to vector<32x128xf32>
    %392 = arith.mulf %390, %391 : vector<32x128xf32>
    %393 = arith.truncf %392 : vector<32x128xf32> to vector<32x128xbf16>
    %c5_223 = arith.constant 5 : index
    %c0_224 = arith.constant 0 : index
    %c0_225 = arith.constant 0 : index
    %394 = vector.load %arg6[%c5_223, %c0_224, %c0_225] : memref<8x48x32xbf16, #tpu.memory_space<vmem>>, vector<1x48x32xbf16>
    %395 = vector.shape_cast %394 : vector<1x48x32xbf16> to vector<48x32xbf16>
    %cst_226 = arith.constant dense<0.000000e+00> : vector<48x128xf32>
    %396 = tpu.matmul %395, %393, %cst_226 {dimension_numbers = #tpu.dot_dimension_numbers<[1], [0], [0], [1], [0, 0, 1, 1], [], []>} : vector<48x32xbf16>, vector<32x128xbf16>, vector<48x128xf32> -> vector<48x128xf32>
    %c5_227 = arith.constant 5 : index
    %c0_228 = arith.constant 0 : index
    %c0_229 = arith.constant 0 : index
    %397 = vector.load %arg7[%c5_227, %c0_228, %c0_229] : memref<8x48x1xf32, #tpu.memory_space<vmem>>, vector<1x48x1xf32>
    %398 = vector.shape_cast %397 : vector<1x48x1xf32> to vector<48x1xf32>
    %399 = vector.broadcast %398 : vector<48x1xf32> to vector<48x128xf32>
    %400 = arith.addf %396, %399 : vector<48x128xf32>
    %401 = vector.extract_strided_slice %400 {offsets = [0, 0], sizes = [8, 128], strides = [1, 1]} : vector<48x128xf32> to vector<8x128xf32>
    %402 = vector.extract_strided_slice %400 {offsets = [8, 0], sizes = [8, 128], strides = [1, 1]} : vector<48x128xf32> to vector<8x128xf32>
    %403 = vector.extract_strided_slice %400 {offsets = [16, 0], sizes = [32, 128], strides = [1, 1]} : vector<48x128xf32> to vector<32x128xf32>
    %404 = vector.broadcast %4 : vector<1x128xf32> to vector<32x128xf32>
    %405 = arith.mulf %403, %404 : vector<32x128xf32>
    %406 = arith.truncf %401 : vector<8x128xf32> to vector<8x128xbf16>
    %407 = arith.truncf %402 : vector<8x128xf32> to vector<8x128xbf16>
    %cst_230 = arith.constant dense<0.000000e+00> : vector<128x128xf32>
    %408 = tpu.matmul %406, %407, %cst_230 {dimension_numbers = #tpu.dot_dimension_numbers<[0], [0], [1], [1], [0, 1, 1, 1], [], []>} : vector<8x128xbf16>, vector<8x128xbf16>, vector<128x128xf32> -> vector<128x128xf32>
    %409 = vector.broadcast %7 : vector<1x128xf32> to vector<128x128xf32>
    %410 = arith.addf %408, %409 : vector<128x128xf32>
    %cst_231 = arith.constant dense<0xFF800000> : vector<128xf32>
    %411 = vector.multi_reduction <maximumf>, %410, %cst_231 [1] : vector<128x128xf32> to vector<128xf32>
    %412 = vector.shape_cast %411 : vector<128xf32> to vector<128x1xf32>
    %413 = vector.broadcast %412 : vector<128x1xf32> to vector<128x128xf32>
    %414 = arith.subf %410, %413 : vector<128x128xf32>
    %415 = math.exp %414 : vector<128x128xf32>
    %cst_232 = arith.constant dense<0.000000e+00> : vector<128xf32>
    %416 = vector.multi_reduction <add>, %415, %cst_232 [1] : vector<128x128xf32> to vector<128xf32>
    %417 = vector.shape_cast %416 : vector<128xf32> to vector<128x1xf32>
    %418 = tpu.reciprocal %417 {approx = true} : vector<128x1xf32> -> vector<128x1xf32>
    %419 = vector.broadcast %418 : vector<128x1xf32> to vector<128x128xf32>
    %420 = arith.mulf %415, %419 : vector<128x128xf32>
    %421 = arith.truncf %405 : vector<32x128xf32> to vector<32x128xbf16>
    %422 = arith.truncf %420 : vector<128x128xf32> to vector<128x128xbf16>
    %cst_233 = arith.constant dense<0.000000e+00> : vector<32x128xf32>
    %423 = tpu.matmul %421, %422, %cst_233 {dimension_numbers = #tpu.dot_dimension_numbers<[1], [0], [0], [1], [0, 0, 1, 1], [], []>} : vector<32x128xbf16>, vector<128x128xbf16>, vector<32x128xf32> -> vector<32x128xf32>
    %424 = arith.addf %423, %392 : vector<32x128xf32>
    %425 = vector.broadcast %4 : vector<1x128xf32> to vector<32x128xf32>
    %426 = arith.mulf %424, %425 : vector<32x128xf32>
    %427 = arith.truncf %426 : vector<32x128xf32> to vector<32x128xbf16>
    %c0_234 = arith.constant 0 : index
    %c128_235 = arith.constant 128 : index
    %428 = vector.load %arg12[%c0_234, %c128_235] : memref<32x384xbf16, #tpu.memory_space<vmem>>, vector<32x128xbf16>
    tpu.vector_store %arg12[%c0_234, %c128_235], %427 {strides = array<i32>} : memref<32x384xbf16, #tpu.memory_space<vmem>>, vector<32x128xbf16>,
    %c5_236 = arith.constant 5 : index
    %c0_237 = arith.constant 0 : index
    %c0_238 = arith.constant 0 : index
    %c0_239 = arith.constant 0 : index
    %429 = vector.load %arg3[%c5_236, %c0_237, %c0_238, %c0_239] : memref<7x3x64x32xbf16, #tpu.memory_space<vmem>>, vector<1x1x64x32xbf16>
    %430 = vector.shape_cast %429 : vector<1x1x64x32xbf16> to vector<64x32xbf16>
    %c5_240 = arith.constant 5 : index
    %c1_241 = arith.constant 1 : index
    %c0_242 = arith.constant 0 : index
    %c0_243 = arith.constant 0 : index
    %431 = vector.load %arg3[%c5_240, %c1_241, %c0_242, %c0_243] : memref<7x3x64x32xbf16, #tpu.memory_space<vmem>>, vector<1x1x64x32xbf16>
    %432 = vector.shape_cast %431 : vector<1x1x64x32xbf16> to vector<64x32xbf16>
    %c5_244 = arith.constant 5 : index
    %c2_245 = arith.constant 2 : index
    %c0_246 = arith.constant 0 : index
    %c0_247 = arith.constant 0 : index
    %433 = vector.load %arg3[%c5_244, %c2_245, %c0_246, %c0_247] : memref<7x3x64x32xbf16, #tpu.memory_space<vmem>>, vector<1x1x64x32xbf16>
    %434 = vector.shape_cast %433 : vector<1x1x64x32xbf16> to vector<64x32xbf16>
    %c0_248 = arith.constant 0 : index
    %c64 = arith.constant 64 : index
    %435 = vector.load %arg12[%c0_248, %c64] : memref<32x384xbf16, #tpu.memory_space<vmem>>, vector<32x128xbf16>
    %c0_249 = arith.constant 0 : index
    %c128_250 = arith.constant 128 : index
    %436 = vector.load %arg12[%c0_249, %c128_250] : memref<32x384xbf16, #tpu.memory_space<vmem>>, vector<32x128xbf16>
    %c0_251 = arith.constant 0 : index
    %c192 = arith.constant 192 : index
    %437 = vector.load %arg12[%c0_251, %c192] : memref<32x384xbf16, #tpu.memory_space<vmem>>, vector<32x128xbf16>
    %cst_252 = arith.constant dense<0.000000e+00> : vector<64x128xf32>
    %438 = tpu.matmul %430, %435, %cst_252 {dimension_numbers = #tpu.dot_dimension_numbers<[1], [0], [0], [1], [0, 0, 1, 1], [], []>} : vector<64x32xbf16>, vector<32x128xbf16>, vector<64x128xf32> -> vector<64x128xf32>
    %cst_253 = arith.constant dense<0.000000e+00> : vector<64x128xf32>
    %439 = tpu.matmul %432, %436, %cst_253 {dimension_numbers = #tpu.dot_dimension_numbers<[1], [0], [0], [1], [0, 0, 1, 1], [], []>} : vector<64x32xbf16>, vector<32x128xbf16>, vector<64x128xf32> -> vector<64x128xf32>
    %440 = arith.addf %438, %439 : vector<64x128xf32>
    %cst_254 = arith.constant dense<0.000000e+00> : vector<64x128xf32>
    %441 = tpu.matmul %434, %437, %cst_254 {dimension_numbers = #tpu.dot_dimension_numbers<[1], [0], [0], [1], [0, 0, 1, 1], [], []>} : vector<64x32xbf16>, vector<32x128xbf16>, vector<64x128xf32> -> vector<64x128xf32>
    %442 = arith.addf %440, %441 : vector<64x128xf32>
    %c6 = arith.constant 6 : index
    %c0_255 = arith.constant 0 : index
    %c0_256 = arith.constant 0 : index
    %443 = vector.load %arg4[%c6, %c0_255, %c0_256] : memref<8x64x1xf32, #tpu.memory_space<vmem>>, vector<1x64x1xf32>
    %444 = vector.shape_cast %443 : vector<1x64x1xf32> to vector<64x1xf32>
    %445 = vector.broadcast %444 : vector<64x1xf32> to vector<64x128xf32>
    %446 = arith.mulf %442, %445 : vector<64x128xf32>
    %c6_257 = arith.constant 6 : index
    %c0_258 = arith.constant 0 : index
    %c0_259 = arith.constant 0 : index
    %447 = vector.load %arg5[%c6_257, %c0_258, %c0_259] : memref<8x64x1xf32, #tpu.memory_space<vmem>>, vector<1x64x1xf32>
    %448 = vector.shape_cast %447 : vector<1x64x1xf32> to vector<64x1xf32>
    %449 = vector.broadcast %448 : vector<64x1xf32> to vector<64x128xf32>
    %450 = arith.addf %446, %449 : vector<64x128xf32>
    %451 = vector.extract_strided_slice %450 {offsets = [0, 0], sizes = [32, 128], strides = [1, 1]} : vector<64x128xf32> to vector<32x128xf32>
    %452 = math.tanh %451 : vector<32x128xf32>
    %453 = vector.extract_strided_slice %450 {offsets = [32, 0], sizes = [32, 128], strides = [1, 1]} : vector<64x128xf32> to vector<32x128xf32>
    %454 = arith.negf %453 : vector<32x128xf32>
    %455 = math.exp %454 : vector<32x128xf32>
    %cst_260 = arith.constant 1.000000e+00 : f32
    %456 = vector.broadcast %cst_260 : f32 to vector<32x128xf32>
    %457 = arith.addf %456, %455 : vector<32x128xf32>
    %458 = arith.divf %456, %457 : vector<32x128xf32>
    %459 = arith.mulf %452, %458 : vector<32x128xf32>
    %460 = vector.broadcast %4 : vector<1x128xf32> to vector<32x128xf32>
    %461 = arith.mulf %459, %460 : vector<32x128xf32>
    %462 = arith.truncf %461 : vector<32x128xf32> to vector<32x128xbf16>
    %c6_261 = arith.constant 6 : index
    %c0_262 = arith.constant 0 : index
    %c0_263 = arith.constant 0 : index
    %463 = vector.load %arg6[%c6_261, %c0_262, %c0_263] : memref<8x48x32xbf16, #tpu.memory_space<vmem>>, vector<1x48x32xbf16>
    %464 = vector.shape_cast %463 : vector<1x48x32xbf16> to vector<48x32xbf16>
    %cst_264 = arith.constant dense<0.000000e+00> : vector<48x128xf32>
    %465 = tpu.matmul %464, %462, %cst_264 {dimension_numbers = #tpu.dot_dimension_numbers<[1], [0], [0], [1], [0, 0, 1, 1], [], []>} : vector<48x32xbf16>, vector<32x128xbf16>, vector<48x128xf32> -> vector<48x128xf32>
    %c6_265 = arith.constant 6 : index
    %c0_266 = arith.constant 0 : index
    %c0_267 = arith.constant 0 : index
    %466 = vector.load %arg7[%c6_265, %c0_266, %c0_267] : memref<8x48x1xf32, #tpu.memory_space<vmem>>, vector<1x48x1xf32>
    %467 = vector.shape_cast %466 : vector<1x48x1xf32> to vector<48x1xf32>
    %468 = vector.broadcast %467 : vector<48x1xf32> to vector<48x128xf32>
    %469 = arith.addf %465, %468 : vector<48x128xf32>
    %470 = vector.extract_strided_slice %469 {offsets = [0, 0], sizes = [8, 128], strides = [1, 1]} : vector<48x128xf32> to vector<8x128xf32>
    %471 = vector.extract_strided_slice %469 {offsets = [8, 0], sizes = [8, 128], strides = [1, 1]} : vector<48x128xf32> to vector<8x128xf32>
    %472 = vector.extract_strided_slice %469 {offsets = [16, 0], sizes = [32, 128], strides = [1, 1]} : vector<48x128xf32> to vector<32x128xf32>
    %473 = vector.broadcast %4 : vector<1x128xf32> to vector<32x128xf32>
    %474 = arith.mulf %472, %473 : vector<32x128xf32>
    %475 = arith.truncf %470 : vector<8x128xf32> to vector<8x128xbf16>
    %476 = arith.truncf %471 : vector<8x128xf32> to vector<8x128xbf16>
    %cst_268 = arith.constant dense<0.000000e+00> : vector<128x128xf32>
    %477 = tpu.matmul %475, %476, %cst_268 {dimension_numbers = #tpu.dot_dimension_numbers<[0], [0], [1], [1], [0, 1, 1, 1], [], []>} : vector<8x128xbf16>, vector<8x128xbf16>, vector<128x128xf32> -> vector<128x128xf32>
    %478 = vector.broadcast %7 : vector<1x128xf32> to vector<128x128xf32>
    %479 = arith.addf %477, %478 : vector<128x128xf32>
    %cst_269 = arith.constant dense<0xFF800000> : vector<128xf32>
    %480 = vector.multi_reduction <maximumf>, %479, %cst_269 [1] : vector<128x128xf32> to vector<128xf32>
    %481 = vector.shape_cast %480 : vector<128xf32> to vector<128x1xf32>
    %482 = vector.broadcast %481 : vector<128x1xf32> to vector<128x128xf32>
    %483 = arith.subf %479, %482 : vector<128x128xf32>
    %484 = math.exp %483 : vector<128x128xf32>
    %cst_270 = arith.constant dense<0.000000e+00> : vector<128xf32>
    %485 = vector.multi_reduction <add>, %484, %cst_270 [1] : vector<128x128xf32> to vector<128xf32>
    %486 = vector.shape_cast %485 : vector<128xf32> to vector<128x1xf32>
    %487 = tpu.reciprocal %486 {approx = true} : vector<128x1xf32> -> vector<128x1xf32>
    %488 = vector.broadcast %487 : vector<128x1xf32> to vector<128x128xf32>
    %489 = arith.mulf %484, %488 : vector<128x128xf32>
    %490 = arith.truncf %474 : vector<32x128xf32> to vector<32x128xbf16>
    %491 = arith.truncf %489 : vector<128x128xf32> to vector<128x128xbf16>
    %cst_271 = arith.constant dense<0.000000e+00> : vector<32x128xf32>
    %492 = tpu.matmul %490, %491, %cst_271 {dimension_numbers = #tpu.dot_dimension_numbers<[1], [0], [0], [1], [0, 0, 1, 1], [], []>} : vector<32x128xbf16>, vector<128x128xbf16>, vector<32x128xf32> -> vector<32x128xf32>
    %493 = arith.addf %492, %461 : vector<32x128xf32>
    %494 = vector.broadcast %4 : vector<1x128xf32> to vector<32x128xf32>
    %495 = arith.mulf %493, %494 : vector<32x128xf32>
    %496 = arith.truncf %495 : vector<32x128xf32> to vector<32x128xbf16>
    %c0_272 = arith.constant 0 : index
    %c128_273 = arith.constant 128 : index
    %497 = vector.load %arg12[%c0_272, %c128_273] : memref<32x384xbf16, #tpu.memory_space<vmem>>, vector<32x128xbf16>
    tpu.vector_store %arg12[%c0_272, %c128_273], %496 {strides = array<i32>} : memref<32x384xbf16, #tpu.memory_space<vmem>>, vector<32x128xbf16>,
    %c6_274 = arith.constant 6 : index
    %c0_275 = arith.constant 0 : index
    %c0_276 = arith.constant 0 : index
    %c0_277 = arith.constant 0 : index
    %498 = vector.load %arg3[%c6_274, %c0_275, %c0_276, %c0_277] : memref<7x3x64x32xbf16, #tpu.memory_space<vmem>>, vector<1x1x64x32xbf16>
    %499 = vector.shape_cast %498 : vector<1x1x64x32xbf16> to vector<64x32xbf16>
    %c6_278 = arith.constant 6 : index
    %c1_279 = arith.constant 1 : index
    %c0_280 = arith.constant 0 : index
    %c0_281 = arith.constant 0 : index
    %500 = vector.load %arg3[%c6_278, %c1_279, %c0_280, %c0_281] : memref<7x3x64x32xbf16, #tpu.memory_space<vmem>>, vector<1x1x64x32xbf16>
    %501 = vector.shape_cast %500 : vector<1x1x64x32xbf16> to vector<64x32xbf16>
    %c6_282 = arith.constant 6 : index
    %c2_283 = arith.constant 2 : index
    %c0_284 = arith.constant 0 : index
    %c0_285 = arith.constant 0 : index
    %502 = vector.load %arg3[%c6_282, %c2_283, %c0_284, %c0_285] : memref<7x3x64x32xbf16, #tpu.memory_space<vmem>>, vector<1x1x64x32xbf16>
    %503 = vector.shape_cast %502 : vector<1x1x64x32xbf16> to vector<64x32xbf16>
    %c0_286 = arith.constant 0 : index
    %c0_287 = arith.constant 0 : index
    %504 = vector.load %arg12[%c0_286, %c0_287] : memref<32x384xbf16, #tpu.memory_space<vmem>>, vector<32x128xbf16>
    %c0_288 = arith.constant 0 : index
    %c128_289 = arith.constant 128 : index
    %505 = vector.load %arg12[%c0_288, %c128_289] : memref<32x384xbf16, #tpu.memory_space<vmem>>, vector<32x128xbf16>
    %c0_290 = arith.constant 0 : index
    %c256 = arith.constant 256 : index
    %506 = vector.load %arg12[%c0_290, %c256] : memref<32x384xbf16, #tpu.memory_space<vmem>>, vector<32x128xbf16>
    %cst_291 = arith.constant dense<0.000000e+00> : vector<64x128xf32>
    %507 = tpu.matmul %499, %504, %cst_291 {dimension_numbers = #tpu.dot_dimension_numbers<[1], [0], [0], [1], [0, 0, 1, 1], [], []>} : vector<64x32xbf16>, vector<32x128xbf16>, vector<64x128xf32> -> vector<64x128xf32>
    %cst_292 = arith.constant dense<0.000000e+00> : vector<64x128xf32>
    %508 = tpu.matmul %501, %505, %cst_292 {dimension_numbers = #tpu.dot_dimension_numbers<[1], [0], [0], [1], [0, 0, 1, 1], [], []>} : vector<64x32xbf16>, vector<32x128xbf16>, vector<64x128xf32> -> vector<64x128xf32>
    %509 = arith.addf %507, %508 : vector<64x128xf32>
    %cst_293 = arith.constant dense<0.000000e+00> : vector<64x128xf32>
    %510 = tpu.matmul %503, %506, %cst_293 {dimension_numbers = #tpu.dot_dimension_numbers<[1], [0], [0], [1], [0, 0, 1, 1], [], []>} : vector<64x32xbf16>, vector<32x128xbf16>, vector<64x128xf32> -> vector<64x128xf32>
    %511 = arith.addf %509, %510 : vector<64x128xf32>
    %c7 = arith.constant 7 : index
    %c0_294 = arith.constant 0 : index
    %c0_295 = arith.constant 0 : index
    %512 = vector.load %arg4[%c7, %c0_294, %c0_295] : memref<8x64x1xf32, #tpu.memory_space<vmem>>, vector<1x64x1xf32>
    %513 = vector.shape_cast %512 : vector<1x64x1xf32> to vector<64x1xf32>
    %514 = vector.broadcast %513 : vector<64x1xf32> to vector<64x128xf32>
    %515 = arith.mulf %511, %514 : vector<64x128xf32>
    %c7_296 = arith.constant 7 : index
    %c0_297 = arith.constant 0 : index
    %c0_298 = arith.constant 0 : index
    %516 = vector.load %arg5[%c7_296, %c0_297, %c0_298] : memref<8x64x1xf32, #tpu.memory_space<vmem>>, vector<1x64x1xf32>
    %517 = vector.shape_cast %516 : vector<1x64x1xf32> to vector<64x1xf32>
    %518 = vector.broadcast %517 : vector<64x1xf32> to vector<64x128xf32>
    %519 = arith.addf %515, %518 : vector<64x128xf32>
    %520 = vector.extract_strided_slice %519 {offsets = [0, 0], sizes = [32, 128], strides = [1, 1]} : vector<64x128xf32> to vector<32x128xf32>
    %521 = math.tanh %520 : vector<32x128xf32>
    %522 = vector.extract_strided_slice %519 {offsets = [32, 0], sizes = [32, 128], strides = [1, 1]} : vector<64x128xf32> to vector<32x128xf32>
    %523 = arith.negf %522 : vector<32x128xf32>
    %524 = math.exp %523 : vector<32x128xf32>
    %cst_299 = arith.constant 1.000000e+00 : f32
    %525 = vector.broadcast %cst_299 : f32 to vector<32x128xf32>
    %526 = arith.addf %525, %524 : vector<32x128xf32>
    %527 = arith.divf %525, %526 : vector<32x128xf32>
    %528 = arith.mulf %521, %527 : vector<32x128xf32>
    %529 = vector.broadcast %4 : vector<1x128xf32> to vector<32x128xf32>
    %530 = arith.mulf %528, %529 : vector<32x128xf32>
    %531 = arith.truncf %530 : vector<32x128xf32> to vector<32x128xbf16>
    %c7_300 = arith.constant 7 : index
    %c0_301 = arith.constant 0 : index
    %c0_302 = arith.constant 0 : index
    %532 = vector.load %arg6[%c7_300, %c0_301, %c0_302] : memref<8x48x32xbf16, #tpu.memory_space<vmem>>, vector<1x48x32xbf16>
    %533 = vector.shape_cast %532 : vector<1x48x32xbf16> to vector<48x32xbf16>
    %cst_303 = arith.constant dense<0.000000e+00> : vector<48x128xf32>
    %534 = tpu.matmul %533, %531, %cst_303 {dimension_numbers = #tpu.dot_dimension_numbers<[1], [0], [0], [1], [0, 0, 1, 1], [], []>} : vector<48x32xbf16>, vector<32x128xbf16>, vector<48x128xf32> -> vector<48x128xf32>
    %c7_304 = arith.constant 7 : index
    %c0_305 = arith.constant 0 : index
    %c0_306 = arith.constant 0 : index
    %535 = vector.load %arg7[%c7_304, %c0_305, %c0_306] : memref<8x48x1xf32, #tpu.memory_space<vmem>>, vector<1x48x1xf32>
    %536 = vector.shape_cast %535 : vector<1x48x1xf32> to vector<48x1xf32>
    %537 = vector.broadcast %536 : vector<48x1xf32> to vector<48x128xf32>
    %538 = arith.addf %534, %537 : vector<48x128xf32>
    %539 = vector.extract_strided_slice %538 {offsets = [0, 0], sizes = [8, 128], strides = [1, 1]} : vector<48x128xf32> to vector<8x128xf32>
    %540 = vector.extract_strided_slice %538 {offsets = [8, 0], sizes = [8, 128], strides = [1, 1]} : vector<48x128xf32> to vector<8x128xf32>
    %541 = vector.extract_strided_slice %538 {offsets = [16, 0], sizes = [32, 128], strides = [1, 1]} : vector<48x128xf32> to vector<32x128xf32>
    %542 = vector.broadcast %4 : vector<1x128xf32> to vector<32x128xf32>
    %543 = arith.mulf %541, %542 : vector<32x128xf32>
    %544 = arith.truncf %539 : vector<8x128xf32> to vector<8x128xbf16>
    %545 = arith.truncf %540 : vector<8x128xf32> to vector<8x128xbf16>
    %cst_307 = arith.constant dense<0.000000e+00> : vector<128x128xf32>
    %546 = tpu.matmul %544, %545, %cst_307 {dimension_numbers = #tpu.dot_dimension_numbers<[0], [0], [1], [1], [0, 1, 1, 1], [], []>} : vector<8x128xbf16>, vector<8x128xbf16>, vector<128x128xf32> -> vector<128x128xf32>
    %547 = vector.broadcast %7 : vector<1x128xf32> to vector<128x128xf32>
    %548 = arith.addf %546, %547 : vector<128x128xf32>
    %cst_308 = arith.constant dense<0xFF800000> : vector<128xf32>
    %549 = vector.multi_reduction <maximumf>, %548, %cst_308 [1] : vector<128x128xf32> to vector<128xf32>
    %550 = vector.shape_cast %549 : vector<128xf32> to vector<128x1xf32>
    %551 = vector.broadcast %550 : vector<128x1xf32> to vector<128x128xf32>
    %552 = arith.subf %548, %551 : vector<128x128xf32>
    %553 = math.exp %552 : vector<128x128xf32>
    %cst_309 = arith.constant dense<0.000000e+00> : vector<128xf32>
    %554 = vector.multi_reduction <add>, %553, %cst_309 [1] : vector<128x128xf32> to vector<128xf32>
    %555 = vector.shape_cast %554 : vector<128xf32> to vector<128x1xf32>
    %556 = tpu.reciprocal %555 {approx = true} : vector<128x1xf32> -> vector<128x1xf32>
    %557 = vector.broadcast %556 : vector<128x1xf32> to vector<128x128xf32>
    %558 = arith.mulf %553, %557 : vector<128x128xf32>
    %559 = arith.truncf %543 : vector<32x128xf32> to vector<32x128xbf16>
    %560 = arith.truncf %558 : vector<128x128xf32> to vector<128x128xbf16>
    %cst_310 = arith.constant dense<0.000000e+00> : vector<32x128xf32>
    %561 = tpu.matmul %559, %560, %cst_310 {dimension_numbers = #tpu.dot_dimension_numbers<[1], [0], [0], [1], [0, 0, 1, 1], [], []>} : vector<32x128xbf16>, vector<128x128xbf16>, vector<32x128xf32> -> vector<32x128xf32>
    %562 = arith.addf %561, %530 : vector<32x128xf32>
    %563 = vector.broadcast %4 : vector<1x128xf32> to vector<32x128xf32>
    %564 = arith.mulf %562, %563 : vector<32x128xf32>
    %c0_311 = arith.constant 0 : index
    %c0_312 = arith.constant 0 : index
    %565 = vector.load %arg8[%c0_311, %c0_312] : memref<1x32xbf16, #tpu.memory_space<vmem>>, vector<1x32xbf16>
    %566 = arith.truncf %564 : vector<32x128xf32> to vector<32x128xbf16>
    %cst_313 = arith.constant dense<0.000000e+00> : vector<1x128xf32>
    %567 = tpu.matmul %565, %566, %cst_313 {dimension_numbers = #tpu.dot_dimension_numbers<[1], [0], [0], [1], [0, 0, 1, 1], [], []>} : vector<1x32xbf16>, vector<32x128xbf16>, vector<1x128xf32> -> vector<1x128xf32>
    %c0_314 = arith.constant 0 : index
    %c0_315 = arith.constant 0 : index
    %568 = vector.load %arg9[%c0_314, %c0_315] : memref<1x1xf32, #tpu.memory_space<vmem>>, vector<1x1xf32>
    %569 = vector.broadcast %568 : vector<1x1xf32> to vector<1x128xf32>
    %570 = arith.addf %567, %569 : vector<1x128xf32>
    %c0_316 = arith.constant 0 : index
    %c0_317 = arith.constant 0 : index
    %c0_318 = arith.constant 0 : index
    %571 = vector.load %arg10[%c0_316, %c0_317, %c0_318] : memref<1x1x128xf32, #tpu.memory_space<vmem>>, vector<1x1x128xf32>
    %572 = vector.shape_cast %571 : vector<1x1x128xf32> to vector<1x128xf32>
    %573 = vector.shape_cast %570 : vector<1x128xf32> to vector<1x1x128xf32>
    tpu.vector_store %arg10[%c0_316, %c0_317, %c0_318], %573 {strides = array<i32>} : memref<1x1x128xf32, #tpu.memory_space<vmem>>, vector<1x1x128xf32>,
    return
  }
  func.func @transform_0(%arg0: i32) -> (i32, i32, i32) {
    %c0_i32 = arith.constant 0 : i32
    %c0_i32_0 = arith.constant 0 : i32
    %c0_i32_1 = arith.constant 0 : i32
    return %arg0, %c0_i32, %c0_i32_0 : i32, i32, i32
  }
  func.func @transform_1(%arg0: i32) -> (i32, i32, i32) {
    %c0_i32 = arith.constant 0 : i32
    %c0_i32_0 = arith.constant 0 : i32
    %c0_i32_1 = arith.constant 0 : i32
    %c0_i32_2 = arith.constant 0 : i32
    return %c0_i32, %c0_i32_0, %c0_i32_1 : i32, i32, i32
  }
  func.func @transform_2(%arg0: i32) -> (i32, i32, i32, i32) {
    %c0_i32 = arith.constant 0 : i32
    %c0_i32_0 = arith.constant 0 : i32
    %c0_i32_1 = arith.constant 0 : i32
    %c0_i32_2 = arith.constant 0 : i32
    %c0_i32_3 = arith.constant 0 : i32
    return %c0_i32, %c0_i32_0, %c0_i32_1, %c0_i32_2 : i32, i32, i32, i32
  }
  func.func @transform_3(%arg0: i32) -> (i32, i32, i32) {
    %c0_i32 = arith.constant 0 : i32
    %c0_i32_0 = arith.constant 0 : i32
    %c0_i32_1 = arith.constant 0 : i32
    %c0_i32_2 = arith.constant 0 : i32
    return %c0_i32, %c0_i32_0, %c0_i32_1 : i32, i32, i32
  }
  func.func @transform_4(%arg0: i32) -> (i32, i32, i32) {
    %c0_i32 = arith.constant 0 : i32
    %c0_i32_0 = arith.constant 0 : i32
    %c0_i32_1 = arith.constant 0 : i32
    %c0_i32_2 = arith.constant 0 : i32
    return %c0_i32, %c0_i32_0, %c0_i32_1 : i32, i32, i32
  }
  func.func @transform_5(%arg0: i32) -> (i32, i32, i32) {
    %c0_i32 = arith.constant 0 : i32
    %c0_i32_0 = arith.constant 0 : i32
    %c0_i32_1 = arith.constant 0 : i32
    %c0_i32_2 = arith.constant 0 : i32
    return %c0_i32, %c0_i32_0, %c0_i32_1 : i32, i32, i32
  }
  func.func @transform_6(%arg0: i32) -> (i32, i32, i32) {
    %c0_i32 = arith.constant 0 : i32
    %c0_i32_0 = arith.constant 0 : i32
    %c0_i32_1 = arith.constant 0 : i32
    %c0_i32_2 = arith.constant 0 : i32
    return %c0_i32, %c0_i32_0, %c0_i32_1 : i32, i32, i32
  }
  func.func @transform_7(%arg0: i32) -> (i32, i32) {
    %c0_i32 = arith.constant 0 : i32
    %c0_i32_0 = arith.constant 0 : i32
    %c0_i32_1 = arith.constant 0 : i32
    return %c0_i32, %c0_i32_0 : i32, i32
  }
  func.func @transform_8(%arg0: i32) -> (i32, i32) {
    %c0_i32 = arith.constant 0 : i32
    %c0_i32_0 = arith.constant 0 : i32
    %c0_i32_1 = arith.constant 0 : i32
    return %c0_i32, %c0_i32_0 : i32, i32
  }
  func.func @transform_9(%arg0: i32) -> (i32, i32, i32) {
    %c0_i32 = arith.constant 0 : i32
    %c0_i32_0 = arith.constant 0 : i32
    %c0_i32_1 = arith.constant 0 : i32
    return %arg0, %c0_i32, %c0_i32_0 : i32, i32, i32
  }
}

</mosaic_0001>

<llo_original>
// kernel: wavenet_forward.1
$region0: #{wavenet_forward.1}
  #allocation0 [shape = 'u32[]', space=smem, size = 0x4, offset = 0x4, fixed_abs, tag = 'smem constant byte address 0x4 - core index']
  #allocation1 [shape = 'u32[144,128]{1,0:T(1,128)}', space=vmem, size = 0x12000, scoped, tag = 'internal scratch']
  #allocation2 [shape = 'bf16[4,384]{1,0:T(4,128)(2,1)}', space=vmem, size = 0xc00, scoped, tag = 'scratch operand']
  #allocation3 [shape = 'bf16[32,384]{1,0:T(16,128)(2,1)}', space=vmem, size = 0x6000, scoped, tag = 'scratch operand']
  #allocation4 [shape = 'f32[1,1]{1,0:T(1,128)S(1)}', space=vmem, size = 0x200, scoped, tag = 'scoped memory for wavenet_forward.1']
  %s0 = inlined_call_operand.hbm [shape: bf16[2,4,128], index: 0, kind: input, shape index: {}]
  %s1 = inlined_call_operand.hbm [shape: bf16[3,64,4], index: 1, kind: input, shape index: {}]
  %s2 = inlined_call_operand.hbm [shape: bf16[7,3,64,32], index: 2, kind: input, shape index: {}]
  %s3 = inlined_call_operand.hbm [shape: f32[8,64,1], index: 3, kind: input, shape index: {}]
  %s4 = inlined_call_operand.hbm [shape: f32[8,64,1], index: 4, kind: input, shape index: {}]
  %s5 = inlined_call_operand.hbm [shape: bf16[8,48,32], index: 5, kind: input, shape index: {}]
  %s6 = inlined_call_operand.hbm [shape: f32[8,48,1], index: 6, kind: input, shape index: {}]
  %s7 = inlined_call_operand.hbm [shape: bf16[1,32], index: 7, kind: input, shape index: {}]
  %s8 = inlined_call_operand.<no memory space> [shape: f32[1,1], index: 8, kind: input, shape index: {}]
  %s9 = inlined_call_operand.hbm [shape: f32[2,1,128], index: 9, kind: output, shape index: {}]
  %s10 = sld [smem:[#allocation0]]
  $region101: #{wavenet_forward.1} parent=0
    _
  %s12 = ssub.s32 1, %s10
  %s13 = scalar_select 0, %s12, %s10
  %v14 = vstv %s8
  %15 = vst [vmem:[#allocation4] sm:$0x1] %v14
  $region1: #{wavenet_forward.1} parent=0
    #allocation5 [shape = 'u8[2048]{0}', space=vmem, size = 0x800, scoped, tag = 'input window, operand 0']
    #allocation6 [shape = 's32[2]{0}', space=sflag, size = 0x8, scoped, tag = 'scoped memory for wavenet_forward.1']
    #allocation7 [shape = 's32[2]{0}', space=sflag, size = 0x8, scoped, tag = 'scoped memory for wavenet_forward.1']
    #allocation8 [shape = 'u8[49152]{0}', space=vmem, size = 0xc000, scoped, tag = 'input window, operand 1, single buffered']
    #allocation9 [shape = 's32[1]{0}', space=sflag, size = 0x4, scoped, tag = 'scoped memory for wavenet_forward.1']
    #allocation10 [shape = 'u8[344064]{0}', space=vmem, size = 0x54000, scoped, tag = 'input window, operand 2, single buffered']
    #allocation11 [shape = 'u8[262144]{0}', space=vmem, size = 0x40000, scoped, tag = 'input window, operand 3, single buffered']
    #allocation12 [shape = 's32[1]{0}', space=sflag, size = 0x4, scoped, tag = 'scoped memory for wavenet_forward.1']
    #allocation13 [shape = 'u8[262144]{0}', space=vmem, size = 0x40000, scoped, tag = 'input window, operand 4, single buffered']
    #allocation14 [shape = 'u8[98304]{0}', space=vmem, size = 0x18000, scoped, tag = 'input window, operand 5, single buffered']
    #allocation15 [shape = 's32[1]{0}', space=sflag, size = 0x4, scoped, tag = 'scoped memory for wavenet_forward.1']
    #allocation16 [shape = 'u8[196608]{0}', space=vmem, size = 0x30000, scoped, tag = 'input window, operand 6, single buffered']
    #allocation17 [shape = 'u8[512]{0}', space=vmem, size = 0x400, scoped, tag = 'input window, operand 7, single buffered']
    #allocation18 [shape = 's32[1]{0}', space=sflag, size = 0x4, scoped, tag = 'scoped memory for wavenet_forward.1']
    #allocation19 [shape = 'u8[1024]{0}', space=vmem, size = 0x400, scoped, tag = 'output window, operand 0']
    %16 = vsyncpa [#allocation6], 0
    %s17 = scalar_lea.sflag [#allocation6], 1
    %18 = vsyncpa %s17, 0
    %19 = vsyncpa [#allocation9], 0
    %20 = vsyncpa [#allocation12], 0
    %21 = vsyncpa [#allocation15], 0
    %22 = vsyncpa [#allocation18], 0
    %23 = vsyncpa [#allocation7], 0
    %s24 = scalar_lea.sflag [#allocation7], 1
    %25 = vsyncpa %s24, 0
    loop: start=0, step=1, limit=4
    $region2: #{wavenet_forward.1} parent=1 // loop_pre_header
      _
    $region3: #{wavenet_forward.1} parent=1 // loop_header
      %s27 = sphi 0, %s31
      %p28 = scmp.ge.s32.totalorder %s27, 4
      %s37 = sphi 0, %s39
      %s40 = sphi 0, %s37
      %s41 = sphi 0, %s40
      %s57 = sphi 0, %s41
      %s61 = sphi 0, %s61
      %s63 = sphi 0, %s61
      %s64 = sphi 0, %s63
      %s78 = sphi 0, %s64
      %s82 = sphi 0, %s82
      %s84 = sphi 0, %s82
      %s85 = sphi 0, %s84
      %s99 = sphi 0, %s85
      %s103 = sphi 0, %s103
      %s105 = sphi 0, %s103
      %s106 = sphi 0, %s105
      %s120 = sphi 0, %s106
      %s124 = sphi 0, %s124
      %s126 = sphi 0, %s124
      %s127 = sphi 0, %s126
      %s141 = sphi 0, %s127
      %s145 = sphi 0, %s145
      %s147 = sphi 0, %s145
      %s148 = sphi 0, %s147
      %s162 = sphi 0, %s148
      %s166 = sphi 0, %s166
      %s168 = sphi 0, %s166
      %s169 = sphi 0, %s168
      %s183 = sphi 0, %s169
      %s187 = sphi 0, %s187
      %s189 = sphi 0, %s187
      %s190 = sphi 0, %s189
      %s204 = sphi 0, %s190
      %s208 = sphi 0, %s208
      %s210 = sphi 0, %s208
      %s211 = sphi 0, %s210
      %s225 = sphi 0, %s211
      %s231 = sphi 0, %s233
      %s234 = sphi 0, %s231
      %s235 = sphi 0, %s234
      %s251 = sphi 0, %s235
    $region4: #{wavenet_forward.1} parent=1 // loop_header_branch
      %30 = sbr.rel (%p28) target = $region8
    $region5: #{wavenet_forward.1} parent=1 // loop_body
      %s32 = ssub.s32 %s27, 1
      %s33 = ssub.s32 %s27, 2
      %s34 = sadd.s32 %s27, 1
      %s35 = ssub.s32 %s27, %s34
      %p36 = scmp.eq.s32.totalorder %s35, 0
      %s38 = sadd.s32 %s37, 1
      %s39 = scalar_select %p36, %s37, %s38
      %p42 = pneg %p36
      %p43 = scmp.eq.s32.totalorder %s27, 1
      %p44 = por %p42, %p43
      %p45 = scmp.ne.s32.totalorder %s37, %s40
      %p46 = scmp.eq.s32.totalorder %s27, 0
      %p47 = por %p45, %p46
      %p48 = scmp.ne.s32.totalorder %s37, %s40
      %p49 = scmp.eq.s32.totalorder %s32, 1
      %p50 = por %p48, %p49
      %p51 = scmp.ne.s32.totalorder %s40, %s41
      %p52 = scmp.eq.s32.totalorder %s32, 0
      %p53 = por %p51, %p52
      %p54 = scmp.ne.s32.totalorder %s40, %s41
      %p55 = scmp.eq.s32.totalorder %s33, 1
      %p56 = por %p54, %p55
      %p58 = scmp.ne.s32.totalorder %s41, %s57
      %p59 = scmp.eq.s32.totalorder %s33, 0
      %p60 = por %p58, %p59
      %s62 = sadd.s32 %s61, 1
      %p65 = scmp.eq.s32.totalorder %s27, 1
      %p66 = scmp.ne.s32.totalorder %s61, %s63
      %p67 = scmp.eq.s32.totalorder %s27, 0
      %p68 = por %p66, %p67
      %p69 = scmp.ne.s32.totalorder %s61, %s63
      %p70 = scmp.eq.s32.totalorder %s32, 1
      %p71 = por %p69, %p70
      %p72 = scmp.ne.s32.totalorder %s63, %s64
      %p73 = scmp.eq.s32.totalorder %s32, 0
      %p74 = por %p72, %p73
      %p75 = scmp.ne.s32.totalorder %s63, %s64
      %p76 = scmp.eq.s32.totalorder %s33, 1
      %p77 = por %p75, %p76
      %p79 = scmp.ne.s32.totalorder %s64, %s78
      %p80 = scmp.eq.s32.totalorder %s33, 0
      %p81 = por %p79, %p80
      %s83 = sadd.s32 %s82, 1
      %p86 = scmp.eq.s32.totalorder %s27, 1
      %p87 = scmp.ne.s32.totalorder %s82, %s84
      %p88 = scmp.eq.s32.totalorder %s27, 0
      %p89 = por %p87, %p88
      %p90 = scmp.ne.s32.totalorder %s82, %s84
      %p91 = scmp.eq.s32.totalorder %s32, 1
      %p92 = por %p90, %p91
      %p93 = scmp.ne.s32.totalorder %s84, %s85
      %p94 = scmp.eq.s32.totalorder %s32, 0
      %p95 = por %p93, %p94
      %p96 = scmp.ne.s32.totalorder %s84, %s85
      %p97 = scmp.eq.s32.totalorder %s33, 1
      %p98 = por %p96, %p97
      %p100 = scmp.ne.s32.totalorder %s85, %s99
      %p101 = scmp.eq.s32.totalorder %s33, 0
      %p102 = por %p100, %p101
      %s104 = sadd.s32 %s103, 1
      %p107 = scmp.eq.s32.totalorder %s27, 1
      %p108 = scmp.ne.s32.totalorder %s103, %s105
      %p109 = scmp.eq.s32.totalorder %s27, 0
      %p110 = por %p108, %p109
      %p111 = scmp.ne.s32.totalorder %s103, %s105
      %p112 = scmp.eq.s32.totalorder %s32, 1
      %p113 = por %p111, %p112
      %p114 = scmp.ne.s32.totalorder %s105, %s106
      %p115 = scmp.eq.s32.totalorder %s32, 0
      %p116 = por %p114, %p115
      %p117 = scmp.ne.s32.totalorder %s105, %s106
      %p118 = scmp.eq.s32.totalorder %s33, 1
      %p119 = por %p117, %p118
      %p121 = scmp.ne.s32.totalorder %s106, %s120
      %p122 = scmp.eq.s32.totalorder %s33, 0
      %p123 = por %p121, %p122
      %s125 = sadd.s32 %s124, 1
      %p128 = scmp.eq.s32.totalorder %s27, 1
      %p129 = scmp.ne.s32.totalorder %s124, %s126
      %p130 = scmp.eq.s32.totalorder %s27, 0
      %p131 = por %p129, %p130
      %p132 = scmp.ne.s32.totalorder %s124, %s126
      %p133 = scmp.eq.s32.totalorder %s32, 1
      %p134 = por %p132, %p133
      %p135 = scmp.ne.s32.totalorder %s126, %s127
      %p136 = scmp.eq.s32.totalorder %s32, 0
      %p137 = por %p135, %p136
      %p138 = scmp.ne.s32.totalorder %s126, %s127
      %p139 = scmp.eq.s32.totalorder %s33, 1
      %p140 = por %p138, %p139
      %p142 = scmp.ne.s32.totalorder %s127, %s141
      %p143 = scmp.eq.s32.totalorder %s33, 0
      %p144 = por %p142, %p143
      %s146 = sadd.s32 %s145, 1
      %p149 = scmp.eq.s32.totalorder %s27, 1
      %p150 = scmp.ne.s32.totalorder %s145, %s147
      %p151 = scmp.eq.s32.totalorder %s27, 0
      %p152 = por %p150, %p151
      %p153 = scmp.ne.s32.totalorder %s145, %s147
      %p154 = scmp.eq.s32.totalorder %s32, 1
      %p155 = por %p153, %p154
      %p156 = scmp.ne.s32.totalorder %s147, %s148
      %p157 = scmp.eq.s32.totalorder %s32, 0
      %p158 = por %p156, %p157
      %p159 = scmp.ne.s32.totalorder %s147, %s148
      %p160 = scmp.eq.s32.totalorder %s33, 1
      %p161 = por %p159, %p160
      %p163 = scmp.ne.s32.totalorder %s148, %s162
      %p164 = scmp.eq.s32.totalorder %s33, 0
      %p165 = por %p163, %p164
      %s167 = sadd.s32 %s166, 1
      %p170 = scmp.eq.s32.totalorder %s27, 1
      %p171 = scmp.ne.s32.totalorder %s166, %s168
      %p172 = scmp.eq.s32.totalorder %s27, 0
      %p173 = por %p171, %p172
      %p174 = scmp.ne.s32.totalorder %s166, %s168
      %p175 = scmp.eq.s32.totalorder %s32, 1
      %p176 = por %p174, %p175
      %p177 = scmp.ne.s32.totalorder %s168, %s169
      %p178 = scmp.eq.s32.totalorder %s32, 0
      %p179 = por %p177, %p178
      %p180 = scmp.ne.s32.totalorder %s168, %s169
      %p181 = scmp.eq.s32.totalorder %s33, 1
      %p182 = por %p180, %p181
      %p184 = scmp.ne.s32.totalorder %s169, %s183
      %p185 = scmp.eq.s32.totalorder %s33, 0
      %p186 = por %p184, %p185
      %s188 = sadd.s32 %s187, 1
      %p191 = scmp.eq.s32.totalorder %s27, 1
      %p192 = scmp.ne.s32.totalorder %s187, %s189
      %p193 = scmp.eq.s32.totalorder %s27, 0
      %p194 = por %p192, %p193
      %p195 = scmp.ne.s32.totalorder %s187, %s189
      %p196 = scmp.eq.s32.totalorder %s32, 1
      %p197 = por %p195, %p196
      %p198 = scmp.ne.s32.totalorder %s189, %s190
      %p199 = scmp.eq.s32.totalorder %s32, 0
      %p200 = por %p198, %p199
      %p201 = scmp.ne.s32.totalorder %s189, %s190
      %p202 = scmp.eq.s32.totalorder %s33, 1
      %p203 = por %p201, %p202
      %p205 = scmp.ne.s32.totalorder %s190, %s204
      %p206 = scmp.eq.s32.totalorder %s33, 0
      %p207 = por %p205, %p206
      %s209 = sadd.s32 %s208, 1
      %p212 = scmp.eq.s32.totalorder %s27, 1
      %p213 = scmp.ne.s32.totalorder %s208, %s210
      %p214 = scmp.eq.s32.totalorder %s27, 0
      %p215 = por %p213, %p214
      %p216 = scmp.ne.s32.totalorder %s208, %s210
      %p217 = scmp.eq.s32.totalorder %s32, 1
      %p218 = por %p216, %p217
      %p219 = scmp.ne.s32.totalorder %s210, %s211
      %p220 = scmp.eq.s32.totalorder %s32, 0
      %p221 = por %p219, %p220
      %p222 = scmp.ne.s32.totalorder %s210, %s211
      %p223 = scmp.eq.s32.totalorder %s33, 1
      %p224 = por %p222, %p223
      %p226 = scmp.ne.s32.totalorder %s211, %s225
      %p227 = scmp.eq.s32.totalorder %s33, 0
      %p228 = por %p226, %p227
      %s229 = ssub.s32 %s27, %s34
      %p230 = scmp.eq.s32.totalorder %s229, 0
      %s232 = sadd.s32 %s231, 1
      %s233 = scalar_select %p230, %s231, %s232
      %p236 = pneg %p230
      %p237 = scmp.eq.s32.totalorder %s27, 1
      %p238 = por %p236, %p237
      %p239 = scmp.ne.s32.totalorder %s231, %s234
      %p240 = scmp.eq.s32.totalorder %s27, 0
      %p241 = por %p239, %p240
      %p242 = scmp.ne.s32.totalorder %s231, %s234
      %p243 = scmp.eq.s32.totalorder %s32, 1
      %p244 = por %p242, %p243
      %p245 = scmp.ne.s32.totalorder %s234, %s235
      %p246 = scmp.eq.s32.totalorder %s32, 0
      %p247 = por %p245, %p246
      %p248 = scmp.ne.s32.totalorder %s234, %s235
      %p249 = scmp.eq.s32.totalorder %s33, 1
      %p250 = por %p248, %p249
      %p252 = scmp.ne.s32.totalorder %s235, %s251
      %p253 = scmp.eq.s32.totalorder %s33, 0
      %p254 = por %p252, %p253
      %p255 = scmp.le.s32.totalorder 1, %s27
      %p256 = scmp.lt.s32.totalorder %s27, 3
      %p257 = pnand %p255, %p256
      %p258 = pneg %p257
      // Predicated region
      $region9: #{wavenet_forward.1} parent=5 // pred_check
        _
      $region10: #{wavenet_forward.1} parent=5 // pred_check_branch
        %260 = sbr.rel (%p257) target = $region12
      $region11: #{wavenet_forward.1} parent=5 // pred_region
        %s261 = ssub.s32 %s27, 1
        // Predicated region
        $region13: #{wavenet_forward.1} parent=11 // pred_check
          %p262 = pneg %p74
        $region14: #{wavenet_forward.1} parent=11 // pred_check_branch
          %264 = sbr.rel (%p262) target = $region16
        $region15: #{wavenet_forward.1} parent=11 // pred_region
          %s266 = ssub.s32 1536, 1536
          %267 = vsyncadd [#allocation9], %s266
          %s268 = sshll.u32 [#allocation8], 4
          %s269 = int_to_ptr.vmem [resolvable:$true] %s268
          %274 = dma.hbm_to_vmem [thread:$0]  %s1, 1536, %s269, [#allocation9], 64, 64, 4
        $region16: #{wavenet_forward.1} parent=11 // pred_fallthru
          _
        // Predicated region
        $region17: #{wavenet_forward.1} parent=11 // pred_check
          %p275 = pneg %p95
        $region18: #{wavenet_forward.1} parent=11 // pred_check_branch
          %277 = sbr.rel (%p275) target = $region20
        $region19: #{wavenet_forward.1} parent=11 // pred_region
          %s279 = ssub.s32 10752, 10752
          %280 = vsyncadd [#allocation9], %s279
          %s281 = sshll.u32 [#allocation10], 4
          %s282 = int_to_ptr.vmem [resolvable:$true] %s281
          %287 = dma.hbm_to_vmem [thread:$0]  %s2, 10752, %s282, [#allocation9], 64, 64, 4
        $region20: #{wavenet_forward.1} parent=11 // pred_fallthru
          _
        // Predicated region
        $region21: #{wavenet_forward.1} parent=11 // pred_check
          %p288 = pneg %p116
        $region22: #{wavenet_forward.1} parent=11 // pred_check_branch
          %290 = sbr.rel (%p288) target = $region24
        $region23: #{wavenet_forward.1} parent=11 // pred_region
          %s292 = ssub.s32 8192, 8192
          %293 = vsyncadd [#allocation12], %s292
          %s294 = sshll.u32 [#allocation11], 4
          %s295 = int_to_ptr.vmem [resolvable:$true] %s294
          %300 = dma.hbm_to_vmem [thread:$0]  %s3, 8192, %s295, [#allocation12], 128, 128, 8
        $region24: #{wavenet_forward.1} parent=11 // pred_fallthru
          _
        // Predicated region
        $region25: #{wavenet_forward.1} parent=11 // pred_check
          %p301 = pneg %p137
        $region26: #{wavenet_forward.1} parent=11 // pred_check_branch
          %303 = sbr.rel (%p301) target = $region28
        $region27: #{wavenet_forward.1} parent=11 // pred_region
          %s305 = ssub.s32 8192, 8192
          %306 = vsyncadd [#allocation12], %s305
          %s307 = sshll.u32 [#allocation13], 4
          %s308 = int_to_ptr.vmem [resolvable:$true] %s307
          %313 = dma.hbm_to_vmem [thread:$0]  %s4, 8192, %s308, [#allocation12], 128, 128, 8
        $region28: #{wavenet_forward.1} parent=11 // pred_fallthru
          _
        // Predicated region
        $region29: #{wavenet_forward.1} parent=11 // pred_check
          %p314 = pneg %p158
        $region30: #{wavenet_forward.1} parent=11 // pred_check_branch
          %316 = sbr.rel (%p314) target = $region32
        $region31: #{wavenet_forward.1} parent=11 // pred_region
          %s318 = ssub.s32 3072, 3072
          %319 = vsyncadd [#allocation15], %s318
          %s320 = sshll.u32 [#allocation14], 4
          %s321 = int_to_ptr.vmem [resolvable:$true] %s320
          %326 = dma.hbm_to_vmem [thread:$0]  %s5, 3072, %s321, [#allocation15], 64, 64, 4
        $region32: #{wavenet_forward.1} parent=11 // pred_fallthru
          _
        // Predicated region
        $region33: #{wavenet_forward.1} parent=11 // pred_check
          %p327 = pneg %p179
        $region34: #{wavenet_forward.1} parent=11 // pred_check_branch
          %329 = sbr.rel (%p327) target = $region36
        $region35: #{wavenet_forward.1} parent=11 // pred_region
          %s331 = ssub.s32 6144, 6144
          %332 = vsyncadd [#allocation15], %s331
          %s333 = sshll.u32 [#allocation16], 4
          %s334 = int_to_ptr.vmem [resolvable:$true] %s333
          %339 = dma.hbm_to_vmem [thread:$0]  %s6, 6144, %s334, [#allocation15], 128, 128, 8
        $region36: #{wavenet_forward.1} parent=11 // pred_fallthru
          _
        // Predicated region
        $region37: #{wavenet_forward.1} parent=11 // pred_check
          %p340 = pneg %p200
        $region38: #{wavenet_forward.1} parent=11 // pred_check_branch
          %342 = sbr.rel (%p340) target = $region40
        $region39: #{wavenet_forward.1} parent=11 // pred_region
          %s344 = ssub.s32 16, 16
          %345 = vsyncadd [#allocation18], %s344
          %s347 = sshll.u32 [#allocation17], 4
          %s348 = int_to_ptr.vmem [resolvable:$true] %s347
          %350 = dma.hbm_to_vmem [thread:$0]  %s7, 16, %s348, [#allocation18]
        $region40: #{wavenet_forward.1} parent=11 // pred_fallthru
          _
        // Predicated region
        $region41: #{wavenet_forward.1} parent=11 // pred_check
          %p351 = pneg %p221
        $region42: #{wavenet_forward.1} parent=11 // pred_check_branch
          %353 = sbr.rel (%p351) target = $region44
        $region43: #{wavenet_forward.1} parent=11 // pred_region
          _
        $region44: #{wavenet_forward.1} parent=11 // pred_fallthru
          _
      $region12: #{wavenet_forward.1} parent=5 // pred_fallthru
        _
      %p354 = scmp.lt.s32.totalorder %s27, 2
      // Predicated region
      $region45: #{wavenet_forward.1} parent=5 // pred_check
        %p355 = pneg %p354
      $region46: #{wavenet_forward.1} parent=5 // pred_check_branch
        %357 = sbr.rel (%p355) target = $region48
      $region47: #{wavenet_forward.1} parent=5 // pred_region
        // Predicated region
        $region49: #{wavenet_forward.1} parent=47 // pred_check
          %p358 = pneg %p47
        $region50: #{wavenet_forward.1} parent=47 // pred_check_branch
          %360 = sbr.rel (%p358) target = $region52
        $region51: #{wavenet_forward.1} parent=47 // pred_region
          %s361 = sand.u32 %s37, 1
          %s362 = scalar_lea.sflag [#allocation6], %s361
          %s363 = sand.u32 %s37, 1
          %s364 = smul.addr %s363, 2
          %s365 = scalar_lea.vmem [#allocation5], %s364
          %s367 = ssub.s32 32, 32
          %368 = vsyncadd %s362, %s367
          %s369 = smul.addr %s27, 32
          %s370 = scalar_lea.hbm %s0, %s369
          %s372 = sshll.u32 %s365, 4
          %s373 = int_to_ptr.vmem [resolvable:$true] %s372
          %375 = dma.hbm_to_vmem [thread:$0]  %s370, 32, %s373, %s362
        $region52: #{wavenet_forward.1} parent=47 // pred_fallthru
          _
      $region48: #{wavenet_forward.1} parent=5 // pred_fallthru
        _
      %p376 = scmp.le.s32.totalorder 1, %s27
      %p377 = scmp.lt.s32.totalorder %s27, 3
      %p378 = pnand %p376, %p377
      %p379 = pneg %p378
      // Predicated region
      $region53: #{wavenet_forward.1} parent=5 // pred_check
        _
      $region54: #{wavenet_forward.1} parent=5 // pred_check_branch
        %381 = sbr.rel (%p378) target = $region56
      $region55: #{wavenet_forward.1} parent=5 // pred_region
        %s382 = ssub.s32 %s27, 1
        %s383 = sand.u32 %s40, 1
        %s384 = scalar_lea.sflag [#allocation6], %s383
        %s385 = sand.u32 %s40, 1
        %s386 = smul.addr %s385, 2
        %s387 = scalar_lea.vmem [#allocation5], %s386
        // Predicated region
        $region57: #{wavenet_forward.1} parent=55 // pred_check
          %p388 = pneg %p53
        $region58: #{wavenet_forward.1} parent=55 // pred_check_branch
          %390 = sbr.rel (%p388) target = $region60
        $region59: #{wavenet_forward.1} parent=55 // pred_region
          %391 = dma.done %s384, 32
        $region60: #{wavenet_forward.1} parent=55 // pred_fallthru
          _
        // Predicated region
        $region61: #{wavenet_forward.1} parent=55 // pred_check
          %p392 = pneg %p74
        $region62: #{wavenet_forward.1} parent=55 // pred_check_branch
          %394 = sbr.rel (%p392) target = $region64
        $region63: #{wavenet_forward.1} parent=55 // pred_region
          %395 = dma.done [#allocation9], 1536
        $region64: #{wavenet_forward.1} parent=55 // pred_fallthru
          _
        // Predicated region
        $region65: #{wavenet_forward.1} parent=55 // pred_check
          %p396 = pneg %p95
        $region66: #{wavenet_forward.1} parent=55 // pred_check_branch
          %398 = sbr.rel (%p396) target = $region68
        $region67: #{wavenet_forward.1} parent=55 // pred_region
          %399 = dma.done [#allocation9], 10752
        $region68: #{wavenet_forward.1} parent=55 // pred_fallthru
          _
        // Predicated region
        $region69: #{wavenet_forward.1} parent=55 // pred_check
          %p400 = pneg %p116
        $region70: #{wavenet_forward.1} parent=55 // pred_check_branch
          %402 = sbr.rel (%p400) target = $region72
        $region71: #{wavenet_forward.1} parent=55 // pred_region
          %403 = dma.done [#allocation12], 8192
        $region72: #{wavenet_forward.1} parent=55 // pred_fallthru
          _
        // Predicated region
        $region73: #{wavenet_forward.1} parent=55 // pred_check
          %p404 = pneg %p137
        $region74: #{wavenet_forward.1} parent=55 // pred_check_branch
          %406 = sbr.rel (%p404) target = $region76
        $region75: #{wavenet_forward.1} parent=55 // pred_region
          %407 = dma.done [#allocation12], 8192
        $region76: #{wavenet_forward.1} parent=55 // pred_fallthru
          _
        // Predicated region
        $region77: #{wavenet_forward.1} parent=55 // pred_check
          %p408 = pneg %p158
        $region78: #{wavenet_forward.1} parent=55 // pred_check_branch
          %410 = sbr.rel (%p408) target = $region80
        $region79: #{wavenet_forward.1} parent=55 // pred_region
          %411 = dma.done [#allocation15], 3072
        $region80: #{wavenet_forward.1} parent=55 // pred_fallthru
          _
        // Predicated region
        $region81: #{wavenet_forward.1} parent=55 // pred_check
          %p412 = pneg %p179
        $region82: #{wavenet_forward.1} parent=55 // pred_check_branch
          %414 = sbr.rel (%p412) target = $region84
        $region83: #{wavenet_forward.1} parent=55 // pred_region
          %415 = dma.done [#allocation15], 6144
        $region84: #{wavenet_forward.1} parent=55 // pred_fallthru
          _
        // Predicated region
        $region85: #{wavenet_forward.1} parent=55 // pred_check
          %p416 = pneg %p200
        $region86: #{wavenet_forward.1} parent=55 // pred_check_branch
          %418 = sbr.rel (%p416) target = $region88
        $region87: #{wavenet_forward.1} parent=55 // pred_region
          %419 = dma.done [#allocation18], 16
        $region88: #{wavenet_forward.1} parent=55 // pred_fallthru
          _
        %s420 = sand.u32 %s40, 1
        %s421 = scalar_lea.sflag [#allocation6], %s420
        %s422 = sand.u32 %s40, 1
        %s423 = smul.addr %s422, 2
        %s424 = scalar_lea.vmem [#allocation5], %s423
        %p425 = pneg %p53
        %p426 = pneg %p50
        %p427 = pneg %p74
        %p428 = pneg %p71
        %p429 = pneg %p95
        %p430 = pneg %p92
        %p431 = pneg %p116
        %p432 = pneg %p113
        %p433 = pneg %p137
        %p434 = pneg %p134
        %p435 = pneg %p158
        %p436 = pneg %p155
        %p437 = pneg %p179
        %p438 = pneg %p176
        %p439 = pneg %p200
        %p440 = pneg %p197
        %p441 = pneg %p221
        %p442 = pneg %p218
        %p443 = pneg %p247
        %p444 = pneg %p244
        %s445 = sand.u32 %s234, 1
        %s446 = scalar_lea.sflag [#allocation7], %s445
        %s447 = sand.u32 %s234, 1
        %s448 = scalar_lea.vmem [#allocation19], %s447
        %v450 = vlaneseq
        %v451 = vand.u32 %v450, 127
        %vm452 = vcmp.lt.s32.totalorder %v451, 16
        %v453 = vsel %vm452, 1, 0
        %v454 = vcvt.s32.f32 %v453
        %v455 = vsel %vm452, 0.0, -1e+30
        %456 = vst [vmem:[#allocation2] sm:$0x3f] 0
        %v457 = vld [vmem:[%s387] sm:$0x3]
        %458 = vst [vmem:[#allocation2 + $0x2] sm:$0x3] %v457
        %459 = vst [vmem:[#allocation3] sm:$0xff] 0
        %460 = vst [vmem:[#allocation3 + $0x8] sm:$0xff] 0
        %461 = vst [vmem:[#allocation3 + $0x10] sm:$0xff] 0
        %462 = vst [vmem:[#allocation3 + $0x18] sm:$0xff] 0
        %463 = vst [vmem:[#allocation3 + $0x20] sm:$0xff] 0
        %464 = vst [vmem:[#allocation3 + $0x28] sm:$0xff] 0
        %v465 = vld [vmem:[#allocation8] sm:$0xf]
        %v466 = vld [vmem:[#allocation8 + $0x4] sm:$0xf]
        %v467 = vld [vmem:[#allocation8 + $0x8] sm:$0xf]
        %v468 = vld [vmem:[#allocation8 + $0xc] sm:$0xf]
        %v469 = vld [vmem:[#allocation8 + $0x10] sm:$0xf]
        %v470 = vld [vmem:[#allocation8 + $0x14] sm:$0xf]
        %v471 = vld [vmem:[#allocation8 + $0x18] sm:$0xf]
        %v472 = vld [vmem:[#allocation8 + $0x1c] sm:$0xf]
        %s473 = scalar_lea.vmem [#allocation8], 32
        %v474 = vld [vmem:[%s473] sm:$0xf]
        %v475 = vld [vmem:[%s473 + $0x4] sm:$0xf]
        %v476 = vld [vmem:[%s473 + $0x8] sm:$0xf]
        %v477 = vld [vmem:[%s473 + $0xc] sm:$0xf]
        %v478 = vld [vmem:[%s473 + $0x10] sm:$0xf]
        %v479 = vld [vmem:[%s473 + $0x14] sm:$0xf]
        %v480 = vld [vmem:[%s473 + $0x18] sm:$0xf]
        %v481 = vld [vmem:[%s473 + $0x1c] sm:$0xf]
        %s482 = scalar_lea.vmem [#allocation8], 64
        %v483 = vld [vmem:[%s482] sm:$0xf]
        %v484 = vld [vmem:[%s482 + $0x4] sm:$0xf]
        %v485 = vld [vmem:[%s482 + $0x8] sm:$0xf]
        %v486 = vld [vmem:[%s482 + $0xc] sm:$0xf]
        %v487 = vld [vmem:[%s482 + $0x10] sm:$0xf]
        %v488 = vld [vmem:[%s482 + $0x14] sm:$0xf]
        %v489 = vld [vmem:[%s482 + $0x18] sm:$0xf]
        %v490 = vld [vmem:[%s482 + $0x1c] sm:$0xf]
        %v491 = vld [vmem:[#allocation2] sm:$0xf]
        %v492 = vld [vmem:[#allocation2 + $0x2] sm:$0x3]
        %v493 = vld [vmem:[#allocation2 + $0x2] sm:$0xf]
        %v502 = vunpack.c.l.b16 %v474
        %v503 = vunpack.c.l.b16 %v475
        %v504 = vunpack.c.l.b16 %v476
        %v505 = vunpack.c.l.b16 %v477
        %v506 = vunpack.c.l.b16 %v478
        %v507 = vunpack.c.l.b16 %v479
        %v508 = vunpack.c.l.b16 %v480
        %v509 = vunpack.c.l.b16 %v481
        %v510 = vpack.c.b16 %v503, %v502
        %v511 = vpack.c.b16 %v505, %v504
        %v512 = vpack.c.b16 %v507, %v506
        %v513 = vpack.c.b16 %v509, %v508
        %vm514 = vcmask 31744
        %v516 = vsel %vm514, %v510, 0
        %v519 = vsel %vm514, %v511, 0
        %v522 = vsel %vm514, %v512, 0
        %v525 = vsel %vm514, %v513, 0
        %vm527 = vcmask 1041408
        %v529 = vsel %vm527, %v492, 0
        %531 = vmatprep.subr.bf16.mxu0 0
        %532 = vmatpush1.bf16.msra.mxu0 %v529
        %533 = vmatprep.subr.bf16.mxu0 0
        %534 = vmatpush1.bf16.msra.mxu0 0
        %535 = vmatprep.subr.bf16.mxu0 0
        %536 = vmatpush1.bf16.msra.mxu0 0
        %537 = vmatprep.subr.bf16.mxu0 0
        %538 = vmatpush1.bf16.msra.mxu0 0
        %539 = vmatprep.subr.bf16.mxu0 0
        %540 = vmatpush1.bf16.msra.mxu0 0
        %541 = vmatprep.subr.bf16.mxu0 0
        %542 = vmatpush1.bf16.msra.mxu0 0
        %543 = vmatprep.subr.bf16.mxu0 0
        %544 = vmatpush1.bf16.msra.mxu0 0
        %545 = vmatprep.subr.bf16.mxu0 0
        %546 = vmatpush1.bf16.msra.mxu0 0
        %547 = vmatprep.subr.bf16.mxu0 0
        %548 = vmatpush1.bf16.msra.mxu0 0
        %549 = vmatprep.subr.bf16.mxu0 0
        %550 = vmatpush1.bf16.msra.mxu0 0
        %551 = vmatprep.subr.bf16.mxu0 0
        %552 = vmatpush1.bf16.msra.mxu0 0
        %553 = vmatprep.subr.bf16.mxu0 0
        %554 = vmatpush1.bf16.msra.mxu0 0
        %555 = vmatprep.subr.bf16.mxu0 0
        %556 = vmatpush1.bf16.msra.mxu0 0
        %557 = vmatprep.subr.bf16.mxu0 0
        %558 = vmatpush1.bf16.msra.mxu0 0
        %559 = vmatprep.subr.bf16.mxu0 0
        %560 = vmatpush1.bf16.msra.mxu0 0
        %561 = vmatprep.subr.bf16.mxu0 0
        %562 = vmatpush1.bf16.msra.mxu0 0
        %563 = vmatprep.mubr.bf16.mxu0 0
        %564 = vmatmul.mubr.bf16.gmra.mrb[0].mxu0 %v516
        %v565 = vpop.f32.mrb[0].mxu0
        %v566 = vadd.f32 0.0, %v565
        %v567 = vpop.f32.mrb[0].mxu0
        %v568 = vpop.f32.mrb[0].mxu0
        %v569 = vadd.f32 0.0, %v568
        %v570 = vpop.f32.mrb[0].mxu0
        %571 = vmatprep.mubr.bf16.mxu0 0
        %572 = vmatmul.mubr.bf16.gmra.mrb[0].mxu0 %v519
        %v573 = vpop.f32.mrb[0].mxu0
        %v574 = vadd.f32 0.0, %v573
        %v575 = vpop.f32.mrb[0].mxu0
        %v576 = vpop.f32.mrb[0].mxu0
        %v577 = vadd.f32 0.0, %v576
        %v578 = vpop.f32.mrb[0].mxu0
        %579 = vmatprep.mubr.bf16.mxu0 0
        %580 = vmatmul.mubr.bf16.gmra.mrb[0].mxu0 %v522
        %v581 = vpop.f32.mrb[0].mxu0
        %v582 = vadd.f32 0.0, %v581
        %v583 = vpop.f32.mrb[0].mxu0
        %v584 = vpop.f32.mrb[0].mxu0
        %v585 = vadd.f32 0.0, %v584
        %v586 = vpop.f32.mrb[0].mxu0
        %587 = vmatprep.mubr.bf16.mxu0 0
        %588 = vmatmul.mubr.bf16.gmra.mrb[0].mxu0 %v525
        %v589 = vpop.f32.mrb[0].mxu0
        %v590 = vadd.f32 0.0, %v589
        %v591 = vpop.f32.mrb[0].mxu0
        %v592 = vpop.f32.mrb[0].mxu0
        %v593 = vadd.f32 0.0, %v592
        %v594 = vpop.f32.mrb[0].mxu0
        %595 = vdwg.mxu0
        %v604 = vunpack.c.l.b16 %v465
        %v605 = vunpack.c.l.b16 %v466
        %v606 = vunpack.c.l.b16 %v467
        %v607 = vunpack.c.l.b16 %v468
        %v608 = vunpack.c.l.b16 %v469
        %v609 = vunpack.c.l.b16 %v470
        %v610 = vunpack.c.l.b16 %v471
        %v611 = vunpack.c.l.b16 %v472
        %v612 = vpack.c.b16 %v605, %v604
        %v613 = vpack.c.b16 %v607, %v606
        %v614 = vpack.c.b16 %v609, %v608
        %v615 = vpack.c.b16 %v611, %v610
        %v618 = vunpack.c.l.s4 1983009808
        %v619 = vunpack.c.0.s8 %v618
        %v620 = vlaneseq
        %v621 = vshrl.u32 %v620, 7
        %v622 = vsub.s32 %v619, %v621
        %v623 = vrot.slane %v491, %v622
        %v624 = vcombine.high %v623, %v623
        %625 = vrot.lane.b32.xlu0 %v623, 1
        %v626 = vpop.permute.xlu0 %625
        %627 = vrot.lane.b32.xlu0 %v624, 1
        %v628 = vpop.permute.xlu0 %627
        %vm629 = vcmask 7168
        %v630 = vsel %vm629, %v626, %v628
        %v632 = vsel %vm514, %v612, 0
        %v635 = vsel %vm514, %v613, 0
        %v638 = vsel %vm514, %v614, 0
        %v641 = vsel %vm514, %v615, 0
        %v644 = vsel %vm527, %v630, 0
        %646 = vmatprep.subr.bf16.mxu0 0
        %647 = vmatpush1.bf16.msra.mxu0 %v644
        %648 = vmatprep.subr.bf16.mxu0 0
        %649 = vmatpush1.bf16.msra.mxu0 0
        %650 = vmatprep.subr.bf16.mxu0 0
        %651 = vmatpush1.bf16.msra.mxu0 0
        %652 = vmatprep.subr.bf16.mxu0 0
        %653 = vmatpush1.bf16.msra.mxu0 0
        %654 = vmatprep.subr.bf16.mxu0 0
        %655 = vmatpush1.bf16.msra.mxu0 0
        %656 = vmatprep.subr.bf16.mxu0 0
        %657 = vmatpush1.bf16.msra.mxu0 0
        %658 = vmatprep.subr.bf16.mxu0 0
        %659 = vmatpush1.bf16.msra.mxu0 0
        %660 = vmatprep.subr.bf16.mxu0 0
        %661 = vmatpush1.bf16.msra.mxu0 0
        %662 = vmatprep.subr.bf16.mxu0 0
        %663 = vmatpush1.bf16.msra.mxu0 0
        %664 = vmatprep.subr.bf16.mxu0 0
        %665 = vmatpush1.bf16.msra.mxu0 0
        %666 = vmatprep.subr.bf16.mxu0 0
        %667 = vmatpush1.bf16.msra.mxu0 0
        %668 = vmatprep.subr.bf16.mxu0 0
        %669 = vmatpush1.bf16.msra.mxu0 0
        %670 = vmatprep.subr.bf16.mxu0 0
        %671 = vmatpush1.bf16.msra.mxu0 0
        %672 = vmatprep.subr.bf16.mxu0 0
        %673 = vmatpush1.bf16.msra.mxu0 0
        %674 = vmatprep.subr.bf16.mxu0 0
        %675 = vmatpush1.bf16.msra.mxu0 0
        %676 = vmatprep.subr.bf16.mxu0 0
        %677 = vmatpush1.bf16.msra.mxu0 0
        %678 = vmatprep.mubr.bf16.mxu0 0
        %679 = vmatmul.mubr.bf16.gmra.mrb[0].mxu0 %v632
        %v680 = vpop.f32.mrb[0].mxu0
        %v681 = vadd.f32 %v566, %v680
        %v682 = vpop.f32.mrb[0].mxu0
        %v683 = vpop.f32.mrb[0].mxu0
        %v684 = vadd.f32 %v569, %v683
        %v685 = vpop.f32.mrb[0].mxu0
        %686 = vmatprep.mubr.bf16.mxu0 0
        %687 = vmatmul.mubr.bf16.gmra.mrb[0].mxu0 %v635
        %v688 = vpop.f32.mrb[0].mxu0
        %v689 = vadd.f32 %v574, %v688
        %v690 = vpop.f32.mrb[0].mxu0
        %v691 = vpop.f32.mrb[0].mxu0
        %v692 = vadd.f32 %v577, %v691
        %v693 = vpop.f32.mrb[0].mxu0
        %694 = vmatprep.mubr.bf16.mxu0 0
        %695 = vmatmul.mubr.bf16.gmra.mrb[0].mxu0 %v638
        %v696 = vpop.f32.mrb[0].mxu0
        %v697 = vadd.f32 %v582, %v696
        %v698 = vpop.f32.mrb[0].mxu0
        %v699 = vpop.f32.mrb[0].mxu0
        %v700 = vadd.f32 %v585, %v699
        %v701 = vpop.f32.mrb[0].mxu0
        %702 = vmatprep.mubr.bf16.mxu0 0
        %703 = vmatmul.mubr.bf16.gmra.mrb[0].mxu0 %v641
        %v704 = vpop.f32.mrb[0].mxu0
        %v705 = vadd.f32 %v590, %v704
        %v706 = vpop.f32.mrb[0].mxu0
        %v707 = vpop.f32.mrb[0].mxu0
        %v708 = vadd.f32 %v593, %v707
        %v709 = vpop.f32.mrb[0].mxu0
        %710 = vdwg.mxu0
        %v719 = vunpack.c.l.b16 %v483
        %v720 = vunpack.c.l.b16 %v484
        %v721 = vunpack.c.l.b16 %v485
        %v722 = vunpack.c.l.b16 %v486
        %v723 = vunpack.c.l.b16 %v487
        %v724 = vunpack.c.l.b16 %v488
        %v725 = vunpack.c.l.b16 %v489
        %v726 = vunpack.c.l.b16 %v490
        %v727 = vpack.c.b16 %v720, %v719
        %v728 = vpack.c.b16 %v722, %v721
        %v729 = vpack.c.b16 %v724, %v723
        %v730 = vpack.c.b16 %v726, %v725
        %v733 = vunpack.c.l.s4 1983009808
        %v734 = vunpack.c.0.s8 %v733
        %v735 = vlaneseq
        %v736 = vshrl.u32 %v735, 7
        %v737 = vsub.s32 %v734, %v736
        %v738 = vrot.slane %v493, %v737
        %v739 = vcombine.high %v738, %v738
        %740 = vrot.lane.b32.xlu0 %v738, 127
        %v741 = vpop.permute.xlu0 %740
        %742 = vrot.lane.b32.xlu0 %v739, 127
        %v743 = vpop.permute.xlu0 %742
        %vm744 = vcmask 1039360
        %v745 = vsel %vm744, %v741, %v743
        %v747 = vsel %vm514, %v727, 0
        %v750 = vsel %vm514, %v728, 0
        %v753 = vsel %vm514, %v729, 0
        %v756 = vsel %vm514, %v730, 0
        %v759 = vsel %vm527, %v745, 0
        %761 = vmatprep.subr.bf16.mxu0 0
        %762 = vmatpush1.bf16.msra.mxu0 %v759
        %763 = vmatprep.subr.bf16.mxu0 0
        %764 = vmatpush1.bf16.msra.mxu0 0
        %765 = vmatprep.subr.bf16.mxu0 0
        %766 = vmatpush1.bf16.msra.mxu0 0
        %767 = vmatprep.subr.bf16.mxu0 0
        %768 = vmatpush1.bf16.msra.mxu0 0
        %769 = vmatprep.subr.bf16.mxu0 0
        %770 = vmatpush1.bf16.msra.mxu0 0
        %771 = vmatprep.subr.bf16.mxu0 0
        %772 = vmatpush1.bf16.msra.mxu0 0
        %773 = vmatprep.subr.bf16.mxu0 0
        %774 = vmatpush1.bf16.msra.mxu0 0
        %775 = vmatprep.subr.bf16.mxu0 0
        %776 = vmatpush1.bf16.msra.mxu0 0
        %777 = vmatprep.subr.bf16.mxu0 0
        %778 = vmatpush1.bf16.msra.mxu0 0
        %779 = vmatprep.subr.bf16.mxu0 0
        %780 = vmatpush1.bf16.msra.mxu0 0
        %781 = vmatprep.subr.bf16.mxu0 0
        %782 = vmatpush1.bf16.msra.mxu0 0
        %783 = vmatprep.subr.bf16.mxu0 0
        %784 = vmatpush1.bf16.msra.mxu0 0
        %785 = vmatprep.subr.bf16.mxu0 0
        %786 = vmatpush1.bf16.msra.mxu0 0
        %787 = vmatprep.subr.bf16.mxu0 0
        %788 = vmatpush1.bf16.msra.mxu0 0
        %789 = vmatprep.subr.bf16.mxu0 0
        %790 = vmatpush1.bf16.msra.mxu0 0
        %791 = vmatprep.subr.bf16.mxu0 0
        %792 = vmatpush1.bf16.msra.mxu0 0
        %793 = vmatprep.mubr.bf16.mxu0 0
        %794 = vmatmul.mubr.bf16.gmra.mrb[0].mxu0 %v747
        %v795 = vpop.f32.mrb[0].mxu0
        %v796 = vadd.f32 0.0, %v795
        %v797 = vpop.f32.mrb[0].mxu0
        %v798 = vpop.f32.mrb[0].mxu0
        %v799 = vadd.f32 0.0, %v798
        %v800 = vpop.f32.mrb[0].mxu0
        %801 = vmatprep.mubr.bf16.mxu0 0
        %802 = vmatmul.mubr.bf16.gmra.mrb[0].mxu0 %v750
        %v803 = vpop.f32.mrb[0].mxu0
        %v804 = vadd.f32 0.0, %v803
        %v805 = vpop.f32.mrb[0].mxu0
        %v806 = vpop.f32.mrb[0].mxu0
        %v807 = vadd.f32 0.0, %v806
        %v808 = vpop.f32.mrb[0].mxu0
        %809 = vmatprep.mubr.bf16.mxu0 0
        %810 = vmatmul.mubr.bf16.gmra.mrb[0].mxu0 %v753
        %v811 = vpop.f32.mrb[0].mxu0
        %v812 = vadd.f32 0.0, %v811
        %v813 = vpop.f32.mrb[0].mxu0
        %v814 = vpop.f32.mrb[0].mxu0
        %v815 = vadd.f32 0.0, %v814
        %v816 = vpop.f32.mrb[0].mxu0
        %817 = vmatprep.mubr.bf16.mxu0 0
        %818 = vmatmul.mubr.bf16.gmra.mrb[0].mxu0 %v756
        %v819 = vpop.f32.mrb[0].mxu0
        %v820 = vadd.f32 0.0, %v819
        %v821 = vpop.f32.mrb[0].mxu0
        %v822 = vpop.f32.mrb[0].mxu0
        %v823 = vadd.f32 0.0, %v822
        %v824 = vpop.f32.mrb[0].mxu0
        %825 = vdwg.mxu0
        %v826 = vadd.f32 %v681, %v796
        %v827 = vadd.f32 %v684, %v799
        %v828 = vadd.f32 %v689, %v804
        %v829 = vadd.f32 %v692, %v807
        %v830 = vadd.f32 %v697, %v812
        %v831 = vadd.f32 %v700, %v815
        %v832 = vadd.f32 %v705, %v820
        %v833 = vadd.f32 %v708, %v823
        %v834 = vld [vmem:[#allocation11] sm:$0xff]
        %v835 = vld [vmem:[#allocation11 + $0x8] sm:$0xff]
        %v836 = vld [vmem:[#allocation11 + $0x10] sm:$0xff]
        %v837 = vld [vmem:[#allocation11 + $0x18] sm:$0xff]
        %v838 = vld [vmem:[#allocation11 + $0x20] sm:$0xff]
        %v839 = vld [vmem:[#allocation11 + $0x28] sm:$0xff]
        %v840 = vld [vmem:[#allocation11 + $0x30] sm:$0xff]
        %v841 = vld [vmem:[#allocation11 + $0x38] sm:$0xff]
        %843 = vset.pattern.permute.xlu0 0
        %844 = vperm.xlu0 %843, %v834
        %v845 = vpop.permute.xlu0 %844
        %848 = vset.pattern.permute.xlu0 0
        %849 = vperm.xlu0 %848, %v835
        %v850 = vpop.permute.xlu0 %849
        %853 = vset.pattern.permute.xlu0 0
        %854 = vperm.xlu0 %853, %v836
        %v855 = vpop.permute.xlu0 %854
        %858 = vset.pattern.permute.xlu0 0
        %859 = vperm.xlu0 %858, %v837
        %v860 = vpop.permute.xlu0 %859
        %863 = vset.pattern.permute.xlu0 0
        %864 = vperm.xlu0 %863, %v838
        %v865 = vpop.permute.xlu0 %864
        %868 = vset.pattern.permute.xlu0 0
        %869 = vperm.xlu0 %868, %v839
        %v870 = vpop.permute.xlu0 %869
        %873 = vset.pattern.permute.xlu0 0
        %874 = vperm.xlu0 %873, %v840
        %v875 = vpop.permute.xlu0 %874
        %878 = vset.pattern.permute.xlu0 0
        %879 = vperm.xlu0 %878, %v841
        %v880 = vpop.permute.xlu0 %879
        %v882 = vmul.f32 %v826, %v845
        %v883 = vmul.f32 %v827, %v850
        %v884 = vmul.f32 %v828, %v855
        %v885 = vmul.f32 %v829, %v860
        %v886 = vmul.f32 %v830, %v865
        %v887 = vmul.f32 %v831, %v870
        %v888 = vmul.f32 %v832, %v875
        %v889 = vmul.f32 %v833, %v880
        %v890 = vld [vmem:[#allocation13] sm:$0xff]
        %v891 = vld [vmem:[#allocation13 + $0x8] sm:$0xff]
        %v892 = vld [vmem:[#allocation13 + $0x10] sm:$0xff]
        %v893 = vld [vmem:[#allocation13 + $0x18] sm:$0xff]
        %v894 = vld [vmem:[#allocation13 + $0x20] sm:$0xff]
        %v895 = vld [vmem:[#allocation13 + $0x28] sm:$0xff]
        %v896 = vld [vmem:[#allocation13 + $0x30] sm:$0xff]
        %v897 = vld [vmem:[#allocation13 + $0x38] sm:$0xff]
        %899 = vset.pattern.permute.xlu0 0
        %900 = vperm.xlu0 %899, %v890
        %v901 = vpop.permute.xlu0 %900
        %904 = vset.pattern.permute.xlu0 0
        %905 = vperm.xlu0 %904, %v891
        %v906 = vpop.permute.xlu0 %905
        %909 = vset.pattern.permute.xlu0 0
        %910 = vperm.xlu0 %909, %v892
        %v911 = vpop.permute.xlu0 %910
        %914 = vset.pattern.permute.xlu0 0
        %915 = vperm.xlu0 %914, %v893
        %v916 = vpop.permute.xlu0 %915
        %919 = vset.pattern.permute.xlu0 0
        %920 = vperm.xlu0 %919, %v894
        %v921 = vpop.permute.xlu0 %920
        %924 = vset.pattern.permute.xlu0 0
        %925 = vperm.xlu0 %924, %v895
        %v926 = vpop.permute.xlu0 %925
        %929 = vset.pattern.permute.xlu0 0
        %930 = vperm.xlu0 %929, %v896
        %v931 = vpop.permute.xlu0 %930
        %934 = vset.pattern.permute.xlu0 0
        %935 = vperm.xlu0 %934, %v897
        %v936 = vpop.permute.xlu0 %935
        %v938 = vadd.f32 %v882, %v901
        %v939 = vadd.f32 %v883, %v906
        %v940 = vadd.f32 %v884, %v911
        %v941 = vadd.f32 %v885, %v916
        %v942 = vadd.f32 %v886, %v921
        %v943 = vadd.f32 %v887, %v926
        %v944 = vadd.f32 %v888, %v931
        %v945 = vadd.f32 %v889, %v936
        %v946 = vtanh.pop %v938
        %v947 = vtanh.pop %v939
        %v948 = vtanh.pop %v940
        %v949 = vtanh.pop %v941
        %v950 = vxor.u32 %v942, 2147483648
        %v951 = vxor.u32 %v943, 2147483648
        %v952 = vxor.u32 %v944, 2147483648
        %v953 = vxor.u32 %v945, 2147483648
        %v954 = vmul.f32 %v950, 1.442695
        %v955 = vpow.pop %v954
        %v956 = vmul.f32 %v951, 1.442695
        %v957 = vpow.pop %v956
        %v958 = vmul.f32 %v952, 1.442695
        %v959 = vpow.pop %v958
        %v960 = vmul.f32 %v953, 1.442695
        %v961 = vpow.pop %v960
        %v962 = vadd.f32 %v955, 1.0
        %v963 = vadd.f32 %v957, 1.0
        %v964 = vadd.f32 %v959, 1.0
        %v965 = vadd.f32 %v961, 1.0
        %v966 = vrcp.pop %v962
        %v967 = vmul.f32 1.0, %v966
        %v968 = vrcp.pop %v963
        %v969 = vmul.f32 1.0, %v968
        %v970 = vrcp.pop %v964
        %v971 = vmul.f32 1.0, %v970
        %v972 = vrcp.pop %v965
        %v973 = vmul.f32 1.0, %v972
        %v974 = vmul.f32 %v946, %v967
        %v975 = vmul.f32 %v947, %v969
        %v976 = vmul.f32 %v948, %v971
        %v977 = vmul.f32 %v949, %v973
        %v978 = vmul.f32 %v974, %v454
        %v979 = vmul.f32 %v975, %v454
        %v980 = vmul.f32 %v976, %v454
        %v981 = vmul.f32 %v977, %v454
        %v982 = vpack.c.bf16 %v979, %v978
        %v983 = vpack.c.bf16 %v981, %v980
        %v984 = vld [vmem:[#allocation14] sm:$0xf]
        %v985 = vld [vmem:[#allocation14 + $0x4] sm:$0xf]
        %v986 = vld [vmem:[#allocation14 + $0x8] sm:$0xf]
        %v987 = vld [vmem:[#allocation14 + $0xc] sm:$0xf]
        %v988 = vld [vmem:[#allocation14 + $0x10] sm:$0xf]
        %v989 = vld [vmem:[#allocation14 + $0x14] sm:$0xf]
        %v990 = vld [vmem:[#allocation16] sm:$0xff]
        %v991 = vld [vmem:[#allocation16 + $0x8] sm:$0xff]
        %v992 = vld [vmem:[#allocation16 + $0x10] sm:$0xff]
        %v993 = vld [vmem:[#allocation16 + $0x18] sm:$0xff]
        %v994 = vld [vmem:[#allocation16 + $0x20] sm:$0xff]
        %v995 = vld [vmem:[#allocation16 + $0x28] sm:$0xff]
        %997 = vset.pattern.permute.xlu0 0
        %998 = vperm.xlu0 %997, %v990
        %v999 = vpop.permute.xlu0 %998
        %1002 = vset.pattern.permute.xlu0 0
        %1003 = vperm.xlu0 %1002, %v991
        %v1004 = vpop.permute.xlu0 %1003
        %1007 = vset.pattern.permute.xlu0 0
        %1008 = vperm.xlu0 %1007, %v992
        %v1009 = vpop.permute.xlu0 %1008
        %1012 = vset.pattern.permute.xlu0 0
        %1013 = vperm.xlu0 %1012, %v993
        %v1014 = vpop.permute.xlu0 %1013
        %1017 = vset.pattern.permute.xlu0 0
        %1018 = vperm.xlu0 %1017, %v994
        %v1019 = vpop.permute.xlu0 %1018
        %1022 = vset.pattern.permute.xlu0 0
        %1023 = vperm.xlu0 %1022, %v995
        %v1024 = vpop.permute.xlu0 %1023
        %v1032 = vunpack.c.l.b16 %v984
        %v1033 = vunpack.c.l.b16 %v985
        %v1034 = vunpack.c.l.b16 %v986
        %v1035 = vunpack.c.l.b16 %v987
        %v1036 = vunpack.c.l.b16 %v988
        %v1037 = vunpack.c.l.b16 %v989
        %v1038 = vpack.c.b16 %v1033, %v1032
        %v1039 = vpack.c.b16 %v1035, %v1034
        %v1040 = vpack.c.b16 %v1037, %v1036
        %vm1041 = vcmask 261120
        %v1043 = vsel %vm1041, %v1038, 0
        %v1046 = vsel %vm1041, %v1039, 0
        %v1049 = vsel %vm1041, %v1040, 0
        %1051 = vmatprep.subr.bf16.mxu0 0
        %1052 = vmatpush1.bf16.msra.mxu0 %v982
        %1053 = vmatprep.subr.bf16.mxu0 0
        %1054 = vmatpush1.bf16.msra.mxu0 %v983
        %1055 = vmatprep.subr.bf16.mxu0 0
        %1056 = vmatpush1.bf16.msra.mxu0 0
        %1057 = vmatprep.subr.bf16.mxu0 0
        %1058 = vmatpush1.bf16.msra.mxu0 0
        %1059 = vmatprep.subr.bf16.mxu0 0
        %1060 = vmatpush1.bf16.msra.mxu0 0
        %1061 = vmatprep.subr.bf16.mxu0 0
        %1062 = vmatpush1.bf16.msra.mxu0 0
        %1063 = vmatprep.subr.bf16.mxu0 0
        %1064 = vmatpush1.bf16.msra.mxu0 0
        %1065 = vmatprep.subr.bf16.mxu0 0
        %1066 = vmatpush1.bf16.msra.mxu0 0
        %1067 = vmatprep.subr.bf16.mxu0 0
        %1068 = vmatpush1.bf16.msra.mxu0 0
        %1069 = vmatprep.subr.bf16.mxu0 0
        %1070 = vmatpush1.bf16.msra.mxu0 0
        %1071 = vmatprep.subr.bf16.mxu0 0
        %1072 = vmatpush1.bf16.msra.mxu0 0
        %1073 = vmatprep.subr.bf16.mxu0 0
        %1074 = vmatpush1.bf16.msra.mxu0 0
        %1075 = vmatprep.subr.bf16.mxu0 0
        %1076 = vmatpush1.bf16.msra.mxu0 0
        %1077 = vmatprep.subr.bf16.mxu0 0
        %1078 = vmatpush1.bf16.msra.mxu0 0
        %1079 = vmatprep.subr.bf16.mxu0 0
        %1080 = vmatpush1.bf16.msra.mxu0 0
        %1081 = vmatprep.subr.bf16.mxu0 0
        %1082 = vmatpush1.bf16.msra.mxu0 0
        %1083 = vmatprep.mubr.bf16.mxu0 0
        %1084 = vmatmul.mubr.bf16.gmra.mrb[0].mxu0 %v1043
        %v1085 = vpop.f32.mrb[0].mxu0
        %v1086 = vadd.f32 %v999, %v1085
        %v1087 = vpop.f32.mrb[0].mxu0
        %v1088 = vpop.f32.mrb[0].mxu0
        %v1089 = vadd.f32 %v1004, %v1088
        %v1090 = vpop.f32.mrb[0].mxu0
        %1091 = vmatprep.mubr.bf16.mxu0 0
        %1092 = vmatmul.mubr.bf16.gmra.mrb[0].mxu0 %v1046
        %v1093 = vpop.f32.mrb[0].mxu0
        %v1094 = vadd.f32 %v1009, %v1093
        %v1095 = vpop.f32.mrb[0].mxu0
        %v1096 = vpop.f32.mrb[0].mxu0
        %v1097 = vadd.f32 %v1014, %v1096
        %v1098 = vpop.f32.mrb[0].mxu0
        %1099 = vmatprep.mubr.bf16.mxu0 0
        %1100 = vmatmul.mubr.bf16.gmra.mrb[0].mxu0 %v1049
        %v1101 = vpop.f32.mrb[0].mxu0
        %v1102 = vadd.f32 %v1019, %v1101
        %v1103 = vpop.f32.mrb[0].mxu0
        %v1104 = vpop.f32.mrb[0].mxu0
        %v1105 = vadd.f32 %v1024, %v1104
        %v1106 = vpop.f32.mrb[0].mxu0
        %1107 = vdwg.mxu0
        %v1108 = vmul.f32 %v1094, %v454
        %v1109 = vmul.f32 %v1097, %v454
        %v1110 = vmul.f32 %v1102, %v454
        %v1111 = vmul.f32 %v1105, %v454
        %v1112 = vpack.c.bf16 %v1086, %v1086
        %v1113 = vpack.c.bf16 %v1089, %v1089
        %1114 = vxpose.xlu0.c.b16.start [1/8] %v1112, 128
        %1115 = vxpose.xlu0.c.b16.cont [2/8] 0, 128
        %1116 = vxpose.xlu0.c.b16.cont [3/8] 0, 128
        %1117 = vxpose.xlu0.c.b16.cont [4/8] 0, 128
        %1118 = vxpose.xlu0.c.b16.cont [5/8] 0, 128
        %1119 = vxpose.xlu0.c.b16.cont [6/8] 0, 128
        %1120 = vxpose.xlu0.c.b16.cont [7/8] 0, 128
        %1121 = vxpose.xlu0.c.b16.end [8/8] 0, 128
        %v1122 = vpop.trf.xlu0
        %v1123 = vpop.trf.xlu0
        %v1124 = vpop.trf.xlu0
        %v1125 = vpop.trf.xlu0
        %v1126 = vpop.trf.xlu0
        %v1127 = vpop.trf.xlu0
        %v1128 = vpop.trf.xlu0
        %v1129 = vpop.trf.xlu0
        %vm1130 = vcmask 64512
        %v1132 = vsel %vm1130, %v1122, 0
        %v1135 = vsel %vm1130, %v1123, 0
        %v1138 = vsel %vm1130, %v1124, 0
        %v1141 = vsel %vm1130, %v1125, 0
        %v1144 = vsel %vm1130, %v1126, 0
        %v1147 = vsel %vm1130, %v1127, 0
        %v1150 = vsel %vm1130, %v1128, 0
        %v1153 = vsel %vm1130, %v1129, 0
        %vm1155 = vcmask 1043456
        %v1157 = vsel %vm1155, %v1113, 0
        %1159 = vmatprep.subr.bf16.mxu0 0
        %1160 = vmatpush1.bf16.msra.mxu0 %v1157
        %1161 = vmatprep.subr.bf16.mxu0 0
        %1162 = vmatpush1.bf16.msra.mxu0 0
        %1163 = vmatprep.subr.bf16.mxu0 0
        %1164 = vmatpush1.bf16.msra.mxu0 0
        %1165 = vmatprep.subr.bf16.mxu0 0
        %1166 = vmatpush1.bf16.msra.mxu0 0
        %1167 = vmatprep.subr.bf16.mxu0 0
        %1168 = vmatpush1.bf16.msra.mxu0 0
        %1169 = vmatprep.subr.bf16.mxu0 0
        %1170 = vmatpush1.bf16.msra.mxu0 0
        %1171 = vmatprep.subr.bf16.mxu0 0
        %1172 = vmatpush1.bf16.msra.mxu0 0
        %1173 = vmatprep.subr.bf16.mxu0 0
        %1174 = vmatpush1.bf16.msra.mxu0 0
        %1175 = vmatprep.subr.bf16.mxu0 0
        %1176 = vmatpush1.bf16.msra.mxu0 0
        %1177 = vmatprep.subr.bf16.mxu0 0
        %1178 = vmatpush1.bf16.msra.mxu0 0
        %1179 = vmatprep.subr.bf16.mxu0 0
        %1180 = vmatpush1.bf16.msra.mxu0 0
        %1181 = vmatprep.subr.bf16.mxu0 0
        %1182 = vmatpush1.bf16.msra.mxu0 0
        %1183 = vmatprep.subr.bf16.mxu0 0
        %1184 = vmatpush1.bf16.msra.mxu0 0
        %1185 = vmatprep.subr.bf16.mxu0 0
        %1186 = vmatpush1.bf16.msra.mxu0 0
        %1187 = vmatprep.subr.bf16.mxu0 0
        %1188 = vmatpush1.bf16.msra.mxu0 0
        %1189 = vmatprep.subr.bf16.mxu0 0
        %1190 = vmatpush1.bf16.msra.mxu0 0
        %1191 = vmatprep.mubr.bf16.mxu0 0
        %1192 = vmatmul.mubr.bf16.gmra.mrb[0].mxu0 %v1132
        %v1193 = vpop.f32.mrb[0].mxu0
        %v1194 = vadd.f32 %v455, %v1193
        %v1195 = vpop.f32.mrb[0].mxu0
        %v1196 = vpop.f32.mrb[0].mxu0
        %v1197 = vadd.f32 %v455, %v1196
        %v1198 = vpop.f32.mrb[0].mxu0
        %1199 = vmatprep.mubr.bf16.mxu0 0
        %1200 = vmatmul.mubr.bf16.gmra.mrb[0].mxu0 %v1135
        %v1201 = vpop.f32.mrb[0].mxu0
        %v1202 = vadd.f32 %v455, %v1201
        %v1203 = vpop.f32.mrb[0].mxu0
        %v1204 = vpop.f32.mrb[0].mxu0
        %v1205 = vadd.f32 %v455, %v1204
        %v1206 = vpop.f32.mrb[0].mxu0
        %1207 = vmatprep.mubr.bf16.mxu0 0
        %1208 = vmatmul.mubr.bf16.gmra.mrb[0].mxu0 %v1138
        %v1209 = vpop.f32.mrb[0].mxu0
        %v1210 = vadd.f32 %v455, %v1209
        %v1211 = vpop.f32.mrb[0].mxu0
        %v1212 = vpop.f32.mrb[0].mxu0
        %v1213 = vadd.f32 %v455, %v1212
        %v1214 = vpop.f32.mrb[0].mxu0
        %1215 = vmatprep.mubr.bf16.mxu0 0
        %1216 = vmatmul.mubr.bf16.gmra.mrb[0].mxu0 %v1141
        %v1217 = vpop.f32.mrb[0].mxu0
        %v1218 = vadd.f32 %v455, %v1217
        %v1219 = vpop.f32.mrb[0].mxu0
        %v1220 = vpop.f32.mrb[0].mxu0
        %v1221 = vadd.f32 %v455, %v1220
        %v1222 = vpop.f32.mrb[0].mxu0
        %1223 = vmatprep.mubr.bf16.mxu0 0
        %1224 = vmatmul.mubr.bf16.gmra.mrb[0].mxu0 %v1144
        %v1225 = vpop.f32.mrb[0].mxu0
        %v1226 = vadd.f32 %v455, %v1225
        %v1227 = vpop.f32.mrb[0].mxu0
        %v1228 = vpop.f32.mrb[0].mxu0
        %v1229 = vadd.f32 %v455, %v1228
        %v1230 = vpop.f32.mrb[0].mxu0
        %1231 = vmatprep.mubr.bf16.mxu0 0
        %1232 = vmatmul.mubr.bf16.gmra.mrb[0].mxu0 %v1147
        %v1233 = vpop.f32.mrb[0].mxu0
        %v1234 = vadd.f32 %v455, %v1233
        %v1235 = vpop.f32.mrb[0].mxu0
        %v1236 = vpop.f32.mrb[0].mxu0
        %v1237 = vadd.f32 %v455, %v1236
        %v1238 = vpop.f32.mrb[0].mxu0
        %1239 = vmatprep.mubr.bf16.mxu0 0
        %1240 = vmatmul.mubr.bf16.gmra.mrb[0].mxu0 %v1150
        %v1241 = vpop.f32.mrb[0].mxu0
        %v1242 = vadd.f32 %v455, %v1241
        %v1243 = vpop.f32.mrb[0].mxu0
        %v1244 = vpop.f32.mrb[0].mxu0
        %v1245 = vadd.f32 %v455, %v1244
        %v1246 = vpop.f32.mrb[0].mxu0
        %1247 = vmatprep.mubr.bf16.mxu0 0
        %1248 = vmatmul.mubr.bf16.gmra.mrb[0].mxu0 %v1153
        %v1249 = vpop.f32.mrb[0].mxu0
        %v1250 = vadd.f32 %v455, %v1249
        %v1251 = vpop.f32.mrb[0].mxu0
        %v1252 = vpop.f32.mrb[0].mxu0
        %v1253 = vadd.f32 %v455, %v1252
        %v1254 = vpop.f32.mrb[0].mxu0
        %1255 = vdwg.mxu0
        %1256 = vmax.xlane.f32.xlu0 %v1194
        %v1257 = vpop.xlane.xlu0 %1256
        %1258 = vmax.xlane.f32.xlu0 %v1197
        %v1259 = vpop.xlane.xlu0 %1258
        %1260 = vmax.xlane.f32.xlu0 %v1202
        %v1261 = vpop.xlane.xlu0 %1260
        %1262 = vmax.xlane.f32.xlu0 %v1205
        %v1263 = vpop.xlane.xlu0 %1262
        %1264 = vmax.xlane.f32.xlu0 %v1210
        %v1265 = vpop.xlane.xlu0 %1264
        %1266 = vmax.xlane.f32.xlu0 %v1213
        %v1267 = vpop.xlane.xlu0 %1266
        %1268 = vmax.xlane.f32.xlu0 %v1218
        %v1269 = vpop.xlane.xlu0 %1268
        %1270 = vmax.xlane.f32.xlu0 %v1221
        %v1271 = vpop.xlane.xlu0 %1270
        %1272 = vmax.xlane.f32.xlu0 %v1226
        %v1273 = vpop.xlane.xlu0 %1272
        %1274 = vmax.xlane.f32.xlu0 %v1229
        %v1275 = vpop.xlane.xlu0 %1274
        %1276 = vmax.xlane.f32.xlu0 %v1234
        %v1277 = vpop.xlane.xlu0 %1276
        %1278 = vmax.xlane.f32.xlu0 %v1237
        %v1279 = vpop.xlane.xlu0 %1278
        %1280 = vmax.xlane.f32.xlu0 %v1242
        %v1281 = vpop.xlane.xlu0 %1280
        %1282 = vmax.xlane.f32.xlu0 %v1245
        %v1283 = vpop.xlane.xlu0 %1282
        %1284 = vmax.xlane.f32.xlu0 %v1250
        %v1285 = vpop.xlane.xlu0 %1284
        %1286 = vmax.xlane.f32.xlu0 %v1253
        %v1287 = vpop.xlane.xlu0 %1286
        %v1288 = vsub.f32 %v1194, %v1257
        %v1289 = vsub.f32 %v1197, %v1259
        %v1290 = vsub.f32 %v1202, %v1261
        %v1291 = vsub.f32 %v1205, %v1263
        %v1292 = vsub.f32 %v1210, %v1265
        %v1293 = vsub.f32 %v1213, %v1267
        %v1294 = vsub.f32 %v1218, %v1269
        %v1295 = vsub.f32 %v1221, %v1271
        %v1296 = vsub.f32 %v1226, %v1273
        %v1297 = vsub.f32 %v1229, %v1275
        %v1298 = vsub.f32 %v1234, %v1277
        %v1299 = vsub.f32 %v1237, %v1279
        %v1300 = vsub.f32 %v1242, %v1281
        %v1301 = vsub.f32 %v1245, %v1283
        %v1302 = vsub.f32 %v1250, %v1285
        %v1303 = vsub.f32 %v1253, %v1287
        %v1304 = vmul.f32 %v1288, 1.442695
        %v1305 = vpow.pop %v1304
        %v1306 = vmul.f32 %v1289, 1.442695
        %v1307 = vpow.pop %v1306
        %v1308 = vmul.f32 %v1290, 1.442695
        %v1309 = vpow.pop %v1308
        %v1310 = vmul.f32 %v1291, 1.442695
        %v1311 = vpow.pop %v1310
        %v1312 = vmul.f32 %v1292, 1.442695
        %v1313 = vpow.pop %v1312
        %v1314 = vmul.f32 %v1293, 1.442695
        %v1315 = vpow.pop %v1314
        %v1316 = vmul.f32 %v1294, 1.442695
        %v1317 = vpow.pop %v1316
        %v1318 = vmul.f32 %v1295, 1.442695
        %v1319 = vpow.pop %v1318
        %v1320 = vmul.f32 %v1296, 1.442695
        %v1321 = vpow.pop %v1320
        %v1322 = vmul.f32 %v1297, 1.442695
        %v1323 = vpow.pop %v1322
        %v1324 = vmul.f32 %v1298, 1.442695
        %v1325 = vpow.pop %v1324
        %v1326 = vmul.f32 %v1299, 1.442695
        %v1327 = vpow.pop %v1326
        %v1328 = vmul.f32 %v1300, 1.442695
        %v1329 = vpow.pop %v1328
        %v1330 = vmul.f32 %v1301, 1.442695
        %v1331 = vpow.pop %v1330
        %v1332 = vmul.f32 %v1302, 1.442695
        %v1333 = vpow.pop %v1332
        %v1334 = vmul.f32 %v1303, 1.442695
        %v1335 = vpow.pop %v1334
        %1336 = vadd.xlane.f32.xlu0 %v1305
        %v1337 = vpop.xlane.xlu0 %1336
        %1338 = vadd.xlane.f32.xlu0 %v1307
        %v1339 = vpop.xlane.xlu0 %1338
        %1340 = vadd.xlane.f32.xlu0 %v1309
        %v1341 = vpop.xlane.xlu0 %1340
        %1342 = vadd.xlane.f32.xlu0 %v1311
        %v1343 = vpop.xlane.xlu0 %1342
        %1344 = vadd.xlane.f32.xlu0 %v1313
        %v1345 = vpop.xlane.xlu0 %1344
        %1346 = vadd.xlane.f32.xlu0 %v1315
        %v1347 = vpop.xlane.xlu0 %1346
        %1348 = vadd.xlane.f32.xlu0 %v1317
        %v1349 = vpop.xlane.xlu0 %1348
        %1350 = vadd.xlane.f32.xlu0 %v1319
        %v1351 = vpop.xlane.xlu0 %1350
        %1352 = vadd.xlane.f32.xlu0 %v1321
        %v1353 = vpop.xlane.xlu0 %1352
        %1354 = vadd.xlane.f32.xlu0 %v1323
        %v1355 = vpop.xlane.xlu0 %1354
        %1356 = vadd.xlane.f32.xlu0 %v1325
        %v1357 = vpop.xlane.xlu0 %1356
        %1358 = vadd.xlane.f32.xlu0 %v1327
        %v1359 = vpop.xlane.xlu0 %1358
        %1360 = vadd.xlane.f32.xlu0 %v1329
        %v1361 = vpop.xlane.xlu0 %1360
        %1362 = vadd.xlane.f32.xlu0 %v1331
        %v1363 = vpop.xlane.xlu0 %1362
        %1364 = vadd.xlane.f32.xlu0 %v1333
        %v1365 = vpop.xlane.xlu0 %1364
        %1366 = vadd.xlane.f32.xlu0 %v1335
        %v1367 = vpop.xlane.xlu0 %1366
        %v1368 = vrcp.pop %v1337
        %v1369 = vrcp.pop %v1339
        %v1370 = vrcp.pop %v1341
        %v1371 = vrcp.pop %v1343
        %v1372 = vrcp.pop %v1345
        %v1373 = vrcp.pop %v1347
        %v1374 = vrcp.pop %v1349
        %v1375 = vrcp.pop %v1351
        %v1376 = vrcp.pop %v1353
        %v1377 = vrcp.pop %v1355
        %v1378 = vrcp.pop %v1357
        %v1379 = vrcp.pop %v1359
        %v1380 = vrcp.pop %v1361
        %v1381 = vrcp.pop %v1363
        %v1382 = vrcp.pop %v1365
        %v1383 = vrcp.pop %v1367
        %v1384 = vmul.f32 %v1305, %v1368
        %v1385 = vmul.f32 %v1307, %v1369
        %v1386 = vmul.f32 %v1309, %v1370
        %v1387 = vmul.f32 %v1311, %v1371
        %v1388 = vmul.f32 %v1313, %v1372
        %v1389 = vmul.f32 %v1315, %v1373
        %v1390 = vmul.f32 %v1317, %v1374
        %v1391 = vmul.f32 %v1319, %v1375
        %v1392 = vmul.f32 %v1321, %v1376
        %v1393 = vmul.f32 %v1323, %v1377
        %v1394 = vmul.f32 %v1325, %v1378
        %v1395 = vmul.f32 %v1327, %v1379
        %v1396 = vmul.f32 %v1329, %v1380
        %v1397 = vmul.f32 %v1331, %v1381
        %v1398 = vmul.f32 %v1333, %v1382
        %v1399 = vmul.f32 %v1335, %v1383
        %v1400 = vpack.c.bf16 %v1109, %v1108
        %v1401 = vpack.c.bf16 %v1111, %v1110
        %v1402 = vpack.c.bf16 %v1385, %v1384
        %v1403 = vpack.c.bf16 %v1387, %v1386
        %v1404 = vpack.c.bf16 %v1389, %v1388
        %v1405 = vpack.c.bf16 %v1391, %v1390
        %v1406 = vpack.c.bf16 %v1393, %v1392
        %v1407 = vpack.c.bf16 %v1395, %v1394
        %v1408 = vpack.c.bf16 %v1397, %v1396
        %v1409 = vpack.c.bf16 %v1399, %v1398
        %1410 = vmatprep.subr.bf16.mxu0 0
        %1411 = vmatpush1.bf16.msra.mxu0 %v1402
        %1412 = vmatprep.subr.bf16.mxu0 0
        %1413 = vmatpush1.bf16.msra.mxu0 %v1403
        %1414 = vmatprep.subr.bf16.mxu0 0
        %1415 = vmatpush1.bf16.msra.mxu0 %v1404
        %1416 = vmatprep.subr.bf16.mxu0 0
        %1417 = vmatpush1.bf16.msra.mxu0 %v1405
        %1418 = vmatprep.subr.bf16.mxu0 0
        %1419 = vmatpush1.bf16.msra.mxu0 %v1406
        %1420 = vmatprep.subr.bf16.mxu0 0
        %1421 = vmatpush1.bf16.msra.mxu0 %v1407
        %1422 = vmatprep.subr.bf16.mxu0 0
        %1423 = vmatpush1.bf16.msra.mxu0 %v1408
        %1424 = vmatprep.subr.bf16.mxu0 0
        %1425 = vmatpush1.bf16.msra.mxu0 %v1409
        %1426 = vmatprep.subr.bf16.mxu0 0
        %1427 = vmatpush1.bf16.msra.mxu0 0
        %1428 = vmatprep.subr.bf16.mxu0 0
        %1429 = vmatpush1.bf16.msra.mxu0 0
        %1430 = vmatprep.subr.bf16.mxu0 0
        %1431 = vmatpush1.bf16.msra.mxu0 0
        %1432 = vmatprep.subr.bf16.mxu0 0
        %1433 = vmatpush1.bf16.msra.mxu0 0
        %1434 = vmatprep.subr.bf16.mxu0 0
        %1435 = vmatpush1.bf16.msra.mxu0 0
        %1436 = vmatprep.subr.bf16.mxu0 0
        %1437 = vmatpush1.bf16.msra.mxu0 0
        %1438 = vmatprep.subr.bf16.mxu0 0
        %1439 = vmatpush1.bf16.msra.mxu0 0
        %1440 = vmatprep.subr.bf16.mxu0 0
        %1441 = vmatpush1.bf16.msra.mxu0 0
        %1442 = vmatprep.mubr.bf16.mxu0 0
        %1443 = vmatmul.mubr.bf16.gmra.mrb[0].mxu0 %v1400
        %v1444 = vpop.f32.mrb[0].mxu0
        %v1445 = vadd.f32 %v978, %v1444
        %v1446 = vpop.f32.mrb[0].mxu0
        %v1447 = vpop.f32.mrb[0].mxu0
        %v1448 = vadd.f32 %v979, %v1447
        %v1449 = vpop.f32.mrb[0].mxu0
        %1450 = vmatprep.mubr.bf16.mxu0 0
        %1451 = vmatmul.mubr.bf16.gmra.mrb[0].mxu0 %v1401
        %v1452 = vpop.f32.mrb[0].mxu0
        %v1453 = vadd.f32 %v980, %v1452
        %v1454 = vpop.f32.mrb[0].mxu0
        %v1455 = vpop.f32.mrb[0].mxu0
        %v1456 = vadd.f32 %v981, %v1455
        %v1457 = vpop.f32.mrb[0].mxu0
        %1458 = vdwg.mxu0
        %v1459 = vmul.f32 %v1445, %v454
        %v1460 = vmul.f32 %v1448, %v454
        %v1461 = vmul.f32 %v1453, %v454
        %v1462 = vmul.f32 %v1456, %v454
        %v1463 = vpack.c.bf16 %v1460, %v1459
        %v1464 = vpack.c.bf16 %v1462, %v1461
        %1465 = vst [vmem:[#allocation3 + $0x8] sm:$0xff] %v1463
        %1466 = vst [vmem:[#allocation3 + $0x20] sm:$0xff] %v1464
        %v1467 = vld [vmem:[#allocation10] sm:$0xf]
        %v1468 = vld [vmem:[#allocation10 + $0x4] sm:$0xf]
        %v1469 = vld [vmem:[#allocation10 + $0x8] sm:$0xf]
        %v1470 = vld [vmem:[#allocation10 + $0xc] sm:$0xf]
        %v1471 = vld [vmem:[#allocation10 + $0x10] sm:$0xf]
        %v1472 = vld [vmem:[#allocation10 + $0x14] sm:$0xf]
        %v1473 = vld [vmem:[#allocation10 + $0x18] sm:$0xf]
        %v1474 = vld [vmem:[#allocation10 + $0x1c] sm:$0xf]
        %s1475 = scalar_lea.vmem [#allocation10], 32
        %v1476 = vld [vmem:[%s1475] sm:$0xf]
        %v1477 = vld [vmem:[%s1475 + $0x4] sm:$0xf]
        %v1478 = vld [vmem:[%s1475 + $0x8] sm:$0xf]
        %v1479 = vld [vmem:[%s1475 + $0xc] sm:$0xf]
        %v1480 = vld [vmem:[%s1475 + $0x10] sm:$0xf]
        %v1481 = vld [vmem:[%s1475 + $0x14] sm:$0xf]
        %v1482 = vld [vmem:[%s1475 + $0x18] sm:$0xf]
        %v1483 = vld [vmem:[%s1475 + $0x1c] sm:$0xf]
        %s1484 = scalar_lea.vmem [#allocation10], 64
        %v1485 = vld [vmem:[%s1484] sm:$0xf]
        %v1486 = vld [vmem:[%s1484 + $0x4] sm:$0xf]
        %v1487 = vld [vmem:[%s1484 + $0x8] sm:$0xf]
        %v1488 = vld [vmem:[%s1484 + $0xc] sm:$0xf]
        %v1489 = vld [vmem:[%s1484 + $0x10] sm:$0xf]
        %v1490 = vld [vmem:[%s1484 + $0x14] sm:$0xf]
        %v1491 = vld [vmem:[%s1484 + $0x18] sm:$0xf]
        %v1492 = vld [vmem:[%s1484 + $0x1c] sm:$0xf]
        %v1493 = vld [vmem:[#allocation3] sm:$0xff]
        %v1494 = vld [vmem:[#allocation3 + $0x8] sm:$0xff]
        %v1495 = vld [vmem:[#allocation3 + $0x18] sm:$0xff]
        %v1496 = vld [vmem:[#allocation3 + $0x20] sm:$0xff]
        %v1497 = vld [vmem:[#allocation3 + $0x8] sm:$0xff]
        %v1498 = vld [vmem:[#allocation3 + $0x10] sm:$0xff]
        %v1499 = vld [vmem:[#allocation3 + $0x20] sm:$0xff]
        %v1500 = vld [vmem:[#allocation3 + $0x28] sm:$0xff]
        %v1509 = vunpack.c.l.b16 %v1476
        %v1510 = vunpack.c.l.b16 %v1477
        %v1511 = vunpack.c.l.b16 %v1478
        %v1512 = vunpack.c.l.b16 %v1479
        %v1513 = vunpack.c.l.b16 %v1480
        %v1514 = vunpack.c.l.b16 %v1481
        %v1515 = vunpack.c.l.b16 %v1482
        %v1516 = vunpack.c.l.b16 %v1483
        %v1517 = vpack.c.b16 %v1510, %v1509
        %v1518 = vpack.c.b16 %v1512, %v1511
        %v1519 = vpack.c.b16 %v1514, %v1513
        %v1520 = vpack.c.b16 %v1516, %v1515
        %v1522 = vsel %vm1041, %v1517, 0
        %v1525 = vsel %vm1041, %v1518, 0
        %v1528 = vsel %vm1041, %v1519, 0
        %v1531 = vsel %vm1041, %v1520, 0
        %1533 = vmatprep.subr.bf16.mxu0 0
        %1534 = vmatpush1.bf16.msra.mxu0 %v1494
        %1535 = vmatprep.subr.bf16.mxu0 0
        %1536 = vmatpush1.bf16.msra.mxu0 %v1496
        %1537 = vmatprep.subr.bf16.mxu0 0
        %1538 = vmatpush1.bf16.msra.mxu0 0
        %1539 = vmatprep.subr.bf16.mxu0 0
        %1540 = vmatpush1.bf16.msra.mxu0 0
        %1541 = vmatprep.subr.bf16.mxu0 0
        %1542 = vmatpush1.bf16.msra.mxu0 0
        %1543 = vmatprep.subr.bf16.mxu0 0
        %1544 = vmatpush1.bf16.msra.mxu0 0
        %1545 = vmatprep.subr.bf16.mxu0 0
        %1546 = vmatpush1.bf16.msra.mxu0 0
        %1547 = vmatprep.subr.bf16.mxu0 0
        %1548 = vmatpush1.bf16.msra.mxu0 0
        %1549 = vmatprep.subr.bf16.mxu0 0
        %1550 = vmatpush1.bf16.msra.mxu0 0
        %1551 = vmatprep.subr.bf16.mxu0 0
        %1552 = vmatpush1.bf16.msra.mxu0 0
        %1553 = vmatprep.subr.bf16.mxu0 0
        %1554 = vmatpush1.bf16.msra.mxu0 0
        %1555 = vmatprep.subr.bf16.mxu0 0
        %1556 = vmatpush1.bf16.msra.mxu0 0
        %1557 = vmatprep.subr.bf16.mxu0 0
        %1558 = vmatpush1.bf16.msra.mxu0 0
        %1559 = vmatprep.subr.bf16.mxu0 0
        %1560 = vmatpush1.bf16.msra.mxu0 0
        %1561 = vmatprep.subr.bf16.mxu0 0
        %1562 = vmatpush1.bf16.msra.mxu0 0
        %1563 = vmatprep.subr.bf16.mxu0 0
        %1564 = vmatpush1.bf16.msra.mxu0 0
        %1565 = vmatprep.mubr.bf16.mxu0 0
        %1566 = vmatmul.mubr.bf16.gmra.mrb[0].mxu0 %v1522
        %v1567 = vpop.f32.mrb[0].mxu0
        %v1568 = vadd.f32 0.0, %v1567
        %v1569 = vpop.f32.mrb[0].mxu0
        %v1570 = vpop.f32.mrb[0].mxu0
        %v1571 = vadd.f32 0.0, %v1570
        %v1572 = vpop.f32.mrb[0].mxu0
        %1573 = vmatprep.mubr.bf16.mxu0 0
        %1574 = vmatmul.mubr.bf16.gmra.mrb[0].mxu0 %v1525
        %v1575 = vpop.f32.mrb[0].mxu0
        %v1576 = vadd.f32 0.0, %v1575
        %v1577 = vpop.f32.mrb[0].mxu0
        %v1578 = vpop.f32.mrb[0].mxu0
        %v1579 = vadd.f32 0.0, %v1578
        %v1580 = vpop.f32.mrb[0].mxu0
        %1581 = vmatprep.mubr.bf16.mxu0 0
        %1582 = vmatmul.mubr.bf16.gmra.mrb[0].mxu0 %v1528
        %v1583 = vpop.f32.mrb[0].mxu0
        %v1584 = vadd.f32 0.0, %v1583
        %v1585 = vpop.f32.mrb[0].mxu0
        %v1586 = vpop.f32.mrb[0].mxu0
        %v1587 = vadd.f32 0.0, %v1586
        %v1588 = vpop.f32.mrb[0].mxu0
        %1589 = vmatprep.mubr.bf16.mxu0 0
        %1590 = vmatmul.mubr.bf16.gmra.mrb[0].mxu0 %v1531
        %v1591 = vpop.f32.mrb[0].mxu0
        %v1592 = vadd.f32 0.0, %v1591
        %v1593 = vpop.f32.mrb[0].mxu0
        %v1594 = vpop.f32.mrb[0].mxu0
        %v1595 = vadd.f32 0.0, %v1594
        %v1596 = vpop.f32.mrb[0].mxu0
        %1597 = vdwg.mxu0
        %v1606 = vunpack.c.l.b16 %v1467
        %v1607 = vunpack.c.l.b16 %v1468
        %v1608 = vunpack.c.l.b16 %v1469
        %v1609 = vunpack.c.l.b16 %v1470
        %v1610 = vunpack.c.l.b16 %v1471
        %v1611 = vunpack.c.l.b16 %v1472
        %v1612 = vunpack.c.l.b16 %v1473
        %v1613 = vunpack.c.l.b16 %v1474
        %v1614 = vpack.c.b16 %v1607, %v1606
        %v1615 = vpack.c.b16 %v1609, %v1608
        %v1616 = vpack.c.b16 %v1611, %v1610
        %v1617 = vpack.c.b16 %v1613, %v1612
        %1622 = vrot.lane.b32.xlu0 %v1493, 2
        %v1623 = vpop.permute.xlu0 %1622
        %1624 = vrot.lane.b32.xlu0 %v1494, 2
        %v1625 = vpop.permute.xlu0 %1624
        %1626 = vrot.lane.b32.xlu0 %v1495, 2
        %v1627 = vpop.permute.xlu0 %1626
        %1628 = vrot.lane.b32.xlu0 %v1496, 2
        %v1629 = vpop.permute.xlu0 %1628
        %vm1630 = vcmask 15360
        %v1631 = vsel %vm1630, %v1623, %v1625
        %v1632 = vsel %vm1630, %v1627, %v1629
        %v1636 = vsel %vm1041, %v1614, 0
        %v1639 = vsel %vm1041, %v1615, 0
        %v1642 = vsel %vm1041, %v1616, 0
        %v1645 = vsel %vm1041, %v1617, 0
        %1647 = vmatprep.subr.bf16.mxu0 0
        %1648 = vmatpush1.bf16.msra.mxu0 %v1631
        %1649 = vmatprep.subr.bf16.mxu0 0
        %1650 = vmatpush1.bf16.msra.mxu0 %v1632
        %1651 = vmatprep.subr.bf16.mxu0 0
        %1652 = vmatpush1.bf16.msra.mxu0 0
        %1653 = vmatprep.subr.bf16.mxu0 0
        %1654 = vmatpush1.bf16.msra.mxu0 0
        %1655 = vmatprep.subr.bf16.mxu0 0
        %1656 = vmatpush1.bf16.msra.mxu0 0
        %1657 = vmatprep.subr.bf16.mxu0 0
        %1658 = vmatpush1.bf16.msra.mxu0 0
        %1659 = vmatprep.subr.bf16.mxu0 0
        %1660 = vmatpush1.bf16.msra.mxu0 0
        %1661 = vmatprep.subr.bf16.mxu0 0
        %1662 = vmatpush1.bf16.msra.mxu0 0
        %1663 = vmatprep.subr.bf16.mxu0 0
        %1664 = vmatpush1.bf16.msra.mxu0 0
        %1665 = vmatprep.subr.bf16.mxu0 0
        %1666 = vmatpush1.bf16.msra.mxu0 0
        %1667 = vmatprep.subr.bf16.mxu0 0
        %1668 = vmatpush1.bf16.msra.mxu0 0
        %1669 = vmatprep.subr.bf16.mxu0 0
        %1670 = vmatpush1.bf16.msra.mxu0 0
        %1671 = vmatprep.subr.bf16.mxu0 0
        %1672 = vmatpush1.bf16.msra.mxu0 0
        %1673 = vmatprep.subr.bf16.mxu0 0
        %1674 = vmatpush1.bf16.msra.mxu0 0
        %1675 = vmatprep.subr.bf16.mxu0 0
        %1676 = vmatpush1.bf16.msra.mxu0 0
        %1677 = vmatprep.subr.bf16.mxu0 0
        %1678 = vmatpush1.bf16.msra.mxu0 0
        %1679 = vmatprep.mubr.bf16.mxu0 0
        %1680 = vmatmul.mubr.bf16.gmra.mrb[0].mxu0 %v1636
        %v1681 = vpop.f32.mrb[0].mxu0
        %v1682 = vadd.f32 %v1568, %v1681
        %v1683 = vpop.f32.mrb[0].mxu0
        %v1684 = vpop.f32.mrb[0].mxu0
        %v1685 = vadd.f32 %v1571, %v1684
        %v1686 = vpop.f32.mrb[0].mxu0
        %1687 = vmatprep.mubr.bf16.mxu0 0
        %1688 = vmatmul.mubr.bf16.gmra.mrb[0].mxu0 %v1639
        %v1689 = vpop.f32.mrb[0].mxu0
        %v1690 = vadd.f32 %v1576, %v1689
        %v1691 = vpop.f32.mrb[0].mxu0
        %v1692 = vpop.f32.mrb[0].mxu0
        %v1693 = vadd.f32 %v1579, %v1692
        %v1694 = vpop.f32.mrb[0].mxu0
        %1695 = vmatprep.mubr.bf16.mxu0 0
        %1696 = vmatmul.mubr.bf16.gmra.mrb[0].mxu0 %v1642
        %v1697 = vpop.f32.mrb[0].mxu0
        %v1698 = vadd.f32 %v1584, %v1697
        %v1699 = vpop.f32.mrb[0].mxu0
        %v1700 = vpop.f32.mrb[0].mxu0
        %v1701 = vadd.f32 %v1587, %v1700
        %v1702 = vpop.f32.mrb[0].mxu0
        %1703 = vmatprep.mubr.bf16.mxu0 0
        %1704 = vmatmul.mubr.bf16.gmra.mrb[0].mxu0 %v1645
        %v1705 = vpop.f32.mrb[0].mxu0
        %v1706 = vadd.f32 %v1592, %v1705
        %v1707 = vpop.f32.mrb[0].mxu0
        %v1708 = vpop.f32.mrb[0].mxu0
        %v1709 = vadd.f32 %v1595, %v1708
        %v1710 = vpop.f32.mrb[0].mxu0
        %1711 = vdwg.mxu0
        %v1720 = vunpack.c.l.b16 %v1485
        %v1721 = vunpack.c.l.b16 %v1486
        %v1722 = vunpack.c.l.b16 %v1487
        %v1723 = vunpack.c.l.b16 %v1488
        %v1724 = vunpack.c.l.b16 %v1489
        %v1725 = vunpack.c.l.b16 %v1490
        %v1726 = vunpack.c.l.b16 %v1491
        %v1727 = vunpack.c.l.b16 %v1492
        %v1728 = vpack.c.b16 %v1721, %v1720
        %v1729 = vpack.c.b16 %v1723, %v1722
        %v1730 = vpack.c.b16 %v1725, %v1724
        %v1731 = vpack.c.b16 %v1727, %v1726
        %1736 = vrot.lane.b32.xlu0 %v1497, 126
        %v1737 = vpop.permute.xlu0 %1736
        %1738 = vrot.lane.b32.xlu0 %v1498, 126
        %v1739 = vpop.permute.xlu0 %1738
        %1740 = vrot.lane.b32.xlu0 %v1499, 126
        %v1741 = vpop.permute.xlu0 %1740
        %1742 = vrot.lane.b32.xlu0 %v1500, 126
        %v1743 = vpop.permute.xlu0 %1742
        %vm1744 = vcmask 1031168
        %v1745 = vsel %vm1744, %v1737, %v1739
        %v1746 = vsel %vm1744, %v1741, %v1743
        %v1750 = vsel %vm1041, %v1728, 0
        %v1753 = vsel %vm1041, %v1729, 0
        %v1756 = vsel %vm1041, %v1730, 0
        %v1759 = vsel %vm1041, %v1731, 0
        %1761 = vmatprep.subr.bf16.mxu0 0
        %1762 = vmatpush1.bf16.msra.mxu0 %v1745
        %1763 = vmatprep.subr.bf16.mxu0 0
        %1764 = vmatpush1.bf16.msra.mxu0 %v1746
        %1765 = vmatprep.subr.bf16.mxu0 0
        %1766 = vmatpush1.bf16.msra.mxu0 0
        %1767 = vmatprep.subr.bf16.mxu0 0
        %1768 = vmatpush1.bf16.msra.mxu0 0
        %1769 = vmatprep.subr.bf16.mxu0 0
        %1770 = vmatpush1.bf16.msra.mxu0 0
        %1771 = vmatprep.subr.bf16.mxu0 0
        %1772 = vmatpush1.bf16.msra.mxu0 0
        %1773 = vmatprep.subr.bf16.mxu0 0
        %1774 = vmatpush1.bf16.msra.mxu0 0
        %1775 = vmatprep.subr.bf16.mxu0 0
        %1776 = vmatpush1.bf16.msra.mxu0 0
        %1777 = vmatprep.subr.bf16.mxu0 0
        %1778 = vmatpush1.bf16.msra.mxu0 0
        %1779 = vmatprep.subr.bf16.mxu0 0
        %1780 = vmatpush1.bf16.msra.mxu0 0
        %1781 = vmatprep.subr.bf16.mxu0 0
        %1782 = vmatpush1.bf16.msra.mxu0 0
        %1783 = vmatprep.subr.bf16.mxu0 0
        %1784 = vmatpush1.bf16.msra.mxu0 0
        %1785 = vmatprep.subr.bf16.mxu0 0
        %1786 = vmatpush1.bf16.msra.mxu0 0
        %1787 = vmatprep.subr.bf16.mxu0 0
        %1788 = vmatpush1.bf16.msra.mxu0 0
        %1789 = vmatprep.subr.bf16.mxu0 0
        %1790 = vmatpush1.bf16.msra.mxu0 0
        %1791 = vmatprep.subr.bf16.mxu0 0
        %1792 = vmatpush1.bf16.msra.mxu0 0
        %1793 = vmatprep.mubr.bf16.mxu0 0
        %1794 = vmatmul.mubr.bf16.gmra.mrb[0].mxu0 %v1750
        %v1795 = vpop.f32.mrb[0].mxu0
        %v1796 = vadd.f32 0.0, %v1795
        %v1797 = vpop.f32.mrb[0].mxu0
        %v1798 = vpop.f32.mrb[0].mxu0
        %v1799 = vadd.f32 0.0, %v1798
        %v1800 = vpop.f32.mrb[0].mxu0
        %1801 = vmatprep.mubr.bf16.mxu0 0
        %1802 = vmatmul.mubr.bf16.gmra.mrb[0].mxu0 %v1753
        %v1803 = vpop.f32.mrb[0].mxu0
        %v1804 = vadd.f32 0.0, %v1803
        %v1805 = vpop.f32.mrb[0].mxu0
        %v1806 = vpop.f32.mrb[0].mxu0
        %v1807 = vadd.f32 0.0, %v1806
        %v1808 = vpop.f32.mrb[0].mxu0
        %1809 = vmatprep.mubr.bf16.mxu0 0
        %1810 = vmatmul.mubr.bf16.gmra.mrb[0].mxu0 %v1756
        %v1811 = vpop.f32.mrb[0].mxu0
        %v1812 = vadd.f32 0.0, %v1811
        %v1813 = vpop.f32.mrb[0].mxu0
        %v1814 = vpop.f32.mrb[0].mxu0
        %v1815 = vadd.f32 0.0, %v1814
        %v1816 = vpop.f32.mrb[0].mxu0
        %1817 = vmatprep.mubr.bf16.mxu0 0
        %1818 = vmatmul.mubr.bf16.gmra.mrb[0].mxu0 %v1759
        %v1819 = vpop.f32.mrb[0].mxu0
        %v1820 = vadd.f32 0.0, %v1819
        %v1821 = vpop.f32.mrb[0].mxu0
        %v1822 = vpop.f32.mrb[0].mxu0
        %v1823 = vadd.f32 0.0, %v1822
        %v1824 = vpop.f32.mrb[0].mxu0
        %1825 = vdwg.mxu0
        %v1826 = vadd.f32 %v1682, %v1796
        %v1827 = vadd.f32 %v1685, %v1799
        %v1828 = vadd.f32 %v1690, %v1804
        %v1829 = vadd.f32 %v1693, %v1807
        %v1830 = vadd.f32 %v1698, %v1812
        %v1831 = vadd.f32 %v1701, %v1815
        %v1832 = vadd.f32 %v1706, %v1820
        %v1833 = vadd.f32 %v1709, %v1823
        %s1834 = scalar_lea.vmem [#allocation11], 64
        %v1835 = vld [vmem:[%s1834] sm:$0xff]
        %v1836 = vld [vmem:[%s1834 + $0x8] sm:$0xff]
        %v1837 = vld [vmem:[%s1834 + $0x10] sm:$0xff]
        %v1838 = vld [vmem:[%s1834 + $0x18] sm:$0xff]
        %v1839 = vld [vmem:[%s1834 + $0x20] sm:$0xff]
        %v1840 = vld [vmem:[%s1834 + $0x28] sm:$0xff]
        %v1841 = vld [vmem:[%s1834 + $0x30] sm:$0xff]
        %v1842 = vld [vmem:[%s1834 + $0x38] sm:$0xff]
        %1844 = vset.pattern.permute.xlu0 0
        %1845 = vperm.xlu0 %1844, %v1835
        %v1846 = vpop.permute.xlu0 %1845
        %1849 = vset.pattern.permute.xlu0 0
        %1850 = vperm.xlu0 %1849, %v1836
        %v1851 = vpop.permute.xlu0 %1850
        %1854 = vset.pattern.permute.xlu0 0
        %1855 = vperm.xlu0 %1854, %v1837
        %v1856 = vpop.permute.xlu0 %1855
        %1859 = vset.pattern.permute.xlu0 0
        %1860 = vperm.xlu0 %1859, %v1838
        %v1861 = vpop.permute.xlu0 %1860
        %1864 = vset.pattern.permute.xlu0 0
        %1865 = vperm.xlu0 %1864, %v1839
        %v1866 = vpop.permute.xlu0 %1865
        %1869 = vset.pattern.permute.xlu0 0
        %1870 = vperm.xlu0 %1869, %v1840
        %v1871 = vpop.permute.xlu0 %1870
        %1874 = vset.pattern.permute.xlu0 0
        %1875 = vperm.xlu0 %1874, %v1841
        %v1876 = vpop.permute.xlu0 %1875
        %1879 = vset.pattern.permute.xlu0 0
        %1880 = vperm.xlu0 %1879, %v1842
        %v1881 = vpop.permute.xlu0 %1880
        %v1883 = vmul.f32 %v1826, %v1846
        %v1884 = vmul.f32 %v1827, %v1851
        %v1885 = vmul.f32 %v1828, %v1856
        %v1886 = vmul.f32 %v1829, %v1861
        %v1887 = vmul.f32 %v1830, %v1866
        %v1888 = vmul.f32 %v1831, %v1871
        %v1889 = vmul.f32 %v1832, %v1876
        %v1890 = vmul.f32 %v1833, %v1881
        %s1891 = scalar_lea.vmem [#allocation13], 64
        %v1892 = vld [vmem:[%s1891] sm:$0xff]
        %v1893 = vld [vmem:[%s1891 + $0x8] sm:$0xff]
        %v1894 = vld [vmem:[%s1891 + $0x10] sm:$0xff]
        %v1895 = vld [vmem:[%s1891 + $0x18] sm:$0xff]
        %v1896 = vld [vmem:[%s1891 + $0x20] sm:$0xff]
        %v1897 = vld [vmem:[%s1891 + $0x28] sm:$0xff]
        %v1898 = vld [vmem:[%s1891 + $0x30] sm:$0xff]
        %v1899 = vld [vmem:[%s1891 + $0x38] sm:$0xff]
        %1901 = vset.pattern.permute.xlu0 0
        %1902 = vperm.xlu0 %1901, %v1892
        %v1903 = vpop.permute.xlu0 %1902
        %1906 = vset.pattern.permute.xlu0 0
        %1907 = vperm.xlu0 %1906, %v1893
        %v1908 = vpop.permute.xlu0 %1907
        %1911 = vset.pattern.permute.xlu0 0
        %1912 = vperm.xlu0 %1911, %v1894
        %v1913 = vpop.permute.xlu0 %1912
        %1916 = vset.pattern.permute.xlu0 0
        %1917 = vperm.xlu0 %1916, %v1895
        %v1918 = vpop.permute.xlu0 %1917
        %1921 = vset.pattern.permute.xlu0 0
        %1922 = vperm.xlu0 %1921, %v1896
        %v1923 = vpop.permute.xlu0 %1922
        %1926 = vset.pattern.permute.xlu0 0
        %1927 = vperm.xlu0 %1926, %v1897
        %v1928 = vpop.permute.xlu0 %1927
        %1931 = vset.pattern.permute.xlu0 0
        %1932 = vperm.xlu0 %1931, %v1898
        %v1933 = vpop.permute.xlu0 %1932
        %1936 = vset.pattern.permute.xlu0 0
        %1937 = vperm.xlu0 %1936, %v1899
        %v1938 = vpop.permute.xlu0 %1937
        %v1940 = vadd.f32 %v1883, %v1903
        %v1941 = vadd.f32 %v1884, %v1908
        %v1942 = vadd.f32 %v1885, %v1913
        %v1943 = vadd.f32 %v1886, %v1918
        %v1944 = vadd.f32 %v1887, %v1923
        %v1945 = vadd.f32 %v1888, %v1928
        %v1946 = vadd.f32 %v1889, %v1933
        %v1947 = vadd.f32 %v1890, %v1938
        %v1948 = vtanh.pop %v1940
        %v1949 = vtanh.pop %v1941
        %v1950 = vtanh.pop %v1942
        %v1951 = vtanh.pop %v1943
        %v1952 = vxor.u32 %v1944, 2147483648
        %v1953 = vxor.u32 %v1945, 2147483648
        %v1954 = vxor.u32 %v1946, 2147483648
        %v1955 = vxor.u32 %v1947, 2147483648
        %v1956 = vmul.f32 %v1952, 1.442695
        %v1957 = vpow.pop %v1956
        %v1958 = vmul.f32 %v1953, 1.442695
        %v1959 = vpow.pop %v1958
        %v1960 = vmul.f32 %v1954, 1.442695
        %v1961 = vpow.pop %v1960
        %v1962 = vmul.f32 %v1955, 1.442695
        %v1963 = vpow.pop %v1962
        %v1964 = vadd.f32 %v1957, 1.0
        %v1965 = vadd.f32 %v1959, 1.0
        %v1966 = vadd.f32 %v1961, 1.0
        %v1967 = vadd.f32 %v1963, 1.0
        %v1968 = vrcp.pop %v1964
        %v1969 = vmul.f32 1.0, %v1968
        %v1970 = vrcp.pop %v1965
        %v1971 = vmul.f32 1.0, %v1970
        %v1972 = vrcp.pop %v1966
        %v1973 = vmul.f32 1.0, %v1972
        %v1974 = vrcp.pop %v1967
        %v1975 = vmul.f32 1.0, %v1974
        %v1976 = vmul.f32 %v1948, %v1969
        %v1977 = vmul.f32 %v1949, %v1971
        %v1978 = vmul.f32 %v1950, %v1973
        %v1979 = vmul.f32 %v1951, %v1975
        %v1980 = vmul.f32 %v1976, %v454
        %v1981 = vmul.f32 %v1977, %v454
        %v1982 = vmul.f32 %v1978, %v454
        %v1983 = vmul.f32 %v1979, %v454
        %v1984 = vpack.c.bf16 %v1981, %v1980
        %v1985 = vpack.c.bf16 %v1983, %v1982
        %s1986 = scalar_lea.vmem [#allocation14], 24
        %v1987 = vld [vmem:[%s1986] sm:$0xf]
        %v1988 = vld [vmem:[%s1986 + $0x4] sm:$0xf]
        %v1989 = vld [vmem:[%s1986 + $0x8] sm:$0xf]
        %v1990 = vld [vmem:[%s1986 + $0xc] sm:$0xf]
        %v1991 = vld [vmem:[%s1986 + $0x10] sm:$0xf]
        %v1992 = vld [vmem:[%s1986 + $0x14] sm:$0xf]
        %s1993 = scalar_lea.vmem [#allocation16], 48
        %v1994 = vld [vmem:[%s1993] sm:$0xff]
        %v1995 = vld [vmem:[%s1993 + $0x8] sm:$0xff]
        %v1996 = vld [vmem:[%s1993 + $0x10] sm:$0xff]
        %v1997 = vld [vmem:[%s1993 + $0x18] sm:$0xff]
        %v1998 = vld [vmem:[%s1993 + $0x20] sm:$0xff]
        %v1999 = vld [vmem:[%s1993 + $0x28] sm:$0xff]
        %2001 = vset.pattern.permute.xlu0 0
        %2002 = vperm.xlu0 %2001, %v1994
        %v2003 = vpop.permute.xlu0 %2002
        %2006 = vset.pattern.permute.xlu0 0
        %2007 = vperm.xlu0 %2006, %v1995
        %v2008 = vpop.permute.xlu0 %2007
        %2011 = vset.pattern.permute.xlu0 0
        %2012 = vperm.xlu0 %2011, %v1996
        %v2013 = vpop.permute.xlu0 %2012
        %2016 = vset.pattern.permute.xlu0 0
        %2017 = vperm.xlu0 %2016, %v1997
        %v2018 = vpop.permute.xlu0 %2017
        %2021 = vset.pattern.permute.xlu0 0
        %2022 = vperm.xlu0 %2021, %v1998
        %v2023 = vpop.permute.xlu0 %2022
        %2026 = vset.pattern.permute.xlu0 0
        %2027 = vperm.xlu0 %2026, %v1999
        %v2028 = vpop.permute.xlu0 %2027
        %v2036 = vunpack.c.l.b16 %v1987
        %v2037 = vunpack.c.l.b16 %v1988
        %v2038 = vunpack.c.l.b16 %v1989
        %v2039 = vunpack.c.l.b16 %v1990
        %v2040 = vunpack.c.l.b16 %v1991
        %v2041 = vunpack.c.l.b16 %v1992
        %v2042 = vpack.c.b16 %v2037, %v2036
        %v2043 = vpack.c.b16 %v2039, %v2038
        %v2044 = vpack.c.b16 %v2041, %v2040
        %v2046 = vsel %vm1041, %v2042, 0
        %v2049 = vsel %vm1041, %v2043, 0
        %v2052 = vsel %vm1041, %v2044, 0
        %2054 = vmatprep.subr.bf16.mxu0 0
        %2055 = vmatpush1.bf16.msra.mxu0 %v1984
        %2056 = vmatprep.subr.bf16.mxu0 0
        %2057 = vmatpush1.bf16.msra.mxu0 %v1985
        %2058 = vmatprep.subr.bf16.mxu0 0
        %2059 = vmatpush1.bf16.msra.mxu0 0
        %2060 = vmatprep.subr.bf16.mxu0 0
        %2061 = vmatpush1.bf16.msra.mxu0 0
        %2062 = vmatprep.subr.bf16.mxu0 0
        %2063 = vmatpush1.bf16.msra.mxu0 0
        %2064 = vmatprep.subr.bf16.mxu0 0
        %2065 = vmatpush1.bf16.msra.mxu0 0
        %2066 = vmatprep.subr.bf16.mxu0 0
        %2067 = vmatpush1.bf16.msra.mxu0 0
        %2068 = vmatprep.subr.bf16.mxu0 0
        %2069 = vmatpush1.bf16.msra.mxu0 0
        %2070 = vmatprep.subr.bf16.mxu0 0
        %2071 = vmatpush1.bf16.msra.mxu0 0
        %2072 = vmatprep.subr.bf16.mxu0 0
        %2073 = vmatpush1.bf16.msra.mxu0 0
        %2074 = vmatprep.subr.bf16.mxu0 0
        %2075 = vmatpush1.bf16.msra.mxu0 0
        %2076 = vmatprep.subr.bf16.mxu0 0
        %2077 = vmatpush1.bf16.msra.mxu0 0
        %2078 = vmatprep.subr.bf16.mxu0 0
        %2079 = vmatpush1.bf16.msra.mxu0 0
        %2080 = vmatprep.subr.bf16.mxu0 0
        %2081 = vmatpush1.bf16.msra.mxu0 0
        %2082 = vmatprep.subr.bf16.mxu0 0
        %2083 = vmatpush1.bf16.msra.mxu0 0
        %2084 = vmatprep.subr.bf16.mxu0 0
        %2085 = vmatpush1.bf16.msra.mxu0 0
        %2086 = vmatprep.mubr.bf16.mxu0 0
        %2087 = vmatmul.mubr.bf16.gmra.mrb[0].mxu0 %v2046
        %v2088 = vpop.f32.mrb[0].mxu0
        %v2089 = vadd.f32 %v2003, %v2088
        %v2090 = vpop.f32.mrb[0].mxu0
        %v2091 = vpop.f32.mrb[0].mxu0
        %v2092 = vadd.f32 %v2008, %v2091
        %v2093 = vpop.f32.mrb[0].mxu0
        %2094 = vmatprep.mubr.bf16.mxu0 0
        %2095 = vmatmul.mubr.bf16.gmra.mrb[0].mxu0 %v2049
        %v2096 = vpop.f32.mrb[0].mxu0
        %v2097 = vadd.f32 %v2013, %v2096
        %v2098 = vpop.f32.mrb[0].mxu0
        %v2099 = vpop.f32.mrb[0].mxu0
        %v2100 = vadd.f32 %v2018, %v2099
        %v2101 = vpop.f32.mrb[0].mxu0
        %2102 = vmatprep.mubr.bf16.mxu0 0
        %2103 = vmatmul.mubr.bf16.gmra.mrb[0].mxu0 %v2052
        %v2104 = vpop.f32.mrb[0].mxu0
        %v2105 = vadd.f32 %v2023, %v2104
        %v2106 = vpop.f32.mrb[0].mxu0
        %v2107 = vpop.f32.mrb[0].mxu0
        %v2108 = vadd.f32 %v2028, %v2107
        %v2109 = vpop.f32.mrb[0].mxu0
        %2110 = vdwg.mxu0
        %v2111 = vmul.f32 %v2097, %v454
        %v2112 = vmul.f32 %v2100, %v454
        %v2113 = vmul.f32 %v2105, %v454
        %v2114 = vmul.f32 %v2108, %v454
        %v2115 = vpack.c.bf16 %v2089, %v2089
        %v2116 = vpack.c.bf16 %v2092, %v2092
        %2117 = vxpose.xlu0.c.b16.start [1/8] %v2115, 128
        %2118 = vxpose.xlu0.c.b16.cont [2/8] 0, 128
        %2119 = vxpose.xlu0.c.b16.cont [3/8] 0, 128
        %2120 = vxpose.xlu0.c.b16.cont [4/8] 0, 128
        %2121 = vxpose.xlu0.c.b16.cont [5/8] 0, 128
        %2122 = vxpose.xlu0.c.b16.cont [6/8] 0, 128
        %2123 = vxpose.xlu0.c.b16.cont [7/8] 0, 128
        %2124 = vxpose.xlu0.c.b16.end [8/8] 0, 128
        %v2125 = vpop.trf.xlu0
        %v2126 = vpop.trf.xlu0
        %v2127 = vpop.trf.xlu0
        %v2128 = vpop.trf.xlu0
        %v2129 = vpop.trf.xlu0
        %v2130 = vpop.trf.xlu0
        %v2131 = vpop.trf.xlu0
        %v2132 = vpop.trf.xlu0
        %v2134 = vsel %vm1130, %v2125, 0
        %v2137 = vsel %vm1130, %v2126, 0
        %v2140 = vsel %vm1130, %v2127, 0
        %v2143 = vsel %vm1130, %v2128, 0
        %v2146 = vsel %vm1130, %v2129, 0
        %v2149 = vsel %vm1130, %v2130, 0
        %v2152 = vsel %vm1130, %v2131, 0
        %v2155 = vsel %vm1130, %v2132, 0
        %v2158 = vsel %vm1155, %v2116, 0
        %2160 = vmatprep.subr.bf16.mxu0 0
        %2161 = vmatpush1.bf16.msra.mxu0 %v2158
        %2162 = vmatprep.subr.bf16.mxu0 0
        %2163 = vmatpush1.bf16.msra.mxu0 0
        %2164 = vmatprep.subr.bf16.mxu0 0
        %2165 = vmatpush1.bf16.msra.mxu0 0
        %2166 = vmatprep.subr.bf16.mxu0 0
        %2167 = vmatpush1.bf16.msra.mxu0 0
        %2168 = vmatprep.subr.bf16.mxu0 0
        %2169 = vmatpush1.bf16.msra.mxu0 0
        %2170 = vmatprep.subr.bf16.mxu0 0
        %2171 = vmatpush1.bf16.msra.mxu0 0
        %2172 = vmatprep.subr.bf16.mxu0 0
        %2173 = vmatpush1.bf16.msra.mxu0 0
        %2174 = vmatprep.subr.bf16.mxu0 0
        %2175 = vmatpush1.bf16.msra.mxu0 0
        %2176 = vmatprep.subr.bf16.mxu0 0
        %2177 = vmatpush1.bf16.msra.mxu0 0
        %2178 = vmatprep.subr.bf16.mxu0 0
        %2179 = vmatpush1.bf16.msra.mxu0 0
        %2180 = vmatprep.subr.bf16.mxu0 0
        %2181 = vmatpush1.bf16.msra.mxu0 0
        %2182 = vmatprep.subr.bf16.mxu0 0
        %2183 = vmatpush1.bf16.msra.mxu0 0
        %2184 = vmatprep.subr.bf16.mxu0 0
        %2185 = vmatpush1.bf16.msra.mxu0 0
        %2186 = vmatprep.subr.bf16.mxu0 0
        %2187 = vmatpush1.bf16.msra.mxu0 0
        %2188 = vmatprep.subr.bf16.mxu0 0
        %2189 = vmatpush1.bf16.msra.mxu0 0
        %2190 = vmatprep.subr.bf16.mxu0 0
        %2191 = vmatpush1.bf16.msra.mxu0 0
        %2192 = vmatprep.mubr.bf16.mxu0 0
        %2193 = vmatmul.mubr.bf16.gmra.mrb[0].mxu0 %v2134
        %v2194 = vpop.f32.mrb[0].mxu0
        %v2195 = vadd.f32 %v455, %v2194
        %v2196 = vpop.f32.mrb[0].mxu0
        %v2197 = vpop.f32.mrb[0].mxu0
        %v2198 = vadd.f32 %v455, %v2197
        %v2199 = vpop.f32.mrb[0].mxu0
        %2200 = vmatprep.mubr.bf16.mxu0 0
        %2201 = vmatmul.mubr.bf16.gmra.mrb[0].mxu0 %v2137
        %v2202 = vpop.f32.mrb[0].mxu0
        %v2203 = vadd.f32 %v455, %v2202
        %v2204 = vpop.f32.mrb[0].mxu0
        %v2205 = vpop.f32.mrb[0].mxu0
        %v2206 = vadd.f32 %v455, %v2205
        %v2207 = vpop.f32.mrb[0].mxu0
        %2208 = vmatprep.mubr.bf16.mxu0 0
        %2209 = vmatmul.mubr.bf16.gmra.mrb[0].mxu0 %v2140
        %v2210 = vpop.f32.mrb[0].mxu0
        %v2211 = vadd.f32 %v455, %v2210
        %v2212 = vpop.f32.mrb[0].mxu0
        %v2213 = vpop.f32.mrb[0].mxu0
        %v2214 = vadd.f32 %v455, %v2213
        %v2215 = vpop.f32.mrb[0].mxu0
        %2216 = vmatprep.mubr.bf16.mxu0 0
        %2217 = vmatmul.mubr.bf16.gmra.mrb[0].mxu0 %v2143
        %v2218 = vpop.f32.mrb[0].mxu0
        %v2219 = vadd.f32 %v455, %v2218
        %v2220 = vpop.f32.mrb[0].mxu0
        %v2221 = vpop.f32.mrb[0].mxu0
        %v2222 = vadd.f32 %v455, %v2221
        %v2223 = vpop.f32.mrb[0].mxu0
        %2224 = vmatprep.mubr.bf16.mxu0 0
        %2225 = vmatmul.mubr.bf16.gmra.mrb[0].mxu0 %v2146
        %v2226 = vpop.f32.mrb[0].mxu0
        %v2227 = vadd.f32 %v455, %v2226
        %v2228 = vpop.f32.mrb[0].mxu0
        %v2229 = vpop.f32.mrb[0].mxu0
        %v2230 = vadd.f32 %v455, %v2229
        %v2231 = vpop.f32.mrb[0].mxu0
        %2232 = vmatprep.mubr.bf16.mxu0 0
        %2233 = vmatmul.mubr.bf16.gmra.mrb[0].mxu0 %v2149
        %v2234 = vpop.f32.mrb[0].mxu0
        %v2235 = vadd.f32 %v455, %v2234
        %v2236 = vpop.f32.mrb[0].mxu0
        %v2237 = vpop.f32.mrb[0].mxu0
        %v2238 = vadd.f32 %v455, %v2237
        %v2239 = vpop.f32.mrb[0].mxu0
        %2240 = vmatprep.mubr.bf16.mxu0 0
        %2241 = vmatmul.mubr.bf16.gmra.mrb[0].mxu0 %v2152
        %v2242 = vpop.f32.mrb[0].mxu0
        %v2243 = vadd.f32 %v455, %v2242
        %v2244 = vpop.f32.mrb[0].mxu0
        %v2245 = vpop.f32.mrb[0].mxu0
        %v2246 = vadd.f32 %v455, %v2245
        %v2247 = vpop.f32.mrb[0].mxu0
        %2248 = vmatprep.mubr.bf16.mxu0 0
        %2249 = vmatmul.mubr.bf16.gmra.mrb[0].mxu0 %v2155
        %v2250 = vpop.f32.mrb[0].mxu0
        %v2251 = vadd.f32 %v455, %v2250
        %v2252 = vpop.f32.mrb[0].mxu0
        %v2253 = vpop.f32.mrb[0].mxu0
        %v2254 = vadd.f32 %v455, %v2253
        %v2255 = vpop.f32.mrb[0].mxu0
        %2256 = vdwg.mxu0
        %2257 = vmax.xlane.f32.xlu0 %v2195
        %v2258 = vpop.xlane.xlu0 %2257
        %2259 = vmax.xlane.f32.xlu0 %v2198
        %v2260 = vpop.xlane.xlu0 %2259
        %2261 = vmax.xlane.f32.xlu0 %v2203
        %v2262 = vpop.xlane.xlu0 %2261
        %2263 = vmax.xlane.f32.xlu0 %v2206
        %v2264 = vpop.xlane.xlu0 %2263
        %2265 = vmax.xlane.f32.xlu0 %v2211
        %v2266 = vpop.xlane.xlu0 %2265
        %2267 = vmax.xlane.f32.xlu0 %v2214
        %v2268 = vpop.xlane.xlu0 %2267
        %2269 = vmax.xlane.f32.xlu0 %v2219
        %v2270 = vpop.xlane.xlu0 %2269
        %2271 = vmax.xlane.f32.xlu0 %v2222
        %v2272 = vpop.xlane.xlu0 %2271
        %2273 = vmax.xlane.f32.xlu0 %v2227
        %v2274 = vpop.xlane.xlu0 %2273
        %2275 = vmax.xlane.f32.xlu0 %v2230
        %v2276 = vpop.xlane.xlu0 %2275
        %2277 = vmax.xlane.f32.xlu0 %v2235
        %v2278 = vpop.xlane.xlu0 %2277
        %2279 = vmax.xlane.f32.xlu0 %v2238
        %v2280 = vpop.xlane.xlu0 %2279
        %2281 = vmax.xlane.f32.xlu0 %v2243
        %v2282 = vpop.xlane.xlu0 %2281
        %2283 = vmax.xlane.f32.xlu0 %v2246
        %v2284 = vpop.xlane.xlu0 %2283
        %2285 = vmax.xlane.f32.xlu0 %v2251
        %v2286 = vpop.xlane.xlu0 %2285
        %2287 = vmax.xlane.f32.xlu0 %v2254
        %v2288 = vpop.xlane.xlu0 %2287
        %v2289 = vsub.f32 %v2195, %v2258
        %v2290 = vsub.f32 %v2198, %v2260
        %v2291 = vsub.f32 %v2203, %v2262
        %v2292 = vsub.f32 %v2206, %v2264
        %v2293 = vsub.f32 %v2211, %v2266
        %v2294 = vsub.f32 %v2214, %v2268
        %v2295 = vsub.f32 %v2219, %v2270
        %v2296 = vsub.f32 %v2222, %v2272
        %v2297 = vsub.f32 %v2227, %v2274
        %v2298 = vsub.f32 %v2230, %v2276
        %v2299 = vsub.f32 %v2235, %v2278
        %v2300 = vsub.f32 %v2238, %v2280
        %v2301 = vsub.f32 %v2243, %v2282
        %v2302 = vsub.f32 %v2246, %v2284
        %v2303 = vsub.f32 %v2251, %v2286
        %v2304 = vsub.f32 %v2254, %v2288
        %v2305 = vmul.f32 %v2289, 1.442695
        %v2306 = vpow.pop %v2305
        %v2307 = vmul.f32 %v2290, 1.442695
        %v2308 = vpow.pop %v2307
        %v2309 = vmul.f32 %v2291, 1.442695
        %v2310 = vpow.pop %v2309
        %v2311 = vmul.f32 %v2292, 1.442695
        %v2312 = vpow.pop %v2311
        %v2313 = vmul.f32 %v2293, 1.442695
        %v2314 = vpow.pop %v2313
        %v2315 = vmul.f32 %v2294, 1.442695
        %v2316 = vpow.pop %v2315
        %v2317 = vmul.f32 %v2295, 1.442695
        %v2318 = vpow.pop %v2317
        %v2319 = vmul.f32 %v2296, 1.442695
        %v2320 = vpow.pop %v2319
        %v2321 = vmul.f32 %v2297, 1.442695
        %v2322 = vpow.pop %v2321
        %v2323 = vmul.f32 %v2298, 1.442695
        %v2324 = vpow.pop %v2323
        %v2325 = vmul.f32 %v2299, 1.442695
        %v2326 = vpow.pop %v2325
        %v2327 = vmul.f32 %v2300, 1.442695
        %v2328 = vpow.pop %v2327
        %v2329 = vmul.f32 %v2301, 1.442695
        %v2330 = vpow.pop %v2329
        %v2331 = vmul.f32 %v2302, 1.442695
        %v2332 = vpow.pop %v2331
        %v2333 = vmul.f32 %v2303, 1.442695
        %v2334 = vpow.pop %v2333
        %v2335 = vmul.f32 %v2304, 1.442695
        %v2336 = vpow.pop %v2335
        %2337 = vadd.xlane.f32.xlu0 %v2306
        %v2338 = vpop.xlane.xlu0 %2337
        %2339 = vadd.xlane.f32.xlu0 %v2308
        %v2340 = vpop.xlane.xlu0 %2339
        %2341 = vadd.xlane.f32.xlu0 %v2310
        %v2342 = vpop.xlane.xlu0 %2341
        %2343 = vadd.xlane.f32.xlu0 %v2312
        %v2344 = vpop.xlane.xlu0 %2343
        %2345 = vadd.xlane.f32.xlu0 %v2314
        %v2346 = vpop.xlane.xlu0 %2345
        %2347 = vadd.xlane.f32.xlu0 %v2316
        %v2348 = vpop.xlane.xlu0 %2347
        %2349 = vadd.xlane.f32.xlu0 %v2318
        %v2350 = vpop.xlane.xlu0 %2349
        %2351 = vadd.xlane.f32.xlu0 %v2320
        %v2352 = vpop.xlane.xlu0 %2351
        %2353 = vadd.xlane.f32.xlu0 %v2322
        %v2354 = vpop.xlane.xlu0 %2353
        %2355 = vadd.xlane.f32.xlu0 %v2324
        %v2356 = vpop.xlane.xlu0 %2355
        %2357 = vadd.xlane.f32.xlu0 %v2326
        %v2358 = vpop.xlane.xlu0 %2357
        %2359 = vadd.xlane.f32.xlu0 %v2328
        %v2360 = vpop.xlane.xlu0 %2359
        %2361 = vadd.xlane.f32.xlu0 %v2330
        %v2362 = vpop.xlane.xlu0 %2361
        %2363 = vadd.xlane.f32.xlu0 %v2332
        %v2364 = vpop.xlane.xlu0 %2363
        %2365 = vadd.xlane.f32.xlu0 %v2334
        %v2366 = vpop.xlane.xlu0 %2365
        %2367 = vadd.xlane.f32.xlu0 %v2336
        %v2368 = vpop.xlane.xlu0 %2367
        %v2369 = vrcp.pop %v2338
        %v2370 = vrcp.pop %v2340
        %v2371 = vrcp.pop %v2342
        %v2372 = vrcp.pop %v2344
        %v2373 = vrcp.pop %v2346
        %v2374 = vrcp.pop %v2348
        %v2375 = vrcp.pop %v2350
        %v2376 = vrcp.pop %v2352
        %v2377 = vrcp.pop %v2354
        %v2378 = vrcp.pop %v2356
        %v2379 = vrcp.pop %v2358
        %v2380 = vrcp.pop %v2360
        %v2381 = vrcp.pop %v2362
        %v2382 = vrcp.pop %v2364
        %v2383 = vrcp.pop %v2366
        %v2384 = vrcp.pop %v2368
        %v2385 = vmul.f32 %v2306, %v2369
        %v2386 = vmul.f32 %v2308, %v2370
        %v2387 = vmul.f32 %v2310, %v2371
        %v2388 = vmul.f32 %v2312, %v2372
        %v2389 = vmul.f32 %v2314, %v2373
        %v2390 = vmul.f32 %v2316, %v2374
        %v2391 = vmul.f32 %v2318, %v2375
        %v2392 = vmul.f32 %v2320, %v2376
        %v2393 = vmul.f32 %v2322, %v2377
        %v2394 = vmul.f32 %v2324, %v2378
        %v2395 = vmul.f32 %v2326, %v2379
        %v2396 = vmul.f32 %v2328, %v2380
        %v2397 = vmul.f32 %v2330, %v2381
        %v2398 = vmul.f32 %v2332, %v2382
        %v2399 = vmul.f32 %v2334, %v2383
        %v2400 = vmul.f32 %v2336, %v2384
        %v2401 = vpack.c.bf16 %v2112, %v2111
        %v2402 = vpack.c.bf16 %v2114, %v2113
        %v2403 = vpack.c.bf16 %v2386, %v2385
        %v2404 = vpack.c.bf16 %v2388, %v2387
        %v2405 = vpack.c.bf16 %v2390, %v2389
        %v2406 = vpack.c.bf16 %v2392, %v2391
        %v2407 = vpack.c.bf16 %v2394, %v2393
        %v2408 = vpack.c.bf16 %v2396, %v2395
        %v2409 = vpack.c.bf16 %v2398, %v2397
        %v2410 = vpack.c.bf16 %v2400, %v2399
        %2411 = vmatprep.subr.bf16.mxu0 0
        %2412 = vmatpush1.bf16.msra.mxu0 %v2403
        %2413 = vmatprep.subr.bf16.mxu0 0
        %2414 = vmatpush1.bf16.msra.mxu0 %v2404
        %2415 = vmatprep.subr.bf16.mxu0 0
        %2416 = vmatpush1.bf16.msra.mxu0 %v2405
        %2417 = vmatprep.subr.bf16.mxu0 0
        %2418 = vmatpush1.bf16.msra.mxu0 %v2406
        %2419 = vmatprep.subr.bf16.mxu0 0
        %2420 = vmatpush1.bf16.msra.mxu0 %v2407
        %2421 = vmatprep.subr.bf16.mxu0 0
        %2422 = vmatpush1.bf16.msra.mxu0 %v2408
        %2423 = vmatprep.subr.bf16.mxu0 0
        %2424 = vmatpush1.bf16.msra.mxu0 %v2409
        %2425 = vmatprep.subr.bf16.mxu0 0
        %2426 = vmatpush1.bf16.msra.mxu0 %v2410
        %2427 = vmatprep.subr.bf16.mxu0 0
        %2428 = vmatpush1.bf16.msra.mxu0 0
        %2429 = vmatprep.subr.bf16.mxu0 0
        %2430 = vmatpush1.bf16.msra.mxu0 0
        %2431 = vmatprep.subr.bf16.mxu0 0
        %2432 = vmatpush1.bf16.msra.mxu0 0
        %2433 = vmatprep.subr.bf16.mxu0 0
        %2434 = vmatpush1.bf16.msra.mxu0 0
        %2435 = vmatprep.subr.bf16.mxu0 0
        %2436 = vmatpush1.bf16.msra.mxu0 0
        %2437 = vmatprep.subr.bf16.mxu0 0
        %2438 = vmatpush1.bf16.msra.mxu0 0
        %2439 = vmatprep.subr.bf16.mxu0 0
        %2440 = vmatpush1.bf16.msra.mxu0 0
        %2441 = vmatprep.subr.bf16.mxu0 0
        %2442 = vmatpush1.bf16.msra.mxu0 0
        %2443 = vmatprep.mubr.bf16.mxu0 0
        %2444 = vmatmul.mubr.bf16.gmra.mrb[0].mxu0 %v2401
        %v2445 = vpop.f32.mrb[0].mxu0
        %v2446 = vadd.f32 %v1980, %v2445
        %v2447 = vpop.f32.mrb[0].mxu0
        %v2448 = vpop.f32.mrb[0].mxu0
        %v2449 = vadd.f32 %v1981, %v2448
        %v2450 = vpop.f32.mrb[0].mxu0
        %2451 = vmatprep.mubr.bf16.mxu0 0
        %2452 = vmatmul.mubr.bf16.gmra.mrb[0].mxu0 %v2402
        %v2453 = vpop.f32.mrb[0].mxu0
        %v2454 = vadd.f32 %v1982, %v2453
        %v2455 = vpop.f32.mrb[0].mxu0
        %v2456 = vpop.f32.mrb[0].mxu0
        %v2457 = vadd.f32 %v1983, %v2456
        %v2458 = vpop.f32.mrb[0].mxu0
        %2459 = vdwg.mxu0
        %v2460 = vmul.f32 %v2446, %v454
        %v2461 = vmul.f32 %v2449, %v454
        %v2462 = vmul.f32 %v2454, %v454
        %v2463 = vmul.f32 %v2457, %v454
        %v2464 = vpack.c.bf16 %v2461, %v2460
        %v2465 = vpack.c.bf16 %v2463, %v2462
        %2466 = vst [vmem:[#allocation3 + $0x8] sm:$0xff] %v2464
        %2467 = vst [vmem:[#allocation3 + $0x20] sm:$0xff] %v2465
        %s2468 = scalar_lea.vmem [#allocation10], 96
        %v2469 = vld [vmem:[%s2468] sm:$0xf]
        %v2470 = vld [vmem:[%s2468 + $0x4] sm:$0xf]
        %v2471 = vld [vmem:[%s2468 + $0x8] sm:$0xf]
        %v2472 = vld [vmem:[%s2468 + $0xc] sm:$0xf]
        %v2473 = vld [vmem:[%s2468 + $0x10] sm:$0xf]
        %v2474 = vld [vmem:[%s2468 + $0x14] sm:$0xf]
        %v2475 = vld [vmem:[%s2468 + $0x18] sm:$0xf]
        %v2476 = vld [vmem:[%s2468 + $0x1c] sm:$0xf]
        %s2477 = scalar_lea.vmem [#allocation10], 128
        %v2478 = vld [vmem:[%s2477] sm:$0xf]
        %v2479 = vld [vmem:[%s2477 + $0x4] sm:$0xf]
        %v2480 = vld [vmem:[%s2477 + $0x8] sm:$0xf]
        %v2481 = vld [vmem:[%s2477 + $0xc] sm:$0xf]
        %v2482 = vld [vmem:[%s2477 + $0x10] sm:$0xf]
        %v2483 = vld [vmem:[%s2477 + $0x14] sm:$0xf]
        %v2484 = vld [vmem:[%s2477 + $0x18] sm:$0xf]
        %v2485 = vld [vmem:[%s2477 + $0x1c] sm:$0xf]
        %s2486 = scalar_lea.vmem [#allocation10], 160
        %v2487 = vld [vmem:[%s2486] sm:$0xf]
        %v2488 = vld [vmem:[%s2486 + $0x4] sm:$0xf]
        %v2489 = vld [vmem:[%s2486 + $0x8] sm:$0xf]
        %v2490 = vld [vmem:[%s2486 + $0xc] sm:$0xf]
        %v2491 = vld [vmem:[%s2486 + $0x10] sm:$0xf]
        %v2492 = vld [vmem:[%s2486 + $0x14] sm:$0xf]
        %v2493 = vld [vmem:[%s2486 + $0x18] sm:$0xf]
        %v2494 = vld [vmem:[%s2486 + $0x1c] sm:$0xf]
        %v2495 = vld [vmem:[#allocation3] sm:$0xff]
        %v2496 = vld [vmem:[#allocation3 + $0x8] sm:$0xff]
        %v2497 = vld [vmem:[#allocation3 + $0x18] sm:$0xff]
        %v2498 = vld [vmem:[#allocation3 + $0x20] sm:$0xff]
        %v2499 = vld [vmem:[#allocation3 + $0x8] sm:$0xff]
        %v2500 = vld [vmem:[#allocation3 + $0x10] sm:$0xff]
        %v2501 = vld [vmem:[#allocation3 + $0x20] sm:$0xff]
        %v2502 = vld [vmem:[#allocation3 + $0x28] sm:$0xff]
        %v2511 = vunpack.c.l.b16 %v2478
        %v2512 = vunpack.c.l.b16 %v2479
        %v2513 = vunpack.c.l.b16 %v2480
        %v2514 = vunpack.c.l.b16 %v2481
        %v2515 = vunpack.c.l.b16 %v2482
        %v2516 = vunpack.c.l.b16 %v2483
        %v2517 = vunpack.c.l.b16 %v2484
        %v2518 = vunpack.c.l.b16 %v2485
        %v2519 = vpack.c.b16 %v2512, %v2511
        %v2520 = vpack.c.b16 %v2514, %v2513
        %v2521 = vpack.c.b16 %v2516, %v2515
        %v2522 = vpack.c.b16 %v2518, %v2517
        %v2524 = vsel %vm1041, %v2519, 0
        %v2527 = vsel %vm1041, %v2520, 0
        %v2530 = vsel %vm1041, %v2521, 0
        %v2533 = vsel %vm1041, %v2522, 0
        %2535 = vmatprep.subr.bf16.mxu0 0
        %2536 = vmatpush1.bf16.msra.mxu0 %v2496
        %2537 = vmatprep.subr.bf16.mxu0 0
        %2538 = vmatpush1.bf16.msra.mxu0 %v2498
        %2539 = vmatprep.subr.bf16.mxu0 0
        %2540 = vmatpush1.bf16.msra.mxu0 0
        %2541 = vmatprep.subr.bf16.mxu0 0
        %2542 = vmatpush1.bf16.msra.mxu0 0
        %2543 = vmatprep.subr.bf16.mxu0 0
        %2544 = vmatpush1.bf16.msra.mxu0 0
        %2545 = vmatprep.subr.bf16.mxu0 0
        %2546 = vmatpush1.bf16.msra.mxu0 0
        %2547 = vmatprep.subr.bf16.mxu0 0
        %2548 = vmatpush1.bf16.msra.mxu0 0
        %2549 = vmatprep.subr.bf16.mxu0 0
        %2550 = vmatpush1.bf16.msra.mxu0 0
        %2551 = vmatprep.subr.bf16.mxu0 0
        %2552 = vmatpush1.bf16.msra.mxu0 0
        %2553 = vmatprep.subr.bf16.mxu0 0
        %2554 = vmatpush1.bf16.msra.mxu0 0
        %2555 = vmatprep.subr.bf16.mxu0 0
        %2556 = vmatpush1.bf16.msra.mxu0 0
        %2557 = vmatprep.subr.bf16.mxu0 0
        %2558 = vmatpush1.bf16.msra.mxu0 0
        %2559 = vmatprep.subr.bf16.mxu0 0
        %2560 = vmatpush1.bf16.msra.mxu0 0
        %2561 = vmatprep.subr.bf16.mxu0 0
        %2562 = vmatpush1.bf16.msra.mxu0 0
        %2563 = vmatprep.subr.bf16.mxu0 0
        %2564 = vmatpush1.bf16.msra.mxu0 0
        %2565 = vmatprep.subr.bf16.mxu0 0
        %2566 = vmatpush1.bf16.msra.mxu0 0
        %2567 = vmatprep.mubr.bf16.mxu0 0
        %2568 = vmatmul.mubr.bf16.gmra.mrb[0].mxu0 %v2524
        %v2569 = vpop.f32.mrb[0].mxu0
        %v2570 = vadd.f32 0.0, %v2569
        %v2571 = vpop.f32.mrb[0].mxu0
        %v2572 = vpop.f32.mrb[0].mxu0
        %v2573 = vadd.f32 0.0, %v2572
        %v2574 = vpop.f32.mrb[0].mxu0
        %2575 = vmatprep.mubr.bf16.mxu0 0
        %2576 = vmatmul.mubr.bf16.gmra.mrb[0].mxu0 %v2527
        %v2577 = vpop.f32.mrb[0].mxu0
        %v2578 = vadd.f32 0.0, %v2577
        %v2579 = vpop.f32.mrb[0].mxu0
        %v2580 = vpop.f32.mrb[0].mxu0
        %v2581 = vadd.f32 0.0, %v2580
        %v2582 = vpop.f32.mrb[0].mxu0
        %2583 = vmatprep.mubr.bf16.mxu0 0
        %2584 = vmatmul.mubr.bf16.gmra.mrb[0].mxu0 %v2530
        %v2585 = vpop.f32.mrb[0].mxu0
        %v2586 = vadd.f32 0.0, %v2585
        %v2587 = vpop.f32.mrb[0].mxu0
        %v2588 = vpop.f32.mrb[0].mxu0
        %v2589 = vadd.f32 0.0, %v2588
        %v2590 = vpop.f32.mrb[0].mxu0
        %2591 = vmatprep.mubr.bf16.mxu0 0
        %2592 = vmatmul.mubr.bf16.gmra.mrb[0].mxu0 %v2533
        %v2593 = vpop.f32.mrb[0].mxu0
        %v2594 = vadd.f32 0.0, %v2593
        %v2595 = vpop.f32.mrb[0].mxu0
        %v2596 = vpop.f32.mrb[0].mxu0
        %v2597 = vadd.f32 0.0, %v2596
        %v2598 = vpop.f32.mrb[0].mxu0
        %2599 = vdwg.mxu0
        %v2608 = vunpack.c.l.b16 %v2469
        %v2609 = vunpack.c.l.b16 %v2470
        %v2610 = vunpack.c.l.b16 %v2471
        %v2611 = vunpack.c.l.b16 %v2472
        %v2612 = vunpack.c.l.b16 %v2473
        %v2613 = vunpack.c.l.b16 %v2474
        %v2614 = vunpack.c.l.b16 %v2475
        %v2615 = vunpack.c.l.b16 %v2476
        %v2616 = vpack.c.b16 %v2609, %v2608
        %v2617 = vpack.c.b16 %v2611, %v2610
        %v2618 = vpack.c.b16 %v2613, %v2612
        %v2619 = vpack.c.b16 %v2615, %v2614
        %2624 = vrot.lane.b32.xlu0 %v2495, 4
        %v2625 = vpop.permute.xlu0 %2624
        %2626 = vrot.lane.b32.xlu0 %v2496, 4
        %v2627 = vpop.permute.xlu0 %2626
        %2628 = vrot.lane.b32.xlu0 %v2497, 4
        %v2629 = vpop.permute.xlu0 %2628
        %2630 = vrot.lane.b32.xlu0 %v2498, 4
        %v2631 = vpop.permute.xlu0 %2630
        %vm2632 = vcmask 31744
        %v2633 = vsel %vm2632, %v2625, %v2627
        %v2634 = vsel %vm2632, %v2629, %v2631
        %v2638 = vsel %vm1041, %v2616, 0
        %v2641 = vsel %vm1041, %v2617, 0
        %v2644 = vsel %vm1041, %v2618, 0
        %v2647 = vsel %vm1041, %v2619, 0
        %2649 = vmatprep.subr.bf16.mxu0 0
        %2650 = vmatpush1.bf16.msra.mxu0 %v2633
        %2651 = vmatprep.subr.bf16.mxu0 0
        %2652 = vmatpush1.bf16.msra.mxu0 %v2634
        %2653 = vmatprep.subr.bf16.mxu0 0
        %2654 = vmatpush1.bf16.msra.mxu0 0
        %2655 = vmatprep.subr.bf16.mxu0 0
        %2656 = vmatpush1.bf16.msra.mxu0 0
        %2657 = vmatprep.subr.bf16.mxu0 0
        %2658 = vmatpush1.bf16.msra.mxu0 0
        %2659 = vmatprep.subr.bf16.mxu0 0
        %2660 = vmatpush1.bf16.msra.mxu0 0
        %2661 = vmatprep.subr.bf16.mxu0 0
        %2662 = vmatpush1.bf16.msra.mxu0 0
        %2663 = vmatprep.subr.bf16.mxu0 0
        %2664 = vmatpush1.bf16.msra.mxu0 0
        %2665 = vmatprep.subr.bf16.mxu0 0
        %2666 = vmatpush1.bf16.msra.mxu0 0
        %2667 = vmatprep.subr.bf16.mxu0 0
        %2668 = vmatpush1.bf16.msra.mxu0 0
        %2669 = vmatprep.subr.bf16.mxu0 0
        %2670 = vmatpush1.bf16.msra.mxu0 0
        %2671 = vmatprep.subr.bf16.mxu0 0
        %2672 = vmatpush1.bf16.msra.mxu0 0
        %2673 = vmatprep.subr.bf16.mxu0 0
        %2674 = vmatpush1.bf16.msra.mxu0 0
        %2675 = vmatprep.subr.bf16.mxu0 0
        %2676 = vmatpush1.bf16.msra.mxu0 0
        %2677 = vmatprep.subr.bf16.mxu0 0
        %2678 = vmatpush1.bf16.msra.mxu0 0
        %2679 = vmatprep.subr.bf16.mxu0 0
        %2680 = vmatpush1.bf16.msra.mxu0 0
        %2681 = vmatprep.mubr.bf16.mxu0 0
        %2682 = vmatmul.mubr.bf16.gmra.mrb[0].mxu0 %v2638
        %v2683 = vpop.f32.mrb[0].mxu0
        %v2684 = vadd.f32 %v2570, %v2683
        %v2685 = vpop.f32.mrb[0].mxu0
        %v2686 = vpop.f32.mrb[0].mxu0
        %v2687 = vadd.f32 %v2573, %v2686
        %v2688 = vpop.f32.mrb[0].mxu0
        %2689 = vmatprep.mubr.bf16.mxu0 0
        %2690 = vmatmul.mubr.bf16.gmra.mrb[0].mxu0 %v2641
        %v2691 = vpop.f32.mrb[0].mxu0
        %v2692 = vadd.f32 %v2578, %v2691
        %v2693 = vpop.f32.mrb[0].mxu0
        %v2694 = vpop.f32.mrb[0].mxu0
        %v2695 = vadd.f32 %v2581, %v2694
        %v2696 = vpop.f32.mrb[0].mxu0
        %2697 = vmatprep.mubr.bf16.mxu0 0
        %2698 = vmatmul.mubr.bf16.gmra.mrb[0].mxu0 %v2644
        %v2699 = vpop.f32.mrb[0].mxu0
        %v2700 = vadd.f32 %v2586, %v2699
        %v2701 = vpop.f32.mrb[0].mxu0
        %v2702 = vpop.f32.mrb[0].mxu0
        %v2703 = vadd.f32 %v2589, %v2702
        %v2704 = vpop.f32.mrb[0].mxu0
        %2705 = vmatprep.mubr.bf16.mxu0 0
        %2706 = vmatmul.mubr.bf16.gmra.mrb[0].mxu0 %v2647
        %v2707 = vpop.f32.mrb[0].mxu0
        %v2708 = vadd.f32 %v2594, %v2707
        %v2709 = vpop.f32.mrb[0].mxu0
        %v2710 = vpop.f32.mrb[0].mxu0
        %v2711 = vadd.f32 %v2597, %v2710
        %v2712 = vpop.f32.mrb[0].mxu0
        %2713 = vdwg.mxu0
        %v2722 = vunpack.c.l.b16 %v2487
        %v2723 = vunpack.c.l.b16 %v2488
        %v2724 = vunpack.c.l.b16 %v2489
        %v2725 = vunpack.c.l.b16 %v2490
        %v2726 = vunpack.c.l.b16 %v2491
        %v2727 = vunpack.c.l.b16 %v2492
        %v2728 = vunpack.c.l.b16 %v2493
        %v2729 = vunpack.c.l.b16 %v2494
        %v2730 = vpack.c.b16 %v2723, %v2722
        %v2731 = vpack.c.b16 %v2725, %v2724
        %v2732 = vpack.c.b16 %v2727, %v2726
        %v2733 = vpack.c.b16 %v2729, %v2728
        %2738 = vrot.lane.b32.xlu0 %v2499, 124
        %v2739 = vpop.permute.xlu0 %2738
        %2740 = vrot.lane.b32.xlu0 %v2500, 124
        %v2741 = vpop.permute.xlu0 %2740
        %2742 = vrot.lane.b32.xlu0 %v2501, 124
        %v2743 = vpop.permute.xlu0 %2742
        %2744 = vrot.lane.b32.xlu0 %v2502, 124
        %v2745 = vpop.permute.xlu0 %2744
        %vm2746 = vcmask 1014784
        %v2747 = vsel %vm2746, %v2739, %v2741
        %v2748 = vsel %vm2746, %v2743, %v2745
        %v2752 = vsel %vm1041, %v2730, 0
        %v2755 = vsel %vm1041, %v2731, 0
        %v2758 = vsel %vm1041, %v2732, 0
        %v2761 = vsel %vm1041, %v2733, 0
        %2763 = vmatprep.subr.bf16.mxu0 0
        %2764 = vmatpush1.bf16.msra.mxu0 %v2747
        %2765 = vmatprep.subr.bf16.mxu0 0
        %2766 = vmatpush1.bf16.msra.mxu0 %v2748
        %2767 = vmatprep.subr.bf16.mxu0 0
        %2768 = vmatpush1.bf16.msra.mxu0 0
        %2769 = vmatprep.subr.bf16.mxu0 0
        %2770 = vmatpush1.bf16.msra.mxu0 0
        %2771 = vmatprep.subr.bf16.mxu0 0
        %2772 = vmatpush1.bf16.msra.mxu0 0
        %2773 = vmatprep.subr.bf16.mxu0 0
        %2774 = vmatpush1.bf16.msra.mxu0 0
        %2775 = vmatprep.subr.bf16.mxu0 0
        %2776 = vmatpush1.bf16.msra.mxu0 0
        %2777 = vmatprep.subr.bf16.mxu0 0
        %2778 = vmatpush1.bf16.msra.mxu0 0
        %2779 = vmatprep.subr.bf16.mxu0 0
        %2780 = vmatpush1.bf16.msra.mxu0 0
        %2781 = vmatprep.subr.bf16.mxu0 0
        %2782 = vmatpush1.bf16.msra.mxu0 0
        %2783 = vmatprep.subr.bf16.mxu0 0
        %2784 = vmatpush1.bf16.msra.mxu0 0
        %2785 = vmatprep.subr.bf16.mxu0 0
        %2786 = vmatpush1.bf16.msra.mxu0 0
        %2787 = vmatprep.subr.bf16.mxu0 0
        %2788 = vmatpush1.bf16.msra.mxu0 0
        %2789 = vmatprep.subr.bf16.mxu0 0
        %2790 = vmatpush1.bf16.msra.mxu0 0
        %2791 = vmatprep.subr.bf16.mxu0 0
        %2792 = vmatpush1.bf16.msra.mxu0 0
        %2793 = vmatprep.subr.bf16.mxu0 0
        %2794 = vmatpush1.bf16.msra.mxu0 0
        %2795 = vmatprep.mubr.bf16.mxu0 0
        %2796 = vmatmul.mubr.bf16.gmra.mrb[0].mxu0 %v2752
        %v2797 = vpop.f32.mrb[0].mxu0
        %v2798 = vadd.f32 0.0, %v2797
        %v2799 = vpop.f32.mrb[0].mxu0
        %v2800 = vpop.f32.mrb[0].mxu0
        %v2801 = vadd.f32 0.0, %v2800
        %v2802 = vpop.f32.mrb[0].mxu0
        %2803 = vmatprep.mubr.bf16.mxu0 0
        %2804 = vmatmul.mubr.bf16.gmra.mrb[0].mxu0 %v2755
        %v2805 = vpop.f32.mrb[0].mxu0
        %v2806 = vadd.f32 0.0, %v2805
        %v2807 = vpop.f32.mrb[0].mxu0
        %v2808 = vpop.f32.mrb[0].mxu0
        %v2809 = vadd.f32 0.0, %v2808
        %v2810 = vpop.f32.mrb[0].mxu0
        %2811 = vmatprep.mubr.bf16.mxu0 0
        %2812 = vmatmul.mubr.bf16.gmra.mrb[0].mxu0 %v2758
        %v2813 = vpop.f32.mrb[0].mxu0
        %v2814 = vadd.f32 0.0, %v2813
        %v2815 = vpop.f32.mrb[0].mxu0
        %v2816 = vpop.f32.mrb[0].mxu0
        %v2817 = vadd.f32 0.0, %v2816
        %v2818 = vpop.f32.mrb[0].mxu0
        %2819 = vmatprep.mubr.bf16.mxu0 0
        %2820 = vmatmul.mubr.bf16.gmra.mrb[0].mxu0 %v2761
        %v2821 = vpop.f32.mrb[0].mxu0
        %v2822 = vadd.f32 0.0, %v2821
        %v2823 = vpop.f32.mrb[0].mxu0
        %v2824 = vpop.f32.mrb[0].mxu0
        %v2825 = vadd.f32 0.0, %v2824
        %v2826 = vpop.f32.mrb[0].mxu0
        %2827 = vdwg.mxu0
        %v2828 = vadd.f32 %v2684, %v2798
        %v2829 = vadd.f32 %v2687, %v2801
        %v2830 = vadd.f32 %v2692, %v2806
        %v2831 = vadd.f32 %v2695, %v2809
        %v2832 = vadd.f32 %v2700, %v2814
        %v2833 = vadd.f32 %v2703, %v2817
        %v2834 = vadd.f32 %v2708, %v2822
        %v2835 = vadd.f32 %v2711, %v2825
        %s2836 = scalar_lea.vmem [#allocation11], 128
        %v2837 = vld [vmem:[%s2836] sm:$0xff]
        %v2838 = vld [vmem:[%s2836 + $0x8] sm:$0xff]
        %v2839 = vld [vmem:[%s2836 + $0x10] sm:$0xff]
        %v2840 = vld [vmem:[%s2836 + $0x18] sm:$0xff]
        %v2841 = vld [vmem:[%s2836 + $0x20] sm:$0xff]
        %v2842 = vld [vmem:[%s2836 + $0x28] sm:$0xff]
        %v2843 = vld [vmem:[%s2836 + $0x30] sm:$0xff]
        %v2844 = vld [vmem:[%s2836 + $0x38] sm:$0xff]
        %2846 = vset.pattern.permute.xlu0 0
        %2847 = vperm.xlu0 %2846, %v2837
        %v2848 = vpop.permute.xlu0 %2847
        %2851 = vset.pattern.permute.xlu0 0
        %2852 = vperm.xlu0 %2851, %v2838
        %v2853 = vpop.permute.xlu0 %2852
        %2856 = vset.pattern.permute.xlu0 0
        %2857 = vperm.xlu0 %2856, %v2839
        %v2858 = vpop.permute.xlu0 %2857
        %2861 = vset.pattern.permute.xlu0 0
        %2862 = vperm.xlu0 %2861, %v2840
        %v2863 = vpop.permute.xlu0 %2862
        %2866 = vset.pattern.permute.xlu0 0
        %2867 = vperm.xlu0 %2866, %v2841
        %v2868 = vpop.permute.xlu0 %2867
        %2871 = vset.pattern.permute.xlu0 0
        %2872 = vperm.xlu0 %2871, %v2842
        %v2873 = vpop.permute.xlu0 %2872
        %2876 = vset.pattern.permute.xlu0 0
        %2877 = vperm.xlu0 %2876, %v2843
        %v2878 = vpop.permute.xlu0 %2877
        %2881 = vset.pattern.permute.xlu0 0
        %2882 = vperm.xlu0 %2881, %v2844
        %v2883 = vpop.permute.xlu0 %2882
        %v2885 = vmul.f32 %v2828, %v2848
        %v2886 = vmul.f32 %v2829, %v2853
        %v2887 = vmul.f32 %v2830, %v2858
        %v2888 = vmul.f32 %v2831, %v2863
        %v2889 = vmul.f32 %v2832, %v2868
        %v2890 = vmul.f32 %v2833, %v2873
        %v2891 = vmul.f32 %v2834, %v2878
        %v2892 = vmul.f32 %v2835, %v2883
        %s2893 = scalar_lea.vmem [#allocation13], 128
        %v2894 = vld [vmem:[%s2893] sm:$0xff]
        %v2895 = vld [vmem:[%s2893 + $0x8] sm:$0xff]
        %v2896 = vld [vmem:[%s2893 + $0x10] sm:$0xff]
        %v2897 = vld [vmem:[%s2893 + $0x18] sm:$0xff]
        %v2898 = vld [vmem:[%s2893 + $0x20] sm:$0xff]
        %v2899 = vld [vmem:[%s2893 + $0x28] sm:$0xff]
        %v2900 = vld [vmem:[%s2893 + $0x30] sm:$0xff]
        %v2901 = vld [vmem:[%s2893 + $0x38] sm:$0xff]
        %2903 = vset.pattern.permute.xlu0 0
        %2904 = vperm.xlu0 %2903, %v2894
        %v2905 = vpop.permute.xlu0 %2904
        %2908 = vset.pattern.permute.xlu0 0
        %2909 = vperm.xlu0 %2908, %v2895
        %v2910 = vpop.permute.xlu0 %2909
        %2913 = vset.pattern.permute.xlu0 0
        %2914 = vperm.xlu0 %2913, %v2896
        %v2915 = vpop.permute.xlu0 %2914
        %2918 = vset.pattern.permute.xlu0 0
        %2919 = vperm.xlu0 %2918, %v2897
        %v2920 = vpop.permute.xlu0 %2919
        %2923 = vset.pattern.permute.xlu0 0
        %2924 = vperm.xlu0 %2923, %v2898
        %v2925 = vpop.permute.xlu0 %2924
        %2928 = vset.pattern.permute.xlu0 0
        %2929 = vperm.xlu0 %2928, %v2899
        %v2930 = vpop.permute.xlu0 %2929
        %2933 = vset.pattern.permute.xlu0 0
        %2934 = vperm.xlu0 %2933, %v2900
        %v2935 = vpop.permute.xlu0 %2934
        %2938 = vset.pattern.permute.xlu0 0
        %2939 = vperm.xlu0 %2938, %v2901
        %v2940 = vpop.permute.xlu0 %2939
        %v2942 = vadd.f32 %v2885, %v2905
        %v2943 = vadd.f32 %v2886, %v2910
        %v2944 = vadd.f32 %v2887, %v2915
        %v2945 = vadd.f32 %v2888, %v2920
        %v2946 = vadd.f32 %v2889, %v2925
        %v2947 = vadd.f32 %v2890, %v2930
        %v2948 = vadd.f32 %v2891, %v2935
        %v2949 = vadd.f32 %v2892, %v2940
        %v2950 = vtanh.pop %v2942
        %v2951 = vtanh.pop %v2943
        %v2952 = vtanh.pop %v2944
        %v2953 = vtanh.pop %v2945
        %v2954 = vxor.u32 %v2946, 2147483648
        %v2955 = vxor.u32 %v2947, 2147483648
        %v2956 = vxor.u32 %v2948, 2147483648
        %v2957 = vxor.u32 %v2949, 2147483648
        %v2958 = vmul.f32 %v2954, 1.442695
        %v2959 = vpow.pop %v2958
        %v2960 = vmul.f32 %v2955, 1.442695
        %v2961 = vpow.pop %v2960
        %v2962 = vmul.f32 %v2956, 1.442695
        %v2963 = vpow.pop %v2962
        %v2964 = vmul.f32 %v2957, 1.442695
        %v2965 = vpow.pop %v2964
        %v2966 = vadd.f32 %v2959, 1.0
        %v2967 = vadd.f32 %v2961, 1.0
        %v2968 = vadd.f32 %v2963, 1.0
        %v2969 = vadd.f32 %v2965, 1.0
        %v2970 = vrcp.pop %v2966
        %v2971 = vmul.f32 1.0, %v2970
        %v2972 = vrcp.pop %v2967
        %v2973 = vmul.f32 1.0, %v2972
        %v2974 = vrcp.pop %v2968
        %v2975 = vmul.f32 1.0, %v2974
        %v2976 = vrcp.pop %v2969
        %v2977 = vmul.f32 1.0, %v2976
        %v2978 = vmul.f32 %v2950, %v2971
        %v2979 = vmul.f32 %v2951, %v2973
        %v2980 = vmul.f32 %v2952, %v2975
        %v2981 = vmul.f32 %v2953, %v2977
        %v2982 = vmul.f32 %v2978, %v454
        %v2983 = vmul.f32 %v2979, %v454
        %v2984 = vmul.f32 %v2980, %v454
        %v2985 = vmul.f32 %v2981, %v454
        %v2986 = vpack.c.bf16 %v2983, %v2982
        %v2987 = vpack.c.bf16 %v2985, %v2984
        %s2988 = scalar_lea.vmem [#allocation14], 48
        %v2989 = vld [vmem:[%s2988] sm:$0xf]
        %v2990 = vld [vmem:[%s2988 + $0x4] sm:$0xf]
        %v2991 = vld [vmem:[%s2988 + $0x8] sm:$0xf]
        %v2992 = vld [vmem:[%s2988 + $0xc] sm:$0xf]
        %v2993 = vld [vmem:[%s2988 + $0x10] sm:$0xf]
        %v2994 = vld [vmem:[%s2988 + $0x14] sm:$0xf]
        %s2995 = scalar_lea.vmem [#allocation16], 96
        %v2996 = vld [vmem:[%s2995] sm:$0xff]
        %v2997 = vld [vmem:[%s2995 + $0x8] sm:$0xff]
        %v2998 = vld [vmem:[%s2995 + $0x10] sm:$0xff]
        %v2999 = vld [vmem:[%s2995 + $0x18] sm:$0xff]
        %v3000 = vld [vmem:[%s2995 + $0x20] sm:$0xff]
        %v3001 = vld [vmem:[%s2995 + $0x28] sm:$0xff]
        %3003 = vset.pattern.permute.xlu0 0
        %3004 = vperm.xlu0 %3003, %v2996
        %v3005 = vpop.permute.xlu0 %3004
        %3008 = vset.pattern.permute.xlu0 0
        %3009 = vperm.xlu0 %3008, %v2997
        %v3010 = vpop.permute.xlu0 %3009
        %3013 = vset.pattern.permute.xlu0 0
        %3014 = vperm.xlu0 %3013, %v2998
        %v3015 = vpop.permute.xlu0 %3014
        %3018 = vset.pattern.permute.xlu0 0
        %3019 = vperm.xlu0 %3018, %v2999
        %v3020 = vpop.permute.xlu0 %3019
        %3023 = vset.pattern.permute.xlu0 0
        %3024 = vperm.xlu0 %3023, %v3000
        %v3025 = vpop.permute.xlu0 %3024
        %3028 = vset.pattern.permute.xlu0 0
        %3029 = vperm.xlu0 %3028, %v3001
        %v3030 = vpop.permute.xlu0 %3029
        %v3038 = vunpack.c.l.b16 %v2989
        %v3039 = vunpack.c.l.b16 %v2990
        %v3040 = vunpack.c.l.b16 %v2991
        %v3041 = vunpack.c.l.b16 %v2992
        %v3042 = vunpack.c.l.b16 %v2993
        %v3043 = vunpack.c.l.b16 %v2994
        %v3044 = vpack.c.b16 %v3039, %v3038
        %v3045 = vpack.c.b16 %v3041, %v3040
        %v3046 = vpack.c.b16 %v3043, %v3042
        %v3048 = vsel %vm1041, %v3044, 0
        %v3051 = vsel %vm1041, %v3045, 0
        %v3054 = vsel %vm1041, %v3046, 0
        %3056 = vmatprep.subr.bf16.mxu0 0
        %3057 = vmatpush1.bf16.msra.mxu0 %v2986
        %3058 = vmatprep.subr.bf16.mxu0 0
        %3059 = vmatpush1.bf16.msra.mxu0 %v2987
        %3060 = vmatprep.subr.bf16.mxu0 0
        %3061 = vmatpush1.bf16.msra.mxu0 0
        %3062 = vmatprep.subr.bf16.mxu0 0
        %3063 = vmatpush1.bf16.msra.mxu0 0
        %3064 = vmatprep.subr.bf16.mxu0 0
        %3065 = vmatpush1.bf16.msra.mxu0 0
        %3066 = vmatprep.subr.bf16.mxu0 0
        %3067 = vmatpush1.bf16.msra.mxu0 0
        %3068 = vmatprep.subr.bf16.mxu0 0
        %3069 = vmatpush1.bf16.msra.mxu0 0
        %3070 = vmatprep.subr.bf16.mxu0 0
        %3071 = vmatpush1.bf16.msra.mxu0 0
        %3072 = vmatprep.subr.bf16.mxu0 0
        %3073 = vmatpush1.bf16.msra.mxu0 0
        %3074 = vmatprep.subr.bf16.mxu0 0
        %3075 = vmatpush1.bf16.msra.mxu0 0
        %3076 = vmatprep.subr.bf16.mxu0 0
        %3077 = vmatpush1.bf16.msra.mxu0 0
        %3078 = vmatprep.subr.bf16.mxu0 0
        %3079 = vmatpush1.bf16.msra.mxu0 0
        %3080 = vmatprep.subr.bf16.mxu0 0
        %3081 = vmatpush1.bf16.msra.mxu0 0
        %3082 = vmatprep.subr.bf16.mxu0 0
        %3083 = vmatpush1.bf16.msra.mxu0 0
        %3084 = vmatprep.subr.bf16.mxu0 0
        %3085 = vmatpush1.bf16.msra.mxu0 0
        %3086 = vmatprep.subr.bf16.mxu0 0
        %3087 = vmatpush1.bf16.msra.mxu0 0
        %3088 = vmatprep.mubr.bf16.mxu0 0
        %3089 = vmatmul.mubr.bf16.gmra.mrb[0].mxu0 %v3048
        %v3090 = vpop.f32.mrb[0].mxu0
        %v3091 = vadd.f32 %v3005, %v3090
        %v3092 = vpop.f32.mrb[0].mxu0
        %v3093 = vpop.f32.mrb[0].mxu0
        %v3094 = vadd.f32 %v3010, %v3093
        %v3095 = vpop.f32.mrb[0].mxu0
        %3096 = vmatprep.mubr.bf16.mxu0 0
        %3097 = vmatmul.mubr.bf16.gmra.mrb[0].mxu0 %v3051
        %v3098 = vpop.f32.mrb[0].mxu0
        %v3099 = vadd.f32 %v3015, %v3098
        %v3100 = vpop.f32.mrb[0].mxu0
        %v3101 = vpop.f32.mrb[0].mxu0
        %v3102 = vadd.f32 %v3020, %v3101
        %v3103 = vpop.f32.mrb[0].mxu0
        %3104 = vmatprep.mubr.bf16.mxu0 0
        %3105 = vmatmul.mubr.bf16.gmra.mrb[0].mxu0 %v3054
        %v3106 = vpop.f32.mrb[0].mxu0
        %v3107 = vadd.f32 %v3025, %v3106
        %v3108 = vpop.f32.mrb[0].mxu0
        %v3109 = vpop.f32.mrb[0].mxu0
        %v3110 = vadd.f32 %v3030, %v3109
        %v3111 = vpop.f32.mrb[0].mxu0
        %3112 = vdwg.mxu0
        %v3113 = vmul.f32 %v3099, %v454
        %v3114 = vmul.f32 %v3102, %v454
        %v3115 = vmul.f32 %v3107, %v454
        %v3116 = vmul.f32 %v3110, %v454
        %v3117 = vpack.c.bf16 %v3091, %v3091
        %v3118 = vpack.c.bf16 %v3094, %v3094
        %3119 = vxpose.xlu0.c.b16.start [1/8] %v3117, 128
        %3120 = vxpose.xlu0.c.b16.cont [2/8] 0, 128
        %3121 = vxpose.xlu0.c.b16.cont [3/8] 0, 128
        %3122 = vxpose.xlu0.c.b16.cont [4/8] 0, 128
        %3123 = vxpose.xlu0.c.b16.cont [5/8] 0, 128
        %3124 = vxpose.xlu0.c.b16.cont [6/8] 0, 128
        %3125 = vxpose.xlu0.c.b16.cont [7/8] 0, 128
        %3126 = vxpose.xlu0.c.b16.end [8/8] 0, 128
        %v3127 = vpop.trf.xlu0
        %v3128 = vpop.trf.xlu0
        %v3129 = vpop.trf.xlu0
        %v3130 = vpop.trf.xlu0
        %v3131 = vpop.trf.xlu0
        %v3132 = vpop.trf.xlu0
        %v3133 = vpop.trf.xlu0
        %v3134 = vpop.trf.xlu0
        %v3136 = vsel %vm1130, %v3127, 0
        %v3139 = vsel %vm1130, %v3128, 0
        %v3142 = vsel %vm1130, %v3129, 0
        %v3145 = vsel %vm1130, %v3130, 0
        %v3148 = vsel %vm1130, %v3131, 0
        %v3151 = vsel %vm1130, %v3132, 0
        %v3154 = vsel %vm1130, %v3133, 0
        %v3157 = vsel %vm1130, %v3134, 0
        %v3160 = vsel %vm1155, %v3118, 0
        %3162 = vmatprep.subr.bf16.mxu0 0
        %3163 = vmatpush1.bf16.msra.mxu0 %v3160
        %3164 = vmatprep.subr.bf16.mxu0 0
        %3165 = vmatpush1.bf16.msra.mxu0 0
        %3166 = vmatprep.subr.bf16.mxu0 0
        %3167 = vmatpush1.bf16.msra.mxu0 0
        %3168 = vmatprep.subr.bf16.mxu0 0
        %3169 = vmatpush1.bf16.msra.mxu0 0
        %3170 = vmatprep.subr.bf16.mxu0 0
        %3171 = vmatpush1.bf16.msra.mxu0 0
        %3172 = vmatprep.subr.bf16.mxu0 0
        %3173 = vmatpush1.bf16.msra.mxu0 0
        %3174 = vmatprep.subr.bf16.mxu0 0
        %3175 = vmatpush1.bf16.msra.mxu0 0
        %3176 = vmatprep.subr.bf16.mxu0 0
        %3177 = vmatpush1.bf16.msra.mxu0 0
        %3178 = vmatprep.subr.bf16.mxu0 0
        %3179 = vmatpush1.bf16.msra.mxu0 0
        %3180 = vmatprep.subr.bf16.mxu0 0
        %3181 = vmatpush1.bf16.msra.mxu0 0
        %3182 = vmatprep.subr.bf16.mxu0 0
        %3183 = vmatpush1.bf16.msra.mxu0 0
        %3184 = vmatprep.subr.bf16.mxu0 0
        %3185 = vmatpush1.bf16.msra.mxu0 0
        %3186 = vmatprep.subr.bf16.mxu0 0
        %3187 = vmatpush1.bf16.msra.mxu0 0
        %3188 = vmatprep.subr.bf16.mxu0 0
        %3189 = vmatpush1.bf16.msra.mxu0 0
        %3190 = vmatprep.subr.bf16.mxu0 0
        %3191 = vmatpush1.bf16.msra.mxu0 0
        %3192 = vmatprep.subr.bf16.mxu0 0
        %3193 = vmatpush1.bf16.msra.mxu0 0
        %3194 = vmatprep.mubr.bf16.mxu0 0
        %3195 = vmatmul.mubr.bf16.gmra.mrb[0].mxu0 %v3136
        %v3196 = vpop.f32.mrb[0].mxu0
        %v3197 = vadd.f32 %v455, %v3196
        %v3198 = vpop.f32.mrb[0].mxu0
        %v3199 = vpop.f32.mrb[0].mxu0
        %v3200 = vadd.f32 %v455, %v3199
        %v3201 = vpop.f32.mrb[0].mxu0
        %3202 = vmatprep.mubr.bf16.mxu0 0
        %3203 = vmatmul.mubr.bf16.gmra.mrb[0].mxu0 %v3139
        %v3204 = vpop.f32.mrb[0].mxu0
        %v3205 = vadd.f32 %v455, %v3204
        %v3206 = vpop.f32.mrb[0].mxu0
        %v3207 = vpop.f32.mrb[0].mxu0
        %v3208 = vadd.f32 %v455, %v3207
        %v3209 = vpop.f32.mrb[0].mxu0
        %3210 = vmatprep.mubr.bf16.mxu0 0
        %3211 = vmatmul.mubr.bf16.gmra.mrb[0].mxu0 %v3142
        %v3212 = vpop.f32.mrb[0].mxu0
        %v3213 = vadd.f32 %v455, %v3212
        %v3214 = vpop.f32.mrb[0].mxu0
        %v3215 = vpop.f32.mrb[0].mxu0
        %v3216 = vadd.f32 %v455, %v3215
        %v3217 = vpop.f32.mrb[0].mxu0
        %3218 = vmatprep.mubr.bf16.mxu0 0
        %3219 = vmatmul.mubr.bf16.gmra.mrb[0].mxu0 %v3145
        %v3220 = vpop.f32.mrb[0].mxu0
        %v3221 = vadd.f32 %v455, %v3220
        %v3222 = vpop.f32.mrb[0].mxu0
        %v3223 = vpop.f32.mrb[0].mxu0
        %v3224 = vadd.f32 %v455, %v3223
        %v3225 = vpop.f32.mrb[0].mxu0
        %3226 = vmatprep.mubr.bf16.mxu0 0
        %3227 = vmatmul.mubr.bf16.gmra.mrb[0].mxu0 %v3148
        %v3228 = vpop.f32.mrb[0].mxu0
        %v3229 = vadd.f32 %v455, %v3228
        %v3230 = vpop.f32.mrb[0].mxu0
        %v3231 = vpop.f32.mrb[0].mxu0
        %v3232 = vadd.f32 %v455, %v3231
        %v3233 = vpop.f32.mrb[0].mxu0
        %3234 = vmatprep.mubr.bf16.mxu0 0
        %3235 = vmatmul.mubr.bf16.gmra.mrb[0].mxu0 %v3151
        %v3236 = vpop.f32.mrb[0].mxu0
        %v3237 = vadd.f32 %v455, %v3236
        %v3238 = vpop.f32.mrb[0].mxu0
        %v3239 = vpop.f32.mrb[0].mxu0
        %v3240 = vadd.f32 %v455, %v3239
        %v3241 = vpop.f32.mrb[0].mxu0
        %3242 = vmatprep.mubr.bf16.mxu0 0
        %3243 = vmatmul.mubr.bf16.gmra.mrb[0].mxu0 %v3154
        %v3244 = vpop.f32.mrb[0].mxu0
        %v3245 = vadd.f32 %v455, %v3244
        %v3246 = vpop.f32.mrb[0].mxu0
        %v3247 = vpop.f32.mrb[0].mxu0
        %v3248 = vadd.f32 %v455, %v3247
        %v3249 = vpop.f32.mrb[0].mxu0
        %3250 = vmatprep.mubr.bf16.mxu0 0
        %3251 = vmatmul.mubr.bf16.gmra.mrb[0].mxu0 %v3157
        %v3252 = vpop.f32.mrb[0].mxu0
        %v3253 = vadd.f32 %v455, %v3252
        %v3254 = vpop.f32.mrb[0].mxu0
        %v3255 = vpop.f32.mrb[0].mxu0
        %v3256 = vadd.f32 %v455, %v3255
        %v3257 = vpop.f32.mrb[0].mxu0
        %3258 = vdwg.mxu0
        %3259 = vmax.xlane.f32.xlu0 %v3197
        %v3260 = vpop.xlane.xlu0 %3259
        %3261 = vmax.xlane.f32.xlu0 %v3200
        %v3262 = vpop.xlane.xlu0 %3261
        %3263 = vmax.xlane.f32.xlu0 %v3205
        %v3264 = vpop.xlane.xlu0 %3263
        %3265 = vmax.xlane.f32.xlu0 %v3208
        %v3266 = vpop.xlane.xlu0 %3265
        %3267 = vmax.xlane.f32.xlu0 %v3213
        %v3268 = vpop.xlane.xlu0 %3267
        %3269 = vmax.xlane.f32.xlu0 %v3216
        %v3270 = vpop.xlane.xlu0 %3269
        %3271 = vmax.xlane.f32.xlu0 %v3221
        %v3272 = vpop.xlane.xlu0 %3271
        %3273 = vmax.xlane.f32.xlu0 %v3224
        %v3274 = vpop.xlane.xlu0 %3273
        %3275 = vmax.xlane.f32.xlu0 %v3229
        %v3276 = vpop.xlane.xlu0 %3275
        %3277 = vmax.xlane.f32.xlu0 %v3232
        %v3278 = vpop.xlane.xlu0 %3277
        %3279 = vmax.xlane.f32.xlu0 %v3237
        %v3280 = vpop.xlane.xlu0 %3279
        %3281 = vmax.xlane.f32.xlu0 %v3240
        %v3282 = vpop.xlane.xlu0 %3281
        %3283 = vmax.xlane.f32.xlu0 %v3245
        %v3284 = vpop.xlane.xlu0 %3283
        %3285 = vmax.xlane.f32.xlu0 %v3248
        %v3286 = vpop.xlane.xlu0 %3285
        %3287 = vmax.xlane.f32.xlu0 %v3253
        %v3288 = vpop.xlane.xlu0 %3287
        %3289 = vmax.xlane.f32.xlu0 %v3256
        %v3290 = vpop.xlane.xlu0 %3289
        %v3291 = vsub.f32 %v3197, %v3260
        %v3292 = vsub.f32 %v3200, %v3262
        %v3293 = vsub.f32 %v3205, %v3264
        %v3294 = vsub.f32 %v3208, %v3266
        %v3295 = vsub.f32 %v3213, %v3268
        %v3296 = vsub.f32 %v3216, %v3270
        %v3297 = vsub.f32 %v3221, %v3272
        %v3298 = vsub.f32 %v3224, %v3274
        %v3299 = vsub.f32 %v3229, %v3276
        %v3300 = vsub.f32 %v3232, %v3278
        %v3301 = vsub.f32 %v3237, %v3280
        %v3302 = vsub.f32 %v3240, %v3282
        %v3303 = vsub.f32 %v3245, %v3284
        %v3304 = vsub.f32 %v3248, %v3286
        %v3305 = vsub.f32 %v3253, %v3288
        %v3306 = vsub.f32 %v3256, %v3290
        %v3307 = vmul.f32 %v3291, 1.442695
        %v3308 = vpow.pop %v3307
        %v3309 = vmul.f32 %v3292, 1.442695
        %v3310 = vpow.pop %v3309
        %v3311 = vmul.f32 %v3293, 1.442695
        %v3312 = vpow.pop %v3311
        %v3313 = vmul.f32 %v3294, 1.442695
        %v3314 = vpow.pop %v3313
        %v3315 = vmul.f32 %v3295, 1.442695
        %v3316 = vpow.pop %v3315
        %v3317 = vmul.f32 %v3296, 1.442695
        %v3318 = vpow.pop %v3317
        %v3319 = vmul.f32 %v3297, 1.442695
        %v3320 = vpow.pop %v3319
        %v3321 = vmul.f32 %v3298, 1.442695
        %v3322 = vpow.pop %v3321
        %v3323 = vmul.f32 %v3299, 1.442695
        %v3324 = vpow.pop %v3323
        %v3325 = vmul.f32 %v3300, 1.442695
        %v3326 = vpow.pop %v3325
        %v3327 = vmul.f32 %v3301, 1.442695
        %v3328 = vpow.pop %v3327
        %v3329 = vmul.f32 %v3302, 1.442695
        %v3330 = vpow.pop %v3329
        %v3331 = vmul.f32 %v3303, 1.442695
        %v3332 = vpow.pop %v3331
        %v3333 = vmul.f32 %v3304, 1.442695
        %v3334 = vpow.pop %v3333
        %v3335 = vmul.f32 %v3305, 1.442695
        %v3336 = vpow.pop %v3335
        %v3337 = vmul.f32 %v3306, 1.442695
        %v3338 = vpow.pop %v3337
        %3339 = vadd.xlane.f32.xlu0 %v3308
        %v3340 = vpop.xlane.xlu0 %3339
        %3341 = vadd.xlane.f32.xlu0 %v3310
        %v3342 = vpop.xlane.xlu0 %3341
        %3343 = vadd.xlane.f32.xlu0 %v3312
        %v3344 = vpop.xlane.xlu0 %3343
        %3345 = vadd.xlane.f32.xlu0 %v3314
        %v3346 = vpop.xlane.xlu0 %3345
        %3347 = vadd.xlane.f32.xlu0 %v3316
        %v3348 = vpop.xlane.xlu0 %3347
        %3349 = vadd.xlane.f32.xlu0 %v3318
        %v3350 = vpop.xlane.xlu0 %3349
        %3351 = vadd.xlane.f32.xlu0 %v3320
        %v3352 = vpop.xlane.xlu0 %3351
        %3353 = vadd.xlane.f32.xlu0 %v3322
        %v3354 = vpop.xlane.xlu0 %3353
        %3355 = vadd.xlane.f32.xlu0 %v3324
        %v3356 = vpop.xlane.xlu0 %3355
        %3357 = vadd.xlane.f32.xlu0 %v3326
        %v3358 = vpop.xlane.xlu0 %3357
        %3359 = vadd.xlane.f32.xlu0 %v3328
        %v3360 = vpop.xlane.xlu0 %3359
        %3361 = vadd.xlane.f32.xlu0 %v3330
        %v3362 = vpop.xlane.xlu0 %3361
        %3363 = vadd.xlane.f32.xlu0 %v3332
        %v3364 = vpop.xlane.xlu0 %3363
        %3365 = vadd.xlane.f32.xlu0 %v3334
        %v3366 = vpop.xlane.xlu0 %3365
        %3367 = vadd.xlane.f32.xlu0 %v3336
        %v3368 = vpop.xlane.xlu0 %3367
        %3369 = vadd.xlane.f32.xlu0 %v3338
        %v3370 = vpop.xlane.xlu0 %3369
        %v3371 = vrcp.pop %v3340
        %v3372 = vrcp.pop %v3342
        %v3373 = vrcp.pop %v3344
        %v3374 = vrcp.pop %v3346
        %v3375 = vrcp.pop %v3348
        %v3376 = vrcp.pop %v3350
        %v3377 = vrcp.pop %v3352
        %v3378 = vrcp.pop %v3354
        %v3379 = vrcp.pop %v3356
        %v3380 = vrcp.pop %v3358
        %v3381 = vrcp.pop %v3360
        %v3382 = vrcp.pop %v3362
        %v3383 = vrcp.pop %v3364
        %v3384 = vrcp.pop %v3366
        %v3385 = vrcp.pop %v3368
        %v3386 = vrcp.pop %v3370
        %v3387 = vmul.f32 %v3308, %v3371
        %v3388 = vmul.f32 %v3310, %v3372
        %v3389 = vmul.f32 %v3312, %v3373
        %v3390 = vmul.f32 %v3314, %v3374
        %v3391 = vmul.f32 %v3316, %v3375
        %v3392 = vmul.f32 %v3318, %v3376
        %v3393 = vmul.f32 %v3320, %v3377
        %v3394 = vmul.f32 %v3322, %v3378
        %v3395 = vmul.f32 %v3324, %v3379
        %v3396 = vmul.f32 %v3326, %v3380
        %v3397 = vmul.f32 %v3328, %v3381
        %v3398 = vmul.f32 %v3330, %v3382
        %v3399 = vmul.f32 %v3332, %v3383
        %v3400 = vmul.f32 %v3334, %v3384
        %v3401 = vmul.f32 %v3336, %v3385
        %v3402 = vmul.f32 %v3338, %v3386
        %v3403 = vpack.c.bf16 %v3114, %v3113
        %v3404 = vpack.c.bf16 %v3116, %v3115
        %v3405 = vpack.c.bf16 %v3388, %v3387
        %v3406 = vpack.c.bf16 %v3390, %v3389
        %v3407 = vpack.c.bf16 %v3392, %v3391
        %v3408 = vpack.c.bf16 %v3394, %v3393
        %v3409 = vpack.c.bf16 %v3396, %v3395
        %v3410 = vpack.c.bf16 %v3398, %v3397
        %v3411 = vpack.c.bf16 %v3400, %v3399
        %v3412 = vpack.c.bf16 %v3402, %v3401
        %3413 = vmatprep.subr.bf16.mxu0 0
        %3414 = vmatpush1.bf16.msra.mxu0 %v3405
        %3415 = vmatprep.subr.bf16.mxu0 0
        %3416 = vmatpush1.bf16.msra.mxu0 %v3406
        %3417 = vmatprep.subr.bf16.mxu0 0
        %3418 = vmatpush1.bf16.msra.mxu0 %v3407
        %3419 = vmatprep.subr.bf16.mxu0 0
        %3420 = vmatpush1.bf16.msra.mxu0 %v3408
        %3421 = vmatprep.subr.bf16.mxu0 0
        %3422 = vmatpush1.bf16.msra.mxu0 %v3409
        %3423 = vmatprep.subr.bf16.mxu0 0
        %3424 = vmatpush1.bf16.msra.mxu0 %v3410
        %3425 = vmatprep.subr.bf16.mxu0 0
        %3426 = vmatpush1.bf16.msra.mxu0 %v3411
        %3427 = vmatprep.subr.bf16.mxu0 0
        %3428 = vmatpush1.bf16.msra.mxu0 %v3412
        %3429 = vmatprep.subr.bf16.mxu0 0
        %3430 = vmatpush1.bf16.msra.mxu0 0
        %3431 = vmatprep.subr.bf16.mxu0 0
        %3432 = vmatpush1.bf16.msra.mxu0 0
        %3433 = vmatprep.subr.bf16.mxu0 0
        %3434 = vmatpush1.bf16.msra.mxu0 0
        %3435 = vmatprep.subr.bf16.mxu0 0
        %3436 = vmatpush1.bf16.msra.mxu0 0
        %3437 = vmatprep.subr.bf16.mxu0 0
        %3438 = vmatpush1.bf16.msra.mxu0 0
        %3439 = vmatprep.subr.bf16.mxu0 0
        %3440 = vmatpush1.bf16.msra.mxu0 0
        %3441 = vmatprep.subr.bf16.mxu0 0
        %3442 = vmatpush1.bf16.msra.mxu0 0
        %3443 = vmatprep.subr.bf16.mxu0 0
        %3444 = vmatpush1.bf16.msra.mxu0 0
        %3445 = vmatprep.mubr.bf16.mxu0 0
        %3446 = vmatmul.mubr.bf16.gmra.mrb[0].mxu0 %v3403
        %v3447 = vpop.f32.mrb[0].mxu0
        %v3448 = vadd.f32 %v2982, %v3447
        %v3449 = vpop.f32.mrb[0].mxu0
        %v3450 = vpop.f32.mrb[0].mxu0
        %v3451 = vadd.f32 %v2983, %v3450
        %v3452 = vpop.f32.mrb[0].mxu0
        %3453 = vmatprep.mubr.bf16.mxu0 0
        %3454 = vmatmul.mubr.bf16.gmra.mrb[0].mxu0 %v3404
        %v3455 = vpop.f32.mrb[0].mxu0
        %v3456 = vadd.f32 %v2984, %v3455
        %v3457 = vpop.f32.mrb[0].mxu0
        %v3458 = vpop.f32.mrb[0].mxu0
        %v3459 = vadd.f32 %v2985, %v3458
        %v3460 = vpop.f32.mrb[0].mxu0
        %3461 = vdwg.mxu0
        %v3462 = vmul.f32 %v3448, %v454
        %v3463 = vmul.f32 %v3451, %v454
        %v3464 = vmul.f32 %v3456, %v454
        %v3465 = vmul.f32 %v3459, %v454
        %v3466 = vpack.c.bf16 %v3463, %v3462
        %v3467 = vpack.c.bf16 %v3465, %v3464
        %3468 = vst [vmem:[#allocation3 + $0x8] sm:$0xff] %v3466
        %3469 = vst [vmem:[#allocation3 + $0x20] sm:$0xff] %v3467
        %s3470 = scalar_lea.vmem [#allocation10], 192
        %v3471 = vld [vmem:[%s3470] sm:$0xf]
        %v3472 = vld [vmem:[%s3470 + $0x4] sm:$0xf]
        %v3473 = vld [vmem:[%s3470 + $0x8] sm:$0xf]
        %v3474 = vld [vmem:[%s3470 + $0xc] sm:$0xf]
        %v3475 = vld [vmem:[%s3470 + $0x10] sm:$0xf]
        %v3476 = vld [vmem:[%s3470 + $0x14] sm:$0xf]
        %v3477 = vld [vmem:[%s3470 + $0x18] sm:$0xf]
        %v3478 = vld [vmem:[%s3470 + $0x1c] sm:$0xf]
        %s3479 = scalar_lea.vmem [#allocation10], 224
        %v3480 = vld [vmem:[%s3479] sm:$0xf]
        %v3481 = vld [vmem:[%s3479 + $0x4] sm:$0xf]
        %v3482 = vld [vmem:[%s3479 + $0x8] sm:$0xf]
        %v3483 = vld [vmem:[%s3479 + $0xc] sm:$0xf]
        %v3484 = vld [vmem:[%s3479 + $0x10] sm:$0xf]
        %v3485 = vld [vmem:[%s3479 + $0x14] sm:$0xf]
        %v3486 = vld [vmem:[%s3479 + $0x18] sm:$0xf]
        %v3487 = vld [vmem:[%s3479 + $0x1c] sm:$0xf]
        %s3488 = scalar_lea.vmem [#allocation10], 256
        %v3489 = vld [vmem:[%s3488] sm:$0xf]
        %v3490 = vld [vmem:[%s3488 + $0x4] sm:$0xf]
        %v3491 = vld [vmem:[%s3488 + $0x8] sm:$0xf]
        %v3492 = vld [vmem:[%s3488 + $0xc] sm:$0xf]
        %v3493 = vld [vmem:[%s3488 + $0x10] sm:$0xf]
        %v3494 = vld [vmem:[%s3488 + $0x14] sm:$0xf]
        %v3495 = vld [vmem:[%s3488 + $0x18] sm:$0xf]
        %v3496 = vld [vmem:[%s3488 + $0x1c] sm:$0xf]
        %v3497 = vld [vmem:[#allocation3] sm:$0xff]
        %v3498 = vld [vmem:[#allocation3 + $0x8] sm:$0xff]
        %v3499 = vld [vmem:[#allocation3 + $0x18] sm:$0xff]
        %v3500 = vld [vmem:[#allocation3 + $0x20] sm:$0xff]
        %v3501 = vld [vmem:[#allocation3 + $0x8] sm:$0xff]
        %v3502 = vld [vmem:[#allocation3 + $0x10] sm:$0xff]
        %v3503 = vld [vmem:[#allocation3 + $0x20] sm:$0xff]
        %v3504 = vld [vmem:[#allocation3 + $0x28] sm:$0xff]
        %v3513 = vunpack.c.l.b16 %v3480
        %v3514 = vunpack.c.l.b16 %v3481
        %v3515 = vunpack.c.l.b16 %v3482
        %v3516 = vunpack.c.l.b16 %v3483
        %v3517 = vunpack.c.l.b16 %v3484
        %v3518 = vunpack.c.l.b16 %v3485
        %v3519 = vunpack.c.l.b16 %v3486
        %v3520 = vunpack.c.l.b16 %v3487
        %v3521 = vpack.c.b16 %v3514, %v3513
        %v3522 = vpack.c.b16 %v3516, %v3515
        %v3523 = vpack.c.b16 %v3518, %v3517
        %v3524 = vpack.c.b16 %v3520, %v3519
        %v3526 = vsel %vm1041, %v3521, 0
        %v3529 = vsel %vm1041, %v3522, 0
        %v3532 = vsel %vm1041, %v3523, 0
        %v3535 = vsel %vm1041, %v3524, 0
        %3537 = vmatprep.subr.bf16.mxu0 0
        %3538 = vmatpush1.bf16.msra.mxu0 %v3498
        %3539 = vmatprep.subr.bf16.mxu0 0
        %3540 = vmatpush1.bf16.msra.mxu0 %v3500
        %3541 = vmatprep.subr.bf16.mxu0 0
        %3542 = vmatpush1.bf16.msra.mxu0 0
        %3543 = vmatprep.subr.bf16.mxu0 0
        %3544 = vmatpush1.bf16.msra.mxu0 0
        %3545 = vmatprep.subr.bf16.mxu0 0
        %3546 = vmatpush1.bf16.msra.mxu0 0
        %3547 = vmatprep.subr.bf16.mxu0 0
        %3548 = vmatpush1.bf16.msra.mxu0 0
        %3549 = vmatprep.subr.bf16.mxu0 0
        %3550 = vmatpush1.bf16.msra.mxu0 0
        %3551 = vmatprep.subr.bf16.mxu0 0
        %3552 = vmatpush1.bf16.msra.mxu0 0
        %3553 = vmatprep.subr.bf16.mxu0 0
        %3554 = vmatpush1.bf16.msra.mxu0 0
        %3555 = vmatprep.subr.bf16.mxu0 0
        %3556 = vmatpush1.bf16.msra.mxu0 0
        %3557 = vmatprep.subr.bf16.mxu0 0
        %3558 = vmatpush1.bf16.msra.mxu0 0
        %3559 = vmatprep.subr.bf16.mxu0 0
        %3560 = vmatpush1.bf16.msra.mxu0 0
        %3561 = vmatprep.subr.bf16.mxu0 0
        %3562 = vmatpush1.bf16.msra.mxu0 0
        %3563 = vmatprep.subr.bf16.mxu0 0
        %3564 = vmatpush1.bf16.msra.mxu0 0
        %3565 = vmatprep.subr.bf16.mxu0 0
        %3566 = vmatpush1.bf16.msra.mxu0 0
        %3567 = vmatprep.subr.bf16.mxu0 0
        %3568 = vmatpush1.bf16.msra.mxu0 0
        %3569 = vmatprep.mubr.bf16.mxu0 0
        %3570 = vmatmul.mubr.bf16.gmra.mrb[0].mxu0 %v3526
        %v3571 = vpop.f32.mrb[0].mxu0
        %v3572 = vadd.f32 0.0, %v3571
        %v3573 = vpop.f32.mrb[0].mxu0
        %v3574 = vpop.f32.mrb[0].mxu0
        %v3575 = vadd.f32 0.0, %v3574
        %v3576 = vpop.f32.mrb[0].mxu0
        %3577 = vmatprep.mubr.bf16.mxu0 0
        %3578 = vmatmul.mubr.bf16.gmra.mrb[0].mxu0 %v3529
        %v3579 = vpop.f32.mrb[0].mxu0
        %v3580 = vadd.f32 0.0, %v3579
        %v3581 = vpop.f32.mrb[0].mxu0
        %v3582 = vpop.f32.mrb[0].mxu0
        %v3583 = vadd.f32 0.0, %v3582
        %v3584 = vpop.f32.mrb[0].mxu0
        %3585 = vmatprep.mubr.bf16.mxu0 0
        %3586 = vmatmul.mubr.bf16.gmra.mrb[0].mxu0 %v3532
        %v3587 = vpop.f32.mrb[0].mxu0
        %v3588 = vadd.f32 0.0, %v3587
        %v3589 = vpop.f32.mrb[0].mxu0
        %v3590 = vpop.f32.mrb[0].mxu0
        %v3591 = vadd.f32 0.0, %v3590
        %v3592 = vpop.f32.mrb[0].mxu0
        %3593 = vmatprep.mubr.bf16.mxu0 0
        %3594 = vmatmul.mubr.bf16.gmra.mrb[0].mxu0 %v3535
        %v3595 = vpop.f32.mrb[0].mxu0
        %v3596 = vadd.f32 0.0, %v3595
        %v3597 = vpop.f32.mrb[0].mxu0
        %v3598 = vpop.f32.mrb[0].mxu0
        %v3599 = vadd.f32 0.0, %v3598
        %v3600 = vpop.f32.mrb[0].mxu0
        %3601 = vdwg.mxu0
        %v3610 = vunpack.c.l.b16 %v3471
        %v3611 = vunpack.c.l.b16 %v3472
        %v3612 = vunpack.c.l.b16 %v3473
        %v3613 = vunpack.c.l.b16 %v3474
        %v3614 = vunpack.c.l.b16 %v3475
        %v3615 = vunpack.c.l.b16 %v3476
        %v3616 = vunpack.c.l.b16 %v3477
        %v3617 = vunpack.c.l.b16 %v3478
        %v3618 = vpack.c.b16 %v3611, %v3610
        %v3619 = vpack.c.b16 %v3613, %v3612
        %v3620 = vpack.c.b16 %v3615, %v3614
        %v3621 = vpack.c.b16 %v3617, %v3616
        %3626 = vrot.lane.b32.xlu0 %v3497, 8
        %v3627 = vpop.permute.xlu0 %3626
        %3628 = vrot.lane.b32.xlu0 %v3498, 8
        %v3629 = vpop.permute.xlu0 %3628
        %3630 = vrot.lane.b32.xlu0 %v3499, 8
        %v3631 = vpop.permute.xlu0 %3630
        %3632 = vrot.lane.b32.xlu0 %v3500, 8
        %v3633 = vpop.permute.xlu0 %3632
        %vm3634 = vcmask 64512
        %v3635 = vsel %vm3634, %v3627, %v3629
        %v3636 = vsel %vm3634, %v3631, %v3633
        %v3640 = vsel %vm1041, %v3618, 0
        %v3643 = vsel %vm1041, %v3619, 0
        %v3646 = vsel %vm1041, %v3620, 0
        %v3649 = vsel %vm1041, %v3621, 0
        %3651 = vmatprep.subr.bf16.mxu0 0
        %3652 = vmatpush1.bf16.msra.mxu0 %v3635
        %3653 = vmatprep.subr.bf16.mxu0 0
        %3654 = vmatpush1.bf16.msra.mxu0 %v3636
        %3655 = vmatprep.subr.bf16.mxu0 0
        %3656 = vmatpush1.bf16.msra.mxu0 0
        %3657 = vmatprep.subr.bf16.mxu0 0
        %3658 = vmatpush1.bf16.msra.mxu0 0
        %3659 = vmatprep.subr.bf16.mxu0 0
        %3660 = vmatpush1.bf16.msra.mxu0 0
        %3661 = vmatprep.subr.bf16.mxu0 0
        %3662 = vmatpush1.bf16.msra.mxu0 0
        %3663 = vmatprep.subr.bf16.mxu0 0
        %3664 = vmatpush1.bf16.msra.mxu0 0
        %3665 = vmatprep.subr.bf16.mxu0 0
        %3666 = vmatpush1.bf16.msra.mxu0 0
        %3667 = vmatprep.subr.bf16.mxu0 0
        %3668 = vmatpush1.bf16.msra.mxu0 0
        %3669 = vmatprep.subr.bf16.mxu0 0
        %3670 = vmatpush1.bf16.msra.mxu0 0
        %3671 = vmatprep.subr.bf16.mxu0 0
        %3672 = vmatpush1.bf16.msra.mxu0 0
        %3673 = vmatprep.subr.bf16.mxu0 0
        %3674 = vmatpush1.bf16.msra.mxu0 0
        %3675 = vmatprep.subr.bf16.mxu0 0
        %3676 = vmatpush1.bf16.msra.mxu0 0
        %3677 = vmatprep.subr.bf16.mxu0 0
        %3678 = vmatpush1.bf16.msra.mxu0 0
        %3679 = vmatprep.subr.bf16.mxu0 0
        %3680 = vmatpush1.bf16.msra.mxu0 0
        %3681 = vmatprep.subr.bf16.mxu0 0
        %3682 = vmatpush1.bf16.msra.mxu0 0
        %3683 = vmatprep.mubr.bf16.mxu0 0
        %3684 = vmatmul.mubr.bf16.gmra.mrb[0].mxu0 %v3640
        %v3685 = vpop.f32.mrb[0].mxu0
        %v3686 = vadd.f32 %v3572, %v3685
        %v3687 = vpop.f32.mrb[0].mxu0
        %v3688 = vpop.f32.mrb[0].mxu0
        %v3689 = vadd.f32 %v3575, %v3688
        %v3690 = vpop.f32.mrb[0].mxu0
        %3691 = vmatprep.mubr.bf16.mxu0 0
        %3692 = vmatmul.mubr.bf16.gmra.mrb[0].mxu0 %v3643
        %v3693 = vpop.f32.mrb[0].mxu0
        %v3694 = vadd.f32 %v3580, %v3693
        %v3695 = vpop.f32.mrb[0].mxu0
        %v3696 = vpop.f32.mrb[0].mxu0
        %v3697 = vadd.f32 %v3583, %v3696
        %v3698 = vpop.f32.mrb[0].mxu0
        %3699 = vmatprep.mubr.bf16.mxu0 0
        %3700 = vmatmul.mubr.bf16.gmra.mrb[0].mxu0 %v3646
        %v3701 = vpop.f32.mrb[0].mxu0
        %v3702 = vadd.f32 %v3588, %v3701
        %v3703 = vpop.f32.mrb[0].mxu0
        %v3704 = vpop.f32.mrb[0].mxu0
        %v3705 = vadd.f32 %v3591, %v3704
        %v3706 = vpop.f32.mrb[0].mxu0
        %3707 = vmatprep.mubr.bf16.mxu0 0
        %3708 = vmatmul.mubr.bf16.gmra.mrb[0].mxu0 %v3649
        %v3709 = vpop.f32.mrb[0].mxu0
        %v3710 = vadd.f32 %v3596, %v3709
        %v3711 = vpop.f32.mrb[0].mxu0
        %v3712 = vpop.f32.mrb[0].mxu0
        %v3713 = vadd.f32 %v3599, %v3712
        %v3714 = vpop.f32.mrb[0].mxu0
        %3715 = vdwg.mxu0
        %v3724 = vunpack.c.l.b16 %v3489
        %v3725 = vunpack.c.l.b16 %v3490
        %v3726 = vunpack.c.l.b16 %v3491
        %v3727 = vunpack.c.l.b16 %v3492
        %v3728 = vunpack.c.l.b16 %v3493
        %v3729 = vunpack.c.l.b16 %v3494
        %v3730 = vunpack.c.l.b16 %v3495
        %v3731 = vunpack.c.l.b16 %v3496
        %v3732 = vpack.c.b16 %v3725, %v3724
        %v3733 = vpack.c.b16 %v3727, %v3726
        %v3734 = vpack.c.b16 %v3729, %v3728
        %v3735 = vpack.c.b16 %v3731, %v3730
        %3740 = vrot.lane.b32.xlu0 %v3501, 120
        %v3741 = vpop.permute.xlu0 %3740
        %3742 = vrot.lane.b32.xlu0 %v3502, 120
        %v3743 = vpop.permute.xlu0 %3742
        %3744 = vrot.lane.b32.xlu0 %v3503, 120
        %v3745 = vpop.permute.xlu0 %3744
        %3746 = vrot.lane.b32.xlu0 %v3504, 120
        %v3747 = vpop.permute.xlu0 %3746
        %vm3748 = vcmask 982016
        %v3749 = vsel %vm3748, %v3741, %v3743
        %v3750 = vsel %vm3748, %v3745, %v3747
        %v3754 = vsel %vm1041, %v3732, 0
        %v3757 = vsel %vm1041, %v3733, 0
        %v3760 = vsel %vm1041, %v3734, 0
        %v3763 = vsel %vm1041, %v3735, 0
        %3765 = vmatprep.subr.bf16.mxu0 0
        %3766 = vmatpush1.bf16.msra.mxu0 %v3749
        %3767 = vmatprep.subr.bf16.mxu0 0
        %3768 = vmatpush1.bf16.msra.mxu0 %v3750
        %3769 = vmatprep.subr.bf16.mxu0 0
        %3770 = vmatpush1.bf16.msra.mxu0 0
        %3771 = vmatprep.subr.bf16.mxu0 0
        %3772 = vmatpush1.bf16.msra.mxu0 0
        %3773 = vmatprep.subr.bf16.mxu0 0
        %3774 = vmatpush1.bf16.msra.mxu0 0
        %3775 = vmatprep.subr.bf16.mxu0 0
        %3776 = vmatpush1.bf16.msra.mxu0 0
        %3777 = vmatprep.subr.bf16.mxu0 0
        %3778 = vmatpush1.bf16.msra.mxu0 0
        %3779 = vmatprep.subr.bf16.mxu0 0
        %3780 = vmatpush1.bf16.msra.mxu0 0
        %3781 = vmatprep.subr.bf16.mxu0 0
        %3782 = vmatpush1.bf16.msra.mxu0 0
        %3783 = vmatprep.subr.bf16.mxu0 0
        %3784 = vmatpush1.bf16.msra.mxu0 0
        %3785 = vmatprep.subr.bf16.mxu0 0
        %3786 = vmatpush1.bf16.msra.mxu0 0
        %3787 = vmatprep.subr.bf16.mxu0 0
        %3788 = vmatpush1.bf16.msra.mxu0 0
        %3789 = vmatprep.subr.bf16.mxu0 0
        %3790 = vmatpush1.bf16.msra.mxu0 0
        %3791 = vmatprep.subr.bf16.mxu0 0
        %3792 = vmatpush1.bf16.msra.mxu0 0
        %3793 = vmatprep.subr.bf16.mxu0 0
        %3794 = vmatpush1.bf16.msra.mxu0 0
        %3795 = vmatprep.subr.bf16.mxu0 0
        %3796 = vmatpush1.bf16.msra.mxu0 0
        %3797 = vmatprep.mubr.bf16.mxu0 0
        %3798 = vmatmul.mubr.bf16.gmra.mrb[0].mxu0 %v3754
        %v3799 = vpop.f32.mrb[0].mxu0
        %v3800 = vadd.f32 0.0, %v3799
        %v3801 = vpop.f32.mrb[0].mxu0
        %v3802 = vpop.f32.mrb[0].mxu0
        %v3803 = vadd.f32 0.0, %v3802
        %v3804 = vpop.f32.mrb[0].mxu0
        %3805 = vmatprep.mubr.bf16.mxu0 0
        %3806 = vmatmul.mubr.bf16.gmra.mrb[0].mxu0 %v3757
        %v3807 = vpop.f32.mrb[0].mxu0
        %v3808 = vadd.f32 0.0, %v3807
        %v3809 = vpop.f32.mrb[0].mxu0
        %v3810 = vpop.f32.mrb[0].mxu0
        %v3811 = vadd.f32 0.0, %v3810
        %v3812 = vpop.f32.mrb[0].mxu0
        %3813 = vmatprep.mubr.bf16.mxu0 0
        %3814 = vmatmul.mubr.bf16.gmra.mrb[0].mxu0 %v3760
        %v3815 = vpop.f32.mrb[0].mxu0
        %v3816 = vadd.f32 0.0, %v3815
        %v3817 = vpop.f32.mrb[0].mxu0
        %v3818 = vpop.f32.mrb[0].mxu0
        %v3819 = vadd.f32 0.0, %v3818
        %v3820 = vpop.f32.mrb[0].mxu0
        %3821 = vmatprep.mubr.bf16.mxu0 0
        %3822 = vmatmul.mubr.bf16.gmra.mrb[0].mxu0 %v3763
        %v3823 = vpop.f32.mrb[0].mxu0
        %v3824 = vadd.f32 0.0, %v3823
        %v3825 = vpop.f32.mrb[0].mxu0
        %v3826 = vpop.f32.mrb[0].mxu0
        %v3827 = vadd.f32 0.0, %v3826
        %v3828 = vpop.f32.mrb[0].mxu0
        %3829 = vdwg.mxu0
        %v3830 = vadd.f32 %v3686, %v3800
        %v3831 = vadd.f32 %v3689, %v3803
        %v3832 = vadd.f32 %v3694, %v3808
        %v3833 = vadd.f32 %v3697, %v3811
        %v3834 = vadd.f32 %v3702, %v3816
        %v3835 = vadd.f32 %v3705, %v3819
        %v3836 = vadd.f32 %v3710, %v3824
        %v3837 = vadd.f32 %v3713, %v3827
        %s3838 = scalar_lea.vmem [#allocation11], 192
        %v3839 = vld [vmem:[%s3838] sm:$0xff]
        %v3840 = vld [vmem:[%s3838 + $0x8] sm:$0xff]
        %v3841 = vld [vmem:[%s3838 + $0x10] sm:$0xff]
        %v3842 = vld [vmem:[%s3838 + $0x18] sm:$0xff]
        %v3843 = vld [vmem:[%s3838 + $0x20] sm:$0xff]
        %v3844 = vld [vmem:[%s3838 + $0x28] sm:$0xff]
        %v3845 = vld [vmem:[%s3838 + $0x30] sm:$0xff]
        %v3846 = vld [vmem:[%s3838 + $0x38] sm:$0xff]
        %3848 = vset.pattern.permute.xlu0 0
        %3849 = vperm.xlu0 %3848, %v3839
        %v3850 = vpop.permute.xlu0 %3849
        %3853 = vset.pattern.permute.xlu0 0
        %3854 = vperm.xlu0 %3853, %v3840
        %v3855 = vpop.permute.xlu0 %3854
        %3858 = vset.pattern.permute.xlu0 0
        %3859 = vperm.xlu0 %3858, %v3841
        %v3860 = vpop.permute.xlu0 %3859
        %3863 = vset.pattern.permute.xlu0 0
        %3864 = vperm.xlu0 %3863, %v3842
        %v3865 = vpop.permute.xlu0 %3864
        %3868 = vset.pattern.permute.xlu0 0
        %3869 = vperm.xlu0 %3868, %v3843
        %v3870 = vpop.permute.xlu0 %3869
        %3873 = vset.pattern.permute.xlu0 0
        %3874 = vperm.xlu0 %3873, %v3844
        %v3875 = vpop.permute.xlu0 %3874
        %3878 = vset.pattern.permute.xlu0 0
        %3879 = vperm.xlu0 %3878, %v3845
        %v3880 = vpop.permute.xlu0 %3879
        %3883 = vset.pattern.permute.xlu0 0
        %3884 = vperm.xlu0 %3883, %v3846
        %v3885 = vpop.permute.xlu0 %3884
        %v3887 = vmul.f32 %v3830, %v3850
        %v3888 = vmul.f32 %v3831, %v3855
        %v3889 = vmul.f32 %v3832, %v3860
        %v3890 = vmul.f32 %v3833, %v3865
        %v3891 = vmul.f32 %v3834, %v3870
        %v3892 = vmul.f32 %v3835, %v3875
        %v3893 = vmul.f32 %v3836, %v3880
        %v3894 = vmul.f32 %v3837, %v3885
        %s3895 = scalar_lea.vmem [#allocation13], 192
        %v3896 = vld [vmem:[%s3895] sm:$0xff]
        %v3897 = vld [vmem:[%s3895 + $0x8] sm:$0xff]
        %v3898 = vld [vmem:[%s3895 + $0x10] sm:$0xff]
        %v3899 = vld [vmem:[%s3895 + $0x18] sm:$0xff]
        %v3900 = vld [vmem:[%s3895 + $0x20] sm:$0xff]
        %v3901 = vld [vmem:[%s3895 + $0x28] sm:$0xff]
        %v3902 = vld [vmem:[%s3895 + $0x30] sm:$0xff]
        %v3903 = vld [vmem:[%s3895 + $0x38] sm:$0xff]
        %3905 = vset.pattern.permute.xlu0 0
        %3906 = vperm.xlu0 %3905, %v3896
        %v3907 = vpop.permute.xlu0 %3906
        %3910 = vset.pattern.permute.xlu0 0
        %3911 = vperm.xlu0 %3910, %v3897
        %v3912 = vpop.permute.xlu0 %3911
        %3915 = vset.pattern.permute.xlu0 0
        %3916 = vperm.xlu0 %3915, %v3898
        %v3917 = vpop.permute.xlu0 %3916
        %3920 = vset.pattern.permute.xlu0 0
        %3921 = vperm.xlu0 %3920, %v3899
        %v3922 = vpop.permute.xlu0 %3921
        %3925 = vset.pattern.permute.xlu0 0
        %3926 = vperm.xlu0 %3925, %v3900
        %v3927 = vpop.permute.xlu0 %3926
        %3930 = vset.pattern.permute.xlu0 0
        %3931 = vperm.xlu0 %3930, %v3901
        %v3932 = vpop.permute.xlu0 %3931
        %3935 = vset.pattern.permute.xlu0 0
        %3936 = vperm.xlu0 %3935, %v3902
        %v3937 = vpop.permute.xlu0 %3936
        %3940 = vset.pattern.permute.xlu0 0
        %3941 = vperm.xlu0 %3940, %v3903
        %v3942 = vpop.permute.xlu0 %3941
        %v3944 = vadd.f32 %v3887, %v3907
        %v3945 = vadd.f32 %v3888, %v3912
        %v3946 = vadd.f32 %v3889, %v3917
        %v3947 = vadd.f32 %v3890, %v3922
        %v3948 = vadd.f32 %v3891, %v3927
        %v3949 = vadd.f32 %v3892, %v3932
        %v3950 = vadd.f32 %v3893, %v3937
        %v3951 = vadd.f32 %v3894, %v3942
        %v3952 = vtanh.pop %v3944
        %v3953 = vtanh.pop %v3945
        %v3954 = vtanh.pop %v3946
        %v3955 = vtanh.pop %v3947
        %v3956 = vxor.u32 %v3948, 2147483648
        %v3957 = vxor.u32 %v3949, 2147483648
        %v3958 = vxor.u32 %v3950, 2147483648
        %v3959 = vxor.u32 %v3951, 2147483648
        %v3960 = vmul.f32 %v3956, 1.442695
        %v3961 = vpow.pop %v3960
        %v3962 = vmul.f32 %v3957, 1.442695
        %v3963 = vpow.pop %v3962
        %v3964 = vmul.f32 %v3958, 1.442695
        %v3965 = vpow.pop %v3964
        %v3966 = vmul.f32 %v3959, 1.442695
        %v3967 = vpow.pop %v3966
        %v3968 = vadd.f32 %v3961, 1.0
        %v3969 = vadd.f32 %v3963, 1.0
        %v3970 = vadd.f32 %v3965, 1.0
        %v3971 = vadd.f32 %v3967, 1.0
        %v3972 = vrcp.pop %v3968
        %v3973 = vmul.f32 1.0, %v3972
        %v3974 = vrcp.pop %v3969
        %v3975 = vmul.f32 1.0, %v3974
        %v3976 = vrcp.pop %v3970
        %v3977 = vmul.f32 1.0, %v3976
        %v3978 = vrcp.pop %v3971
        %v3979 = vmul.f32 1.0, %v3978
        %v3980 = vmul.f32 %v3952, %v3973
        %v3981 = vmul.f32 %v3953, %v3975
        %v3982 = vmul.f32 %v3954, %v3977
        %v3983 = vmul.f32 %v3955, %v3979
        %v3984 = vmul.f32 %v3980, %v454
        %v3985 = vmul.f32 %v3981, %v454
        %v3986 = vmul.f32 %v3982, %v454
        %v3987 = vmul.f32 %v3983, %v454
        %v3988 = vpack.c.bf16 %v3985, %v3984
        %v3989 = vpack.c.bf16 %v3987, %v3986
        %s3990 = scalar_lea.vmem [#allocation14], 72
        %v3991 = vld [vmem:[%s3990] sm:$0xf]
        %v3992 = vld [vmem:[%s3990 + $0x4] sm:$0xf]
        %v3993 = vld [vmem:[%s3990 + $0x8] sm:$0xf]
        %v3994 = vld [vmem:[%s3990 + $0xc] sm:$0xf]
        %v3995 = vld [vmem:[%s3990 + $0x10] sm:$0xf]
        %v3996 = vld [vmem:[%s3990 + $0x14] sm:$0xf]
        %s3997 = scalar_lea.vmem [#allocation16], 144
        %v3998 = vld [vmem:[%s3997] sm:$0xff]
        %v3999 = vld [vmem:[%s3997 + $0x8] sm:$0xff]
        %v4000 = vld [vmem:[%s3997 + $0x10] sm:$0xff]
        %v4001 = vld [vmem:[%s3997 + $0x18] sm:$0xff]
        %v4002 = vld [vmem:[%s3997 + $0x20] sm:$0xff]
        %v4003 = vld [vmem:[%s3997 + $0x28] sm:$0xff]
        %4005 = vset.pattern.permute.xlu0 0
        %4006 = vperm.xlu0 %4005, %v3998
        %v4007 = vpop.permute.xlu0 %4006
        %4010 = vset.pattern.permute.xlu0 0
        %4011 = vperm.xlu0 %4010, %v3999
        %v4012 = vpop.permute.xlu0 %4011
        %4015 = vset.pattern.permute.xlu0 0
        %4016 = vperm.xlu0 %4015, %v4000
        %v4017 = vpop.permute.xlu0 %4016
        %4020 = vset.pattern.permute.xlu0 0
        %4021 = vperm.xlu0 %4020, %v4001
        %v4022 = vpop.permute.xlu0 %4021
        %4025 = vset.pattern.permute.xlu0 0
        %4026 = vperm.xlu0 %4025, %v4002
        %v4027 = vpop.permute.xlu0 %4026
        %4030 = vset.pattern.permute.xlu0 0
        %4031 = vperm.xlu0 %4030, %v4003
        %v4032 = vpop.permute.xlu0 %4031
        %v4040 = vunpack.c.l.b16 %v3991
        %v4041 = vunpack.c.l.b16 %v3992
        %v4042 = vunpack.c.l.b16 %v3993
        %v4043 = vunpack.c.l.b16 %v3994
        %v4044 = vunpack.c.l.b16 %v3995
        %v4045 = vunpack.c.l.b16 %v3996
        %v4046 = vpack.c.b16 %v4041, %v4040
        %v4047 = vpack.c.b16 %v4043, %v4042
        %v4048 = vpack.c.b16 %v4045, %v4044
        %v4050 = vsel %vm1041, %v4046, 0
        %v4053 = vsel %vm1041, %v4047, 0
        %v4056 = vsel %vm1041, %v4048, 0
        %4058 = vmatprep.subr.bf16.mxu0 0
        %4059 = vmatpush1.bf16.msra.mxu0 %v3988
        %4060 = vmatprep.subr.bf16.mxu0 0
        %4061 = vmatpush1.bf16.msra.mxu0 %v3989
        %4062 = vmatprep.subr.bf16.mxu0 0
        %4063 = vmatpush1.bf16.msra.mxu0 0
        %4064 = vmatprep.subr.bf16.mxu0 0
        %4065 = vmatpush1.bf16.msra.mxu0 0
        %4066 = vmatprep.subr.bf16.mxu0 0
        %4067 = vmatpush1.bf16.msra.mxu0 0
        %4068 = vmatprep.subr.bf16.mxu0 0
        %4069 = vmatpush1.bf16.msra.mxu0 0
        %4070 = vmatprep.subr.bf16.mxu0 0
        %4071 = vmatpush1.bf16.msra.mxu0 0
        %4072 = vmatprep.subr.bf16.mxu0 0
        %4073 = vmatpush1.bf16.msra.mxu0 0
        %4074 = vmatprep.subr.bf16.mxu0 0
        %4075 = vmatpush1.bf16.msra.mxu0 0
        %4076 = vmatprep.subr.bf16.mxu0 0
        %4077 = vmatpush1.bf16.msra.mxu0 0
        %4078 = vmatprep.subr.bf16.mxu0 0
        %4079 = vmatpush1.bf16.msra.mxu0 0
        %4080 = vmatprep.subr.bf16.mxu0 0
        %4081 = vmatpush1.bf16.msra.mxu0 0
        %4082 = vmatprep.subr.bf16.mxu0 0
        %4083 = vmatpush1.bf16.msra.mxu0 0
        %4084 = vmatprep.subr.bf16.mxu0 0
        %4085 = vmatpush1.bf16.msra.mxu0 0
        %4086 = vmatprep.subr.bf16.mxu0 0
        %4087 = vmatpush1.bf16.msra.mxu0 0
        %4088 = vmatprep.subr.bf16.mxu0 0
        %4089 = vmatpush1.bf16.msra.mxu0 0
        %4090 = vmatprep.mubr.bf16.mxu0 0
        %4091 = vmatmul.mubr.bf16.gmra.mrb[0].mxu0 %v4050
        %v4092 = vpop.f32.mrb[0].mxu0
        %v4093 = vadd.f32 %v4007, %v4092
        %v4094 = vpop.f32.mrb[0].mxu0
        %v4095 = vpop.f32.mrb[0].mxu0
        %v4096 = vadd.f32 %v4012, %v4095
        %v4097 = vpop.f32.mrb[0].mxu0
        %4098 = vmatprep.mubr.bf16.mxu0 0
        %4099 = vmatmul.mubr.bf16.gmra.mrb[0].mxu0 %v4053
        %v4100 = vpop.f32.mrb[0].mxu0
        %v4101 = vadd.f32 %v4017, %v4100
        %v4102 = vpop.f32.mrb[0].mxu0
        %v4103 = vpop.f32.mrb[0].mxu0
        %v4104 = vadd.f32 %v4022, %v4103
        %v4105 = vpop.f32.mrb[0].mxu0
        %4106 = vmatprep.mubr.bf16.mxu0 0
        %4107 = vmatmul.mubr.bf16.gmra.mrb[0].mxu0 %v4056
        %v4108 = vpop.f32.mrb[0].mxu0
        %v4109 = vadd.f32 %v4027, %v4108
        %v4110 = vpop.f32.mrb[0].mxu0
        %v4111 = vpop.f32.mrb[0].mxu0
        %v4112 = vadd.f32 %v4032, %v4111
        %v4113 = vpop.f32.mrb[0].mxu0
        %4114 = vdwg.mxu0
        %v4115 = vmul.f32 %v4101, %v454
        %v4116 = vmul.f32 %v4104, %v454
        %v4117 = vmul.f32 %v4109, %v454
        %v4118 = vmul.f32 %v4112, %v454
        %v4119 = vpack.c.bf16 %v4093, %v4093
        %v4120 = vpack.c.bf16 %v4096, %v4096
        %4121 = vxpose.xlu0.c.b16.start [1/8] %v4119, 128
        %4122 = vxpose.xlu0.c.b16.cont [2/8] 0, 128
        %4123 = vxpose.xlu0.c.b16.cont [3/8] 0, 128
        %4124 = vxpose.xlu0.c.b16.cont [4/8] 0, 128
        %4125 = vxpose.xlu0.c.b16.cont [5/8] 0, 128
        %4126 = vxpose.xlu0.c.b16.cont [6/8] 0, 128
        %4127 = vxpose.xlu0.c.b16.cont [7/8] 0, 128
        %4128 = vxpose.xlu0.c.b16.end [8/8] 0, 128
        %v4129 = vpop.trf.xlu0
        %v4130 = vpop.trf.xlu0
        %v4131 = vpop.trf.xlu0
        %v4132 = vpop.trf.xlu0
        %v4133 = vpop.trf.xlu0
        %v4134 = vpop.trf.xlu0
        %v4135 = vpop.trf.xlu0
        %v4136 = vpop.trf.xlu0
        %v4138 = vsel %vm1130, %v4129, 0
        %v4141 = vsel %vm1130, %v4130, 0
        %v4144 = vsel %vm1130, %v4131, 0
        %v4147 = vsel %vm1130, %v4132, 0
        %v4150 = vsel %vm1130, %v4133, 0
        %v4153 = vsel %vm1130, %v4134, 0
        %v4156 = vsel %vm1130, %v4135, 0
        %v4159 = vsel %vm1130, %v4136, 0
        %v4162 = vsel %vm1155, %v4120, 0
        %4164 = vmatprep.subr.bf16.mxu0 0
        %4165 = vmatpush1.bf16.msra.mxu0 %v4162
        %4166 = vmatprep.subr.bf16.mxu0 0
        %4167 = vmatpush1.bf16.msra.mxu0 0
        %4168 = vmatprep.subr.bf16.mxu0 0
        %4169 = vmatpush1.bf16.msra.mxu0 0
        %4170 = vmatprep.subr.bf16.mxu0 0
        %4171 = vmatpush1.bf16.msra.mxu0 0
        %4172 = vmatprep.subr.bf16.mxu0 0
        %4173 = vmatpush1.bf16.msra.mxu0 0
        %4174 = vmatprep.subr.bf16.mxu0 0
        %4175 = vmatpush1.bf16.msra.mxu0 0
        %4176 = vmatprep.subr.bf16.mxu0 0
        %4177 = vmatpush1.bf16.msra.mxu0 0
        %4178 = vmatprep.subr.bf16.mxu0 0
        %4179 = vmatpush1.bf16.msra.mxu0 0
        %4180 = vmatprep.subr.bf16.mxu0 0
        %4181 = vmatpush1.bf16.msra.mxu0 0
        %4182 = vmatprep.subr.bf16.mxu0 0
        %4183 = vmatpush1.bf16.msra.mxu0 0
        %4184 = vmatprep.subr.bf16.mxu0 0
        %4185 = vmatpush1.bf16.msra.mxu0 0
        %4186 = vmatprep.subr.bf16.mxu0 0
        %4187 = vmatpush1.bf16.msra.mxu0 0
        %4188 = vmatprep.subr.bf16.mxu0 0
        %4189 = vmatpush1.bf16.msra.mxu0 0
        %4190 = vmatprep.subr.bf16.mxu0 0
        %4191 = vmatpush1.bf16.msra.mxu0 0
        %4192 = vmatprep.subr.bf16.mxu0 0
        %4193 = vmatpush1.bf16.msra.mxu0 0
        %4194 = vmatprep.subr.bf16.mxu0 0
        %4195 = vmatpush1.bf16.msra.mxu0 0
        %4196 = vmatprep.mubr.bf16.mxu0 0
        %4197 = vmatmul.mubr.bf16.gmra.mrb[0].mxu0 %v4138
        %v4198 = vpop.f32.mrb[0].mxu0
        %v4199 = vadd.f32 %v455, %v4198
        %v4200 = vpop.f32.mrb[0].mxu0
        %v4201 = vpop.f32.mrb[0].mxu0
        %v4202 = vadd.f32 %v455, %v4201
        %v4203 = vpop.f32.mrb[0].mxu0
        %4204 = vmatprep.mubr.bf16.mxu0 0
        %4205 = vmatmul.mubr.bf16.gmra.mrb[0].mxu0 %v4141
        %v4206 = vpop.f32.mrb[0].mxu0
        %v4207 = vadd.f32 %v455, %v4206
        %v4208 = vpop.f32.mrb[0].mxu0
        %v4209 = vpop.f32.mrb[0].mxu0
        %v4210 = vadd.f32 %v455, %v4209
        %v4211 = vpop.f32.mrb[0].mxu0
        %4212 = vmatprep.mubr.bf16.mxu0 0
        %4213 = vmatmul.mubr.bf16.gmra.mrb[0].mxu0 %v4144
        %v4214 = vpop.f32.mrb[0].mxu0
        %v4215 = vadd.f32 %v455, %v4214
        %v4216 = vpop.f32.mrb[0].mxu0
        %v4217 = vpop.f32.mrb[0].mxu0
        %v4218 = vadd.f32 %v455, %v4217
        %v4219 = vpop.f32.mrb[0].mxu0
        %4220 = vmatprep.mubr.bf16.mxu0 0
        %4221 = vmatmul.mubr.bf16.gmra.mrb[0].mxu0 %v4147
        %v4222 = vpop.f32.mrb[0].mxu0
        %v4223 = vadd.f32 %v455, %v4222
        %v4224 = vpop.f32.mrb[0].mxu0
        %v4225 = vpop.f32.mrb[0].mxu0
        %v4226 = vadd.f32 %v455, %v4225
        %v4227 = vpop.f32.mrb[0].mxu0
        %4228 = vmatprep.mubr.bf16.mxu0 0
        %4229 = vmatmul.mubr.bf16.gmra.mrb[0].mxu0 %v4150
        %v4230 = vpop.f32.mrb[0].mxu0
        %v4231 = vadd.f32 %v455, %v4230
        %v4232 = vpop.f32.mrb[0].mxu0
        %v4233 = vpop.f32.mrb[0].mxu0
        %v4234 = vadd.f32 %v455, %v4233
        %v4235 = vpop.f32.mrb[0].mxu0
        %4236 = vmatprep.mubr.bf16.mxu0 0
        %4237 = vmatmul.mubr.bf16.gmra.mrb[0].mxu0 %v4153
        %v4238 = vpop.f32.mrb[0].mxu0
        %v4239 = vadd.f32 %v455, %v4238
        %v4240 = vpop.f32.mrb[0].mxu0
        %v4241 = vpop.f32.mrb[0].mxu0
        %v4242 = vadd.f32 %v455, %v4241
        %v4243 = vpop.f32.mrb[0].mxu0
        %4244 = vmatprep.mubr.bf16.mxu0 0
        %4245 = vmatmul.mubr.bf16.gmra.mrb[0].mxu0 %v4156
        %v4246 = vpop.f32.mrb[0].mxu0
        %v4247 = vadd.f32 %v455, %v4246
        %v4248 = vpop.f32.mrb[0].mxu0
        %v4249 = vpop.f32.mrb[0].mxu0
        %v4250 = vadd.f32 %v455, %v4249
        %v4251 = vpop.f32.mrb[0].mxu0
        %4252 = vmatprep.mubr.bf16.mxu0 0
        %4253 = vmatmul.mubr.bf16.gmra.mrb[0].mxu0 %v4159
        %v4254 = vpop.f32.mrb[0].mxu0
        %v4255 = vadd.f32 %v455, %v4254
        %v4256 = vpop.f32.mrb[0].mxu0
        %v4257 = vpop.f32.mrb[0].mxu0
        %v4258 = vadd.f32 %v455, %v4257
        %v4259 = vpop.f32.mrb[0].mxu0
        %4260 = vdwg.mxu0
        %4261 = vmax.xlane.f32.xlu0 %v4199
        %v4262 = vpop.xlane.xlu0 %4261
        %4263 = vmax.xlane.f32.xlu0 %v4202
        %v4264 = vpop.xlane.xlu0 %4263
        %4265 = vmax.xlane.f32.xlu0 %v4207
        %v4266 = vpop.xlane.xlu0 %4265
        %4267 = vmax.xlane.f32.xlu0 %v4210
        %v4268 = vpop.xlane.xlu0 %4267
        %4269 = vmax.xlane.f32.xlu0 %v4215
        %v4270 = vpop.xlane.xlu0 %4269
        %4271 = vmax.xlane.f32.xlu0 %v4218
        %v4272 = vpop.xlane.xlu0 %4271
        %4273 = vmax.xlane.f32.xlu0 %v4223
        %v4274 = vpop.xlane.xlu0 %4273
        %4275 = vmax.xlane.f32.xlu0 %v4226
        %v4276 = vpop.xlane.xlu0 %4275
        %4277 = vmax.xlane.f32.xlu0 %v4231
        %v4278 = vpop.xlane.xlu0 %4277
        %4279 = vmax.xlane.f32.xlu0 %v4234
        %v4280 = vpop.xlane.xlu0 %4279
        %4281 = vmax.xlane.f32.xlu0 %v4239
        %v4282 = vpop.xlane.xlu0 %4281
        %4283 = vmax.xlane.f32.xlu0 %v4242
        %v4284 = vpop.xlane.xlu0 %4283
        %4285 = vmax.xlane.f32.xlu0 %v4247
        %v4286 = vpop.xlane.xlu0 %4285
        %4287 = vmax.xlane.f32.xlu0 %v4250
        %v4288 = vpop.xlane.xlu0 %4287
        %4289 = vmax.xlane.f32.xlu0 %v4255
        %v4290 = vpop.xlane.xlu0 %4289
        %4291 = vmax.xlane.f32.xlu0 %v4258
        %v4292 = vpop.xlane.xlu0 %4291
        %v4293 = vsub.f32 %v4199, %v4262
        %v4294 = vsub.f32 %v4202, %v4264
        %v4295 = vsub.f32 %v4207, %v4266
        %v4296 = vsub.f32 %v4210, %v4268
        %v4297 = vsub.f32 %v4215, %v4270
        %v4298 = vsub.f32 %v4218, %v4272
        %v4299 = vsub.f32 %v4223, %v4274
        %v4300 = vsub.f32 %v4226, %v4276
        %v4301 = vsub.f32 %v4231, %v4278
        %v4302 = vsub.f32 %v4234, %v4280
        %v4303 = vsub.f32 %v4239, %v4282
        %v4304 = vsub.f32 %v4242, %v4284
        %v4305 = vsub.f32 %v4247, %v4286
        %v4306 = vsub.f32 %v4250, %v4288
        %v4307 = vsub.f32 %v4255, %v4290
        %v4308 = vsub.f32 %v4258, %v4292
        %v4309 = vmul.f32 %v4293, 1.442695
        %v4310 = vpow.pop %v4309
        %v4311 = vmul.f32 %v4294, 1.442695
        %v4312 = vpow.pop %v4311
        %v4313 = vmul.f32 %v4295, 1.442695
        %v4314 = vpow.pop %v4313
        %v4315 = vmul.f32 %v4296, 1.442695
        %v4316 = vpow.pop %v4315
        %v4317 = vmul.f32 %v4297, 1.442695
        %v4318 = vpow.pop %v4317
        %v4319 = vmul.f32 %v4298, 1.442695
        %v4320 = vpow.pop %v4319
        %v4321 = vmul.f32 %v4299, 1.442695
        %v4322 = vpow.pop %v4321
        %v4323 = vmul.f32 %v4300, 1.442695
        %v4324 = vpow.pop %v4323
        %v4325 = vmul.f32 %v4301, 1.442695
        %v4326 = vpow.pop %v4325
        %v4327 = vmul.f32 %v4302, 1.442695
        %v4328 = vpow.pop %v4327
        %v4329 = vmul.f32 %v4303, 1.442695
        %v4330 = vpow.pop %v4329
        %v4331 = vmul.f32 %v4304, 1.442695
        %v4332 = vpow.pop %v4331
        %v4333 = vmul.f32 %v4305, 1.442695
        %v4334 = vpow.pop %v4333
        %v4335 = vmul.f32 %v4306, 1.442695
        %v4336 = vpow.pop %v4335
        %v4337 = vmul.f32 %v4307, 1.442695
        %v4338 = vpow.pop %v4337
        %v4339 = vmul.f32 %v4308, 1.442695
        %v4340 = vpow.pop %v4339
        %4341 = vadd.xlane.f32.xlu0 %v4310
        %v4342 = vpop.xlane.xlu0 %4341
        %4343 = vadd.xlane.f32.xlu0 %v4312
        %v4344 = vpop.xlane.xlu0 %4343
        %4345 = vadd.xlane.f32.xlu0 %v4314
        %v4346 = vpop.xlane.xlu0 %4345
        %4347 = vadd.xlane.f32.xlu0 %v4316
        %v4348 = vpop.xlane.xlu0 %4347
        %4349 = vadd.xlane.f32.xlu0 %v4318
        %v4350 = vpop.xlane.xlu0 %4349
        %4351 = vadd.xlane.f32.xlu0 %v4320
        %v4352 = vpop.xlane.xlu0 %4351
        %4353 = vadd.xlane.f32.xlu0 %v4322
        %v4354 = vpop.xlane.xlu0 %4353
        %4355 = vadd.xlane.f32.xlu0 %v4324
        %v4356 = vpop.xlane.xlu0 %4355
        %4357 = vadd.xlane.f32.xlu0 %v4326
        %v4358 = vpop.xlane.xlu0 %4357
        %4359 = vadd.xlane.f32.xlu0 %v4328
        %v4360 = vpop.xlane.xlu0 %4359
        %4361 = vadd.xlane.f32.xlu0 %v4330
        %v4362 = vpop.xlane.xlu0 %4361
        %4363 = vadd.xlane.f32.xlu0 %v4332
        %v4364 = vpop.xlane.xlu0 %4363
        %4365 = vadd.xlane.f32.xlu0 %v4334
        %v4366 = vpop.xlane.xlu0 %4365
        %4367 = vadd.xlane.f32.xlu0 %v4336
        %v4368 = vpop.xlane.xlu0 %4367
        %4369 = vadd.xlane.f32.xlu0 %v4338
        %v4370 = vpop.xlane.xlu0 %4369
        %4371 = vadd.xlane.f32.xlu0 %v4340
        %v4372 = vpop.xlane.xlu0 %4371
        %v4373 = vrcp.pop %v4342
        %v4374 = vrcp.pop %v4344
        %v4375 = vrcp.pop %v4346
        %v4376 = vrcp.pop %v4348
        %v4377 = vrcp.pop %v4350
        %v4378 = vrcp.pop %v4352
        %v4379 = vrcp.pop %v4354
        %v4380 = vrcp.pop %v4356
        %v4381 = vrcp.pop %v4358
        %v4382 = vrcp.pop %v4360
        %v4383 = vrcp.pop %v4362
        %v4384 = vrcp.pop %v4364
        %v4385 = vrcp.pop %v4366
        %v4386 = vrcp.pop %v4368
        %v4387 = vrcp.pop %v4370
        %v4388 = vrcp.pop %v4372
        %v4389 = vmul.f32 %v4310, %v4373
        %v4390 = vmul.f32 %v4312, %v4374
        %v4391 = vmul.f32 %v4314, %v4375
        %v4392 = vmul.f32 %v4316, %v4376
        %v4393 = vmul.f32 %v4318, %v4377
        %v4394 = vmul.f32 %v4320, %v4378
        %v4395 = vmul.f32 %v4322, %v4379
        %v4396 = vmul.f32 %v4324, %v4380
        %v4397 = vmul.f32 %v4326, %v4381
        %v4398 = vmul.f32 %v4328, %v4382
        %v4399 = vmul.f32 %v4330, %v4383
        %v4400 = vmul.f32 %v4332, %v4384
        %v4401 = vmul.f32 %v4334, %v4385
        %v4402 = vmul.f32 %v4336, %v4386
        %v4403 = vmul.f32 %v4338, %v4387
        %v4404 = vmul.f32 %v4340, %v4388
        %v4405 = vpack.c.bf16 %v4116, %v4115
        %v4406 = vpack.c.bf16 %v4118, %v4117
        %v4407 = vpack.c.bf16 %v4390, %v4389
        %v4408 = vpack.c.bf16 %v4392, %v4391
        %v4409 = vpack.c.bf16 %v4394, %v4393
        %v4410 = vpack.c.bf16 %v4396, %v4395
        %v4411 = vpack.c.bf16 %v4398, %v4397
        %v4412 = vpack.c.bf16 %v4400, %v4399
        %v4413 = vpack.c.bf16 %v4402, %v4401
        %v4414 = vpack.c.bf16 %v4404, %v4403
        %4415 = vmatprep.subr.bf16.mxu0 0
        %4416 = vmatpush1.bf16.msra.mxu0 %v4407
        %4417 = vmatprep.subr.bf16.mxu0 0
        %4418 = vmatpush1.bf16.msra.mxu0 %v4408
        %4419 = vmatprep.subr.bf16.mxu0 0
        %4420 = vmatpush1.bf16.msra.mxu0 %v4409
        %4421 = vmatprep.subr.bf16.mxu0 0
        %4422 = vmatpush1.bf16.msra.mxu0 %v4410
        %4423 = vmatprep.subr.bf16.mxu0 0
        %4424 = vmatpush1.bf16.msra.mxu0 %v4411
        %4425 = vmatprep.subr.bf16.mxu0 0
        %4426 = vmatpush1.bf16.msra.mxu0 %v4412
        %4427 = vmatprep.subr.bf16.mxu0 0
        %4428 = vmatpush1.bf16.msra.mxu0 %v4413
        %4429 = vmatprep.subr.bf16.mxu0 0
        %4430 = vmatpush1.bf16.msra.mxu0 %v4414
        %4431 = vmatprep.subr.bf16.mxu0 0
        %4432 = vmatpush1.bf16.msra.mxu0 0
        %4433 = vmatprep.subr.bf16.mxu0 0
        %4434 = vmatpush1.bf16.msra.mxu0 0
        %4435 = vmatprep.subr.bf16.mxu0 0
        %4436 = vmatpush1.bf16.msra.mxu0 0
        %4437 = vmatprep.subr.bf16.mxu0 0
        %4438 = vmatpush1.bf16.msra.mxu0 0
        %4439 = vmatprep.subr.bf16.mxu0 0
        %4440 = vmatpush1.bf16.msra.mxu0 0
        %4441 = vmatprep.subr.bf16.mxu0 0
        %4442 = vmatpush1.bf16.msra.mxu0 0
        %4443 = vmatprep.subr.bf16.mxu0 0
        %4444 = vmatpush1.bf16.msra.mxu0 0
        %4445 = vmatprep.subr.bf16.mxu0 0
        %4446 = vmatpush1.bf16.msra.mxu0 0
        %4447 = vmatprep.mubr.bf16.mxu0 0
        %4448 = vmatmul.mubr.bf16.gmra.mrb[0].mxu0 %v4405
        %v4449 = vpop.f32.mrb[0].mxu0
        %v4450 = vadd.f32 %v3984, %v4449
        %v4451 = vpop.f32.mrb[0].mxu0
        %v4452 = vpop.f32.mrb[0].mxu0
        %v4453 = vadd.f32 %v3985, %v4452
        %v4454 = vpop.f32.mrb[0].mxu0
        %4455 = vmatprep.mubr.bf16.mxu0 0
        %4456 = vmatmul.mubr.bf16.gmra.mrb[0].mxu0 %v4406
        %v4457 = vpop.f32.mrb[0].mxu0
        %v4458 = vadd.f32 %v3986, %v4457
        %v4459 = vpop.f32.mrb[0].mxu0
        %v4460 = vpop.f32.mrb[0].mxu0
        %v4461 = vadd.f32 %v3987, %v4460
        %v4462 = vpop.f32.mrb[0].mxu0
        %4463 = vdwg.mxu0
        %v4464 = vmul.f32 %v4450, %v454
        %v4465 = vmul.f32 %v4453, %v454
        %v4466 = vmul.f32 %v4458, %v454
        %v4467 = vmul.f32 %v4461, %v454
        %v4468 = vpack.c.bf16 %v4465, %v4464
        %v4469 = vpack.c.bf16 %v4467, %v4466
        %4470 = vst [vmem:[#allocation3 + $0x8] sm:$0xff] %v4468
        %4471 = vst [vmem:[#allocation3 + $0x20] sm:$0xff] %v4469
        %s4472 = scalar_lea.vmem [#allocation10], 288
        %v4473 = vld [vmem:[%s4472] sm:$0xf]
        %v4474 = vld [vmem:[%s4472 + $0x4] sm:$0xf]
        %v4475 = vld [vmem:[%s4472 + $0x8] sm:$0xf]
        %v4476 = vld [vmem:[%s4472 + $0xc] sm:$0xf]
        %v4477 = vld [vmem:[%s4472 + $0x10] sm:$0xf]
        %v4478 = vld [vmem:[%s4472 + $0x14] sm:$0xf]
        %v4479 = vld [vmem:[%s4472 + $0x18] sm:$0xf]
        %v4480 = vld [vmem:[%s4472 + $0x1c] sm:$0xf]
        %s4481 = scalar_lea.vmem [#allocation10], 320
        %v4482 = vld [vmem:[%s4481] sm:$0xf]
        %v4483 = vld [vmem:[%s4481 + $0x4] sm:$0xf]
        %v4484 = vld [vmem:[%s4481 + $0x8] sm:$0xf]
        %v4485 = vld [vmem:[%s4481 + $0xc] sm:$0xf]
        %v4486 = vld [vmem:[%s4481 + $0x10] sm:$0xf]
        %v4487 = vld [vmem:[%s4481 + $0x14] sm:$0xf]
        %v4488 = vld [vmem:[%s4481 + $0x18] sm:$0xf]
        %v4489 = vld [vmem:[%s4481 + $0x1c] sm:$0xf]
        %s4490 = scalar_lea.vmem [#allocation10], 352
        %v4491 = vld [vmem:[%s4490] sm:$0xf]
        %v4492 = vld [vmem:[%s4490 + $0x4] sm:$0xf]
        %v4493 = vld [vmem:[%s4490 + $0x8] sm:$0xf]
        %v4494 = vld [vmem:[%s4490 + $0xc] sm:$0xf]
        %v4495 = vld [vmem:[%s4490 + $0x10] sm:$0xf]
        %v4496 = vld [vmem:[%s4490 + $0x14] sm:$0xf]
        %v4497 = vld [vmem:[%s4490 + $0x18] sm:$0xf]
        %v4498 = vld [vmem:[%s4490 + $0x1c] sm:$0xf]
        %v4499 = vld [vmem:[#allocation3] sm:$0xff]
        %v4500 = vld [vmem:[#allocation3 + $0x8] sm:$0xff]
        %v4501 = vld [vmem:[#allocation3 + $0x18] sm:$0xff]
        %v4502 = vld [vmem:[#allocation3 + $0x20] sm:$0xff]
        %v4503 = vld [vmem:[#allocation3 + $0x8] sm:$0xff]
        %v4504 = vld [vmem:[#allocation3 + $0x10] sm:$0xff]
        %v4505 = vld [vmem:[#allocation3 + $0x20] sm:$0xff]
        %v4506 = vld [vmem:[#allocation3 + $0x28] sm:$0xff]
        %v4515 = vunpack.c.l.b16 %v4482
        %v4516 = vunpack.c.l.b16 %v4483
        %v4517 = vunpack.c.l.b16 %v4484
        %v4518 = vunpack.c.l.b16 %v4485
        %v4519 = vunpack.c.l.b16 %v4486
        %v4520 = vunpack.c.l.b16 %v4487
        %v4521 = vunpack.c.l.b16 %v4488
        %v4522 = vunpack.c.l.b16 %v4489
        %v4523 = vpack.c.b16 %v4516, %v4515
        %v4524 = vpack.c.b16 %v4518, %v4517
        %v4525 = vpack.c.b16 %v4520, %v4519
        %v4526 = vpack.c.b16 %v4522, %v4521
        %v4528 = vsel %vm1041, %v4523, 0
        %v4531 = vsel %vm1041, %v4524, 0
        %v4534 = vsel %vm1041, %v4525, 0
        %v4537 = vsel %vm1041, %v4526, 0
        %4539 = vmatprep.subr.bf16.mxu0 0
        %4540 = vmatpush1.bf16.msra.mxu0 %v4500
        %4541 = vmatprep.subr.bf16.mxu0 0
        %4542 = vmatpush1.bf16.msra.mxu0 %v4502
        %4543 = vmatprep.subr.bf16.mxu0 0
        %4544 = vmatpush1.bf16.msra.mxu0 0
        %4545 = vmatprep.subr.bf16.mxu0 0
        %4546 = vmatpush1.bf16.msra.mxu0 0
        %4547 = vmatprep.subr.bf16.mxu0 0
        %4548 = vmatpush1.bf16.msra.mxu0 0
        %4549 = vmatprep.subr.bf16.mxu0 0
        %4550 = vmatpush1.bf16.msra.mxu0 0
        %4551 = vmatprep.subr.bf16.mxu0 0
        %4552 = vmatpush1.bf16.msra.mxu0 0
        %4553 = vmatprep.subr.bf16.mxu0 0
        %4554 = vmatpush1.bf16.msra.mxu0 0
        %4555 = vmatprep.subr.bf16.mxu0 0
        %4556 = vmatpush1.bf16.msra.mxu0 0
        %4557 = vmatprep.subr.bf16.mxu0 0
        %4558 = vmatpush1.bf16.msra.mxu0 0
        %4559 = vmatprep.subr.bf16.mxu0 0
        %4560 = vmatpush1.bf16.msra.mxu0 0
        %4561 = vmatprep.subr.bf16.mxu0 0
        %4562 = vmatpush1.bf16.msra.mxu0 0
        %4563 = vmatprep.subr.bf16.mxu0 0
        %4564 = vmatpush1.bf16.msra.mxu0 0
        %4565 = vmatprep.subr.bf16.mxu0 0
        %4566 = vmatpush1.bf16.msra.mxu0 0
        %4567 = vmatprep.subr.bf16.mxu0 0
        %4568 = vmatpush1.bf16.msra.mxu0 0
        %4569 = vmatprep.subr.bf16.mxu0 0
        %4570 = vmatpush1.bf16.msra.mxu0 0
        %4571 = vmatprep.mubr.bf16.mxu0 0
        %4572 = vmatmul.mubr.bf16.gmra.mrb[0].mxu0 %v4528
        %v4573 = vpop.f32.mrb[0].mxu0
        %v4574 = vadd.f32 0.0, %v4573
        %v4575 = vpop.f32.mrb[0].mxu0
        %v4576 = vpop.f32.mrb[0].mxu0
        %v4577 = vadd.f32 0.0, %v4576
        %v4578 = vpop.f32.mrb[0].mxu0
        %4579 = vmatprep.mubr.bf16.mxu0 0
        %4580 = vmatmul.mubr.bf16.gmra.mrb[0].mxu0 %v4531
        %v4581 = vpop.f32.mrb[0].mxu0
        %v4582 = vadd.f32 0.0, %v4581
        %v4583 = vpop.f32.mrb[0].mxu0
        %v4584 = vpop.f32.mrb[0].mxu0
        %v4585 = vadd.f32 0.0, %v4584
        %v4586 = vpop.f32.mrb[0].mxu0
        %4587 = vmatprep.mubr.bf16.mxu0 0
        %4588 = vmatmul.mubr.bf16.gmra.mrb[0].mxu0 %v4534
        %v4589 = vpop.f32.mrb[0].mxu0
        %v4590 = vadd.f32 0.0, %v4589
        %v4591 = vpop.f32.mrb[0].mxu0
        %v4592 = vpop.f32.mrb[0].mxu0
        %v4593 = vadd.f32 0.0, %v4592
        %v4594 = vpop.f32.mrb[0].mxu0
        %4595 = vmatprep.mubr.bf16.mxu0 0
        %4596 = vmatmul.mubr.bf16.gmra.mrb[0].mxu0 %v4537
        %v4597 = vpop.f32.mrb[0].mxu0
        %v4598 = vadd.f32 0.0, %v4597
        %v4599 = vpop.f32.mrb[0].mxu0
        %v4600 = vpop.f32.mrb[0].mxu0
        %v4601 = vadd.f32 0.0, %v4600
        %v4602 = vpop.f32.mrb[0].mxu0
        %4603 = vdwg.mxu0
        %v4612 = vunpack.c.l.b16 %v4473
        %v4613 = vunpack.c.l.b16 %v4474
        %v4614 = vunpack.c.l.b16 %v4475
        %v4615 = vunpack.c.l.b16 %v4476
        %v4616 = vunpack.c.l.b16 %v4477
        %v4617 = vunpack.c.l.b16 %v4478
        %v4618 = vunpack.c.l.b16 %v4479
        %v4619 = vunpack.c.l.b16 %v4480
        %v4620 = vpack.c.b16 %v4613, %v4612
        %v4621 = vpack.c.b16 %v4615, %v4614
        %v4622 = vpack.c.b16 %v4617, %v4616
        %v4623 = vpack.c.b16 %v4619, %v4618
        %4628 = vrot.lane.b32.xlu0 %v4499, 16
        %v4629 = vpop.permute.xlu0 %4628
        %4630 = vrot.lane.b32.xlu0 %v4500, 16
        %v4631 = vpop.permute.xlu0 %4630
        %4632 = vrot.lane.b32.xlu0 %v4501, 16
        %v4633 = vpop.permute.xlu0 %4632
        %4634 = vrot.lane.b32.xlu0 %v4502, 16
        %v4635 = vpop.permute.xlu0 %4634
        %vm4636 = vcmask 130048
        %v4637 = vsel %vm4636, %v4629, %v4631
        %v4638 = vsel %vm4636, %v4633, %v4635
        %v4642 = vsel %vm1041, %v4620, 0
        %v4645 = vsel %vm1041, %v4621, 0
        %v4648 = vsel %vm1041, %v4622, 0
        %v4651 = vsel %vm1041, %v4623, 0
        %4653 = vmatprep.subr.bf16.mxu0 0
        %4654 = vmatpush1.bf16.msra.mxu0 %v4637
        %4655 = vmatprep.subr.bf16.mxu0 0
        %4656 = vmatpush1.bf16.msra.mxu0 %v4638
        %4657 = vmatprep.subr.bf16.mxu0 0
        %4658 = vmatpush1.bf16.msra.mxu0 0
        %4659 = vmatprep.subr.bf16.mxu0 0
        %4660 = vmatpush1.bf16.msra.mxu0 0
        %4661 = vmatprep.subr.bf16.mxu0 0
        %4662 = vmatpush1.bf16.msra.mxu0 0
        %4663 = vmatprep.subr.bf16.mxu0 0
        %4664 = vmatpush1.bf16.msra.mxu0 0
        %4665 = vmatprep.subr.bf16.mxu0 0
        %4666 = vmatpush1.bf16.msra.mxu0 0
        %4667 = vmatprep.subr.bf16.mxu0 0
        %4668 = vmatpush1.bf16.msra.mxu0 0
        %4669 = vmatprep.subr.bf16.mxu0 0
        %4670 = vmatpush1.bf16.msra.mxu0 0
        %4671 = vmatprep.subr.bf16.mxu0 0
        %4672 = vmatpush1.bf16.msra.mxu0 0
        %4673 = vmatprep.subr.bf16.mxu0 0
        %4674 = vmatpush1.bf16.msra.mxu0 0
        %4675 = vmatprep.subr.bf16.mxu0 0
        %4676 = vmatpush1.bf16.msra.mxu0 0
        %4677 = vmatprep.subr.bf16.mxu0 0
        %4678 = vmatpush1.bf16.msra.mxu0 0
        %4679 = vmatprep.subr.bf16.mxu0 0
        %4680 = vmatpush1.bf16.msra.mxu0 0
        %4681 = vmatprep.subr.bf16.mxu0 0
        %4682 = vmatpush1.bf16.msra.mxu0 0
        %4683 = vmatprep.subr.bf16.mxu0 0
        %4684 = vmatpush1.bf16.msra.mxu0 0
        %4685 = vmatprep.mubr.bf16.mxu0 0
        %4686 = vmatmul.mubr.bf16.gmra.mrb[0].mxu0 %v4642
        %v4687 = vpop.f32.mrb[0].mxu0
        %v4688 = vadd.f32 %v4574, %v4687
        %v4689 = vpop.f32.mrb[0].mxu0
        %v4690 = vpop.f32.mrb[0].mxu0
        %v4691 = vadd.f32 %v4577, %v4690
        %v4692 = vpop.f32.mrb[0].mxu0
        %4693 = vmatprep.mubr.bf16.mxu0 0
        %4694 = vmatmul.mubr.bf16.gmra.mrb[0].mxu0 %v4645
        %v4695 = vpop.f32.mrb[0].mxu0
        %v4696 = vadd.f32 %v4582, %v4695
        %v4697 = vpop.f32.mrb[0].mxu0
        %v4698 = vpop.f32.mrb[0].mxu0
        %v4699 = vadd.f32 %v4585, %v4698
        %v4700 = vpop.f32.mrb[0].mxu0
        %4701 = vmatprep.mubr.bf16.mxu0 0
        %4702 = vmatmul.mubr.bf16.gmra.mrb[0].mxu0 %v4648
        %v4703 = vpop.f32.mrb[0].mxu0
        %v4704 = vadd.f32 %v4590, %v4703
        %v4705 = vpop.f32.mrb[0].mxu0
        %v4706 = vpop.f32.mrb[0].mxu0
        %v4707 = vadd.f32 %v4593, %v4706
        %v4708 = vpop.f32.mrb[0].mxu0
        %4709 = vmatprep.mubr.bf16.mxu0 0
        %4710 = vmatmul.mubr.bf16.gmra.mrb[0].mxu0 %v4651
        %v4711 = vpop.f32.mrb[0].mxu0
        %v4712 = vadd.f32 %v4598, %v4711
        %v4713 = vpop.f32.mrb[0].mxu0
        %v4714 = vpop.f32.mrb[0].mxu0
        %v4715 = vadd.f32 %v4601, %v4714
        %v4716 = vpop.f32.mrb[0].mxu0
        %4717 = vdwg.mxu0
        %v4726 = vunpack.c.l.b16 %v4491
        %v4727 = vunpack.c.l.b16 %v4492
        %v4728 = vunpack.c.l.b16 %v4493
        %v4729 = vunpack.c.l.b16 %v4494
        %v4730 = vunpack.c.l.b16 %v4495
        %v4731 = vunpack.c.l.b16 %v4496
        %v4732 = vunpack.c.l.b16 %v4497
        %v4733 = vunpack.c.l.b16 %v4498
        %v4734 = vpack.c.b16 %v4727, %v4726
        %v4735 = vpack.c.b16 %v4729, %v4728
        %v4736 = vpack.c.b16 %v4731, %v4730
        %v4737 = vpack.c.b16 %v4733, %v4732
        %4742 = vrot.lane.b32.xlu0 %v4503, 112
        %v4743 = vpop.permute.xlu0 %4742
        %4744 = vrot.lane.b32.xlu0 %v4504, 112
        %v4745 = vpop.permute.xlu0 %4744
        %4746 = vrot.lane.b32.xlu0 %v4505, 112
        %v4747 = vpop.permute.xlu0 %4746
        %4748 = vrot.lane.b32.xlu0 %v4506, 112
        %v4749 = vpop.permute.xlu0 %4748
        %vm4750 = vcmask 916480
        %v4751 = vsel %vm4750, %v4743, %v4745
        %v4752 = vsel %vm4750, %v4747, %v4749
        %v4756 = vsel %vm1041, %v4734, 0
        %v4759 = vsel %vm1041, %v4735, 0
        %v4762 = vsel %vm1041, %v4736, 0
        %v4765 = vsel %vm1041, %v4737, 0
        %4767 = vmatprep.subr.bf16.mxu0 0
        %4768 = vmatpush1.bf16.msra.mxu0 %v4751
        %4769 = vmatprep.subr.bf16.mxu0 0
        %4770 = vmatpush1.bf16.msra.mxu0 %v4752
        %4771 = vmatprep.subr.bf16.mxu0 0
        %4772 = vmatpush1.bf16.msra.mxu0 0
        %4773 = vmatprep.subr.bf16.mxu0 0
        %4774 = vmatpush1.bf16.msra.mxu0 0
        %4775 = vmatprep.subr.bf16.mxu0 0
        %4776 = vmatpush1.bf16.msra.mxu0 0
        %4777 = vmatprep.subr.bf16.mxu0 0
        %4778 = vmatpush1.bf16.msra.mxu0 0
        %4779 = vmatprep.subr.bf16.mxu0 0
        %4780 = vmatpush1.bf16.msra.mxu0 0
        %4781 = vmatprep.subr.bf16.mxu0 0
        %4782 = vmatpush1.bf16.msra.mxu0 0
        %4783 = vmatprep.subr.bf16.mxu0 0
        %4784 = vmatpush1.bf16.msra.mxu0 0
        %4785 = vmatprep.subr.bf16.mxu0 0
        %4786 = vmatpush1.bf16.msra.mxu0 0
        %4787 = vmatprep.subr.bf16.mxu0 0
        %4788 = vmatpush1.bf16.msra.mxu0 0
        %4789 = vmatprep.subr.bf16.mxu0 0
        %4790 = vmatpush1.bf16.msra.mxu0 0
        %4791 = vmatprep.subr.bf16.mxu0 0
        %4792 = vmatpush1.bf16.msra.mxu0 0
        %4793 = vmatprep.subr.bf16.mxu0 0
        %4794 = vmatpush1.bf16.msra.mxu0 0
        %4795 = vmatprep.subr.bf16.mxu0 0
        %4796 = vmatpush1.bf16.msra.mxu0 0
        %4797 = vmatprep.subr.bf16.mxu0 0
        %4798 = vmatpush1.bf16.msra.mxu0 0
        %4799 = vmatprep.mubr.bf16.mxu0 0
        %4800 = vmatmul.mubr.bf16.gmra.mrb[0].mxu0 %v4756
        %v4801 = vpop.f32.mrb[0].mxu0
        %v4802 = vadd.f32 0.0, %v4801
        %v4803 = vpop.f32.mrb[0].mxu0
        %v4804 = vpop.f32.mrb[0].mxu0
        %v4805 = vadd.f32 0.0, %v4804
        %v4806 = vpop.f32.mrb[0].mxu0
        %4807 = vmatprep.mubr.bf16.mxu0 0
        %4808 = vmatmul.mubr.bf16.gmra.mrb[0].mxu0 %v4759
        %v4809 = vpop.f32.mrb[0].mxu0
        %v4810 = vadd.f32 0.0, %v4809
        %v4811 = vpop.f32.mrb[0].mxu0
        %v4812 = vpop.f32.mrb[0].mxu0
        %v4813 = vadd.f32 0.0, %v4812
        %v4814 = vpop.f32.mrb[0].mxu0
        %4815 = vmatprep.mubr.bf16.mxu0 0
        %4816 = vmatmul.mubr.bf16.gmra.mrb[0].mxu0 %v4762
        %v4817 = vpop.f32.mrb[0].mxu0
        %v4818 = vadd.f32 0.0, %v4817
        %v4819 = vpop.f32.mrb[0].mxu0
        %v4820 = vpop.f32.mrb[0].mxu0
        %v4821 = vadd.f32 0.0, %v4820
        %v4822 = vpop.f32.mrb[0].mxu0
        %4823 = vmatprep.mubr.bf16.mxu0 0
        %4824 = vmatmul.mubr.bf16.gmra.mrb[0].mxu0 %v4765
        %v4825 = vpop.f32.mrb[0].mxu0
        %v4826 = vadd.f32 0.0, %v4825
        %v4827 = vpop.f32.mrb[0].mxu0
        %v4828 = vpop.f32.mrb[0].mxu0
        %v4829 = vadd.f32 0.0, %v4828
        %v4830 = vpop.f32.mrb[0].mxu0
        %4831 = vdwg.mxu0
        %v4832 = vadd.f32 %v4688, %v4802
        %v4833 = vadd.f32 %v4691, %v4805
        %v4834 = vadd.f32 %v4696, %v4810
        %v4835 = vadd.f32 %v4699, %v4813
        %v4836 = vadd.f32 %v4704, %v4818
        %v4837 = vadd.f32 %v4707, %v4821
        %v4838 = vadd.f32 %v4712, %v4826
        %v4839 = vadd.f32 %v4715, %v4829
        %s4840 = scalar_lea.vmem [#allocation11], 256
        %v4841 = vld [vmem:[%s4840] sm:$0xff]
        %v4842 = vld [vmem:[%s4840 + $0x8] sm:$0xff]
        %v4843 = vld [vmem:[%s4840 + $0x10] sm:$0xff]
        %v4844 = vld [vmem:[%s4840 + $0x18] sm:$0xff]
        %v4845 = vld [vmem:[%s4840 + $0x20] sm:$0xff]
        %v4846 = vld [vmem:[%s4840 + $0x28] sm:$0xff]
        %v4847 = vld [vmem:[%s4840 + $0x30] sm:$0xff]
        %v4848 = vld [vmem:[%s4840 + $0x38] sm:$0xff]
        %4850 = vset.pattern.permute.xlu0 0
        %4851 = vperm.xlu0 %4850, %v4841
        %v4852 = vpop.permute.xlu0 %4851
        %4855 = vset.pattern.permute.xlu0 0
        %4856 = vperm.xlu0 %4855, %v4842
        %v4857 = vpop.permute.xlu0 %4856
        %4860 = vset.pattern.permute.xlu0 0
        %4861 = vperm.xlu0 %4860, %v4843
        %v4862 = vpop.permute.xlu0 %4861
        %4865 = vset.pattern.permute.xlu0 0
        %4866 = vperm.xlu0 %4865, %v4844
        %v4867 = vpop.permute.xlu0 %4866
        %4870 = vset.pattern.permute.xlu0 0
        %4871 = vperm.xlu0 %4870, %v4845
        %v4872 = vpop.permute.xlu0 %4871
        %4875 = vset.pattern.permute.xlu0 0
        %4876 = vperm.xlu0 %4875, %v4846
        %v4877 = vpop.permute.xlu0 %4876
        %4880 = vset.pattern.permute.xlu0 0
        %4881 = vperm.xlu0 %4880, %v4847
        %v4882 = vpop.permute.xlu0 %4881
        %4885 = vset.pattern.permute.xlu0 0
        %4886 = vperm.xlu0 %4885, %v4848
        %v4887 = vpop.permute.xlu0 %4886
        %v4889 = vmul.f32 %v4832, %v4852
        %v4890 = vmul.f32 %v4833, %v4857
        %v4891 = vmul.f32 %v4834, %v4862
        %v4892 = vmul.f32 %v4835, %v4867
        %v4893 = vmul.f32 %v4836, %v4872
        %v4894 = vmul.f32 %v4837, %v4877
        %v4895 = vmul.f32 %v4838, %v4882
        %v4896 = vmul.f32 %v4839, %v4887
        %s4897 = scalar_lea.vmem [#allocation13], 256
        %v4898 = vld [vmem:[%s4897] sm:$0xff]
        %v4899 = vld [vmem:[%s4897 + $0x8] sm:$0xff]
        %v4900 = vld [vmem:[%s4897 + $0x10] sm:$0xff]
        %v4901 = vld [vmem:[%s4897 + $0x18] sm:$0xff]
        %v4902 = vld [vmem:[%s4897 + $0x20] sm:$0xff]
        %v4903 = vld [vmem:[%s4897 + $0x28] sm:$0xff]
        %v4904 = vld [vmem:[%s4897 + $0x30] sm:$0xff]
        %v4905 = vld [vmem:[%s4897 + $0x38] sm:$0xff]
        %4907 = vset.pattern.permute.xlu0 0
        %4908 = vperm.xlu0 %4907, %v4898
        %v4909 = vpop.permute.xlu0 %4908
        %4912 = vset.pattern.permute.xlu0 0
        %4913 = vperm.xlu0 %4912, %v4899
        %v4914 = vpop.permute.xlu0 %4913
        %4917 = vset.pattern.permute.xlu0 0
        %4918 = vperm.xlu0 %4917, %v4900
        %v4919 = vpop.permute.xlu0 %4918
        %4922 = vset.pattern.permute.xlu0 0
        %4923 = vperm.xlu0 %4922, %v4901
        %v4924 = vpop.permute.xlu0 %4923
        %4927 = vset.pattern.permute.xlu0 0
        %4928 = vperm.xlu0 %4927, %v4902
        %v4929 = vpop.permute.xlu0 %4928
        %4932 = vset.pattern.permute.xlu0 0
        %4933 = vperm.xlu0 %4932, %v4903
        %v4934 = vpop.permute.xlu0 %4933
        %4937 = vset.pattern.permute.xlu0 0
        %4938 = vperm.xlu0 %4937, %v4904
        %v4939 = vpop.permute.xlu0 %4938
        %4942 = vset.pattern.permute.xlu0 0
        %4943 = vperm.xlu0 %4942, %v4905
        %v4944 = vpop.permute.xlu0 %4943
        %v4946 = vadd.f32 %v4889, %v4909
        %v4947 = vadd.f32 %v4890, %v4914
        %v4948 = vadd.f32 %v4891, %v4919
        %v4949 = vadd.f32 %v4892, %v4924
        %v4950 = vadd.f32 %v4893, %v4929
        %v4951 = vadd.f32 %v4894, %v4934
        %v4952 = vadd.f32 %v4895, %v4939
        %v4953 = vadd.f32 %v4896, %v4944
        %v4954 = vtanh.pop %v4946
        %v4955 = vtanh.pop %v4947
        %v4956 = vtanh.pop %v4948
        %v4957 = vtanh.pop %v4949
        %v4958 = vxor.u32 %v4950, 2147483648
        %v4959 = vxor.u32 %v4951, 2147483648
        %v4960 = vxor.u32 %v4952, 2147483648
        %v4961 = vxor.u32 %v4953, 2147483648
        %v4962 = vmul.f32 %v4958, 1.442695
        %v4963 = vpow.pop %v4962
        %v4964 = vmul.f32 %v4959, 1.442695
        %v4965 = vpow.pop %v4964
        %v4966 = vmul.f32 %v4960, 1.442695
        %v4967 = vpow.pop %v4966
        %v4968 = vmul.f32 %v4961, 1.442695
        %v4969 = vpow.pop %v4968
        %v4970 = vadd.f32 %v4963, 1.0
        %v4971 = vadd.f32 %v4965, 1.0
        %v4972 = vadd.f32 %v4967, 1.0
        %v4973 = vadd.f32 %v4969, 1.0
        %v4974 = vrcp.pop %v4970
        %v4975 = vmul.f32 1.0, %v4974
        %v4976 = vrcp.pop %v4971
        %v4977 = vmul.f32 1.0, %v4976
        %v4978 = vrcp.pop %v4972
        %v4979 = vmul.f32 1.0, %v4978
        %v4980 = vrcp.pop %v4973
        %v4981 = vmul.f32 1.0, %v4980
        %v4982 = vmul.f32 %v4954, %v4975
        %v4983 = vmul.f32 %v4955, %v4977
        %v4984 = vmul.f32 %v4956, %v4979
        %v4985 = vmul.f32 %v4957, %v4981
        %v4986 = vmul.f32 %v4982, %v454
        %v4987 = vmul.f32 %v4983, %v454
        %v4988 = vmul.f32 %v4984, %v454
        %v4989 = vmul.f32 %v4985, %v454
        %v4990 = vpack.c.bf16 %v4987, %v4986
        %v4991 = vpack.c.bf16 %v4989, %v4988
        %s4992 = scalar_lea.vmem [#allocation14], 96
        %v4993 = vld [vmem:[%s4992] sm:$0xf]
        %v4994 = vld [vmem:[%s4992 + $0x4] sm:$0xf]
        %v4995 = vld [vmem:[%s4992 + $0x8] sm:$0xf]
        %v4996 = vld [vmem:[%s4992 + $0xc] sm:$0xf]
        %v4997 = vld [vmem:[%s4992 + $0x10] sm:$0xf]
        %v4998 = vld [vmem:[%s4992 + $0x14] sm:$0xf]
        %s4999 = scalar_lea.vmem [#allocation16], 192
        %v5000 = vld [vmem:[%s4999] sm:$0xff]
        %v5001 = vld [vmem:[%s4999 + $0x8] sm:$0xff]
        %v5002 = vld [vmem:[%s4999 + $0x10] sm:$0xff]
        %v5003 = vld [vmem:[%s4999 + $0x18] sm:$0xff]
        %v5004 = vld [vmem:[%s4999 + $0x20] sm:$0xff]
        %v5005 = vld [vmem:[%s4999 + $0x28] sm:$0xff]
        %5007 = vset.pattern.permute.xlu0 0
        %5008 = vperm.xlu0 %5007, %v5000
        %v5009 = vpop.permute.xlu0 %5008
        %5012 = vset.pattern.permute.xlu0 0
        %5013 = vperm.xlu0 %5012, %v5001
        %v5014 = vpop.permute.xlu0 %5013
        %5017 = vset.pattern.permute.xlu0 0
        %5018 = vperm.xlu0 %5017, %v5002
        %v5019 = vpop.permute.xlu0 %5018
        %5022 = vset.pattern.permute.xlu0 0
        %5023 = vperm.xlu0 %5022, %v5003
        %v5024 = vpop.permute.xlu0 %5023
        %5027 = vset.pattern.permute.xlu0 0
        %5028 = vperm.xlu0 %5027, %v5004
        %v5029 = vpop.permute.xlu0 %5028
        %5032 = vset.pattern.permute.xlu0 0
        %5033 = vperm.xlu0 %5032, %v5005
        %v5034 = vpop.permute.xlu0 %5033
        %v5042 = vunpack.c.l.b16 %v4993
        %v5043 = vunpack.c.l.b16 %v4994
        %v5044 = vunpack.c.l.b16 %v4995
        %v5045 = vunpack.c.l.b16 %v4996
        %v5046 = vunpack.c.l.b16 %v4997
        %v5047 = vunpack.c.l.b16 %v4998
        %v5048 = vpack.c.b16 %v5043, %v5042
        %v5049 = vpack.c.b16 %v5045, %v5044
        %v5050 = vpack.c.b16 %v5047, %v5046
        %v5052 = vsel %vm1041, %v5048, 0
        %v5055 = vsel %vm1041, %v5049, 0
        %v5058 = vsel %vm1041, %v5050, 0
        %5060 = vmatprep.subr.bf16.mxu0 0
        %5061 = vmatpush1.bf16.msra.mxu0 %v4990
        %5062 = vmatprep.subr.bf16.mxu0 0
        %5063 = vmatpush1.bf16.msra.mxu0 %v4991
        %5064 = vmatprep.subr.bf16.mxu0 0
        %5065 = vmatpush1.bf16.msra.mxu0 0
        %5066 = vmatprep.subr.bf16.mxu0 0
        %5067 = vmatpush1.bf16.msra.mxu0 0
        %5068 = vmatprep.subr.bf16.mxu0 0
        %5069 = vmatpush1.bf16.msra.mxu0 0
        %5070 = vmatprep.subr.bf16.mxu0 0
        %5071 = vmatpush1.bf16.msra.mxu0 0
        %5072 = vmatprep.subr.bf16.mxu0 0
        %5073 = vmatpush1.bf16.msra.mxu0 0
        %5074 = vmatprep.subr.bf16.mxu0 0
        %5075 = vmatpush1.bf16.msra.mxu0 0
        %5076 = vmatprep.subr.bf16.mxu0 0
        %5077 = vmatpush1.bf16.msra.mxu0 0
        %5078 = vmatprep.subr.bf16.mxu0 0
        %5079 = vmatpush1.bf16.msra.mxu0 0
        %5080 = vmatprep.subr.bf16.mxu0 0
        %5081 = vmatpush1.bf16.msra.mxu0 0
        %5082 = vmatprep.subr.bf16.mxu0 0
        %5083 = vmatpush1.bf16.msra.mxu0 0
        %5084 = vmatprep.subr.bf16.mxu0 0
        %5085 = vmatpush1.bf16.msra.mxu0 0
        %5086 = vmatprep.subr.bf16.mxu0 0
        %5087 = vmatpush1.bf16.msra.mxu0 0
        %5088 = vmatprep.subr.bf16.mxu0 0
        %5089 = vmatpush1.bf16.msra.mxu0 0
        %5090 = vmatprep.subr.bf16.mxu0 0
        %5091 = vmatpush1.bf16.msra.mxu0 0
        %5092 = vmatprep.mubr.bf16.mxu0 0
        %5093 = vmatmul.mubr.bf16.gmra.mrb[0].mxu0 %v5052
        %v5094 = vpop.f32.mrb[0].mxu0
        %v5095 = vadd.f32 %v5009, %v5094
        %v5096 = vpop.f32.mrb[0].mxu0
        %v5097 = vpop.f32.mrb[0].mxu0
        %v5098 = vadd.f32 %v5014, %v5097
        %v5099 = vpop.f32.mrb[0].mxu0
        %5100 = vmatprep.mubr.bf16.mxu0 0
        %5101 = vmatmul.mubr.bf16.gmra.mrb[0].mxu0 %v5055
        %v5102 = vpop.f32.mrb[0].mxu0
        %v5103 = vadd.f32 %v5019, %v5102
        %v5104 = vpop.f32.mrb[0].mxu0
        %v5105 = vpop.f32.mrb[0].mxu0
        %v5106 = vadd.f32 %v5024, %v5105
        %v5107 = vpop.f32.mrb[0].mxu0
        %5108 = vmatprep.mubr.bf16.mxu0 0
        %5109 = vmatmul.mubr.bf16.gmra.mrb[0].mxu0 %v5058
        %v5110 = vpop.f32.mrb[0].mxu0
        %v5111 = vadd.f32 %v5029, %v5110
        %v5112 = vpop.f32.mrb[0].mxu0
        %v5113 = vpop.f32.mrb[0].mxu0
        %v5114 = vadd.f32 %v5034, %v5113
        %v5115 = vpop.f32.mrb[0].mxu0
        %5116 = vdwg.mxu0
        %v5117 = vmul.f32 %v5103, %v454
        %v5118 = vmul.f32 %v5106, %v454
        %v5119 = vmul.f32 %v5111, %v454
        %v5120 = vmul.f32 %v5114, %v454
        %v5121 = vpack.c.bf16 %v5095, %v5095
        %v5122 = vpack.c.bf16 %v5098, %v5098
        %5123 = vxpose.xlu0.c.b16.start [1/8] %v5121, 128
        %5124 = vxpose.xlu0.c.b16.cont [2/8] 0, 128
        %5125 = vxpose.xlu0.c.b16.cont [3/8] 0, 128
        %5126 = vxpose.xlu0.c.b16.cont [4/8] 0, 128
        %5127 = vxpose.xlu0.c.b16.cont [5/8] 0, 128
        %5128 = vxpose.xlu0.c.b16.cont [6/8] 0, 128
        %5129 = vxpose.xlu0.c.b16.cont [7/8] 0, 128
        %5130 = vxpose.xlu0.c.b16.end [8/8] 0, 128
        %v5131 = vpop.trf.xlu0
        %v5132 = vpop.trf.xlu0
        %v5133 = vpop.trf.xlu0
        %v5134 = vpop.trf.xlu0
        %v5135 = vpop.trf.xlu0
        %v5136 = vpop.trf.xlu0
        %v5137 = vpop.trf.xlu0
        %v5138 = vpop.trf.xlu0
        %v5140 = vsel %vm1130, %v5131, 0
        %v5143 = vsel %vm1130, %v5132, 0
        %v5146 = vsel %vm1130, %v5133, 0
        %v5149 = vsel %vm1130, %v5134, 0
        %v5152 = vsel %vm1130, %v5135, 0
        %v5155 = vsel %vm1130, %v5136, 0
        %v5158 = vsel %vm1130, %v5137, 0
        %v5161 = vsel %vm1130, %v5138, 0
        %v5164 = vsel %vm1155, %v5122, 0
        %5166 = vmatprep.subr.bf16.mxu0 0
        %5167 = vmatpush1.bf16.msra.mxu0 %v5164
        %5168 = vmatprep.subr.bf16.mxu0 0
        %5169 = vmatpush1.bf16.msra.mxu0 0
        %5170 = vmatprep.subr.bf16.mxu0 0
        %5171 = vmatpush1.bf16.msra.mxu0 0
        %5172 = vmatprep.subr.bf16.mxu0 0
        %5173 = vmatpush1.bf16.msra.mxu0 0
        %5174 = vmatprep.subr.bf16.mxu0 0
        %5175 = vmatpush1.bf16.msra.mxu0 0
        %5176 = vmatprep.subr.bf16.mxu0 0
        %5177 = vmatpush1.bf16.msra.mxu0 0
        %5178 = vmatprep.subr.bf16.mxu0 0
        %5179 = vmatpush1.bf16.msra.mxu0 0
        %5180 = vmatprep.subr.bf16.mxu0 0
        %5181 = vmatpush1.bf16.msra.mxu0 0
        %5182 = vmatprep.subr.bf16.mxu0 0
        %5183 = vmatpush1.bf16.msra.mxu0 0
        %5184 = vmatprep.subr.bf16.mxu0 0
        %5185 = vmatpush1.bf16.msra.mxu0 0
        %5186 = vmatprep.subr.bf16.mxu0 0
        %5187 = vmatpush1.bf16.msra.mxu0 0
        %5188 = vmatprep.subr.bf16.mxu0 0
        %5189 = vmatpush1.bf16.msra.mxu0 0
        %5190 = vmatprep.subr.bf16.mxu0 0
        %5191 = vmatpush1.bf16.msra.mxu0 0
        %5192 = vmatprep.subr.bf16.mxu0 0
        %5193 = vmatpush1.bf16.msra.mxu0 0
        %5194 = vmatprep.subr.bf16.mxu0 0
        %5195 = vmatpush1.bf16.msra.mxu0 0
        %5196 = vmatprep.subr.bf16.mxu0 0
        %5197 = vmatpush1.bf16.msra.mxu0 0
        %5198 = vmatprep.mubr.bf16.mxu0 0
        %5199 = vmatmul.mubr.bf16.gmra.mrb[0].mxu0 %v5140
        %v5200 = vpop.f32.mrb[0].mxu0
        %v5201 = vadd.f32 %v455, %v5200
        %v5202 = vpop.f32.mrb[0].mxu0
        %v5203 = vpop.f32.mrb[0].mxu0
        %v5204 = vadd.f32 %v455, %v5203
        %v5205 = vpop.f32.mrb[0].mxu0
        %5206 = vmatprep.mubr.bf16.mxu0 0
        %5207 = vmatmul.mubr.bf16.gmra.mrb[0].mxu0 %v5143
        %v5208 = vpop.f32.mrb[0].mxu0
        %v5209 = vadd.f32 %v455, %v5208
        %v5210 = vpop.f32.mrb[0].mxu0
        %v5211 = vpop.f32.mrb[0].mxu0
        %v5212 = vadd.f32 %v455, %v5211
        %v5213 = vpop.f32.mrb[0].mxu0
        %5214 = vmatprep.mubr.bf16.mxu0 0
        %5215 = vmatmul.mubr.bf16.gmra.mrb[0].mxu0 %v5146
        %v5216 = vpop.f32.mrb[0].mxu0
        %v5217 = vadd.f32 %v455, %v5216
        %v5218 = vpop.f32.mrb[0].mxu0
        %v5219 = vpop.f32.mrb[0].mxu0
        %v5220 = vadd.f32 %v455, %v5219
        %v5221 = vpop.f32.mrb[0].mxu0
        %5222 = vmatprep.mubr.bf16.mxu0 0
        %5223 = vmatmul.mubr.bf16.gmra.mrb[0].mxu0 %v5149
        %v5224 = vpop.f32.mrb[0].mxu0
        %v5225 = vadd.f32 %v455, %v5224
        %v5226 = vpop.f32.mrb[0].mxu0
        %v5227 = vpop.f32.mrb[0].mxu0
        %v5228 = vadd.f32 %v455, %v5227
        %v5229 = vpop.f32.mrb[0].mxu0
        %5230 = vmatprep.mubr.bf16.mxu0 0
        %5231 = vmatmul.mubr.bf16.gmra.mrb[0].mxu0 %v5152
        %v5232 = vpop.f32.mrb[0].mxu0
        %v5233 = vadd.f32 %v455, %v5232
        %v5234 = vpop.f32.mrb[0].mxu0
        %v5235 = vpop.f32.mrb[0].mxu0
        %v5236 = vadd.f32 %v455, %v5235
        %v5237 = vpop.f32.mrb[0].mxu0
        %5238 = vmatprep.mubr.bf16.mxu0 0
        %5239 = vmatmul.mubr.bf16.gmra.mrb[0].mxu0 %v5155
        %v5240 = vpop.f32.mrb[0].mxu0
        %v5241 = vadd.f32 %v455, %v5240
        %v5242 = vpop.f32.mrb[0].mxu0
        %v5243 = vpop.f32.mrb[0].mxu0
        %v5244 = vadd.f32 %v455, %v5243
        %v5245 = vpop.f32.mrb[0].mxu0
        %5246 = vmatprep.mubr.bf16.mxu0 0
        %5247 = vmatmul.mubr.bf16.gmra.mrb[0].mxu0 %v5158
        %v5248 = vpop.f32.mrb[0].mxu0
        %v5249 = vadd.f32 %v455, %v5248
        %v5250 = vpop.f32.mrb[0].mxu0
        %v5251 = vpop.f32.mrb[0].mxu0
        %v5252 = vadd.f32 %v455, %v5251
        %v5253 = vpop.f32.mrb[0].mxu0
        %5254 = vmatprep.mubr.bf16.mxu0 0
        %5255 = vmatmul.mubr.bf16.gmra.mrb[0].mxu0 %v5161
        %v5256 = vpop.f32.mrb[0].mxu0
        %v5257 = vadd.f32 %v455, %v5256
        %v5258 = vpop.f32.mrb[0].mxu0
        %v5259 = vpop.f32.mrb[0].mxu0
        %v5260 = vadd.f32 %v455, %v5259
        %v5261 = vpop.f32.mrb[0].mxu0
        %5262 = vdwg.mxu0
        %5263 = vmax.xlane.f32.xlu0 %v5201
        %v5264 = vpop.xlane.xlu0 %5263
        %5265 = vmax.xlane.f32.xlu0 %v5204
        %v5266 = vpop.xlane.xlu0 %5265
        %5267 = vmax.xlane.f32.xlu0 %v5209
        %v5268 = vpop.xlane.xlu0 %5267
        %5269 = vmax.xlane.f32.xlu0 %v5212
        %v5270 = vpop.xlane.xlu0 %5269
        %5271 = vmax.xlane.f32.xlu0 %v5217
        %v5272 = vpop.xlane.xlu0 %5271
        %5273 = vmax.xlane.f32.xlu0 %v5220
        %v5274 = vpop.xlane.xlu0 %5273
        %5275 = vmax.xlane.f32.xlu0 %v5225
        %v5276 = vpop.xlane.xlu0 %5275
        %5277 = vmax.xlane.f32.xlu0 %v5228
        %v5278 = vpop.xlane.xlu0 %5277
        %5279 = vmax.xlane.f32.xlu0 %v5233
        %v5280 = vpop.xlane.xlu0 %5279
        %5281 = vmax.xlane.f32.xlu0 %v5236
        %v5282 = vpop.xlane.xlu0 %5281
        %5283 = vmax.xlane.f32.xlu0 %v5241
        %v5284 = vpop.xlane.xlu0 %5283
        %5285 = vmax.xlane.f32.xlu0 %v5244
        %v5286 = vpop.xlane.xlu0 %5285
        %5287 = vmax.xlane.f32.xlu0 %v5249
        %v5288 = vpop.xlane.xlu0 %5287
        %5289 = vmax.xlane.f32.xlu0 %v5252
        %v5290 = vpop.xlane.xlu0 %5289
        %5291 = vmax.xlane.f32.xlu0 %v5257
        %v5292 = vpop.xlane.xlu0 %5291
        %5293 = vmax.xlane.f32.xlu0 %v5260
        %v5294 = vpop.xlane.xlu0 %5293
        %v5295 = vsub.f32 %v5201, %v5264
        %v5296 = vsub.f32 %v5204, %v5266
        %v5297 = vsub.f32 %v5209, %v5268
        %v5298 = vsub.f32 %v5212, %v5270
        %v5299 = vsub.f32 %v5217, %v5272
        %v5300 = vsub.f32 %v5220, %v5274
        %v5301 = vsub.f32 %v5225, %v5276
        %v5302 = vsub.f32 %v5228, %v5278
        %v5303 = vsub.f32 %v5233, %v5280
        %v5304 = vsub.f32 %v5236, %v5282
        %v5305 = vsub.f32 %v5241, %v5284
        %v5306 = vsub.f32 %v5244, %v5286
        %v5307 = vsub.f32 %v5249, %v5288
        %v5308 = vsub.f32 %v5252, %v5290
        %v5309 = vsub.f32 %v5257, %v5292
        %v5310 = vsub.f32 %v5260, %v5294
        %v5311 = vmul.f32 %v5295, 1.442695
        %v5312 = vpow.pop %v5311
        %v5313 = vmul.f32 %v5296, 1.442695
        %v5314 = vpow.pop %v5313
        %v5315 = vmul.f32 %v5297, 1.442695
        %v5316 = vpow.pop %v5315
        %v5317 = vmul.f32 %v5298, 1.442695
        %v5318 = vpow.pop %v5317
        %v5319 = vmul.f32 %v5299, 1.442695
        %v5320 = vpow.pop %v5319
        %v5321 = vmul.f32 %v5300, 1.442695
        %v5322 = vpow.pop %v5321
        %v5323 = vmul.f32 %v5301, 1.442695
        %v5324 = vpow.pop %v5323
        %v5325 = vmul.f32 %v5302, 1.442695
        %v5326 = vpow.pop %v5325
        %v5327 = vmul.f32 %v5303, 1.442695
        %v5328 = vpow.pop %v5327
        %v5329 = vmul.f32 %v5304, 1.442695
        %v5330 = vpow.pop %v5329
        %v5331 = vmul.f32 %v5305, 1.442695
        %v5332 = vpow.pop %v5331
        %v5333 = vmul.f32 %v5306, 1.442695
        %v5334 = vpow.pop %v5333
        %v5335 = vmul.f32 %v5307, 1.442695
        %v5336 = vpow.pop %v5335
        %v5337 = vmul.f32 %v5308, 1.442695
        %v5338 = vpow.pop %v5337
        %v5339 = vmul.f32 %v5309, 1.442695
        %v5340 = vpow.pop %v5339
        %v5341 = vmul.f32 %v5310, 1.442695
        %v5342 = vpow.pop %v5341
        %5343 = vadd.xlane.f32.xlu0 %v5312
        %v5344 = vpop.xlane.xlu0 %5343
        %5345 = vadd.xlane.f32.xlu0 %v5314
        %v5346 = vpop.xlane.xlu0 %5345
        %5347 = vadd.xlane.f32.xlu0 %v5316
        %v5348 = vpop.xlane.xlu0 %5347
        %5349 = vadd.xlane.f32.xlu0 %v5318
        %v5350 = vpop.xlane.xlu0 %5349
        %5351 = vadd.xlane.f32.xlu0 %v5320
        %v5352 = vpop.xlane.xlu0 %5351
        %5353 = vadd.xlane.f32.xlu0 %v5322
        %v5354 = vpop.xlane.xlu0 %5353
        %5355 = vadd.xlane.f32.xlu0 %v5324
        %v5356 = vpop.xlane.xlu0 %5355
        %5357 = vadd.xlane.f32.xlu0 %v5326
        %v5358 = vpop.xlane.xlu0 %5357
        %5359 = vadd.xlane.f32.xlu0 %v5328
        %v5360 = vpop.xlane.xlu0 %5359
        %5361 = vadd.xlane.f32.xlu0 %v5330
        %v5362 = vpop.xlane.xlu0 %5361
        %5363 = vadd.xlane.f32.xlu0 %v5332
        %v5364 = vpop.xlane.xlu0 %5363
        %5365 = vadd.xlane.f32.xlu0 %v5334
        %v5366 = vpop.xlane.xlu0 %5365
        %5367 = vadd.xlane.f32.xlu0 %v5336
        %v5368 = vpop.xlane.xlu0 %5367
        %5369 = vadd.xlane.f32.xlu0 %v5338
        %v5370 = vpop.xlane.xlu0 %5369
        %5371 = vadd.xlane.f32.xlu0 %v5340
        %v5372 = vpop.xlane.xlu0 %5371
        %5373 = vadd.xlane.f32.xlu0 %v5342
        %v5374 = vpop.xlane.xlu0 %5373
        %v5375 = vrcp.pop %v5344
        %v5376 = vrcp.pop %v5346
        %v5377 = vrcp.pop %v5348
        %v5378 = vrcp.pop %v5350
        %v5379 = vrcp.pop %v5352
        %v5380 = vrcp.pop %v5354
        %v5381 = vrcp.pop %v5356
        %v5382 = vrcp.pop %v5358
        %v5383 = vrcp.pop %v5360
        %v5384 = vrcp.pop %v5362
        %v5385 = vrcp.pop %v5364
        %v5386 = vrcp.pop %v5366
        %v5387 = vrcp.pop %v5368
        %v5388 = vrcp.pop %v5370
        %v5389 = vrcp.pop %v5372
        %v5390 = vrcp.pop %v5374
        %v5391 = vmul.f32 %v5312, %v5375
        %v5392 = vmul.f32 %v5314, %v5376
        %v5393 = vmul.f32 %v5316, %v5377
        %v5394 = vmul.f32 %v5318, %v5378
        %v5395 = vmul.f32 %v5320, %v5379
        %v5396 = vmul.f32 %v5322, %v5380
        %v5397 = vmul.f32 %v5324, %v5381
        %v5398 = vmul.f32 %v5326, %v5382
        %v5399 = vmul.f32 %v5328, %v5383
        %v5400 = vmul.f32 %v5330, %v5384
        %v5401 = vmul.f32 %v5332, %v5385
        %v5402 = vmul.f32 %v5334, %v5386
        %v5403 = vmul.f32 %v5336, %v5387
        %v5404 = vmul.f32 %v5338, %v5388
        %v5405 = vmul.f32 %v5340, %v5389
        %v5406 = vmul.f32 %v5342, %v5390
        %v5407 = vpack.c.bf16 %v5118, %v5117
        %v5408 = vpack.c.bf16 %v5120, %v5119
        %v5409 = vpack.c.bf16 %v5392, %v5391
        %v5410 = vpack.c.bf16 %v5394, %v5393
        %v5411 = vpack.c.bf16 %v5396, %v5395
        %v5412 = vpack.c.bf16 %v5398, %v5397
        %v5413 = vpack.c.bf16 %v5400, %v5399
        %v5414 = vpack.c.bf16 %v5402, %v5401
        %v5415 = vpack.c.bf16 %v5404, %v5403
        %v5416 = vpack.c.bf16 %v5406, %v5405
        %5417 = vmatprep.subr.bf16.mxu0 0
        %5418 = vmatpush1.bf16.msra.mxu0 %v5409
        %5419 = vmatprep.subr.bf16.mxu0 0
        %5420 = vmatpush1.bf16.msra.mxu0 %v5410
        %5421 = vmatprep.subr.bf16.mxu0 0
        %5422 = vmatpush1.bf16.msra.mxu0 %v5411
        %5423 = vmatprep.subr.bf16.mxu0 0
        %5424 = vmatpush1.bf16.msra.mxu0 %v5412
        %5425 = vmatprep.subr.bf16.mxu0 0
        %5426 = vmatpush1.bf16.msra.mxu0 %v5413
        %5427 = vmatprep.subr.bf16.mxu0 0
        %5428 = vmatpush1.bf16.msra.mxu0 %v5414
        %5429 = vmatprep.subr.bf16.mxu0 0
        %5430 = vmatpush1.bf16.msra.mxu0 %v5415
        %5431 = vmatprep.subr.bf16.mxu0 0
        %5432 = vmatpush1.bf16.msra.mxu0 %v5416
        %5433 = vmatprep.subr.bf16.mxu0 0
        %5434 = vmatpush1.bf16.msra.mxu0 0
        %5435 = vmatprep.subr.bf16.mxu0 0
        %5436 = vmatpush1.bf16.msra.mxu0 0
        %5437 = vmatprep.subr.bf16.mxu0 0
        %5438 = vmatpush1.bf16.msra.mxu0 0
        %5439 = vmatprep.subr.bf16.mxu0 0
        %5440 = vmatpush1.bf16.msra.mxu0 0
        %5441 = vmatprep.subr.bf16.mxu0 0
        %5442 = vmatpush1.bf16.msra.mxu0 0
        %5443 = vmatprep.subr.bf16.mxu0 0
        %5444 = vmatpush1.bf16.msra.mxu0 0
        %5445 = vmatprep.subr.bf16.mxu0 0
        %5446 = vmatpush1.bf16.msra.mxu0 0
        %5447 = vmatprep.subr.bf16.mxu0 0
        %5448 = vmatpush1.bf16.msra.mxu0 0
        %5449 = vmatprep.mubr.bf16.mxu0 0
        %5450 = vmatmul.mubr.bf16.gmra.mrb[0].mxu0 %v5407
        %v5451 = vpop.f32.mrb[0].mxu0
        %v5452 = vadd.f32 %v4986, %v5451
        %v5453 = vpop.f32.mrb[0].mxu0
        %v5454 = vpop.f32.mrb[0].mxu0
        %v5455 = vadd.f32 %v4987, %v5454
        %v5456 = vpop.f32.mrb[0].mxu0
        %5457 = vmatprep.mubr.bf16.mxu0 0
        %5458 = vmatmul.mubr.bf16.gmra.mrb[0].mxu0 %v5408
        %v5459 = vpop.f32.mrb[0].mxu0
        %v5460 = vadd.f32 %v4988, %v5459
        %v5461 = vpop.f32.mrb[0].mxu0
        %v5462 = vpop.f32.mrb[0].mxu0
        %v5463 = vadd.f32 %v4989, %v5462
        %v5464 = vpop.f32.mrb[0].mxu0
        %5465 = vdwg.mxu0
        %v5466 = vmul.f32 %v5452, %v454
        %v5467 = vmul.f32 %v5455, %v454
        %v5468 = vmul.f32 %v5460, %v454
        %v5469 = vmul.f32 %v5463, %v454
        %v5470 = vpack.c.bf16 %v5467, %v5466
        %v5471 = vpack.c.bf16 %v5469, %v5468
        %5472 = vst [vmem:[#allocation3 + $0x8] sm:$0xff] %v5470
        %5473 = vst [vmem:[#allocation3 + $0x20] sm:$0xff] %v5471
        %s5474 = scalar_lea.vmem [#allocation10], 384
        %v5475 = vld [vmem:[%s5474] sm:$0xf]
        %v5476 = vld [vmem:[%s5474 + $0x4] sm:$0xf]
        %v5477 = vld [vmem:[%s5474 + $0x8] sm:$0xf]
        %v5478 = vld [vmem:[%s5474 + $0xc] sm:$0xf]
        %v5479 = vld [vmem:[%s5474 + $0x10] sm:$0xf]
        %v5480 = vld [vmem:[%s5474 + $0x14] sm:$0xf]
        %v5481 = vld [vmem:[%s5474 + $0x18] sm:$0xf]
        %v5482 = vld [vmem:[%s5474 + $0x1c] sm:$0xf]
        %s5483 = scalar_lea.vmem [#allocation10], 416
        %v5484 = vld [vmem:[%s5483] sm:$0xf]
        %v5485 = vld [vmem:[%s5483 + $0x4] sm:$0xf]
        %v5486 = vld [vmem:[%s5483 + $0x8] sm:$0xf]
        %v5487 = vld [vmem:[%s5483 + $0xc] sm:$0xf]
        %v5488 = vld [vmem:[%s5483 + $0x10] sm:$0xf]
        %v5489 = vld [vmem:[%s5483 + $0x14] sm:$0xf]
        %v5490 = vld [vmem:[%s5483 + $0x18] sm:$0xf]
        %v5491 = vld [vmem:[%s5483 + $0x1c] sm:$0xf]
        %s5492 = scalar_lea.vmem [#allocation10], 448
        %v5493 = vld [vmem:[%s5492] sm:$0xf]
        %v5494 = vld [vmem:[%s5492 + $0x4] sm:$0xf]
        %v5495 = vld [vmem:[%s5492 + $0x8] sm:$0xf]
        %v5496 = vld [vmem:[%s5492 + $0xc] sm:$0xf]
        %v5497 = vld [vmem:[%s5492 + $0x10] sm:$0xf]
        %v5498 = vld [vmem:[%s5492 + $0x14] sm:$0xf]
        %v5499 = vld [vmem:[%s5492 + $0x18] sm:$0xf]
        %v5500 = vld [vmem:[%s5492 + $0x1c] sm:$0xf]
        %v5501 = vld [vmem:[#allocation3] sm:$0xff]
        %v5502 = vld [vmem:[#allocation3 + $0x8] sm:$0xff]
        %v5503 = vld [vmem:[#allocation3 + $0x18] sm:$0xff]
        %v5504 = vld [vmem:[#allocation3 + $0x20] sm:$0xff]
        %v5505 = vld [vmem:[#allocation3 + $0x8] sm:$0xff]
        %v5506 = vld [vmem:[#allocation3 + $0x10] sm:$0xff]
        %v5507 = vld [vmem:[#allocation3 + $0x20] sm:$0xff]
        %v5508 = vld [vmem:[#allocation3 + $0x28] sm:$0xff]
        %v5517 = vunpack.c.l.b16 %v5484
        %v5518 = vunpack.c.l.b16 %v5485
        %v5519 = vunpack.c.l.b16 %v5486
        %v5520 = vunpack.c.l.b16 %v5487
        %v5521 = vunpack.c.l.b16 %v5488
        %v5522 = vunpack.c.l.b16 %v5489
        %v5523 = vunpack.c.l.b16 %v5490
        %v5524 = vunpack.c.l.b16 %v5491
        %v5525 = vpack.c.b16 %v5518, %v5517
        %v5526 = vpack.c.b16 %v5520, %v5519
        %v5527 = vpack.c.b16 %v5522, %v5521
        %v5528 = vpack.c.b16 %v5524, %v5523
        %v5530 = vsel %vm1041, %v5525, 0
        %v5533 = vsel %vm1041, %v5526, 0
        %v5536 = vsel %vm1041, %v5527, 0
        %v5539 = vsel %vm1041, %v5528, 0
        %5541 = vmatprep.subr.bf16.mxu0 0
        %5542 = vmatpush1.bf16.msra.mxu0 %v5502
        %5543 = vmatprep.subr.bf16.mxu0 0
        %5544 = vmatpush1.bf16.msra.mxu0 %v5504
        %5545 = vmatprep.subr.bf16.mxu0 0
        %5546 = vmatpush1.bf16.msra.mxu0 0
        %5547 = vmatprep.subr.bf16.mxu0 0
        %5548 = vmatpush1.bf16.msra.mxu0 0
        %5549 = vmatprep.subr.bf16.mxu0 0
        %5550 = vmatpush1.bf16.msra.mxu0 0
        %5551 = vmatprep.subr.bf16.mxu0 0
        %5552 = vmatpush1.bf16.msra.mxu0 0
        %5553 = vmatprep.subr.bf16.mxu0 0
        %5554 = vmatpush1.bf16.msra.mxu0 0
        %5555 = vmatprep.subr.bf16.mxu0 0
        %5556 = vmatpush1.bf16.msra.mxu0 0
        %5557 = vmatprep.subr.bf16.mxu0 0
        %5558 = vmatpush1.bf16.msra.mxu0 0
        %5559 = vmatprep.subr.bf16.mxu0 0
        %5560 = vmatpush1.bf16.msra.mxu0 0
        %5561 = vmatprep.subr.bf16.mxu0 0
        %5562 = vmatpush1.bf16.msra.mxu0 0
        %5563 = vmatprep.subr.bf16.mxu0 0
        %5564 = vmatpush1.bf16.msra.mxu0 0
        %5565 = vmatprep.subr.bf16.mxu0 0
        %5566 = vmatpush1.bf16.msra.mxu0 0
        %5567 = vmatprep.subr.bf16.mxu0 0
        %5568 = vmatpush1.bf16.msra.mxu0 0
        %5569 = vmatprep.subr.bf16.mxu0 0
        %5570 = vmatpush1.bf16.msra.mxu0 0
        %5571 = vmatprep.subr.bf16.mxu0 0
        %5572 = vmatpush1.bf16.msra.mxu0 0
        %5573 = vmatprep.mubr.bf16.mxu0 0
        %5574 = vmatmul.mubr.bf16.gmra.mrb[0].mxu0 %v5530
        %v5575 = vpop.f32.mrb[0].mxu0
        %v5576 = vadd.f32 0.0, %v5575
        %v5577 = vpop.f32.mrb[0].mxu0
        %v5578 = vpop.f32.mrb[0].mxu0
        %v5579 = vadd.f32 0.0, %v5578
        %v5580 = vpop.f32.mrb[0].mxu0
        %5581 = vmatprep.mubr.bf16.mxu0 0
        %5582 = vmatmul.mubr.bf16.gmra.mrb[0].mxu0 %v5533
        %v5583 = vpop.f32.mrb[0].mxu0
        %v5584 = vadd.f32 0.0, %v5583
        %v5585 = vpop.f32.mrb[0].mxu0
        %v5586 = vpop.f32.mrb[0].mxu0
        %v5587 = vadd.f32 0.0, %v5586
        %v5588 = vpop.f32.mrb[0].mxu0
        %5589 = vmatprep.mubr.bf16.mxu0 0
        %5590 = vmatmul.mubr.bf16.gmra.mrb[0].mxu0 %v5536
        %v5591 = vpop.f32.mrb[0].mxu0
        %v5592 = vadd.f32 0.0, %v5591
        %v5593 = vpop.f32.mrb[0].mxu0
        %v5594 = vpop.f32.mrb[0].mxu0
        %v5595 = vadd.f32 0.0, %v5594
        %v5596 = vpop.f32.mrb[0].mxu0
        %5597 = vmatprep.mubr.bf16.mxu0 0
        %5598 = vmatmul.mubr.bf16.gmra.mrb[0].mxu0 %v5539
        %v5599 = vpop.f32.mrb[0].mxu0
        %v5600 = vadd.f32 0.0, %v5599
        %v5601 = vpop.f32.mrb[0].mxu0
        %v5602 = vpop.f32.mrb[0].mxu0
        %v5603 = vadd.f32 0.0, %v5602
        %v5604 = vpop.f32.mrb[0].mxu0
        %5605 = vdwg.mxu0
        %v5614 = vunpack.c.l.b16 %v5475
        %v5615 = vunpack.c.l.b16 %v5476
        %v5616 = vunpack.c.l.b16 %v5477
        %v5617 = vunpack.c.l.b16 %v5478
        %v5618 = vunpack.c.l.b16 %v5479
        %v5619 = vunpack.c.l.b16 %v5480
        %v5620 = vunpack.c.l.b16 %v5481
        %v5621 = vunpack.c.l.b16 %v5482
        %v5622 = vpack.c.b16 %v5615, %v5614
        %v5623 = vpack.c.b16 %v5617, %v5616
        %v5624 = vpack.c.b16 %v5619, %v5618
        %v5625 = vpack.c.b16 %v5621, %v5620
        %5630 = vrot.lane.b32.xlu0 %v5501, 32
        %v5631 = vpop.permute.xlu0 %5630
        %5632 = vrot.lane.b32.xlu0 %v5502, 32
        %v5633 = vpop.permute.xlu0 %5632
        %5634 = vrot.lane.b32.xlu0 %v5503, 32
        %v5635 = vpop.permute.xlu0 %5634
        %5636 = vrot.lane.b32.xlu0 %v5504, 32
        %v5637 = vpop.permute.xlu0 %5636
        %vm5638 = vcmask 261120
        %v5639 = vsel %vm5638, %v5631, %v5633
        %v5640 = vsel %vm5638, %v5635, %v5637
        %v5644 = vsel %vm1041, %v5622, 0
        %v5647 = vsel %vm1041, %v5623, 0
        %v5650 = vsel %vm1041, %v5624, 0
        %v5653 = vsel %vm1041, %v5625, 0
        %5655 = vmatprep.subr.bf16.mxu0 0
        %5656 = vmatpush1.bf16.msra.mxu0 %v5639
        %5657 = vmatprep.subr.bf16.mxu0 0
        %5658 = vmatpush1.bf16.msra.mxu0 %v5640
        %5659 = vmatprep.subr.bf16.mxu0 0
        %5660 = vmatpush1.bf16.msra.mxu0 0
        %5661 = vmatprep.subr.bf16.mxu0 0
        %5662 = vmatpush1.bf16.msra.mxu0 0
        %5663 = vmatprep.subr.bf16.mxu0 0
        %5664 = vmatpush1.bf16.msra.mxu0 0
        %5665 = vmatprep.subr.bf16.mxu0 0
        %5666 = vmatpush1.bf16.msra.mxu0 0
        %5667 = vmatprep.subr.bf16.mxu0 0
        %5668 = vmatpush1.bf16.msra.mxu0 0
        %5669 = vmatprep.subr.bf16.mxu0 0
        %5670 = vmatpush1.bf16.msra.mxu0 0
        %5671 = vmatprep.subr.bf16.mxu0 0
        %5672 = vmatpush1.bf16.msra.mxu0 0
        %5673 = vmatprep.subr.bf16.mxu0 0
        %5674 = vmatpush1.bf16.msra.mxu0 0
        %5675 = vmatprep.subr.bf16.mxu0 0
        %5676 = vmatpush1.bf16.msra.mxu0 0
        %5677 = vmatprep.subr.bf16.mxu0 0
        %5678 = vmatpush1.bf16.msra.mxu0 0
        %5679 = vmatprep.subr.bf16.mxu0 0
        %5680 = vmatpush1.bf16.msra.mxu0 0
        %5681 = vmatprep.subr.bf16.mxu0 0
        %5682 = vmatpush1.bf16.msra.mxu0 0
        %5683 = vmatprep.subr.bf16.mxu0 0
        %5684 = vmatpush1.bf16.msra.mxu0 0
        %5685 = vmatprep.subr.bf16.mxu0 0
        %5686 = vmatpush1.bf16.msra.mxu0 0
        %5687 = vmatprep.mubr.bf16.mxu0 0
        %5688 = vmatmul.mubr.bf16.gmra.mrb[0].mxu0 %v5644
        %v5689 = vpop.f32.mrb[0].mxu0
        %v5690 = vadd.f32 %v5576, %v5689
        %v5691 = vpop.f32.mrb[0].mxu0
        %v5692 = vpop.f32.mrb[0].mxu0
        %v5693 = vadd.f32 %v5579, %v5692
        %v5694 = vpop.f32.mrb[0].mxu0
        %5695 = vmatprep.mubr.bf16.mxu0 0
        %5696 = vmatmul.mubr.bf16.gmra.mrb[0].mxu0 %v5647
        %v5697 = vpop.f32.mrb[0].mxu0
        %v5698 = vadd.f32 %v5584, %v5697
        %v5699 = vpop.f32.mrb[0].mxu0
        %v5700 = vpop.f32.mrb[0].mxu0
        %v5701 = vadd.f32 %v5587, %v5700
        %v5702 = vpop.f32.mrb[0].mxu0
        %5703 = vmatprep.mubr.bf16.mxu0 0
        %5704 = vmatmul.mubr.bf16.gmra.mrb[0].mxu0 %v5650
        %v5705 = vpop.f32.mrb[0].mxu0
        %v5706 = vadd.f32 %v5592, %v5705
        %v5707 = vpop.f32.mrb[0].mxu0
        %v5708 = vpop.f32.mrb[0].mxu0
        %v5709 = vadd.f32 %v5595, %v5708
        %v5710 = vpop.f32.mrb[0].mxu0
        %5711 = vmatprep.mubr.bf16.mxu0 0
        %5712 = vmatmul.mubr.bf16.gmra.mrb[0].mxu0 %v5653
        %v5713 = vpop.f32.mrb[0].mxu0
        %v5714 = vadd.f32 %v5600, %v5713
        %v5715 = vpop.f32.mrb[0].mxu0
        %v5716 = vpop.f32.mrb[0].mxu0
        %v5717 = vadd.f32 %v5603, %v5716
        %v5718 = vpop.f32.mrb[0].mxu0
        %5719 = vdwg.mxu0
        %v5728 = vunpack.c.l.b16 %v5493
        %v5729 = vunpack.c.l.b16 %v5494
        %v5730 = vunpack.c.l.b16 %v5495
        %v5731 = vunpack.c.l.b16 %v5496
        %v5732 = vunpack.c.l.b16 %v5497
        %v5733 = vunpack.c.l.b16 %v5498
        %v5734 = vunpack.c.l.b16 %v5499
        %v5735 = vunpack.c.l.b16 %v5500
        %v5736 = vpack.c.b16 %v5729, %v5728
        %v5737 = vpack.c.b16 %v5731, %v5730
        %v5738 = vpack.c.b16 %v5733, %v5732
        %v5739 = vpack.c.b16 %v5735, %v5734
        %5744 = vrot.lane.b32.xlu0 %v5505, 96
        %v5745 = vpop.permute.xlu0 %5744
        %5746 = vrot.lane.b32.xlu0 %v5506, 96
        %v5747 = vpop.permute.xlu0 %5746
        %5748 = vrot.lane.b32.xlu0 %v5507, 96
        %v5749 = vpop.permute.xlu0 %5748
        %5750 = vrot.lane.b32.xlu0 %v5508, 96
        %v5751 = vpop.permute.xlu0 %5750
        %vm5752 = vcmask 785408
        %v5753 = vsel %vm5752, %v5745, %v5747
        %v5754 = vsel %vm5752, %v5749, %v5751
        %v5758 = vsel %vm1041, %v5736, 0
        %v5761 = vsel %vm1041, %v5737, 0
        %v5764 = vsel %vm1041, %v5738, 0
        %v5767 = vsel %vm1041, %v5739, 0
        %5769 = vmatprep.subr.bf16.mxu0 0
        %5770 = vmatpush1.bf16.msra.mxu0 %v5753
        %5771 = vmatprep.subr.bf16.mxu0 0
        %5772 = vmatpush1.bf16.msra.mxu0 %v5754
        %5773 = vmatprep.subr.bf16.mxu0 0
        %5774 = vmatpush1.bf16.msra.mxu0 0
        %5775 = vmatprep.subr.bf16.mxu0 0
        %5776 = vmatpush1.bf16.msra.mxu0 0
        %5777 = vmatprep.subr.bf16.mxu0 0
        %5778 = vmatpush1.bf16.msra.mxu0 0
        %5779 = vmatprep.subr.bf16.mxu0 0
        %5780 = vmatpush1.bf16.msra.mxu0 0
        %5781 = vmatprep.subr.bf16.mxu0 0
        %5782 = vmatpush1.bf16.msra.mxu0 0
        %5783 = vmatprep.subr.bf16.mxu0 0
        %5784 = vmatpush1.bf16.msra.mxu0 0
        %5785 = vmatprep.subr.bf16.mxu0 0
        %5786 = vmatpush1.bf16.msra.mxu0 0
        %5787 = vmatprep.subr.bf16.mxu0 0
        %5788 = vmatpush1.bf16.msra.mxu0 0
        %5789 = vmatprep.subr.bf16.mxu0 0
        %5790 = vmatpush1.bf16.msra.mxu0 0
        %5791 = vmatprep.subr.bf16.mxu0 0
        %5792 = vmatpush1.bf16.msra.mxu0 0
        %5793 = vmatprep.subr.bf16.mxu0 0
        %5794 = vmatpush1.bf16.msra.mxu0 0
        %5795 = vmatprep.subr.bf16.mxu0 0
        %5796 = vmatpush1.bf16.msra.mxu0 0
        %5797 = vmatprep.subr.bf16.mxu0 0
        %5798 = vmatpush1.bf16.msra.mxu0 0
        %5799 = vmatprep.subr.bf16.mxu0 0
        %5800 = vmatpush1.bf16.msra.mxu0 0
        %5801 = vmatprep.mubr.bf16.mxu0 0
        %5802 = vmatmul.mubr.bf16.gmra.mrb[0].mxu0 %v5758
        %v5803 = vpop.f32.mrb[0].mxu0
        %v5804 = vadd.f32 0.0, %v5803
        %v5805 = vpop.f32.mrb[0].mxu0
        %v5806 = vpop.f32.mrb[0].mxu0
        %v5807 = vadd.f32 0.0, %v5806
        %v5808 = vpop.f32.mrb[0].mxu0
        %5809 = vmatprep.mubr.bf16.mxu0 0
        %5810 = vmatmul.mubr.bf16.gmra.mrb[0].mxu0 %v5761
        %v5811 = vpop.f32.mrb[0].mxu0
        %v5812 = vadd.f32 0.0, %v5811
        %v5813 = vpop.f32.mrb[0].mxu0
        %v5814 = vpop.f32.mrb[0].mxu0
        %v5815 = vadd.f32 0.0, %v5814
        %v5816 = vpop.f32.mrb[0].mxu0
        %5817 = vmatprep.mubr.bf16.mxu0 0
        %5818 = vmatmul.mubr.bf16.gmra.mrb[0].mxu0 %v5764
        %v5819 = vpop.f32.mrb[0].mxu0
        %v5820 = vadd.f32 0.0, %v5819
        %v5821 = vpop.f32.mrb[0].mxu0
        %v5822 = vpop.f32.mrb[0].mxu0
        %v5823 = vadd.f32 0.0, %v5822
        %v5824 = vpop.f32.mrb[0].mxu0
        %5825 = vmatprep.mubr.bf16.mxu0 0
        %5826 = vmatmul.mubr.bf16.gmra.mrb[0].mxu0 %v5767
        %v5827 = vpop.f32.mrb[0].mxu0
        %v5828 = vadd.f32 0.0, %v5827
        %v5829 = vpop.f32.mrb[0].mxu0
        %v5830 = vpop.f32.mrb[0].mxu0
        %v5831 = vadd.f32 0.0, %v5830
        %v5832 = vpop.f32.mrb[0].mxu0
        %5833 = vdwg.mxu0
        %v5834 = vadd.f32 %v5690, %v5804
        %v5835 = vadd.f32 %v5693, %v5807
        %v5836 = vadd.f32 %v5698, %v5812
        %v5837 = vadd.f32 %v5701, %v5815
        %v5838 = vadd.f32 %v5706, %v5820
        %v5839 = vadd.f32 %v5709, %v5823
        %v5840 = vadd.f32 %v5714, %v5828
        %v5841 = vadd.f32 %v5717, %v5831
        %s5842 = scalar_lea.vmem [#allocation11], 320
        %v5843 = vld [vmem:[%s5842] sm:$0xff]
        %v5844 = vld [vmem:[%s5842 + $0x8] sm:$0xff]
        %v5845 = vld [vmem:[%s5842 + $0x10] sm:$0xff]
        %v5846 = vld [vmem:[%s5842 + $0x18] sm:$0xff]
        %v5847 = vld [vmem:[%s5842 + $0x20] sm:$0xff]
        %v5848 = vld [vmem:[%s5842 + $0x28] sm:$0xff]
        %v5849 = vld [vmem:[%s5842 + $0x30] sm:$0xff]
        %v5850 = vld [vmem:[%s5842 + $0x38] sm:$0xff]
        %5852 = vset.pattern.permute.xlu0 0
        %5853 = vperm.xlu0 %5852, %v5843
        %v5854 = vpop.permute.xlu0 %5853
        %5857 = vset.pattern.permute.xlu0 0
        %5858 = vperm.xlu0 %5857, %v5844
        %v5859 = vpop.permute.xlu0 %5858
        %5862 = vset.pattern.permute.xlu0 0
        %5863 = vperm.xlu0 %5862, %v5845
        %v5864 = vpop.permute.xlu0 %5863
        %5867 = vset.pattern.permute.xlu0 0
        %5868 = vperm.xlu0 %5867, %v5846
        %v5869 = vpop.permute.xlu0 %5868
        %5872 = vset.pattern.permute.xlu0 0
        %5873 = vperm.xlu0 %5872, %v5847
        %v5874 = vpop.permute.xlu0 %5873
        %5877 = vset.pattern.permute.xlu0 0
        %5878 = vperm.xlu0 %5877, %v5848
        %v5879 = vpop.permute.xlu0 %5878
        %5882 = vset.pattern.permute.xlu0 0
        %5883 = vperm.xlu0 %5882, %v5849
        %v5884 = vpop.permute.xlu0 %5883
        %5887 = vset.pattern.permute.xlu0 0
        %5888 = vperm.xlu0 %5887, %v5850
        %v5889 = vpop.permute.xlu0 %5888
        %v5891 = vmul.f32 %v5834, %v5854
        %v5892 = vmul.f32 %v5835, %v5859
        %v5893 = vmul.f32 %v5836, %v5864
        %v5894 = vmul.f32 %v5837, %v5869
        %v5895 = vmul.f32 %v5838, %v5874
        %v5896 = vmul.f32 %v5839, %v5879
        %v5897 = vmul.f32 %v5840, %v5884
        %v5898 = vmul.f32 %v5841, %v5889
        %s5899 = scalar_lea.vmem [#allocation13], 320
        %v5900 = vld [vmem:[%s5899] sm:$0xff]
        %v5901 = vld [vmem:[%s5899 + $0x8] sm:$0xff]
        %v5902 = vld [vmem:[%s5899 + $0x10] sm:$0xff]
        %v5903 = vld [vmem:[%s5899 + $0x18] sm:$0xff]
        %v5904 = vld [vmem:[%s5899 + $0x20] sm:$0xff]
        %v5905 = vld [vmem:[%s5899 + $0x28] sm:$0xff]
        %v5906 = vld [vmem:[%s5899 + $0x30] sm:$0xff]
        %v5907 = vld [vmem:[%s5899 + $0x38] sm:$0xff]
        %5909 = vset.pattern.permute.xlu0 0
        %5910 = vperm.xlu0 %5909, %v5900
        %v5911 = vpop.permute.xlu0 %5910
        %5914 = vset.pattern.permute.xlu0 0
        %5915 = vperm.xlu0 %5914, %v5901
        %v5916 = vpop.permute.xlu0 %5915
        %5919 = vset.pattern.permute.xlu0 0
        %5920 = vperm.xlu0 %5919, %v5902
        %v5921 = vpop.permute.xlu0 %5920
        %5924 = vset.pattern.permute.xlu0 0
        %5925 = vperm.xlu0 %5924, %v5903
        %v5926 = vpop.permute.xlu0 %5925
        %5929 = vset.pattern.permute.xlu0 0
        %5930 = vperm.xlu0 %5929, %v5904
        %v5931 = vpop.permute.xlu0 %5930
        %5934 = vset.pattern.permute.xlu0 0
        %5935 = vperm.xlu0 %5934, %v5905
        %v5936 = vpop.permute.xlu0 %5935
        %5939 = vset.pattern.permute.xlu0 0
        %5940 = vperm.xlu0 %5939, %v5906
        %v5941 = vpop.permute.xlu0 %5940
        %5944 = vset.pattern.permute.xlu0 0
        %5945 = vperm.xlu0 %5944, %v5907
        %v5946 = vpop.permute.xlu0 %5945
        %v5948 = vadd.f32 %v5891, %v5911
        %v5949 = vadd.f32 %v5892, %v5916
        %v5950 = vadd.f32 %v5893, %v5921
        %v5951 = vadd.f32 %v5894, %v5926
        %v5952 = vadd.f32 %v5895, %v5931
        %v5953 = vadd.f32 %v5896, %v5936
        %v5954 = vadd.f32 %v5897, %v5941
        %v5955 = vadd.f32 %v5898, %v5946
        %v5956 = vtanh.pop %v5948
        %v5957 = vtanh.pop %v5949
        %v5958 = vtanh.pop %v5950
        %v5959 = vtanh.pop %v5951
        %v5960 = vxor.u32 %v5952, 2147483648
        %v5961 = vxor.u32 %v5953, 2147483648
        %v5962 = vxor.u32 %v5954, 2147483648
        %v5963 = vxor.u32 %v5955, 2147483648
        %v5964 = vmul.f32 %v5960, 1.442695
        %v5965 = vpow.pop %v5964
        %v5966 = vmul.f32 %v5961, 1.442695
        %v5967 = vpow.pop %v5966
        %v5968 = vmul.f32 %v5962, 1.442695
        %v5969 = vpow.pop %v5968
        %v5970 = vmul.f32 %v5963, 1.442695
        %v5971 = vpow.pop %v5970
        %v5972 = vadd.f32 %v5965, 1.0
        %v5973 = vadd.f32 %v5967, 1.0
        %v5974 = vadd.f32 %v5969, 1.0
        %v5975 = vadd.f32 %v5971, 1.0
        %v5976 = vrcp.pop %v5972
        %v5977 = vmul.f32 1.0, %v5976
        %v5978 = vrcp.pop %v5973
        %v5979 = vmul.f32 1.0, %v5978
        %v5980 = vrcp.pop %v5974
        %v5981 = vmul.f32 1.0, %v5980
        %v5982 = vrcp.pop %v5975
        %v5983 = vmul.f32 1.0, %v5982
        %v5984 = vmul.f32 %v5956, %v5977
        %v5985 = vmul.f32 %v5957, %v5979
        %v5986 = vmul.f32 %v5958, %v5981
        %v5987 = vmul.f32 %v5959, %v5983
        %v5988 = vmul.f32 %v5984, %v454
        %v5989 = vmul.f32 %v5985, %v454
        %v5990 = vmul.f32 %v5986, %v454
        %v5991 = vmul.f32 %v5987, %v454
        %v5992 = vpack.c.bf16 %v5989, %v5988
        %v5993 = vpack.c.bf16 %v5991, %v5990
        %s5994 = scalar_lea.vmem [#allocation14], 120
        %v5995 = vld [vmem:[%s5994] sm:$0xf]
        %v5996 = vld [vmem:[%s5994 + $0x4] sm:$0xf]
        %v5997 = vld [vmem:[%s5994 + $0x8] sm:$0xf]
        %v5998 = vld [vmem:[%s5994 + $0xc] sm:$0xf]
        %v5999 = vld [vmem:[%s5994 + $0x10] sm:$0xf]
        %v6000 = vld [vmem:[%s5994 + $0x14] sm:$0xf]
        %s6001 = scalar_lea.vmem [#allocation16], 240
        %v6002 = vld [vmem:[%s6001] sm:$0xff]
        %v6003 = vld [vmem:[%s6001 + $0x8] sm:$0xff]
        %v6004 = vld [vmem:[%s6001 + $0x10] sm:$0xff]
        %v6005 = vld [vmem:[%s6001 + $0x18] sm:$0xff]
        %v6006 = vld [vmem:[%s6001 + $0x20] sm:$0xff]
        %v6007 = vld [vmem:[%s6001 + $0x28] sm:$0xff]
        %6009 = vset.pattern.permute.xlu0 0
        %6010 = vperm.xlu0 %6009, %v6002
        %v6011 = vpop.permute.xlu0 %6010
        %6014 = vset.pattern.permute.xlu0 0
        %6015 = vperm.xlu0 %6014, %v6003
        %v6016 = vpop.permute.xlu0 %6015
        %6019 = vset.pattern.permute.xlu0 0
        %6020 = vperm.xlu0 %6019, %v6004
        %v6021 = vpop.permute.xlu0 %6020
        %6024 = vset.pattern.permute.xlu0 0
        %6025 = vperm.xlu0 %6024, %v6005
        %v6026 = vpop.permute.xlu0 %6025
        %6029 = vset.pattern.permute.xlu0 0
        %6030 = vperm.xlu0 %6029, %v6006
        %v6031 = vpop.permute.xlu0 %6030
        %6034 = vset.pattern.permute.xlu0 0
        %6035 = vperm.xlu0 %6034, %v6007
        %v6036 = vpop.permute.xlu0 %6035
        %v6044 = vunpack.c.l.b16 %v5995
        %v6045 = vunpack.c.l.b16 %v5996
        %v6046 = vunpack.c.l.b16 %v5997
        %v6047 = vunpack.c.l.b16 %v5998
        %v6048 = vunpack.c.l.b16 %v5999
        %v6049 = vunpack.c.l.b16 %v6000
        %v6050 = vpack.c.b16 %v6045, %v6044
        %v6051 = vpack.c.b16 %v6047, %v6046
        %v6052 = vpack.c.b16 %v6049, %v6048
        %v6054 = vsel %vm1041, %v6050, 0
        %v6057 = vsel %vm1041, %v6051, 0
        %v6060 = vsel %vm1041, %v6052, 0
        %6062 = vmatprep.subr.bf16.mxu0 0
        %6063 = vmatpush1.bf16.msra.mxu0 %v5992
        %6064 = vmatprep.subr.bf16.mxu0 0
        %6065 = vmatpush1.bf16.msra.mxu0 %v5993
        %6066 = vmatprep.subr.bf16.mxu0 0
        %6067 = vmatpush1.bf16.msra.mxu0 0
        %6068 = vmatprep.subr.bf16.mxu0 0
        %6069 = vmatpush1.bf16.msra.mxu0 0
        %6070 = vmatprep.subr.bf16.mxu0 0
        %6071 = vmatpush1.bf16.msra.mxu0 0
        %6072 = vmatprep.subr.bf16.mxu0 0
        %6073 = vmatpush1.bf16.msra.mxu0 0
        %6074 = vmatprep.subr.bf16.mxu0 0
        %6075 = vmatpush1.bf16.msra.mxu0 0
        %6076 = vmatprep.subr.bf16.mxu0 0
        %6077 = vmatpush1.bf16.msra.mxu0 0
        %6078 = vmatprep.subr.bf16.mxu0 0
        %6079 = vmatpush1.bf16.msra.mxu0 0
        %6080 = vmatprep.subr.bf16.mxu0 0
        %6081 = vmatpush1.bf16.msra.mxu0 0
        %6082 = vmatprep.subr.bf16.mxu0 0
        %6083 = vmatpush1.bf16.msra.mxu0 0
        %6084 = vmatprep.subr.bf16.mxu0 0
        %6085 = vmatpush1.bf16.msra.mxu0 0
        %6086 = vmatprep.subr.bf16.mxu0 0
        %6087 = vmatpush1.bf16.msra.mxu0 0
        %6088 = vmatprep.subr.bf16.mxu0 0
        %6089 = vmatpush1.bf16.msra.mxu0 0
        %6090 = vmatprep.subr.bf16.mxu0 0
        %6091 = vmatpush1.bf16.msra.mxu0 0
        %6092 = vmatprep.subr.bf16.mxu0 0
        %6093 = vmatpush1.bf16.msra.mxu0 0
        %6094 = vmatprep.mubr.bf16.mxu0 0
        %6095 = vmatmul.mubr.bf16.gmra.mrb[0].mxu0 %v6054
        %v6096 = vpop.f32.mrb[0].mxu0
        %v6097 = vadd.f32 %v6011, %v6096
        %v6098 = vpop.f32.mrb[0].mxu0
        %v6099 = vpop.f32.mrb[0].mxu0
        %v6100 = vadd.f32 %v6016, %v6099
        %v6101 = vpop.f32.mrb[0].mxu0
        %6102 = vmatprep.mubr.bf16.mxu0 0
        %6103 = vmatmul.mubr.bf16.gmra.mrb[0].mxu0 %v6057
        %v6104 = vpop.f32.mrb[0].mxu0
        %v6105 = vadd.f32 %v6021, %v6104
        %v6106 = vpop.f32.mrb[0].mxu0
        %v6107 = vpop.f32.mrb[0].mxu0
        %v6108 = vadd.f32 %v6026, %v6107
        %v6109 = vpop.f32.mrb[0].mxu0
        %6110 = vmatprep.mubr.bf16.mxu0 0
        %6111 = vmatmul.mubr.bf16.gmra.mrb[0].mxu0 %v6060
        %v6112 = vpop.f32.mrb[0].mxu0
        %v6113 = vadd.f32 %v6031, %v6112
        %v6114 = vpop.f32.mrb[0].mxu0
        %v6115 = vpop.f32.mrb[0].mxu0
        %v6116 = vadd.f32 %v6036, %v6115
        %v6117 = vpop.f32.mrb[0].mxu0
        %6118 = vdwg.mxu0
        %v6119 = vmul.f32 %v6105, %v454
        %v6120 = vmul.f32 %v6108, %v454
        %v6121 = vmul.f32 %v6113, %v454
        %v6122 = vmul.f32 %v6116, %v454
        %v6123 = vpack.c.bf16 %v6097, %v6097
        %v6124 = vpack.c.bf16 %v6100, %v6100
        %6125 = vxpose.xlu0.c.b16.start [1/8] %v6123, 128
        %6126 = vxpose.xlu0.c.b16.cont [2/8] 0, 128
        %6127 = vxpose.xlu0.c.b16.cont [3/8] 0, 128
        %6128 = vxpose.xlu0.c.b16.cont [4/8] 0, 128
        %6129 = vxpose.xlu0.c.b16.cont [5/8] 0, 128
        %6130 = vxpose.xlu0.c.b16.cont [6/8] 0, 128
        %6131 = vxpose.xlu0.c.b16.cont [7/8] 0, 128
        %6132 = vxpose.xlu0.c.b16.end [8/8] 0, 128
        %v6133 = vpop.trf.xlu0
        %v6134 = vpop.trf.xlu0
        %v6135 = vpop.trf.xlu0
        %v6136 = vpop.trf.xlu0
        %v6137 = vpop.trf.xlu0
        %v6138 = vpop.trf.xlu0
        %v6139 = vpop.trf.xlu0
        %v6140 = vpop.trf.xlu0
        %v6142 = vsel %vm1130, %v6133, 0
        %v6145 = vsel %vm1130, %v6134, 0
        %v6148 = vsel %vm1130, %v6135, 0
        %v6151 = vsel %vm1130, %v6136, 0
        %v6154 = vsel %vm1130, %v6137, 0
        %v6157 = vsel %vm1130, %v6138, 0
        %v6160 = vsel %vm1130, %v6139, 0
        %v6163 = vsel %vm1130, %v6140, 0
        %v6166 = vsel %vm1155, %v6124, 0
        %6168 = vmatprep.subr.bf16.mxu0 0
        %6169 = vmatpush1.bf16.msra.mxu0 %v6166
        %6170 = vmatprep.subr.bf16.mxu0 0
        %6171 = vmatpush1.bf16.msra.mxu0 0
        %6172 = vmatprep.subr.bf16.mxu0 0
        %6173 = vmatpush1.bf16.msra.mxu0 0
        %6174 = vmatprep.subr.bf16.mxu0 0
        %6175 = vmatpush1.bf16.msra.mxu0 0
        %6176 = vmatprep.subr.bf16.mxu0 0
        %6177 = vmatpush1.bf16.msra.mxu0 0
        %6178 = vmatprep.subr.bf16.mxu0 0
        %6179 = vmatpush1.bf16.msra.mxu0 0
        %6180 = vmatprep.subr.bf16.mxu0 0
        %6181 = vmatpush1.bf16.msra.mxu0 0
        %6182 = vmatprep.subr.bf16.mxu0 0
        %6183 = vmatpush1.bf16.msra.mxu0 0
        %6184 = vmatprep.subr.bf16.mxu0 0
        %6185 = vmatpush1.bf16.msra.mxu0 0
        %6186 = vmatprep.subr.bf16.mxu0 0
        %6187 = vmatpush1.bf16.msra.mxu0 0
        %6188 = vmatprep.subr.bf16.mxu0 0
        %6189 = vmatpush1.bf16.msra.mxu0 0
        %6190 = vmatprep.subr.bf16.mxu0 0
        %6191 = vmatpush1.bf16.msra.mxu0 0
        %6192 = vmatprep.subr.bf16.mxu0 0
        %6193 = vmatpush1.bf16.msra.mxu0 0
        %6194 = vmatprep.subr.bf16.mxu0 0
        %6195 = vmatpush1.bf16.msra.mxu0 0
        %6196 = vmatprep.subr.bf16.mxu0 0
        %6197 = vmatpush1.bf16.msra.mxu0 0
        %6198 = vmatprep.subr.bf16.mxu0 0
        %6199 = vmatpush1.bf16.msra.mxu0 0
        %6200 = vmatprep.mubr.bf16.mxu0 0
        %6201 = vmatmul.mubr.bf16.gmra.mrb[0].mxu0 %v6142
        %v6202 = vpop.f32.mrb[0].mxu0
        %v6203 = vadd.f32 %v455, %v6202
        %v6204 = vpop.f32.mrb[0].mxu0
        %v6205 = vpop.f32.mrb[0].mxu0
        %v6206 = vadd.f32 %v455, %v6205
        %v6207 = vpop.f32.mrb[0].mxu0
        %6208 = vmatprep.mubr.bf16.mxu0 0
        %6209 = vmatmul.mubr.bf16.gmra.mrb[0].mxu0 %v6145
        %v6210 = vpop.f32.mrb[0].mxu0
        %v6211 = vadd.f32 %v455, %v6210
        %v6212 = vpop.f32.mrb[0].mxu0
        %v6213 = vpop.f32.mrb[0].mxu0
        %v6214 = vadd.f32 %v455, %v6213
        %v6215 = vpop.f32.mrb[0].mxu0
        %6216 = vmatprep.mubr.bf16.mxu0 0
        %6217 = vmatmul.mubr.bf16.gmra.mrb[0].mxu0 %v6148
        %v6218 = vpop.f32.mrb[0].mxu0
        %v6219 = vadd.f32 %v455, %v6218
        %v6220 = vpop.f32.mrb[0].mxu0
        %v6221 = vpop.f32.mrb[0].mxu0
        %v6222 = vadd.f32 %v455, %v6221
        %v6223 = vpop.f32.mrb[0].mxu0
        %6224 = vmatprep.mubr.bf16.mxu0 0
        %6225 = vmatmul.mubr.bf16.gmra.mrb[0].mxu0 %v6151
        %v6226 = vpop.f32.mrb[0].mxu0
        %v6227 = vadd.f32 %v455, %v6226
        %v6228 = vpop.f32.mrb[0].mxu0
        %v6229 = vpop.f32.mrb[0].mxu0
        %v6230 = vadd.f32 %v455, %v6229
        %v6231 = vpop.f32.mrb[0].mxu0
        %6232 = vmatprep.mubr.bf16.mxu0 0
        %6233 = vmatmul.mubr.bf16.gmra.mrb[0].mxu0 %v6154
        %v6234 = vpop.f32.mrb[0].mxu0
        %v6235 = vadd.f32 %v455, %v6234
        %v6236 = vpop.f32.mrb[0].mxu0
        %v6237 = vpop.f32.mrb[0].mxu0
        %v6238 = vadd.f32 %v455, %v6237
        %v6239 = vpop.f32.mrb[0].mxu0
        %6240 = vmatprep.mubr.bf16.mxu0 0
        %6241 = vmatmul.mubr.bf16.gmra.mrb[0].mxu0 %v6157
        %v6242 = vpop.f32.mrb[0].mxu0
        %v6243 = vadd.f32 %v455, %v6242
        %v6244 = vpop.f32.mrb[0].mxu0
        %v6245 = vpop.f32.mrb[0].mxu0
        %v6246 = vadd.f32 %v455, %v6245
        %v6247 = vpop.f32.mrb[0].mxu0
        %6248 = vmatprep.mubr.bf16.mxu0 0
        %6249 = vmatmul.mubr.bf16.gmra.mrb[0].mxu0 %v6160
        %v6250 = vpop.f32.mrb[0].mxu0
        %v6251 = vadd.f32 %v455, %v6250
        %v6252 = vpop.f32.mrb[0].mxu0
        %v6253 = vpop.f32.mrb[0].mxu0
        %v6254 = vadd.f32 %v455, %v6253
        %v6255 = vpop.f32.mrb[0].mxu0
        %6256 = vmatprep.mubr.bf16.mxu0 0
        %6257 = vmatmul.mubr.bf16.gmra.mrb[0].mxu0 %v6163
        %v6258 = vpop.f32.mrb[0].mxu0
        %v6259 = vadd.f32 %v455, %v6258
        %v6260 = vpop.f32.mrb[0].mxu0
        %v6261 = vpop.f32.mrb[0].mxu0
        %v6262 = vadd.f32 %v455, %v6261
        %v6263 = vpop.f32.mrb[0].mxu0
        %6264 = vdwg.mxu0
        %6265 = vmax.xlane.f32.xlu0 %v6203
        %v6266 = vpop.xlane.xlu0 %6265
        %6267 = vmax.xlane.f32.xlu0 %v6206
        %v6268 = vpop.xlane.xlu0 %6267
        %6269 = vmax.xlane.f32.xlu0 %v6211
        %v6270 = vpop.xlane.xlu0 %6269
        %6271 = vmax.xlane.f32.xlu0 %v6214
        %v6272 = vpop.xlane.xlu0 %6271
        %6273 = vmax.xlane.f32.xlu0 %v6219
        %v6274 = vpop.xlane.xlu0 %6273
        %6275 = vmax.xlane.f32.xlu0 %v6222
        %v6276 = vpop.xlane.xlu0 %6275
        %6277 = vmax.xlane.f32.xlu0 %v6227
        %v6278 = vpop.xlane.xlu0 %6277
        %6279 = vmax.xlane.f32.xlu0 %v6230
        %v6280 = vpop.xlane.xlu0 %6279
        %6281 = vmax.xlane.f32.xlu0 %v6235
        %v6282 = vpop.xlane.xlu0 %6281
        %6283 = vmax.xlane.f32.xlu0 %v6238
        %v6284 = vpop.xlane.xlu0 %6283
        %6285 = vmax.xlane.f32.xlu0 %v6243
        %v6286 = vpop.xlane.xlu0 %6285
        %6287 = vmax.xlane.f32.xlu0 %v6246
        %v6288 = vpop.xlane.xlu0 %6287
        %6289 = vmax.xlane.f32.xlu0 %v6251
        %v6290 = vpop.xlane.xlu0 %6289
        %6291 = vmax.xlane.f32.xlu0 %v6254
        %v6292 = vpop.xlane.xlu0 %6291
        %6293 = vmax.xlane.f32.xlu0 %v6259
        %v6294 = vpop.xlane.xlu0 %6293
        %6295 = vmax.xlane.f32.xlu0 %v6262
        %v6296 = vpop.xlane.xlu0 %6295
        %v6297 = vsub.f32 %v6203, %v6266
        %v6298 = vsub.f32 %v6206, %v6268
        %v6299 = vsub.f32 %v6211, %v6270
        %v6300 = vsub.f32 %v6214, %v6272
        %v6301 = vsub.f32 %v6219, %v6274
        %v6302 = vsub.f32 %v6222, %v6276
        %v6303 = vsub.f32 %v6227, %v6278
        %v6304 = vsub.f32 %v6230, %v6280
        %v6305 = vsub.f32 %v6235, %v6282
        %v6306 = vsub.f32 %v6238, %v6284
        %v6307 = vsub.f32 %v6243, %v6286
        %v6308 = vsub.f32 %v6246, %v6288
        %v6309 = vsub.f32 %v6251, %v6290
        %v6310 = vsub.f32 %v6254, %v6292
        %v6311 = vsub.f32 %v6259, %v6294
        %v6312 = vsub.f32 %v6262, %v6296
        %v6313 = vmul.f32 %v6297, 1.442695
        %v6314 = vpow.pop %v6313
        %v6315 = vmul.f32 %v6298, 1.442695
        %v6316 = vpow.pop %v6315
        %v6317 = vmul.f32 %v6299, 1.442695
        %v6318 = vpow.pop %v6317
        %v6319 = vmul.f32 %v6300, 1.442695
        %v6320 = vpow.pop %v6319
        %v6321 = vmul.f32 %v6301, 1.442695
        %v6322 = vpow.pop %v6321
        %v6323 = vmul.f32 %v6302, 1.442695
        %v6324 = vpow.pop %v6323
        %v6325 = vmul.f32 %v6303, 1.442695
        %v6326 = vpow.pop %v6325
        %v6327 = vmul.f32 %v6304, 1.442695
        %v6328 = vpow.pop %v6327
        %v6329 = vmul.f32 %v6305, 1.442695
        %v6330 = vpow.pop %v6329
        %v6331 = vmul.f32 %v6306, 1.442695
        %v6332 = vpow.pop %v6331
        %v6333 = vmul.f32 %v6307, 1.442695
        %v6334 = vpow.pop %v6333
        %v6335 = vmul.f32 %v6308, 1.442695
        %v6336 = vpow.pop %v6335
        %v6337 = vmul.f32 %v6309, 1.442695
        %v6338 = vpow.pop %v6337
        %v6339 = vmul.f32 %v6310, 1.442695
        %v6340 = vpow.pop %v6339
        %v6341 = vmul.f32 %v6311, 1.442695
        %v6342 = vpow.pop %v6341
        %v6343 = vmul.f32 %v6312, 1.442695
        %v6344 = vpow.pop %v6343
        %6345 = vadd.xlane.f32.xlu0 %v6314
        %v6346 = vpop.xlane.xlu0 %6345
        %6347 = vadd.xlane.f32.xlu0 %v6316
        %v6348 = vpop.xlane.xlu0 %6347
        %6349 = vadd.xlane.f32.xlu0 %v6318
        %v6350 = vpop.xlane.xlu0 %6349
        %6351 = vadd.xlane.f32.xlu0 %v6320
        %v6352 = vpop.xlane.xlu0 %6351
        %6353 = vadd.xlane.f32.xlu0 %v6322
        %v6354 = vpop.xlane.xlu0 %6353
        %6355 = vadd.xlane.f32.xlu0 %v6324
        %v6356 = vpop.xlane.xlu0 %6355
        %6357 = vadd.xlane.f32.xlu0 %v6326
        %v6358 = vpop.xlane.xlu0 %6357
        %6359 = vadd.xlane.f32.xlu0 %v6328
        %v6360 = vpop.xlane.xlu0 %6359
        %6361 = vadd.xlane.f32.xlu0 %v6330
        %v6362 = vpop.xlane.xlu0 %6361
        %6363 = vadd.xlane.f32.xlu0 %v6332
        %v6364 = vpop.xlane.xlu0 %6363
        %6365 = vadd.xlane.f32.xlu0 %v6334
        %v6366 = vpop.xlane.xlu0 %6365
        %6367 = vadd.xlane.f32.xlu0 %v6336
        %v6368 = vpop.xlane.xlu0 %6367
        %6369 = vadd.xlane.f32.xlu0 %v6338
        %v6370 = vpop.xlane.xlu0 %6369
        %6371 = vadd.xlane.f32.xlu0 %v6340
        %v6372 = vpop.xlane.xlu0 %6371
        %6373 = vadd.xlane.f32.xlu0 %v6342
        %v6374 = vpop.xlane.xlu0 %6373
        %6375 = vadd.xlane.f32.xlu0 %v6344
        %v6376 = vpop.xlane.xlu0 %6375
        %v6377 = vrcp.pop %v6346
        %v6378 = vrcp.pop %v6348
        %v6379 = vrcp.pop %v6350
        %v6380 = vrcp.pop %v6352
        %v6381 = vrcp.pop %v6354
        %v6382 = vrcp.pop %v6356
        %v6383 = vrcp.pop %v6358
        %v6384 = vrcp.pop %v6360
        %v6385 = vrcp.pop %v6362
        %v6386 = vrcp.pop %v6364
        %v6387 = vrcp.pop %v6366
        %v6388 = vrcp.pop %v6368
        %v6389 = vrcp.pop %v6370
        %v6390 = vrcp.pop %v6372
        %v6391 = vrcp.pop %v6374
        %v6392 = vrcp.pop %v6376
        %v6393 = vmul.f32 %v6314, %v6377
        %v6394 = vmul.f32 %v6316, %v6378
        %v6395 = vmul.f32 %v6318, %v6379
        %v6396 = vmul.f32 %v6320, %v6380
        %v6397 = vmul.f32 %v6322, %v6381
        %v6398 = vmul.f32 %v6324, %v6382
        %v6399 = vmul.f32 %v6326, %v6383
        %v6400 = vmul.f32 %v6328, %v6384
        %v6401 = vmul.f32 %v6330, %v6385
        %v6402 = vmul.f32 %v6332, %v6386
        %v6403 = vmul.f32 %v6334, %v6387
        %v6404 = vmul.f32 %v6336, %v6388
        %v6405 = vmul.f32 %v6338, %v6389
        %v6406 = vmul.f32 %v6340, %v6390
        %v6407 = vmul.f32 %v6342, %v6391
        %v6408 = vmul.f32 %v6344, %v6392
        %v6409 = vpack.c.bf16 %v6120, %v6119
        %v6410 = vpack.c.bf16 %v6122, %v6121
        %v6411 = vpack.c.bf16 %v6394, %v6393
        %v6412 = vpack.c.bf16 %v6396, %v6395
        %v6413 = vpack.c.bf16 %v6398, %v6397
        %v6414 = vpack.c.bf16 %v6400, %v6399
        %v6415 = vpack.c.bf16 %v6402, %v6401
        %v6416 = vpack.c.bf16 %v6404, %v6403
        %v6417 = vpack.c.bf16 %v6406, %v6405
        %v6418 = vpack.c.bf16 %v6408, %v6407
        %6419 = vmatprep.subr.bf16.mxu0 0
        %6420 = vmatpush1.bf16.msra.mxu0 %v6411
        %6421 = vmatprep.subr.bf16.mxu0 0
        %6422 = vmatpush1.bf16.msra.mxu0 %v6412
        %6423 = vmatprep.subr.bf16.mxu0 0
        %6424 = vmatpush1.bf16.msra.mxu0 %v6413
        %6425 = vmatprep.subr.bf16.mxu0 0
        %6426 = vmatpush1.bf16.msra.mxu0 %v6414
        %6427 = vmatprep.subr.bf16.mxu0 0
        %6428 = vmatpush1.bf16.msra.mxu0 %v6415
        %6429 = vmatprep.subr.bf16.mxu0 0
        %6430 = vmatpush1.bf16.msra.mxu0 %v6416
        %6431 = vmatprep.subr.bf16.mxu0 0
        %6432 = vmatpush1.bf16.msra.mxu0 %v6417
        %6433 = vmatprep.subr.bf16.mxu0 0
        %6434 = vmatpush1.bf16.msra.mxu0 %v6418
        %6435 = vmatprep.subr.bf16.mxu0 0
        %6436 = vmatpush1.bf16.msra.mxu0 0
        %6437 = vmatprep.subr.bf16.mxu0 0
        %6438 = vmatpush1.bf16.msra.mxu0 0
        %6439 = vmatprep.subr.bf16.mxu0 0
        %6440 = vmatpush1.bf16.msra.mxu0 0
        %6441 = vmatprep.subr.bf16.mxu0 0
        %6442 = vmatpush1.bf16.msra.mxu0 0
        %6443 = vmatprep.subr.bf16.mxu0 0
        %6444 = vmatpush1.bf16.msra.mxu0 0
        %6445 = vmatprep.subr.bf16.mxu0 0
        %6446 = vmatpush1.bf16.msra.mxu0 0
        %6447 = vmatprep.subr.bf16.mxu0 0
        %6448 = vmatpush1.bf16.msra.mxu0 0
        %6449 = vmatprep.subr.bf16.mxu0 0
        %6450 = vmatpush1.bf16.msra.mxu0 0
        %6451 = vmatprep.mubr.bf16.mxu0 0
        %6452 = vmatmul.mubr.bf16.gmra.mrb[0].mxu0 %v6409
        %v6453 = vpop.f32.mrb[0].mxu0
        %v6454 = vadd.f32 %v5988, %v6453
        %v6455 = vpop.f32.mrb[0].mxu0
        %v6456 = vpop.f32.mrb[0].mxu0
        %v6457 = vadd.f32 %v5989, %v6456
        %v6458 = vpop.f32.mrb[0].mxu0
        %6459 = vmatprep.mubr.bf16.mxu0 0
        %6460 = vmatmul.mubr.bf16.gmra.mrb[0].mxu0 %v6410
        %v6461 = vpop.f32.mrb[0].mxu0
        %v6462 = vadd.f32 %v5990, %v6461
        %v6463 = vpop.f32.mrb[0].mxu0
        %v6464 = vpop.f32.mrb[0].mxu0
        %v6465 = vadd.f32 %v5991, %v6464
        %v6466 = vpop.f32.mrb[0].mxu0
        %6467 = vdwg.mxu0
        %v6468 = vmul.f32 %v6454, %v454
        %v6469 = vmul.f32 %v6457, %v454
        %v6470 = vmul.f32 %v6462, %v454
        %v6471 = vmul.f32 %v6465, %v454
        %v6472 = vpack.c.bf16 %v6469, %v6468
        %v6473 = vpack.c.bf16 %v6471, %v6470
        %6474 = vst [vmem:[#allocation3 + $0x8] sm:$0xff] %v6472
        %6475 = vst [vmem:[#allocation3 + $0x20] sm:$0xff] %v6473
        %s6476 = scalar_lea.vmem [#allocation10], 480
        %v6477 = vld [vmem:[%s6476] sm:$0xf]
        %v6478 = vld [vmem:[%s6476 + $0x4] sm:$0xf]
        %v6479 = vld [vmem:[%s6476 + $0x8] sm:$0xf]
        %v6480 = vld [vmem:[%s6476 + $0xc] sm:$0xf]
        %v6481 = vld [vmem:[%s6476 + $0x10] sm:$0xf]
        %v6482 = vld [vmem:[%s6476 + $0x14] sm:$0xf]
        %v6483 = vld [vmem:[%s6476 + $0x18] sm:$0xf]
        %v6484 = vld [vmem:[%s6476 + $0x1c] sm:$0xf]
        %s6485 = scalar_lea.vmem [#allocation10], 512
        %v6486 = vld [vmem:[%s6485] sm:$0xf]
        %v6487 = vld [vmem:[%s6485 + $0x4] sm:$0xf]
        %v6488 = vld [vmem:[%s6485 + $0x8] sm:$0xf]
        %v6489 = vld [vmem:[%s6485 + $0xc] sm:$0xf]
        %v6490 = vld [vmem:[%s6485 + $0x10] sm:$0xf]
        %v6491 = vld [vmem:[%s6485 + $0x14] sm:$0xf]
        %v6492 = vld [vmem:[%s6485 + $0x18] sm:$0xf]
        %v6493 = vld [vmem:[%s6485 + $0x1c] sm:$0xf]
        %s6494 = scalar_lea.vmem [#allocation10], 544
        %v6495 = vld [vmem:[%s6494] sm:$0xf]
        %v6496 = vld [vmem:[%s6494 + $0x4] sm:$0xf]
        %v6497 = vld [vmem:[%s6494 + $0x8] sm:$0xf]
        %v6498 = vld [vmem:[%s6494 + $0xc] sm:$0xf]
        %v6499 = vld [vmem:[%s6494 + $0x10] sm:$0xf]
        %v6500 = vld [vmem:[%s6494 + $0x14] sm:$0xf]
        %v6501 = vld [vmem:[%s6494 + $0x18] sm:$0xf]
        %v6502 = vld [vmem:[%s6494 + $0x1c] sm:$0xf]
        %v6503 = vld [vmem:[#allocation3] sm:$0xff]
        %v6504 = vld [vmem:[#allocation3 + $0x8] sm:$0xff]
        %v6505 = vld [vmem:[#allocation3 + $0x18] sm:$0xff]
        %v6506 = vld [vmem:[#allocation3 + $0x20] sm:$0xff]
        %v6507 = vld [vmem:[#allocation3 + $0x8] sm:$0xff]
        %v6508 = vld [vmem:[#allocation3 + $0x10] sm:$0xff]
        %v6509 = vld [vmem:[#allocation3 + $0x20] sm:$0xff]
        %v6510 = vld [vmem:[#allocation3 + $0x28] sm:$0xff]
        %v6519 = vunpack.c.l.b16 %v6486
        %v6520 = vunpack.c.l.b16 %v6487
        %v6521 = vunpack.c.l.b16 %v6488
        %v6522 = vunpack.c.l.b16 %v6489
        %v6523 = vunpack.c.l.b16 %v6490
        %v6524 = vunpack.c.l.b16 %v6491
        %v6525 = vunpack.c.l.b16 %v6492
        %v6526 = vunpack.c.l.b16 %v6493
        %v6527 = vpack.c.b16 %v6520, %v6519
        %v6528 = vpack.c.b16 %v6522, %v6521
        %v6529 = vpack.c.b16 %v6524, %v6523
        %v6530 = vpack.c.b16 %v6526, %v6525
        %v6532 = vsel %vm1041, %v6527, 0
        %v6535 = vsel %vm1041, %v6528, 0
        %v6538 = vsel %vm1041, %v6529, 0
        %v6541 = vsel %vm1041, %v6530, 0
        %6543 = vmatprep.subr.bf16.mxu0 0
        %6544 = vmatpush1.bf16.msra.mxu0 %v6504
        %6545 = vmatprep.subr.bf16.mxu0 0
        %6546 = vmatpush1.bf16.msra.mxu0 %v6506
        %6547 = vmatprep.subr.bf16.mxu0 0
        %6548 = vmatpush1.bf16.msra.mxu0 0
        %6549 = vmatprep.subr.bf16.mxu0 0
        %6550 = vmatpush1.bf16.msra.mxu0 0
        %6551 = vmatprep.subr.bf16.mxu0 0
        %6552 = vmatpush1.bf16.msra.mxu0 0
        %6553 = vmatprep.subr.bf16.mxu0 0
        %6554 = vmatpush1.bf16.msra.mxu0 0
        %6555 = vmatprep.subr.bf16.mxu0 0
        %6556 = vmatpush1.bf16.msra.mxu0 0
        %6557 = vmatprep.subr.bf16.mxu0 0
        %6558 = vmatpush1.bf16.msra.mxu0 0
        %6559 = vmatprep.subr.bf16.mxu0 0
        %6560 = vmatpush1.bf16.msra.mxu0 0
        %6561 = vmatprep.subr.bf16.mxu0 0
        %6562 = vmatpush1.bf16.msra.mxu0 0
        %6563 = vmatprep.subr.bf16.mxu0 0
        %6564 = vmatpush1.bf16.msra.mxu0 0
        %6565 = vmatprep.subr.bf16.mxu0 0
        %6566 = vmatpush1.bf16.msra.mxu0 0
        %6567 = vmatprep.subr.bf16.mxu0 0
        %6568 = vmatpush1.bf16.msra.mxu0 0
        %6569 = vmatprep.subr.bf16.mxu0 0
        %6570 = vmatpush1.bf16.msra.mxu0 0
        %6571 = vmatprep.subr.bf16.mxu0 0
        %6572 = vmatpush1.bf16.msra.mxu0 0
        %6573 = vmatprep.subr.bf16.mxu0 0
        %6574 = vmatpush1.bf16.msra.mxu0 0
        %6575 = vmatprep.mubr.bf16.mxu0 0
        %6576 = vmatmul.mubr.bf16.gmra.mrb[0].mxu0 %v6532
        %v6577 = vpop.f32.mrb[0].mxu0
        %v6578 = vadd.f32 0.0, %v6577
        %v6579 = vpop.f32.mrb[0].mxu0
        %v6580 = vpop.f32.mrb[0].mxu0
        %v6581 = vadd.f32 0.0, %v6580
        %v6582 = vpop.f32.mrb[0].mxu0
        %6583 = vmatprep.mubr.bf16.mxu0 0
        %6584 = vmatmul.mubr.bf16.gmra.mrb[0].mxu0 %v6535
        %v6585 = vpop.f32.mrb[0].mxu0
        %v6586 = vadd.f32 0.0, %v6585
        %v6587 = vpop.f32.mrb[0].mxu0
        %v6588 = vpop.f32.mrb[0].mxu0
        %v6589 = vadd.f32 0.0, %v6588
        %v6590 = vpop.f32.mrb[0].mxu0
        %6591 = vmatprep.mubr.bf16.mxu0 0
        %6592 = vmatmul.mubr.bf16.gmra.mrb[0].mxu0 %v6538
        %v6593 = vpop.f32.mrb[0].mxu0
        %v6594 = vadd.f32 0.0, %v6593
        %v6595 = vpop.f32.mrb[0].mxu0
        %v6596 = vpop.f32.mrb[0].mxu0
        %v6597 = vadd.f32 0.0, %v6596
        %v6598 = vpop.f32.mrb[0].mxu0
        %6599 = vmatprep.mubr.bf16.mxu0 0
        %6600 = vmatmul.mubr.bf16.gmra.mrb[0].mxu0 %v6541
        %v6601 = vpop.f32.mrb[0].mxu0
        %v6602 = vadd.f32 0.0, %v6601
        %v6603 = vpop.f32.mrb[0].mxu0
        %v6604 = vpop.f32.mrb[0].mxu0
        %v6605 = vadd.f32 0.0, %v6604
        %v6606 = vpop.f32.mrb[0].mxu0
        %6607 = vdwg.mxu0
        %v6616 = vunpack.c.l.b16 %v6477
        %v6617 = vunpack.c.l.b16 %v6478
        %v6618 = vunpack.c.l.b16 %v6479
        %v6619 = vunpack.c.l.b16 %v6480
        %v6620 = vunpack.c.l.b16 %v6481
        %v6621 = vunpack.c.l.b16 %v6482
        %v6622 = vunpack.c.l.b16 %v6483
        %v6623 = vunpack.c.l.b16 %v6484
        %v6624 = vpack.c.b16 %v6617, %v6616
        %v6625 = vpack.c.b16 %v6619, %v6618
        %v6626 = vpack.c.b16 %v6621, %v6620
        %v6627 = vpack.c.b16 %v6623, %v6622
        %6632 = vrot.lane.b32.xlu0 %v6503, 64
        %v6633 = vpop.permute.xlu0 %6632
        %6634 = vrot.lane.b32.xlu0 %v6504, 64
        %v6635 = vpop.permute.xlu0 %6634
        %6636 = vrot.lane.b32.xlu0 %v6505, 64
        %v6637 = vpop.permute.xlu0 %6636
        %6638 = vrot.lane.b32.xlu0 %v6506, 64
        %v6639 = vpop.permute.xlu0 %6638
        %vm6640 = vcmask 523264
        %v6641 = vsel %vm6640, %v6633, %v6635
        %v6642 = vsel %vm6640, %v6637, %v6639
        %v6646 = vsel %vm1041, %v6624, 0
        %v6649 = vsel %vm1041, %v6625, 0
        %v6652 = vsel %vm1041, %v6626, 0
        %v6655 = vsel %vm1041, %v6627, 0
        %6657 = vmatprep.subr.bf16.mxu0 0
        %6658 = vmatpush1.bf16.msra.mxu0 %v6641
        %6659 = vmatprep.subr.bf16.mxu0 0
        %6660 = vmatpush1.bf16.msra.mxu0 %v6642
        %6661 = vmatprep.subr.bf16.mxu0 0
        %6662 = vmatpush1.bf16.msra.mxu0 0
        %6663 = vmatprep.subr.bf16.mxu0 0
        %6664 = vmatpush1.bf16.msra.mxu0 0
        %6665 = vmatprep.subr.bf16.mxu0 0
        %6666 = vmatpush1.bf16.msra.mxu0 0
        %6667 = vmatprep.subr.bf16.mxu0 0
        %6668 = vmatpush1.bf16.msra.mxu0 0
        %6669 = vmatprep.subr.bf16.mxu0 0
        %6670 = vmatpush1.bf16.msra.mxu0 0
        %6671 = vmatprep.subr.bf16.mxu0 0
        %6672 = vmatpush1.bf16.msra.mxu0 0
        %6673 = vmatprep.subr.bf16.mxu0 0
        %6674 = vmatpush1.bf16.msra.mxu0 0
        %6675 = vmatprep.subr.bf16.mxu0 0
        %6676 = vmatpush1.bf16.msra.mxu0 0
        %6677 = vmatprep.subr.bf16.mxu0 0
        %6678 = vmatpush1.bf16.msra.mxu0 0
        %6679 = vmatprep.subr.bf16.mxu0 0
        %6680 = vmatpush1.bf16.msra.mxu0 0
        %6681 = vmatprep.subr.bf16.mxu0 0
        %6682 = vmatpush1.bf16.msra.mxu0 0
        %6683 = vmatprep.subr.bf16.mxu0 0
        %6684 = vmatpush1.bf16.msra.mxu0 0
        %6685 = vmatprep.subr.bf16.mxu0 0
        %6686 = vmatpush1.bf16.msra.mxu0 0
        %6687 = vmatprep.subr.bf16.mxu0 0
        %6688 = vmatpush1.bf16.msra.mxu0 0
        %6689 = vmatprep.mubr.bf16.mxu0 0
        %6690 = vmatmul.mubr.bf16.gmra.mrb[0].mxu0 %v6646
        %v6691 = vpop.f32.mrb[0].mxu0
        %v6692 = vadd.f32 %v6578, %v6691
        %v6693 = vpop.f32.mrb[0].mxu0
        %v6694 = vpop.f32.mrb[0].mxu0
        %v6695 = vadd.f32 %v6581, %v6694
        %v6696 = vpop.f32.mrb[0].mxu0
        %6697 = vmatprep.mubr.bf16.mxu0 0
        %6698 = vmatmul.mubr.bf16.gmra.mrb[0].mxu0 %v6649
        %v6699 = vpop.f32.mrb[0].mxu0
        %v6700 = vadd.f32 %v6586, %v6699
        %v6701 = vpop.f32.mrb[0].mxu0
        %v6702 = vpop.f32.mrb[0].mxu0
        %v6703 = vadd.f32 %v6589, %v6702
        %v6704 = vpop.f32.mrb[0].mxu0
        %6705 = vmatprep.mubr.bf16.mxu0 0
        %6706 = vmatmul.mubr.bf16.gmra.mrb[0].mxu0 %v6652
        %v6707 = vpop.f32.mrb[0].mxu0
        %v6708 = vadd.f32 %v6594, %v6707
        %v6709 = vpop.f32.mrb[0].mxu0
        %v6710 = vpop.f32.mrb[0].mxu0
        %v6711 = vadd.f32 %v6597, %v6710
        %v6712 = vpop.f32.mrb[0].mxu0
        %6713 = vmatprep.mubr.bf16.mxu0 0
        %6714 = vmatmul.mubr.bf16.gmra.mrb[0].mxu0 %v6655
        %v6715 = vpop.f32.mrb[0].mxu0
        %v6716 = vadd.f32 %v6602, %v6715
        %v6717 = vpop.f32.mrb[0].mxu0
        %v6718 = vpop.f32.mrb[0].mxu0
        %v6719 = vadd.f32 %v6605, %v6718
        %v6720 = vpop.f32.mrb[0].mxu0
        %6721 = vdwg.mxu0
        %v6730 = vunpack.c.l.b16 %v6495
        %v6731 = vunpack.c.l.b16 %v6496
        %v6732 = vunpack.c.l.b16 %v6497
        %v6733 = vunpack.c.l.b16 %v6498
        %v6734 = vunpack.c.l.b16 %v6499
        %v6735 = vunpack.c.l.b16 %v6500
        %v6736 = vunpack.c.l.b16 %v6501
        %v6737 = vunpack.c.l.b16 %v6502
        %v6738 = vpack.c.b16 %v6731, %v6730
        %v6739 = vpack.c.b16 %v6733, %v6732
        %v6740 = vpack.c.b16 %v6735, %v6734
        %v6741 = vpack.c.b16 %v6737, %v6736
        %6746 = vrot.lane.b32.xlu0 %v6507, 64
        %v6747 = vpop.permute.xlu0 %6746
        %6748 = vrot.lane.b32.xlu0 %v6508, 64
        %v6749 = vpop.permute.xlu0 %6748
        %6750 = vrot.lane.b32.xlu0 %v6509, 64
        %v6751 = vpop.permute.xlu0 %6750
        %6752 = vrot.lane.b32.xlu0 %v6510, 64
        %v6753 = vpop.permute.xlu0 %6752
        %v6754 = vsel %vm6640, %v6747, %v6749
        %v6755 = vsel %vm6640, %v6751, %v6753
        %v6759 = vsel %vm1041, %v6738, 0
        %v6762 = vsel %vm1041, %v6739, 0
        %v6765 = vsel %vm1041, %v6740, 0
        %v6768 = vsel %vm1041, %v6741, 0
        %6770 = vmatprep.subr.bf16.mxu0 0
        %6771 = vmatpush1.bf16.msra.mxu0 %v6754
        %6772 = vmatprep.subr.bf16.mxu0 0
        %6773 = vmatpush1.bf16.msra.mxu0 %v6755
        %6774 = vmatprep.subr.bf16.mxu0 0
        %6775 = vmatpush1.bf16.msra.mxu0 0
        %6776 = vmatprep.subr.bf16.mxu0 0
        %6777 = vmatpush1.bf16.msra.mxu0 0
        %6778 = vmatprep.subr.bf16.mxu0 0
        %6779 = vmatpush1.bf16.msra.mxu0 0
        %6780 = vmatprep.subr.bf16.mxu0 0
        %6781 = vmatpush1.bf16.msra.mxu0 0
        %6782 = vmatprep.subr.bf16.mxu0 0
        %6783 = vmatpush1.bf16.msra.mxu0 0
        %6784 = vmatprep.subr.bf16.mxu0 0
        %6785 = vmatpush1.bf16.msra.mxu0 0
        %6786 = vmatprep.subr.bf16.mxu0 0
        %6787 = vmatpush1.bf16.msra.mxu0 0
        %6788 = vmatprep.subr.bf16.mxu0 0
        %6789 = vmatpush1.bf16.msra.mxu0 0
        %6790 = vmatprep.subr.bf16.mxu0 0
        %6791 = vmatpush1.bf16.msra.mxu0 0
        %6792 = vmatprep.subr.bf16.mxu0 0
        %6793 = vmatpush1.bf16.msra.mxu0 0
        %6794 = vmatprep.subr.bf16.mxu0 0
        %6795 = vmatpush1.bf16.msra.mxu0 0
        %6796 = vmatprep.subr.bf16.mxu0 0
        %6797 = vmatpush1.bf16.msra.mxu0 0
        %6798 = vmatprep.subr.bf16.mxu0 0
        %6799 = vmatpush1.bf16.msra.mxu0 0
        %6800 = vmatprep.subr.bf16.mxu0 0
        %6801 = vmatpush1.bf16.msra.mxu0 0
        %6802 = vmatprep.mubr.bf16.mxu0 0
        %6803 = vmatmul.mubr.bf16.gmra.mrb[0].mxu0 %v6759
        %v6804 = vpop.f32.mrb[0].mxu0
        %v6805 = vadd.f32 0.0, %v6804
        %v6806 = vpop.f32.mrb[0].mxu0
        %v6807 = vpop.f32.mrb[0].mxu0
        %v6808 = vadd.f32 0.0, %v6807
        %v6809 = vpop.f32.mrb[0].mxu0
        %6810 = vmatprep.mubr.bf16.mxu0 0
        %6811 = vmatmul.mubr.bf16.gmra.mrb[0].mxu0 %v6762
        %v6812 = vpop.f32.mrb[0].mxu0
        %v6813 = vadd.f32 0.0, %v6812
        %v6814 = vpop.f32.mrb[0].mxu0
        %v6815 = vpop.f32.mrb[0].mxu0
        %v6816 = vadd.f32 0.0, %v6815
        %v6817 = vpop.f32.mrb[0].mxu0
        %6818 = vmatprep.mubr.bf16.mxu0 0
        %6819 = vmatmul.mubr.bf16.gmra.mrb[0].mxu0 %v6765
        %v6820 = vpop.f32.mrb[0].mxu0
        %v6821 = vadd.f32 0.0, %v6820
        %v6822 = vpop.f32.mrb[0].mxu0
        %v6823 = vpop.f32.mrb[0].mxu0
        %v6824 = vadd.f32 0.0, %v6823
        %v6825 = vpop.f32.mrb[0].mxu0
        %6826 = vmatprep.mubr.bf16.mxu0 0
        %6827 = vmatmul.mubr.bf16.gmra.mrb[0].mxu0 %v6768
        %v6828 = vpop.f32.mrb[0].mxu0
        %v6829 = vadd.f32 0.0, %v6828
        %v6830 = vpop.f32.mrb[0].mxu0
        %v6831 = vpop.f32.mrb[0].mxu0
        %v6832 = vadd.f32 0.0, %v6831
        %v6833 = vpop.f32.mrb[0].mxu0
        %6834 = vdwg.mxu0
        %v6835 = vadd.f32 %v6692, %v6805
        %v6836 = vadd.f32 %v6695, %v6808
        %v6837 = vadd.f32 %v6700, %v6813
        %v6838 = vadd.f32 %v6703, %v6816
        %v6839 = vadd.f32 %v6708, %v6821
        %v6840 = vadd.f32 %v6711, %v6824
        %v6841 = vadd.f32 %v6716, %v6829
        %v6842 = vadd.f32 %v6719, %v6832
        %s6843 = scalar_lea.vmem [#allocation11], 384
        %v6844 = vld [vmem:[%s6843] sm:$0xff]
        %v6845 = vld [vmem:[%s6843 + $0x8] sm:$0xff]
        %v6846 = vld [vmem:[%s6843 + $0x10] sm:$0xff]
        %v6847 = vld [vmem:[%s6843 + $0x18] sm:$0xff]
        %v6848 = vld [vmem:[%s6843 + $0x20] sm:$0xff]
        %v6849 = vld [vmem:[%s6843 + $0x28] sm:$0xff]
        %v6850 = vld [vmem:[%s6843 + $0x30] sm:$0xff]
        %v6851 = vld [vmem:[%s6843 + $0x38] sm:$0xff]
        %6853 = vset.pattern.permute.xlu0 0
        %6854 = vperm.xlu0 %6853, %v6844
        %v6855 = vpop.permute.xlu0 %6854
        %6858 = vset.pattern.permute.xlu0 0
        %6859 = vperm.xlu0 %6858, %v6845
        %v6860 = vpop.permute.xlu0 %6859
        %6863 = vset.pattern.permute.xlu0 0
        %6864 = vperm.xlu0 %6863, %v6846
        %v6865 = vpop.permute.xlu0 %6864
        %6868 = vset.pattern.permute.xlu0 0
        %6869 = vperm.xlu0 %6868, %v6847
        %v6870 = vpop.permute.xlu0 %6869
        %6873 = vset.pattern.permute.xlu0 0
        %6874 = vperm.xlu0 %6873, %v6848
        %v6875 = vpop.permute.xlu0 %6874
        %6878 = vset.pattern.permute.xlu0 0
        %6879 = vperm.xlu0 %6878, %v6849
        %v6880 = vpop.permute.xlu0 %6879
        %6883 = vset.pattern.permute.xlu0 0
        %6884 = vperm.xlu0 %6883, %v6850
        %v6885 = vpop.permute.xlu0 %6884
        %6888 = vset.pattern.permute.xlu0 0
        %6889 = vperm.xlu0 %6888, %v6851
        %v6890 = vpop.permute.xlu0 %6889
        %v6892 = vmul.f32 %v6835, %v6855
        %v6893 = vmul.f32 %v6836, %v6860
        %v6894 = vmul.f32 %v6837, %v6865
        %v6895 = vmul.f32 %v6838, %v6870
        %v6896 = vmul.f32 %v6839, %v6875
        %v6897 = vmul.f32 %v6840, %v6880
        %v6898 = vmul.f32 %v6841, %v6885
        %v6899 = vmul.f32 %v6842, %v6890
        %s6900 = scalar_lea.vmem [#allocation13], 384
        %v6901 = vld [vmem:[%s6900] sm:$0xff]
        %v6902 = vld [vmem:[%s6900 + $0x8] sm:$0xff]
        %v6903 = vld [vmem:[%s6900 + $0x10] sm:$0xff]
        %v6904 = vld [vmem:[%s6900 + $0x18] sm:$0xff]
        %v6905 = vld [vmem:[%s6900 + $0x20] sm:$0xff]
        %v6906 = vld [vmem:[%s6900 + $0x28] sm:$0xff]
        %v6907 = vld [vmem:[%s6900 + $0x30] sm:$0xff]
        %v6908 = vld [vmem:[%s6900 + $0x38] sm:$0xff]
        %6910 = vset.pattern.permute.xlu0 0
        %6911 = vperm.xlu0 %6910, %v6901
        %v6912 = vpop.permute.xlu0 %6911
        %6915 = vset.pattern.permute.xlu0 0
        %6916 = vperm.xlu0 %6915, %v6902
        %v6917 = vpop.permute.xlu0 %6916
        %6920 = vset.pattern.permute.xlu0 0
        %6921 = vperm.xlu0 %6920, %v6903
        %v6922 = vpop.permute.xlu0 %6921
        %6925 = vset.pattern.permute.xlu0 0
        %6926 = vperm.xlu0 %6925, %v6904
        %v6927 = vpop.permute.xlu0 %6926
        %6930 = vset.pattern.permute.xlu0 0
        %6931 = vperm.xlu0 %6930, %v6905
        %v6932 = vpop.permute.xlu0 %6931
        %6935 = vset.pattern.permute.xlu0 0
        %6936 = vperm.xlu0 %6935, %v6906
        %v6937 = vpop.permute.xlu0 %6936
        %6940 = vset.pattern.permute.xlu0 0
        %6941 = vperm.xlu0 %6940, %v6907
        %v6942 = vpop.permute.xlu0 %6941
        %6945 = vset.pattern.permute.xlu0 0
        %6946 = vperm.xlu0 %6945, %v6908
        %v6947 = vpop.permute.xlu0 %6946
        %v6949 = vadd.f32 %v6892, %v6912
        %v6950 = vadd.f32 %v6893, %v6917
        %v6951 = vadd.f32 %v6894, %v6922
        %v6952 = vadd.f32 %v6895, %v6927
        %v6953 = vadd.f32 %v6896, %v6932
        %v6954 = vadd.f32 %v6897, %v6937
        %v6955 = vadd.f32 %v6898, %v6942
        %v6956 = vadd.f32 %v6899, %v6947
        %v6957 = vtanh.pop %v6949
        %v6958 = vtanh.pop %v6950
        %v6959 = vtanh.pop %v6951
        %v6960 = vtanh.pop %v6952
        %v6961 = vxor.u32 %v6953, 2147483648
        %v6962 = vxor.u32 %v6954, 2147483648
        %v6963 = vxor.u32 %v6955, 2147483648
        %v6964 = vxor.u32 %v6956, 2147483648
        %v6965 = vmul.f32 %v6961, 1.442695
        %v6966 = vpow.pop %v6965
        %v6967 = vmul.f32 %v6962, 1.442695
        %v6968 = vpow.pop %v6967
        %v6969 = vmul.f32 %v6963, 1.442695
        %v6970 = vpow.pop %v6969
        %v6971 = vmul.f32 %v6964, 1.442695
        %v6972 = vpow.pop %v6971
        %v6973 = vadd.f32 %v6966, 1.0
        %v6974 = vadd.f32 %v6968, 1.0
        %v6975 = vadd.f32 %v6970, 1.0
        %v6976 = vadd.f32 %v6972, 1.0
        %v6977 = vrcp.pop %v6973
        %v6978 = vmul.f32 1.0, %v6977
        %v6979 = vrcp.pop %v6974
        %v6980 = vmul.f32 1.0, %v6979
        %v6981 = vrcp.pop %v6975
        %v6982 = vmul.f32 1.0, %v6981
        %v6983 = vrcp.pop %v6976
        %v6984 = vmul.f32 1.0, %v6983
        %v6985 = vmul.f32 %v6957, %v6978
        %v6986 = vmul.f32 %v6958, %v6980
        %v6987 = vmul.f32 %v6959, %v6982
        %v6988 = vmul.f32 %v6960, %v6984
        %v6989 = vmul.f32 %v6985, %v454
        %v6990 = vmul.f32 %v6986, %v454
        %v6991 = vmul.f32 %v6987, %v454
        %v6992 = vmul.f32 %v6988, %v454
        %v6993 = vpack.c.bf16 %v6990, %v6989
        %v6994 = vpack.c.bf16 %v6992, %v6991
        %s6995 = scalar_lea.vmem [#allocation14], 144
        %v6996 = vld [vmem:[%s6995] sm:$0xf]
        %v6997 = vld [vmem:[%s6995 + $0x4] sm:$0xf]
        %v6998 = vld [vmem:[%s6995 + $0x8] sm:$0xf]
        %v6999 = vld [vmem:[%s6995 + $0xc] sm:$0xf]
        %v7000 = vld [vmem:[%s6995 + $0x10] sm:$0xf]
        %v7001 = vld [vmem:[%s6995 + $0x14] sm:$0xf]
        %s7002 = scalar_lea.vmem [#allocation16], 288
        %v7003 = vld [vmem:[%s7002] sm:$0xff]
        %v7004 = vld [vmem:[%s7002 + $0x8] sm:$0xff]
        %v7005 = vld [vmem:[%s7002 + $0x10] sm:$0xff]
        %v7006 = vld [vmem:[%s7002 + $0x18] sm:$0xff]
        %v7007 = vld [vmem:[%s7002 + $0x20] sm:$0xff]
        %v7008 = vld [vmem:[%s7002 + $0x28] sm:$0xff]
        %7010 = vset.pattern.permute.xlu0 0
        %7011 = vperm.xlu0 %7010, %v7003
        %v7012 = vpop.permute.xlu0 %7011
        %7015 = vset.pattern.permute.xlu0 0
        %7016 = vperm.xlu0 %7015, %v7004
        %v7017 = vpop.permute.xlu0 %7016
        %7020 = vset.pattern.permute.xlu0 0
        %7021 = vperm.xlu0 %7020, %v7005
        %v7022 = vpop.permute.xlu0 %7021
        %7025 = vset.pattern.permute.xlu0 0
        %7026 = vperm.xlu0 %7025, %v7006
        %v7027 = vpop.permute.xlu0 %7026
        %7030 = vset.pattern.permute.xlu0 0
        %7031 = vperm.xlu0 %7030, %v7007
        %v7032 = vpop.permute.xlu0 %7031
        %7035 = vset.pattern.permute.xlu0 0
        %7036 = vperm.xlu0 %7035, %v7008
        %v7037 = vpop.permute.xlu0 %7036
        %v7045 = vunpack.c.l.b16 %v6996
        %v7046 = vunpack.c.l.b16 %v6997
        %v7047 = vunpack.c.l.b16 %v6998
        %v7048 = vunpack.c.l.b16 %v6999
        %v7049 = vunpack.c.l.b16 %v7000
        %v7050 = vunpack.c.l.b16 %v7001
        %v7051 = vpack.c.b16 %v7046, %v7045
        %v7052 = vpack.c.b16 %v7048, %v7047
        %v7053 = vpack.c.b16 %v7050, %v7049
        %v7055 = vsel %vm1041, %v7051, 0
        %v7058 = vsel %vm1041, %v7052, 0
        %v7061 = vsel %vm1041, %v7053, 0
        %7063 = vmatprep.subr.bf16.mxu0 0
        %7064 = vmatpush1.bf16.msra.mxu0 %v6993
        %7065 = vmatprep.subr.bf16.mxu0 0
        %7066 = vmatpush1.bf16.msra.mxu0 %v6994
        %7067 = vmatprep.subr.bf16.mxu0 0
        %7068 = vmatpush1.bf16.msra.mxu0 0
        %7069 = vmatprep.subr.bf16.mxu0 0
        %7070 = vmatpush1.bf16.msra.mxu0 0
        %7071 = vmatprep.subr.bf16.mxu0 0
        %7072 = vmatpush1.bf16.msra.mxu0 0
        %7073 = vmatprep.subr.bf16.mxu0 0
        %7074 = vmatpush1.bf16.msra.mxu0 0
        %7075 = vmatprep.subr.bf16.mxu0 0
        %7076 = vmatpush1.bf16.msra.mxu0 0
        %7077 = vmatprep.subr.bf16.mxu0 0
        %7078 = vmatpush1.bf16.msra.mxu0 0
        %7079 = vmatprep.subr.bf16.mxu0 0
        %7080 = vmatpush1.bf16.msra.mxu0 0
        %7081 = vmatprep.subr.bf16.mxu0 0
        %7082 = vmatpush1.bf16.msra.mxu0 0
        %7083 = vmatprep.subr.bf16.mxu0 0
        %7084 = vmatpush1.bf16.msra.mxu0 0
        %7085 = vmatprep.subr.bf16.mxu0 0
        %7086 = vmatpush1.bf16.msra.mxu0 0
        %7087 = vmatprep.subr.bf16.mxu0 0
        %7088 = vmatpush1.bf16.msra.mxu0 0
        %7089 = vmatprep.subr.bf16.mxu0 0
        %7090 = vmatpush1.bf16.msra.mxu0 0
        %7091 = vmatprep.subr.bf16.mxu0 0
        %7092 = vmatpush1.bf16.msra.mxu0 0
        %7093 = vmatprep.subr.bf16.mxu0 0
        %7094 = vmatpush1.bf16.msra.mxu0 0
        %7095 = vmatprep.mubr.bf16.mxu0 0
        %7096 = vmatmul.mubr.bf16.gmra.mrb[0].mxu0 %v7055
        %v7097 = vpop.f32.mrb[0].mxu0
        %v7098 = vadd.f32 %v7012, %v7097
        %v7099 = vpop.f32.mrb[0].mxu0
        %v7100 = vpop.f32.mrb[0].mxu0
        %v7101 = vadd.f32 %v7017, %v7100
        %v7102 = vpop.f32.mrb[0].mxu0
        %7103 = vmatprep.mubr.bf16.mxu0 0
        %7104 = vmatmul.mubr.bf16.gmra.mrb[0].mxu0 %v7058
        %v7105 = vpop.f32.mrb[0].mxu0
        %v7106 = vadd.f32 %v7022, %v7105
        %v7107 = vpop.f32.mrb[0].mxu0
        %v7108 = vpop.f32.mrb[0].mxu0
        %v7109 = vadd.f32 %v7027, %v7108
        %v7110 = vpop.f32.mrb[0].mxu0
        %7111 = vmatprep.mubr.bf16.mxu0 0
        %7112 = vmatmul.mubr.bf16.gmra.mrb[0].mxu0 %v7061
        %v7113 = vpop.f32.mrb[0].mxu0
        %v7114 = vadd.f32 %v7032, %v7113
        %v7115 = vpop.f32.mrb[0].mxu0
        %v7116 = vpop.f32.mrb[0].mxu0
        %v7117 = vadd.f32 %v7037, %v7116
        %v7118 = vpop.f32.mrb[0].mxu0
        %7119 = vdwg.mxu0
        %v7120 = vmul.f32 %v7106, %v454
        %v7121 = vmul.f32 %v7109, %v454
        %v7122 = vmul.f32 %v7114, %v454
        %v7123 = vmul.f32 %v7117, %v454
        %v7124 = vpack.c.bf16 %v7098, %v7098
        %v7125 = vpack.c.bf16 %v7101, %v7101
        %7126 = vxpose.xlu0.c.b16.start [1/8] %v7124, 128
        %7127 = vxpose.xlu0.c.b16.cont [2/8] 0, 128
        %7128 = vxpose.xlu0.c.b16.cont [3/8] 0, 128
        %7129 = vxpose.xlu0.c.b16.cont [4/8] 0, 128
        %7130 = vxpose.xlu0.c.b16.cont [5/8] 0, 128
        %7131 = vxpose.xlu0.c.b16.cont [6/8] 0, 128
        %7132 = vxpose.xlu0.c.b16.cont [7/8] 0, 128
        %7133 = vxpose.xlu0.c.b16.end [8/8] 0, 128
        %v7134 = vpop.trf.xlu0
        %v7135 = vpop.trf.xlu0
        %v7136 = vpop.trf.xlu0
        %v7137 = vpop.trf.xlu0
        %v7138 = vpop.trf.xlu0
        %v7139 = vpop.trf.xlu0
        %v7140 = vpop.trf.xlu0
        %v7141 = vpop.trf.xlu0
        %v7143 = vsel %vm1130, %v7134, 0
        %v7146 = vsel %vm1130, %v7135, 0
        %v7149 = vsel %vm1130, %v7136, 0
        %v7152 = vsel %vm1130, %v7137, 0
        %v7155 = vsel %vm1130, %v7138, 0
        %v7158 = vsel %vm1130, %v7139, 0
        %v7161 = vsel %vm1130, %v7140, 0
        %v7164 = vsel %vm1130, %v7141, 0
        %v7167 = vsel %vm1155, %v7125, 0
        %7169 = vmatprep.subr.bf16.mxu0 0
        %7170 = vmatpush1.bf16.msra.mxu0 %v7167
        %7171 = vmatprep.subr.bf16.mxu0 0
        %7172 = vmatpush1.bf16.msra.mxu0 0
        %7173 = vmatprep.subr.bf16.mxu0 0
        %7174 = vmatpush1.bf16.msra.mxu0 0
        %7175 = vmatprep.subr.bf16.mxu0 0
        %7176 = vmatpush1.bf16.msra.mxu0 0
        %7177 = vmatprep.subr.bf16.mxu0 0
        %7178 = vmatpush1.bf16.msra.mxu0 0
        %7179 = vmatprep.subr.bf16.mxu0 0
        %7180 = vmatpush1.bf16.msra.mxu0 0
        %7181 = vmatprep.subr.bf16.mxu0 0
        %7182 = vmatpush1.bf16.msra.mxu0 0
        %7183 = vmatprep.subr.bf16.mxu0 0
        %7184 = vmatpush1.bf16.msra.mxu0 0
        %7185 = vmatprep.subr.bf16.mxu0 0
        %7186 = vmatpush1.bf16.msra.mxu0 0
        %7187 = vmatprep.subr.bf16.mxu0 0
        %7188 = vmatpush1.bf16.msra.mxu0 0
        %7189 = vmatprep.subr.bf16.mxu0 0
        %7190 = vmatpush1.bf16.msra.mxu0 0
        %7191 = vmatprep.subr.bf16.mxu0 0
        %7192 = vmatpush1.bf16.msra.mxu0 0
        %7193 = vmatprep.subr.bf16.mxu0 0
        %7194 = vmatpush1.bf16.msra.mxu0 0
        %7195 = vmatprep.subr.bf16.mxu0 0
        %7196 = vmatpush1.bf16.msra.mxu0 0
        %7197 = vmatprep.subr.bf16.mxu0 0
        %7198 = vmatpush1.bf16.msra.mxu0 0
        %7199 = vmatprep.subr.bf16.mxu0 0
        %7200 = vmatpush1.bf16.msra.mxu0 0
        %7201 = vmatprep.mubr.bf16.mxu0 0
        %7202 = vmatmul.mubr.bf16.gmra.mrb[0].mxu0 %v7143
        %v7203 = vpop.f32.mrb[0].mxu0
        %v7204 = vadd.f32 %v455, %v7203
        %v7205 = vpop.f32.mrb[0].mxu0
        %v7206 = vpop.f32.mrb[0].mxu0
        %v7207 = vadd.f32 %v455, %v7206
        %v7208 = vpop.f32.mrb[0].mxu0
        %7209 = vmatprep.mubr.bf16.mxu0 0
        %7210 = vmatmul.mubr.bf16.gmra.mrb[0].mxu0 %v7146
        %v7211 = vpop.f32.mrb[0].mxu0
        %v7212 = vadd.f32 %v455, %v7211
        %v7213 = vpop.f32.mrb[0].mxu0
        %v7214 = vpop.f32.mrb[0].mxu0
        %v7215 = vadd.f32 %v455, %v7214
        %v7216 = vpop.f32.mrb[0].mxu0
        %7217 = vmatprep.mubr.bf16.mxu0 0
        %7218 = vmatmul.mubr.bf16.gmra.mrb[0].mxu0 %v7149
        %v7219 = vpop.f32.mrb[0].mxu0
        %v7220 = vadd.f32 %v455, %v7219
        %v7221 = vpop.f32.mrb[0].mxu0
        %v7222 = vpop.f32.mrb[0].mxu0
        %v7223 = vadd.f32 %v455, %v7222
        %v7224 = vpop.f32.mrb[0].mxu0
        %7225 = vmatprep.mubr.bf16.mxu0 0
        %7226 = vmatmul.mubr.bf16.gmra.mrb[0].mxu0 %v7152
        %v7227 = vpop.f32.mrb[0].mxu0
        %v7228 = vadd.f32 %v455, %v7227
        %v7229 = vpop.f32.mrb[0].mxu0
        %v7230 = vpop.f32.mrb[0].mxu0
        %v7231 = vadd.f32 %v455, %v7230
        %v7232 = vpop.f32.mrb[0].mxu0
        %7233 = vmatprep.mubr.bf16.mxu0 0
        %7234 = vmatmul.mubr.bf16.gmra.mrb[0].mxu0 %v7155
        %v7235 = vpop.f32.mrb[0].mxu0
        %v7236 = vadd.f32 %v455, %v7235
        %v7237 = vpop.f32.mrb[0].mxu0
        %v7238 = vpop.f32.mrb[0].mxu0
        %v7239 = vadd.f32 %v455, %v7238
        %v7240 = vpop.f32.mrb[0].mxu0
        %7241 = vmatprep.mubr.bf16.mxu0 0
        %7242 = vmatmul.mubr.bf16.gmra.mrb[0].mxu0 %v7158
        %v7243 = vpop.f32.mrb[0].mxu0
        %v7244 = vadd.f32 %v455, %v7243
        %v7245 = vpop.f32.mrb[0].mxu0
        %v7246 = vpop.f32.mrb[0].mxu0
        %v7247 = vadd.f32 %v455, %v7246
        %v7248 = vpop.f32.mrb[0].mxu0
        %7249 = vmatprep.mubr.bf16.mxu0 0
        %7250 = vmatmul.mubr.bf16.gmra.mrb[0].mxu0 %v7161
        %v7251 = vpop.f32.mrb[0].mxu0
        %v7252 = vadd.f32 %v455, %v7251
        %v7253 = vpop.f32.mrb[0].mxu0
        %v7254 = vpop.f32.mrb[0].mxu0
        %v7255 = vadd.f32 %v455, %v7254
        %v7256 = vpop.f32.mrb[0].mxu0
        %7257 = vmatprep.mubr.bf16.mxu0 0
        %7258 = vmatmul.mubr.bf16.gmra.mrb[0].mxu0 %v7164
        %v7259 = vpop.f32.mrb[0].mxu0
        %v7260 = vadd.f32 %v455, %v7259
        %v7261 = vpop.f32.mrb[0].mxu0
        %v7262 = vpop.f32.mrb[0].mxu0
        %v7263 = vadd.f32 %v455, %v7262
        %v7264 = vpop.f32.mrb[0].mxu0
        %7265 = vdwg.mxu0
        %7266 = vmax.xlane.f32.xlu0 %v7204
        %v7267 = vpop.xlane.xlu0 %7266
        %7268 = vmax.xlane.f32.xlu0 %v7207
        %v7269 = vpop.xlane.xlu0 %7268
        %7270 = vmax.xlane.f32.xlu0 %v7212
        %v7271 = vpop.xlane.xlu0 %7270
        %7272 = vmax.xlane.f32.xlu0 %v7215
        %v7273 = vpop.xlane.xlu0 %7272
        %7274 = vmax.xlane.f32.xlu0 %v7220
        %v7275 = vpop.xlane.xlu0 %7274
        %7276 = vmax.xlane.f32.xlu0 %v7223
        %v7277 = vpop.xlane.xlu0 %7276
        %7278 = vmax.xlane.f32.xlu0 %v7228
        %v7279 = vpop.xlane.xlu0 %7278
        %7280 = vmax.xlane.f32.xlu0 %v7231
        %v7281 = vpop.xlane.xlu0 %7280
        %7282 = vmax.xlane.f32.xlu0 %v7236
        %v7283 = vpop.xlane.xlu0 %7282
        %7284 = vmax.xlane.f32.xlu0 %v7239
        %v7285 = vpop.xlane.xlu0 %7284
        %7286 = vmax.xlane.f32.xlu0 %v7244
        %v7287 = vpop.xlane.xlu0 %7286
        %7288 = vmax.xlane.f32.xlu0 %v7247
        %v7289 = vpop.xlane.xlu0 %7288
        %7290 = vmax.xlane.f32.xlu0 %v7252
        %v7291 = vpop.xlane.xlu0 %7290
        %7292 = vmax.xlane.f32.xlu0 %v7255
        %v7293 = vpop.xlane.xlu0 %7292
        %7294 = vmax.xlane.f32.xlu0 %v7260
        %v7295 = vpop.xlane.xlu0 %7294
        %7296 = vmax.xlane.f32.xlu0 %v7263
        %v7297 = vpop.xlane.xlu0 %7296
        %v7298 = vsub.f32 %v7204, %v7267
        %v7299 = vsub.f32 %v7207, %v7269
        %v7300 = vsub.f32 %v7212, %v7271
        %v7301 = vsub.f32 %v7215, %v7273
        %v7302 = vsub.f32 %v7220, %v7275
        %v7303 = vsub.f32 %v7223, %v7277
        %v7304 = vsub.f32 %v7228, %v7279
        %v7305 = vsub.f32 %v7231, %v7281
        %v7306 = vsub.f32 %v7236, %v7283
        %v7307 = vsub.f32 %v7239, %v7285
        %v7308 = vsub.f32 %v7244, %v7287
        %v7309 = vsub.f32 %v7247, %v7289
        %v7310 = vsub.f32 %v7252, %v7291
        %v7311 = vsub.f32 %v7255, %v7293
        %v7312 = vsub.f32 %v7260, %v7295
        %v7313 = vsub.f32 %v7263, %v7297
        %v7314 = vmul.f32 %v7298, 1.442695
        %v7315 = vpow.pop %v7314
        %v7316 = vmul.f32 %v7299, 1.442695
        %v7317 = vpow.pop %v7316
        %v7318 = vmul.f32 %v7300, 1.442695
        %v7319 = vpow.pop %v7318
        %v7320 = vmul.f32 %v7301, 1.442695
        %v7321 = vpow.pop %v7320
        %v7322 = vmul.f32 %v7302, 1.442695
        %v7323 = vpow.pop %v7322
        %v7324 = vmul.f32 %v7303, 1.442695
        %v7325 = vpow.pop %v7324
        %v7326 = vmul.f32 %v7304, 1.442695
        %v7327 = vpow.pop %v7326
        %v7328 = vmul.f32 %v7305, 1.442695
        %v7329 = vpow.pop %v7328
        %v7330 = vmul.f32 %v7306, 1.442695
        %v7331 = vpow.pop %v7330
        %v7332 = vmul.f32 %v7307, 1.442695
        %v7333 = vpow.pop %v7332
        %v7334 = vmul.f32 %v7308, 1.442695
        %v7335 = vpow.pop %v7334
        %v7336 = vmul.f32 %v7309, 1.442695
        %v7337 = vpow.pop %v7336
        %v7338 = vmul.f32 %v7310, 1.442695
        %v7339 = vpow.pop %v7338
        %v7340 = vmul.f32 %v7311, 1.442695
        %v7341 = vpow.pop %v7340
        %v7342 = vmul.f32 %v7312, 1.442695
        %v7343 = vpow.pop %v7342
        %v7344 = vmul.f32 %v7313, 1.442695
        %v7345 = vpow.pop %v7344
        %7346 = vadd.xlane.f32.xlu0 %v7315
        %v7347 = vpop.xlane.xlu0 %7346
        %7348 = vadd.xlane.f32.xlu0 %v7317
        %v7349 = vpop.xlane.xlu0 %7348
        %7350 = vadd.xlane.f32.xlu0 %v7319
        %v7351 = vpop.xlane.xlu0 %7350
        %7352 = vadd.xlane.f32.xlu0 %v7321
        %v7353 = vpop.xlane.xlu0 %7352
        %7354 = vadd.xlane.f32.xlu0 %v7323
        %v7355 = vpop.xlane.xlu0 %7354
        %7356 = vadd.xlane.f32.xlu0 %v7325
        %v7357 = vpop.xlane.xlu0 %7356
        %7358 = vadd.xlane.f32.xlu0 %v7327
        %v7359 = vpop.xlane.xlu0 %7358
        %7360 = vadd.xlane.f32.xlu0 %v7329
        %v7361 = vpop.xlane.xlu0 %7360
        %7362 = vadd.xlane.f32.xlu0 %v7331
        %v7363 = vpop.xlane.xlu0 %7362
        %7364 = vadd.xlane.f32.xlu0 %v7333
        %v7365 = vpop.xlane.xlu0 %7364
        %7366 = vadd.xlane.f32.xlu0 %v7335
        %v7367 = vpop.xlane.xlu0 %7366
        %7368 = vadd.xlane.f32.xlu0 %v7337
        %v7369 = vpop.xlane.xlu0 %7368
        %7370 = vadd.xlane.f32.xlu0 %v7339
        %v7371 = vpop.xlane.xlu0 %7370
        %7372 = vadd.xlane.f32.xlu0 %v7341
        %v7373 = vpop.xlane.xlu0 %7372
        %7374 = vadd.xlane.f32.xlu0 %v7343
        %v7375 = vpop.xlane.xlu0 %7374
        %7376 = vadd.xlane.f32.xlu0 %v7345
        %v7377 = vpop.xlane.xlu0 %7376
        %v7378 = vrcp.pop %v7347
        %v7379 = vrcp.pop %v7349
        %v7380 = vrcp.pop %v7351
        %v7381 = vrcp.pop %v7353
        %v7382 = vrcp.pop %v7355
        %v7383 = vrcp.pop %v7357
        %v7384 = vrcp.pop %v7359
        %v7385 = vrcp.pop %v7361
        %v7386 = vrcp.pop %v7363
        %v7387 = vrcp.pop %v7365
        %v7388 = vrcp.pop %v7367
        %v7389 = vrcp.pop %v7369
        %v7390 = vrcp.pop %v7371
        %v7391 = vrcp.pop %v7373
        %v7392 = vrcp.pop %v7375
        %v7393 = vrcp.pop %v7377
        %v7394 = vmul.f32 %v7315, %v7378
        %v7395 = vmul.f32 %v7317, %v7379
        %v7396 = vmul.f32 %v7319, %v7380
        %v7397 = vmul.f32 %v7321, %v7381
        %v7398 = vmul.f32 %v7323, %v7382
        %v7399 = vmul.f32 %v7325, %v7383
        %v7400 = vmul.f32 %v7327, %v7384
        %v7401 = vmul.f32 %v7329, %v7385
        %v7402 = vmul.f32 %v7331, %v7386
        %v7403 = vmul.f32 %v7333, %v7387
        %v7404 = vmul.f32 %v7335, %v7388
        %v7405 = vmul.f32 %v7337, %v7389
        %v7406 = vmul.f32 %v7339, %v7390
        %v7407 = vmul.f32 %v7341, %v7391
        %v7408 = vmul.f32 %v7343, %v7392
        %v7409 = vmul.f32 %v7345, %v7393
        %v7410 = vpack.c.bf16 %v7121, %v7120
        %v7411 = vpack.c.bf16 %v7123, %v7122
        %v7412 = vpack.c.bf16 %v7395, %v7394
        %v7413 = vpack.c.bf16 %v7397, %v7396
        %v7414 = vpack.c.bf16 %v7399, %v7398
        %v7415 = vpack.c.bf16 %v7401, %v7400
        %v7416 = vpack.c.bf16 %v7403, %v7402
        %v7417 = vpack.c.bf16 %v7405, %v7404
        %v7418 = vpack.c.bf16 %v7407, %v7406
        %v7419 = vpack.c.bf16 %v7409, %v7408
        %7420 = vmatprep.subr.bf16.mxu0 0
        %7421 = vmatpush1.bf16.msra.mxu0 %v7412
        %7422 = vmatprep.subr.bf16.mxu0 0
        %7423 = vmatpush1.bf16.msra.mxu0 %v7413
        %7424 = vmatprep.subr.bf16.mxu0 0
        %7425 = vmatpush1.bf16.msra.mxu0 %v7414
        %7426 = vmatprep.subr.bf16.mxu0 0
        %7427 = vmatpush1.bf16.msra.mxu0 %v7415
        %7428 = vmatprep.subr.bf16.mxu0 0
        %7429 = vmatpush1.bf16.msra.mxu0 %v7416
        %7430 = vmatprep.subr.bf16.mxu0 0
        %7431 = vmatpush1.bf16.msra.mxu0 %v7417
        %7432 = vmatprep.subr.bf16.mxu0 0
        %7433 = vmatpush1.bf16.msra.mxu0 %v7418
        %7434 = vmatprep.subr.bf16.mxu0 0
        %7435 = vmatpush1.bf16.msra.mxu0 %v7419
        %7436 = vmatprep.subr.bf16.mxu0 0
        %7437 = vmatpush1.bf16.msra.mxu0 0
        %7438 = vmatprep.subr.bf16.mxu0 0
        %7439 = vmatpush1.bf16.msra.mxu0 0
        %7440 = vmatprep.subr.bf16.mxu0 0
        %7441 = vmatpush1.bf16.msra.mxu0 0
        %7442 = vmatprep.subr.bf16.mxu0 0
        %7443 = vmatpush1.bf16.msra.mxu0 0
        %7444 = vmatprep.subr.bf16.mxu0 0
        %7445 = vmatpush1.bf16.msra.mxu0 0
        %7446 = vmatprep.subr.bf16.mxu0 0
        %7447 = vmatpush1.bf16.msra.mxu0 0
        %7448 = vmatprep.subr.bf16.mxu0 0
        %7449 = vmatpush1.bf16.msra.mxu0 0
        %7450 = vmatprep.subr.bf16.mxu0 0
        %7451 = vmatpush1.bf16.msra.mxu0 0
        %7452 = vmatprep.mubr.bf16.mxu0 0
        %7453 = vmatmul.mubr.bf16.gmra.mrb[0].mxu0 %v7410
        %v7454 = vpop.f32.mrb[0].mxu0
        %v7455 = vadd.f32 %v6989, %v7454
        %v7456 = vpop.f32.mrb[0].mxu0
        %v7457 = vpop.f32.mrb[0].mxu0
        %v7458 = vadd.f32 %v6990, %v7457
        %v7459 = vpop.f32.mrb[0].mxu0
        %7460 = vmatprep.mubr.bf16.mxu0 0
        %7461 = vmatmul.mubr.bf16.gmra.mrb[0].mxu0 %v7411
        %v7462 = vpop.f32.mrb[0].mxu0
        %v7463 = vadd.f32 %v6991, %v7462
        %v7464 = vpop.f32.mrb[0].mxu0
        %v7465 = vpop.f32.mrb[0].mxu0
        %v7466 = vadd.f32 %v6992, %v7465
        %v7467 = vpop.f32.mrb[0].mxu0
        %7468 = vdwg.mxu0
        %v7469 = vmul.f32 %v7455, %v454
        %v7470 = vmul.f32 %v7458, %v454
        %v7471 = vmul.f32 %v7463, %v454
        %v7472 = vmul.f32 %v7466, %v454
        %v7473 = vpack.c.bf16 %v7470, %v7469
        %v7474 = vpack.c.bf16 %v7472, %v7471
        %7475 = vst [vmem:[#allocation3 + $0x8] sm:$0xff] %v7473
        %7476 = vst [vmem:[#allocation3 + $0x20] sm:$0xff] %v7474
        %s7477 = scalar_lea.vmem [#allocation10], 576
        %v7478 = vld [vmem:[%s7477] sm:$0xf]
        %v7479 = vld [vmem:[%s7477 + $0x4] sm:$0xf]
        %v7480 = vld [vmem:[%s7477 + $0x8] sm:$0xf]
        %v7481 = vld [vmem:[%s7477 + $0xc] sm:$0xf]
        %v7482 = vld [vmem:[%s7477 + $0x10] sm:$0xf]
        %v7483 = vld [vmem:[%s7477 + $0x14] sm:$0xf]
        %v7484 = vld [vmem:[%s7477 + $0x18] sm:$0xf]
        %v7485 = vld [vmem:[%s7477 + $0x1c] sm:$0xf]
        %s7486 = scalar_lea.vmem [#allocation10], 608
        %v7487 = vld [vmem:[%s7486] sm:$0xf]
        %v7488 = vld [vmem:[%s7486 + $0x4] sm:$0xf]
        %v7489 = vld [vmem:[%s7486 + $0x8] sm:$0xf]
        %v7490 = vld [vmem:[%s7486 + $0xc] sm:$0xf]
        %v7491 = vld [vmem:[%s7486 + $0x10] sm:$0xf]
        %v7492 = vld [vmem:[%s7486 + $0x14] sm:$0xf]
        %v7493 = vld [vmem:[%s7486 + $0x18] sm:$0xf]
        %v7494 = vld [vmem:[%s7486 + $0x1c] sm:$0xf]
        %s7495 = scalar_lea.vmem [#allocation10], 640
        %v7496 = vld [vmem:[%s7495] sm:$0xf]
        %v7497 = vld [vmem:[%s7495 + $0x4] sm:$0xf]
        %v7498 = vld [vmem:[%s7495 + $0x8] sm:$0xf]
        %v7499 = vld [vmem:[%s7495 + $0xc] sm:$0xf]
        %v7500 = vld [vmem:[%s7495 + $0x10] sm:$0xf]
        %v7501 = vld [vmem:[%s7495 + $0x14] sm:$0xf]
        %v7502 = vld [vmem:[%s7495 + $0x18] sm:$0xf]
        %v7503 = vld [vmem:[%s7495 + $0x1c] sm:$0xf]
        %v7504 = vld [vmem:[#allocation3] sm:$0xff]
        %v7505 = vld [vmem:[#allocation3 + $0x18] sm:$0xff]
        %v7506 = vld [vmem:[#allocation3 + $0x8] sm:$0xff]
        %v7507 = vld [vmem:[#allocation3 + $0x20] sm:$0xff]
        %v7508 = vld [vmem:[#allocation3 + $0x10] sm:$0xff]
        %v7509 = vld [vmem:[#allocation3 + $0x28] sm:$0xff]
        %v7518 = vunpack.c.l.b16 %v7487
        %v7519 = vunpack.c.l.b16 %v7488
        %v7520 = vunpack.c.l.b16 %v7489
        %v7521 = vunpack.c.l.b16 %v7490
        %v7522 = vunpack.c.l.b16 %v7491
        %v7523 = vunpack.c.l.b16 %v7492
        %v7524 = vunpack.c.l.b16 %v7493
        %v7525 = vunpack.c.l.b16 %v7494
        %v7526 = vpack.c.b16 %v7519, %v7518
        %v7527 = vpack.c.b16 %v7521, %v7520
        %v7528 = vpack.c.b16 %v7523, %v7522
        %v7529 = vpack.c.b16 %v7525, %v7524
        %v7531 = vsel %vm1041, %v7526, 0
        %v7534 = vsel %vm1041, %v7527, 0
        %v7537 = vsel %vm1041, %v7528, 0
        %v7540 = vsel %vm1041, %v7529, 0
        %7542 = vmatprep.subr.bf16.mxu0 0
        %7543 = vmatpush1.bf16.msra.mxu0 %v7506
        %7544 = vmatprep.subr.bf16.mxu0 0
        %7545 = vmatpush1.bf16.msra.mxu0 %v7507
        %7546 = vmatprep.subr.bf16.mxu0 0
        %7547 = vmatpush1.bf16.msra.mxu0 0
        %7548 = vmatprep.subr.bf16.mxu0 0
        %7549 = vmatpush1.bf16.msra.mxu0 0
        %7550 = vmatprep.subr.bf16.mxu0 0
        %7551 = vmatpush1.bf16.msra.mxu0 0
        %7552 = vmatprep.subr.bf16.mxu0 0
        %7553 = vmatpush1.bf16.msra.mxu0 0
        %7554 = vmatprep.subr.bf16.mxu0 0
        %7555 = vmatpush1.bf16.msra.mxu0 0
        %7556 = vmatprep.subr.bf16.mxu0 0
        %7557 = vmatpush1.bf16.msra.mxu0 0
        %7558 = vmatprep.subr.bf16.mxu0 0
        %7559 = vmatpush1.bf16.msra.mxu0 0
        %7560 = vmatprep.subr.bf16.mxu0 0
        %7561 = vmatpush1.bf16.msra.mxu0 0
        %7562 = vmatprep.subr.bf16.mxu0 0
        %7563 = vmatpush1.bf16.msra.mxu0 0
        %7564 = vmatprep.subr.bf16.mxu0 0
        %7565 = vmatpush1.bf16.msra.mxu0 0
        %7566 = vmatprep.subr.bf16.mxu0 0
        %7567 = vmatpush1.bf16.msra.mxu0 0
        %7568 = vmatprep.subr.bf16.mxu0 0
        %7569 = vmatpush1.bf16.msra.mxu0 0
        %7570 = vmatprep.subr.bf16.mxu0 0
        %7571 = vmatpush1.bf16.msra.mxu0 0
        %7572 = vmatprep.subr.bf16.mxu0 0
        %7573 = vmatpush1.bf16.msra.mxu0 0
        %7574 = vmatprep.mubr.bf16.mxu0 0
        %7575 = vmatmul.mubr.bf16.gmra.mrb[0].mxu0 %v7531
        %v7576 = vpop.f32.mrb[0].mxu0
        %v7577 = vadd.f32 0.0, %v7576
        %v7578 = vpop.f32.mrb[0].mxu0
        %v7579 = vpop.f32.mrb[0].mxu0
        %v7580 = vadd.f32 0.0, %v7579
        %v7581 = vpop.f32.mrb[0].mxu0
        %7582 = vmatprep.mubr.bf16.mxu0 0
        %7583 = vmatmul.mubr.bf16.gmra.mrb[0].mxu0 %v7534
        %v7584 = vpop.f32.mrb[0].mxu0
        %v7585 = vadd.f32 0.0, %v7584
        %v7586 = vpop.f32.mrb[0].mxu0
        %v7587 = vpop.f32.mrb[0].mxu0
        %v7588 = vadd.f32 0.0, %v7587
        %v7589 = vpop.f32.mrb[0].mxu0
        %7590 = vmatprep.mubr.bf16.mxu0 0
        %7591 = vmatmul.mubr.bf16.gmra.mrb[0].mxu0 %v7537
        %v7592 = vpop.f32.mrb[0].mxu0
        %v7593 = vadd.f32 0.0, %v7592
        %v7594 = vpop.f32.mrb[0].mxu0
        %v7595 = vpop.f32.mrb[0].mxu0
        %v7596 = vadd.f32 0.0, %v7595
        %v7597 = vpop.f32.mrb[0].mxu0
        %7598 = vmatprep.mubr.bf16.mxu0 0
        %7599 = vmatmul.mubr.bf16.gmra.mrb[0].mxu0 %v7540
        %v7600 = vpop.f32.mrb[0].mxu0
        %v7601 = vadd.f32 0.0, %v7600
        %v7602 = vpop.f32.mrb[0].mxu0
        %v7603 = vpop.f32.mrb[0].mxu0
        %v7604 = vadd.f32 0.0, %v7603
        %v7605 = vpop.f32.mrb[0].mxu0
        %7606 = vdwg.mxu0
        %v7615 = vunpack.c.l.b16 %v7478
        %v7616 = vunpack.c.l.b16 %v7479
        %v7617 = vunpack.c.l.b16 %v7480
        %v7618 = vunpack.c.l.b16 %v7481
        %v7619 = vunpack.c.l.b16 %v7482
        %v7620 = vunpack.c.l.b16 %v7483
        %v7621 = vunpack.c.l.b16 %v7484
        %v7622 = vunpack.c.l.b16 %v7485
        %v7623 = vpack.c.b16 %v7616, %v7615
        %v7624 = vpack.c.b16 %v7618, %v7617
        %v7625 = vpack.c.b16 %v7620, %v7619
        %v7626 = vpack.c.b16 %v7622, %v7621
        %v7628 = vsel %vm1041, %v7623, 0
        %v7631 = vsel %vm1041, %v7624, 0
        %v7634 = vsel %vm1041, %v7625, 0
        %v7637 = vsel %vm1041, %v7626, 0
        %7639 = vmatprep.subr.bf16.mxu0 0
        %7640 = vmatpush1.bf16.msra.mxu0 %v7504
        %7641 = vmatprep.subr.bf16.mxu0 0
        %7642 = vmatpush1.bf16.msra.mxu0 %v7505
        %7643 = vmatprep.subr.bf16.mxu0 0
        %7644 = vmatpush1.bf16.msra.mxu0 0
        %7645 = vmatprep.subr.bf16.mxu0 0
        %7646 = vmatpush1.bf16.msra.mxu0 0
        %7647 = vmatprep.subr.bf16.mxu0 0
        %7648 = vmatpush1.bf16.msra.mxu0 0
        %7649 = vmatprep.subr.bf16.mxu0 0
        %7650 = vmatpush1.bf16.msra.mxu0 0
        %7651 = vmatprep.subr.bf16.mxu0 0
        %7652 = vmatpush1.bf16.msra.mxu0 0
        %7653 = vmatprep.subr.bf16.mxu0 0
        %7654 = vmatpush1.bf16.msra.mxu0 0
        %7655 = vmatprep.subr.bf16.mxu0 0
        %7656 = vmatpush1.bf16.msra.mxu0 0
        %7657 = vmatprep.subr.bf16.mxu0 0
        %7658 = vmatpush1.bf16.msra.mxu0 0
        %7659 = vmatprep.subr.bf16.mxu0 0
        %7660 = vmatpush1.bf16.msra.mxu0 0
        %7661 = vmatprep.subr.bf16.mxu0 0
        %7662 = vmatpush1.bf16.msra.mxu0 0
        %7663 = vmatprep.subr.bf16.mxu0 0
        %7664 = vmatpush1.bf16.msra.mxu0 0
        %7665 = vmatprep.subr.bf16.mxu0 0
        %7666 = vmatpush1.bf16.msra.mxu0 0
        %7667 = vmatprep.subr.bf16.mxu0 0
        %7668 = vmatpush1.bf16.msra.mxu0 0
        %7669 = vmatprep.subr.bf16.mxu0 0
        %7670 = vmatpush1.bf16.msra.mxu0 0
        %7671 = vmatprep.mubr.bf16.mxu0 0
        %7672 = vmatmul.mubr.bf16.gmra.mrb[0].mxu0 %v7628
        %v7673 = vpop.f32.mrb[0].mxu0
        %v7674 = vadd.f32 %v7577, %v7673
        %v7675 = vpop.f32.mrb[0].mxu0
        %v7676 = vpop.f32.mrb[0].mxu0
        %v7677 = vadd.f32 %v7580, %v7676
        %v7678 = vpop.f32.mrb[0].mxu0
        %7679 = vmatprep.mubr.bf16.mxu0 0
        %7680 = vmatmul.mubr.bf16.gmra.mrb[0].mxu0 %v7631
        %v7681 = vpop.f32.mrb[0].mxu0
        %v7682 = vadd.f32 %v7585, %v7681
        %v7683 = vpop.f32.mrb[0].mxu0
        %v7684 = vpop.f32.mrb[0].mxu0
        %v7685 = vadd.f32 %v7588, %v7684
        %v7686 = vpop.f32.mrb[0].mxu0
        %7687 = vmatprep.mubr.bf16.mxu0 0
        %7688 = vmatmul.mubr.bf16.gmra.mrb[0].mxu0 %v7634
        %v7689 = vpop.f32.mrb[0].mxu0
        %v7690 = vadd.f32 %v7593, %v7689
        %v7691 = vpop.f32.mrb[0].mxu0
        %v7692 = vpop.f32.mrb[0].mxu0
        %v7693 = vadd.f32 %v7596, %v7692
        %v7694 = vpop.f32.mrb[0].mxu0
        %7695 = vmatprep.mubr.bf16.mxu0 0
        %7696 = vmatmul.mubr.bf16.gmra.mrb[0].mxu0 %v7637
        %v7697 = vpop.f32.mrb[0].mxu0
        %v7698 = vadd.f32 %v7601, %v7697
        %v7699 = vpop.f32.mrb[0].mxu0
        %v7700 = vpop.f32.mrb[0].mxu0
        %v7701 = vadd.f32 %v7604, %v7700
        %v7702 = vpop.f32.mrb[0].mxu0
        %7703 = vdwg.mxu0
        %v7712 = vunpack.c.l.b16 %v7496
        %v7713 = vunpack.c.l.b16 %v7497
        %v7714 = vunpack.c.l.b16 %v7498
        %v7715 = vunpack.c.l.b16 %v7499
        %v7716 = vunpack.c.l.b16 %v7500
        %v7717 = vunpack.c.l.b16 %v7501
        %v7718 = vunpack.c.l.b16 %v7502
        %v7719 = vunpack.c.l.b16 %v7503
        %v7720 = vpack.c.b16 %v7713, %v7712
        %v7721 = vpack.c.b16 %v7715, %v7714
        %v7722 = vpack.c.b16 %v7717, %v7716
        %v7723 = vpack.c.b16 %v7719, %v7718
        %v7725 = vsel %vm1041, %v7720, 0
        %v7728 = vsel %vm1041, %v7721, 0
        %v7731 = vsel %vm1041, %v7722, 0
        %v7734 = vsel %vm1041, %v7723, 0
        %7736 = vmatprep.subr.bf16.mxu0 0
        %7737 = vmatpush1.bf16.msra.mxu0 %v7508
        %7738 = vmatprep.subr.bf16.mxu0 0
        %7739 = vmatpush1.bf16.msra.mxu0 %v7509
        %7740 = vmatprep.subr.bf16.mxu0 0
        %7741 = vmatpush1.bf16.msra.mxu0 0
        %7742 = vmatprep.subr.bf16.mxu0 0
        %7743 = vmatpush1.bf16.msra.mxu0 0
        %7744 = vmatprep.subr.bf16.mxu0 0
        %7745 = vmatpush1.bf16.msra.mxu0 0
        %7746 = vmatprep.subr.bf16.mxu0 0
        %7747 = vmatpush1.bf16.msra.mxu0 0
        %7748 = vmatprep.subr.bf16.mxu0 0
        %7749 = vmatpush1.bf16.msra.mxu0 0
        %7750 = vmatprep.subr.bf16.mxu0 0
        %7751 = vmatpush1.bf16.msra.mxu0 0
        %7752 = vmatprep.subr.bf16.mxu0 0
        %7753 = vmatpush1.bf16.msra.mxu0 0
        %7754 = vmatprep.subr.bf16.mxu0 0
        %7755 = vmatpush1.bf16.msra.mxu0 0
        %7756 = vmatprep.subr.bf16.mxu0 0
        %7757 = vmatpush1.bf16.msra.mxu0 0
        %7758 = vmatprep.subr.bf16.mxu0 0
        %7759 = vmatpush1.bf16.msra.mxu0 0
        %7760 = vmatprep.subr.bf16.mxu0 0
        %7761 = vmatpush1.bf16.msra.mxu0 0
        %7762 = vmatprep.subr.bf16.mxu0 0
        %7763 = vmatpush1.bf16.msra.mxu0 0
        %7764 = vmatprep.subr.bf16.mxu0 0
        %7765 = vmatpush1.bf16.msra.mxu0 0
        %7766 = vmatprep.subr.bf16.mxu0 0
        %7767 = vmatpush1.bf16.msra.mxu0 0
        %7768 = vmatprep.mubr.bf16.mxu0 0
        %7769 = vmatmul.mubr.bf16.gmra.mrb[0].mxu0 %v7725
        %v7770 = vpop.f32.mrb[0].mxu0
        %v7771 = vadd.f32 0.0, %v7770
        %v7772 = vpop.f32.mrb[0].mxu0
        %v7773 = vpop.f32.mrb[0].mxu0
        %v7774 = vadd.f32 0.0, %v7773
        %v7775 = vpop.f32.mrb[0].mxu0
        %7776 = vmatprep.mubr.bf16.mxu0 0
        %7777 = vmatmul.mubr.bf16.gmra.mrb[0].mxu0 %v7728
        %v7778 = vpop.f32.mrb[0].mxu0
        %v7779 = vadd.f32 0.0, %v7778
        %v7780 = vpop.f32.mrb[0].mxu0
        %v7781 = vpop.f32.mrb[0].mxu0
        %v7782 = vadd.f32 0.0, %v7781
        %v7783 = vpop.f32.mrb[0].mxu0
        %7784 = vmatprep.mubr.bf16.mxu0 0
        %7785 = vmatmul.mubr.bf16.gmra.mrb[0].mxu0 %v7731
        %v7786 = vpop.f32.mrb[0].mxu0
        %v7787 = vadd.f32 0.0, %v7786
        %v7788 = vpop.f32.mrb[0].mxu0
        %v7789 = vpop.f32.mrb[0].mxu0
        %v7790 = vadd.f32 0.0, %v7789
        %v7791 = vpop.f32.mrb[0].mxu0
        %7792 = vmatprep.mubr.bf16.mxu0 0
        %7793 = vmatmul.mubr.bf16.gmra.mrb[0].mxu0 %v7734
        %v7794 = vpop.f32.mrb[0].mxu0
        %v7795 = vadd.f32 0.0, %v7794
        %v7796 = vpop.f32.mrb[0].mxu0
        %v7797 = vpop.f32.mrb[0].mxu0
        %v7798 = vadd.f32 0.0, %v7797
        %v7799 = vpop.f32.mrb[0].mxu0
        %7800 = vdwg.mxu0
        %v7801 = vadd.f32 %v7674, %v7771
        %v7802 = vadd.f32 %v7677, %v7774
        %v7803 = vadd.f32 %v7682, %v7779
        %v7804 = vadd.f32 %v7685, %v7782
        %v7805 = vadd.f32 %v7690, %v7787
        %v7806 = vadd.f32 %v7693, %v7790
        %v7807 = vadd.f32 %v7698, %v7795
        %v7808 = vadd.f32 %v7701, %v7798
        %s7809 = scalar_lea.vmem [#allocation11], 448
        %v7810 = vld [vmem:[%s7809] sm:$0xff]
        %v7811 = vld [vmem:[%s7809 + $0x8] sm:$0xff]
        %v7812 = vld [vmem:[%s7809 + $0x10] sm:$0xff]
        %v7813 = vld [vmem:[%s7809 + $0x18] sm:$0xff]
        %v7814 = vld [vmem:[%s7809 + $0x20] sm:$0xff]
        %v7815 = vld [vmem:[%s7809 + $0x28] sm:$0xff]
        %v7816 = vld [vmem:[%s7809 + $0x30] sm:$0xff]
        %v7817 = vld [vmem:[%s7809 + $0x38] sm:$0xff]
        %7819 = vset.pattern.permute.xlu0 0
        %7820 = vperm.xlu0 %7819, %v7810
        %v7821 = vpop.permute.xlu0 %7820
        %7824 = vset.pattern.permute.xlu0 0
        %7825 = vperm.xlu0 %7824, %v7811
        %v7826 = vpop.permute.xlu0 %7825
        %7829 = vset.pattern.permute.xlu0 0
        %7830 = vperm.xlu0 %7829, %v7812
        %v7831 = vpop.permute.xlu0 %7830
        %7834 = vset.pattern.permute.xlu0 0
        %7835 = vperm.xlu0 %7834, %v7813
        %v7836 = vpop.permute.xlu0 %7835
        %7839 = vset.pattern.permute.xlu0 0
        %7840 = vperm.xlu0 %7839, %v7814
        %v7841 = vpop.permute.xlu0 %7840
        %7844 = vset.pattern.permute.xlu0 0
        %7845 = vperm.xlu0 %7844, %v7815
        %v7846 = vpop.permute.xlu0 %7845
        %7849 = vset.pattern.permute.xlu0 0
        %7850 = vperm.xlu0 %7849, %v7816
        %v7851 = vpop.permute.xlu0 %7850
        %7854 = vset.pattern.permute.xlu0 0
        %7855 = vperm.xlu0 %7854, %v7817
        %v7856 = vpop.permute.xlu0 %7855
        %v7858 = vmul.f32 %v7801, %v7821
        %v7859 = vmul.f32 %v7802, %v7826
        %v7860 = vmul.f32 %v7803, %v7831
        %v7861 = vmul.f32 %v7804, %v7836
        %v7862 = vmul.f32 %v7805, %v7841
        %v7863 = vmul.f32 %v7806, %v7846
        %v7864 = vmul.f32 %v7807, %v7851
        %v7865 = vmul.f32 %v7808, %v7856
        %s7866 = scalar_lea.vmem [#allocation13], 448
        %v7867 = vld [vmem:[%s7866] sm:$0xff]
        %v7868 = vld [vmem:[%s7866 + $0x8] sm:$0xff]
        %v7869 = vld [vmem:[%s7866 + $0x10] sm:$0xff]
        %v7870 = vld [vmem:[%s7866 + $0x18] sm:$0xff]
        %v7871 = vld [vmem:[%s7866 + $0x20] sm:$0xff]
        %v7872 = vld [vmem:[%s7866 + $0x28] sm:$0xff]
        %v7873 = vld [vmem:[%s7866 + $0x30] sm:$0xff]
        %v7874 = vld [vmem:[%s7866 + $0x38] sm:$0xff]
        %7876 = vset.pattern.permute.xlu0 0
        %7877 = vperm.xlu0 %7876, %v7867
        %v7878 = vpop.permute.xlu0 %7877
        %7881 = vset.pattern.permute.xlu0 0
        %7882 = vperm.xlu0 %7881, %v7868
        %v7883 = vpop.permute.xlu0 %7882
        %7886 = vset.pattern.permute.xlu0 0
        %7887 = vperm.xlu0 %7886, %v7869
        %v7888 = vpop.permute.xlu0 %7887
        %7891 = vset.pattern.permute.xlu0 0
        %7892 = vperm.xlu0 %7891, %v7870
        %v7893 = vpop.permute.xlu0 %7892
        %7896 = vset.pattern.permute.xlu0 0
        %7897 = vperm.xlu0 %7896, %v7871
        %v7898 = vpop.permute.xlu0 %7897
        %7901 = vset.pattern.permute.xlu0 0
        %7902 = vperm.xlu0 %7901, %v7872
        %v7903 = vpop.permute.xlu0 %7902
        %7906 = vset.pattern.permute.xlu0 0
        %7907 = vperm.xlu0 %7906, %v7873
        %v7908 = vpop.permute.xlu0 %7907
        %7911 = vset.pattern.permute.xlu0 0
        %7912 = vperm.xlu0 %7911, %v7874
        %v7913 = vpop.permute.xlu0 %7912
        %v7915 = vadd.f32 %v7858, %v7878
        %v7916 = vadd.f32 %v7859, %v7883
        %v7917 = vadd.f32 %v7860, %v7888
        %v7918 = vadd.f32 %v7861, %v7893
        %v7919 = vadd.f32 %v7862, %v7898
        %v7920 = vadd.f32 %v7863, %v7903
        %v7921 = vadd.f32 %v7864, %v7908
        %v7922 = vadd.f32 %v7865, %v7913
        %v7923 = vtanh.pop %v7915
        %v7924 = vtanh.pop %v7916
        %v7925 = vtanh.pop %v7917
        %v7926 = vtanh.pop %v7918
        %v7927 = vxor.u32 %v7919, 2147483648
        %v7928 = vxor.u32 %v7920, 2147483648
        %v7929 = vxor.u32 %v7921, 2147483648
        %v7930 = vxor.u32 %v7922, 2147483648
        %v7931 = vmul.f32 %v7927, 1.442695
        %v7932 = vpow.pop %v7931
        %v7933 = vmul.f32 %v7928, 1.442695
        %v7934 = vpow.pop %v7933
        %v7935 = vmul.f32 %v7929, 1.442695
        %v7936 = vpow.pop %v7935
        %v7937 = vmul.f32 %v7930, 1.442695
        %v7938 = vpow.pop %v7937
        %v7939 = vadd.f32 %v7932, 1.0
        %v7940 = vadd.f32 %v7934, 1.0
        %v7941 = vadd.f32 %v7936, 1.0
        %v7942 = vadd.f32 %v7938, 1.0
        %v7943 = vrcp.pop %v7939
        %v7944 = vmul.f32 1.0, %v7943
        %v7945 = vrcp.pop %v7940
        %v7946 = vmul.f32 1.0, %v7945
        %v7947 = vrcp.pop %v7941
        %v7948 = vmul.f32 1.0, %v7947
        %v7949 = vrcp.pop %v7942
        %v7950 = vmul.f32 1.0, %v7949
        %v7951 = vmul.f32 %v7923, %v7944
        %v7952 = vmul.f32 %v7924, %v7946
        %v7953 = vmul.f32 %v7925, %v7948
        %v7954 = vmul.f32 %v7926, %v7950
        %v7955 = vmul.f32 %v7951, %v454
        %v7956 = vmul.f32 %v7952, %v454
        %v7957 = vmul.f32 %v7953, %v454
        %v7958 = vmul.f32 %v7954, %v454
        %v7959 = vpack.c.bf16 %v7956, %v7955
        %v7960 = vpack.c.bf16 %v7958, %v7957
        %s7961 = scalar_lea.vmem [#allocation14], 168
        %v7962 = vld [vmem:[%s7961] sm:$0xf]
        %v7963 = vld [vmem:[%s7961 + $0x4] sm:$0xf]
        %v7964 = vld [vmem:[%s7961 + $0x8] sm:$0xf]
        %v7965 = vld [vmem:[%s7961 + $0xc] sm:$0xf]
        %v7966 = vld [vmem:[%s7961 + $0x10] sm:$0xf]
        %v7967 = vld [vmem:[%s7961 + $0x14] sm:$0xf]
        %s7968 = scalar_lea.vmem [#allocation16], 336
        %v7969 = vld [vmem:[%s7968] sm:$0xff]
        %v7970 = vld [vmem:[%s7968 + $0x8] sm:$0xff]
        %v7971 = vld [vmem:[%s7968 + $0x10] sm:$0xff]
        %v7972 = vld [vmem:[%s7968 + $0x18] sm:$0xff]
        %v7973 = vld [vmem:[%s7968 + $0x20] sm:$0xff]
        %v7974 = vld [vmem:[%s7968 + $0x28] sm:$0xff]
        %7976 = vset.pattern.permute.xlu0 0
        %7977 = vperm.xlu0 %7976, %v7969
        %v7978 = vpop.permute.xlu0 %7977
        %7981 = vset.pattern.permute.xlu0 0
        %7982 = vperm.xlu0 %7981, %v7970
        %v7983 = vpop.permute.xlu0 %7982
        %7986 = vset.pattern.permute.xlu0 0
        %7987 = vperm.xlu0 %7986, %v7971
        %v7988 = vpop.permute.xlu0 %7987
        %7991 = vset.pattern.permute.xlu0 0
        %7992 = vperm.xlu0 %7991, %v7972
        %v7993 = vpop.permute.xlu0 %7992
        %7996 = vset.pattern.permute.xlu0 0
        %7997 = vperm.xlu0 %7996, %v7973
        %v7998 = vpop.permute.xlu0 %7997
        %8001 = vset.pattern.permute.xlu0 0
        %8002 = vperm.xlu0 %8001, %v7974
        %v8003 = vpop.permute.xlu0 %8002
        %v8011 = vunpack.c.l.b16 %v7962
        %v8012 = vunpack.c.l.b16 %v7963
        %v8013 = vunpack.c.l.b16 %v7964
        %v8014 = vunpack.c.l.b16 %v7965
        %v8015 = vunpack.c.l.b16 %v7966
        %v8016 = vunpack.c.l.b16 %v7967
        %v8017 = vpack.c.b16 %v8012, %v8011
        %v8018 = vpack.c.b16 %v8014, %v8013
        %v8019 = vpack.c.b16 %v8016, %v8015
        %v8021 = vsel %vm1041, %v8017, 0
        %v8024 = vsel %vm1041, %v8018, 0
        %v8027 = vsel %vm1041, %v8019, 0
        %8029 = vmatprep.subr.bf16.mxu0 0
        %8030 = vmatpush1.bf16.msra.mxu0 %v7959
        %8031 = vmatprep.subr.bf16.mxu0 0
        %8032 = vmatpush1.bf16.msra.mxu0 %v7960
        %8033 = vmatprep.subr.bf16.mxu0 0
        %8034 = vmatpush1.bf16.msra.mxu0 0
        %8035 = vmatprep.subr.bf16.mxu0 0
        %8036 = vmatpush1.bf16.msra.mxu0 0
        %8037 = vmatprep.subr.bf16.mxu0 0
        %8038 = vmatpush1.bf16.msra.mxu0 0
        %8039 = vmatprep.subr.bf16.mxu0 0
        %8040 = vmatpush1.bf16.msra.mxu0 0
        %8041 = vmatprep.subr.bf16.mxu0 0
        %8042 = vmatpush1.bf16.msra.mxu0 0
        %8043 = vmatprep.subr.bf16.mxu0 0
        %8044 = vmatpush1.bf16.msra.mxu0 0
        %8045 = vmatprep.subr.bf16.mxu0 0
        %8046 = vmatpush1.bf16.msra.mxu0 0
        %8047 = vmatprep.subr.bf16.mxu0 0
        %8048 = vmatpush1.bf16.msra.mxu0 0
        %8049 = vmatprep.subr.bf16.mxu0 0
        %8050 = vmatpush1.bf16.msra.mxu0 0
        %8051 = vmatprep.subr.bf16.mxu0 0
        %8052 = vmatpush1.bf16.msra.mxu0 0
        %8053 = vmatprep.subr.bf16.mxu0 0
        %8054 = vmatpush1.bf16.msra.mxu0 0
        %8055 = vmatprep.subr.bf16.mxu0 0
        %8056 = vmatpush1.bf16.msra.mxu0 0
        %8057 = vmatprep.subr.bf16.mxu0 0
        %8058 = vmatpush1.bf16.msra.mxu0 0
        %8059 = vmatprep.subr.bf16.mxu0 0
        %8060 = vmatpush1.bf16.msra.mxu0 0
        %8061 = vmatprep.mubr.bf16.mxu0 0
        %8062 = vmatmul.mubr.bf16.gmra.mrb[0].mxu0 %v8021
        %v8063 = vpop.f32.mrb[0].mxu0
        %v8064 = vadd.f32 %v7978, %v8063
        %v8065 = vpop.f32.mrb[0].mxu0
        %v8066 = vpop.f32.mrb[0].mxu0
        %v8067 = vadd.f32 %v7983, %v8066
        %v8068 = vpop.f32.mrb[0].mxu0
        %8069 = vmatprep.mubr.bf16.mxu0 0
        %8070 = vmatmul.mubr.bf16.gmra.mrb[0].mxu0 %v8024
        %v8071 = vpop.f32.mrb[0].mxu0
        %v8072 = vadd.f32 %v7988, %v8071
        %v8073 = vpop.f32.mrb[0].mxu0
        %v8074 = vpop.f32.mrb[0].mxu0
        %v8075 = vadd.f32 %v7993, %v8074
        %v8076 = vpop.f32.mrb[0].mxu0
        %8077 = vmatprep.mubr.bf16.mxu0 0
        %8078 = vmatmul.mubr.bf16.gmra.mrb[0].mxu0 %v8027
        %v8079 = vpop.f32.mrb[0].mxu0
        %v8080 = vadd.f32 %v7998, %v8079
        %v8081 = vpop.f32.mrb[0].mxu0
        %v8082 = vpop.f32.mrb[0].mxu0
        %v8083 = vadd.f32 %v8003, %v8082
        %v8084 = vpop.f32.mrb[0].mxu0
        %8085 = vdwg.mxu0
        %v8086 = vmul.f32 %v8072, %v454
        %v8087 = vmul.f32 %v8075, %v454
        %v8088 = vmul.f32 %v8080, %v454
        %v8089 = vmul.f32 %v8083, %v454
        %v8090 = vpack.c.bf16 %v8064, %v8064
        %v8091 = vpack.c.bf16 %v8067, %v8067
        %8092 = vxpose.xlu0.c.b16.start [1/8] %v8090, 128
        %8093 = vxpose.xlu0.c.b16.cont [2/8] 0, 128
        %8094 = vxpose.xlu0.c.b16.cont [3/8] 0, 128
        %8095 = vxpose.xlu0.c.b16.cont [4/8] 0, 128
        %8096 = vxpose.xlu0.c.b16.cont [5/8] 0, 128
        %8097 = vxpose.xlu0.c.b16.cont [6/8] 0, 128
        %8098 = vxpose.xlu0.c.b16.cont [7/8] 0, 128
        %8099 = vxpose.xlu0.c.b16.end [8/8] 0, 128
        %v8100 = vpop.trf.xlu0
        %v8101 = vpop.trf.xlu0
        %v8102 = vpop.trf.xlu0
        %v8103 = vpop.trf.xlu0
        %v8104 = vpop.trf.xlu0
        %v8105 = vpop.trf.xlu0
        %v8106 = vpop.trf.xlu0
        %v8107 = vpop.trf.xlu0
        %v8109 = vsel %vm1130, %v8100, 0
        %v8112 = vsel %vm1130, %v8101, 0
        %v8115 = vsel %vm1130, %v8102, 0
        %v8118 = vsel %vm1130, %v8103, 0
        %v8121 = vsel %vm1130, %v8104, 0
        %v8124 = vsel %vm1130, %v8105, 0
        %v8127 = vsel %vm1130, %v8106, 0
        %v8130 = vsel %vm1130, %v8107, 0
        %v8133 = vsel %vm1155, %v8091, 0
        %8135 = vmatprep.subr.bf16.mxu0 0
        %8136 = vmatpush1.bf16.msra.mxu0 %v8133
        %8137 = vmatprep.subr.bf16.mxu0 0
        %8138 = vmatpush1.bf16.msra.mxu0 0
        %8139 = vmatprep.subr.bf16.mxu0 0
        %8140 = vmatpush1.bf16.msra.mxu0 0
        %8141 = vmatprep.subr.bf16.mxu0 0
        %8142 = vmatpush1.bf16.msra.mxu0 0
        %8143 = vmatprep.subr.bf16.mxu0 0
        %8144 = vmatpush1.bf16.msra.mxu0 0
        %8145 = vmatprep.subr.bf16.mxu0 0
        %8146 = vmatpush1.bf16.msra.mxu0 0
        %8147 = vmatprep.subr.bf16.mxu0 0
        %8148 = vmatpush1.bf16.msra.mxu0 0
        %8149 = vmatprep.subr.bf16.mxu0 0
        %8150 = vmatpush1.bf16.msra.mxu0 0
        %8151 = vmatprep.subr.bf16.mxu0 0
        %8152 = vmatpush1.bf16.msra.mxu0 0
        %8153 = vmatprep.subr.bf16.mxu0 0
        %8154 = vmatpush1.bf16.msra.mxu0 0
        %8155 = vmatprep.subr.bf16.mxu0 0
        %8156 = vmatpush1.bf16.msra.mxu0 0
        %8157 = vmatprep.subr.bf16.mxu0 0
        %8158 = vmatpush1.bf16.msra.mxu0 0
        %8159 = vmatprep.subr.bf16.mxu0 0
        %8160 = vmatpush1.bf16.msra.mxu0 0
        %8161 = vmatprep.subr.bf16.mxu0 0
        %8162 = vmatpush1.bf16.msra.mxu0 0
        %8163 = vmatprep.subr.bf16.mxu0 0
        %8164 = vmatpush1.bf16.msra.mxu0 0
        %8165 = vmatprep.subr.bf16.mxu0 0
        %8166 = vmatpush1.bf16.msra.mxu0 0
        %8167 = vmatprep.mubr.bf16.mxu0 0
        %8168 = vmatmul.mubr.bf16.gmra.mrb[0].mxu0 %v8109
        %v8169 = vpop.f32.mrb[0].mxu0
        %v8170 = vadd.f32 %v455, %v8169
        %v8171 = vpop.f32.mrb[0].mxu0
        %v8172 = vpop.f32.mrb[0].mxu0
        %v8173 = vadd.f32 %v455, %v8172
        %v8174 = vpop.f32.mrb[0].mxu0
        %8175 = vmatprep.mubr.bf16.mxu0 0
        %8176 = vmatmul.mubr.bf16.gmra.mrb[0].mxu0 %v8112
        %v8177 = vpop.f32.mrb[0].mxu0
        %v8178 = vadd.f32 %v455, %v8177
        %v8179 = vpop.f32.mrb[0].mxu0
        %v8180 = vpop.f32.mrb[0].mxu0
        %v8181 = vadd.f32 %v455, %v8180
        %v8182 = vpop.f32.mrb[0].mxu0
        %8183 = vmatprep.mubr.bf16.mxu0 0
        %8184 = vmatmul.mubr.bf16.gmra.mrb[0].mxu0 %v8115
        %v8185 = vpop.f32.mrb[0].mxu0
        %v8186 = vadd.f32 %v455, %v8185
        %v8187 = vpop.f32.mrb[0].mxu0
        %v8188 = vpop.f32.mrb[0].mxu0
        %v8189 = vadd.f32 %v455, %v8188
        %v8190 = vpop.f32.mrb[0].mxu0
        %8191 = vmatprep.mubr.bf16.mxu0 0
        %8192 = vmatmul.mubr.bf16.gmra.mrb[0].mxu0 %v8118
        %v8193 = vpop.f32.mrb[0].mxu0
        %v8194 = vadd.f32 %v455, %v8193
        %v8195 = vpop.f32.mrb[0].mxu0
        %v8196 = vpop.f32.mrb[0].mxu0
        %v8197 = vadd.f32 %v455, %v8196
        %v8198 = vpop.f32.mrb[0].mxu0
        %8199 = vmatprep.mubr.bf16.mxu0 0
        %8200 = vmatmul.mubr.bf16.gmra.mrb[0].mxu0 %v8121
        %v8201 = vpop.f32.mrb[0].mxu0
        %v8202 = vadd.f32 %v455, %v8201
        %v8203 = vpop.f32.mrb[0].mxu0
        %v8204 = vpop.f32.mrb[0].mxu0
        %v8205 = vadd.f32 %v455, %v8204
        %v8206 = vpop.f32.mrb[0].mxu0
        %8207 = vmatprep.mubr.bf16.mxu0 0
        %8208 = vmatmul.mubr.bf16.gmra.mrb[0].mxu0 %v8124
        %v8209 = vpop.f32.mrb[0].mxu0
        %v8210 = vadd.f32 %v455, %v8209
        %v8211 = vpop.f32.mrb[0].mxu0
        %v8212 = vpop.f32.mrb[0].mxu0
        %v8213 = vadd.f32 %v455, %v8212
        %v8214 = vpop.f32.mrb[0].mxu0
        %8215 = vmatprep.mubr.bf16.mxu0 0
        %8216 = vmatmul.mubr.bf16.gmra.mrb[0].mxu0 %v8127
        %v8217 = vpop.f32.mrb[0].mxu0
        %v8218 = vadd.f32 %v455, %v8217
        %v8219 = vpop.f32.mrb[0].mxu0
        %v8220 = vpop.f32.mrb[0].mxu0
        %v8221 = vadd.f32 %v455, %v8220
        %v8222 = vpop.f32.mrb[0].mxu0
        %8223 = vmatprep.mubr.bf16.mxu0 0
        %8224 = vmatmul.mubr.bf16.gmra.mrb[0].mxu0 %v8130
        %v8225 = vpop.f32.mrb[0].mxu0
        %v8226 = vadd.f32 %v455, %v8225
        %v8227 = vpop.f32.mrb[0].mxu0
        %v8228 = vpop.f32.mrb[0].mxu0
        %v8229 = vadd.f32 %v455, %v8228
        %v8230 = vpop.f32.mrb[0].mxu0
        %8231 = vdwg.mxu0
        %8232 = vmax.xlane.f32.xlu0 %v8170
        %v8233 = vpop.xlane.xlu0 %8232
        %8234 = vmax.xlane.f32.xlu0 %v8173
        %v8235 = vpop.xlane.xlu0 %8234
        %8236 = vmax.xlane.f32.xlu0 %v8178
        %v8237 = vpop.xlane.xlu0 %8236
        %8238 = vmax.xlane.f32.xlu0 %v8181
        %v8239 = vpop.xlane.xlu0 %8238
        %8240 = vmax.xlane.f32.xlu0 %v8186
        %v8241 = vpop.xlane.xlu0 %8240
        %8242 = vmax.xlane.f32.xlu0 %v8189
        %v8243 = vpop.xlane.xlu0 %8242
        %8244 = vmax.xlane.f32.xlu0 %v8194
        %v8245 = vpop.xlane.xlu0 %8244
        %8246 = vmax.xlane.f32.xlu0 %v8197
        %v8247 = vpop.xlane.xlu0 %8246
        %8248 = vmax.xlane.f32.xlu0 %v8202
        %v8249 = vpop.xlane.xlu0 %8248
        %8250 = vmax.xlane.f32.xlu0 %v8205
        %v8251 = vpop.xlane.xlu0 %8250
        %8252 = vmax.xlane.f32.xlu0 %v8210
        %v8253 = vpop.xlane.xlu0 %8252
        %8254 = vmax.xlane.f32.xlu0 %v8213
        %v8255 = vpop.xlane.xlu0 %8254
        %8256 = vmax.xlane.f32.xlu0 %v8218
        %v8257 = vpop.xlane.xlu0 %8256
        %8258 = vmax.xlane.f32.xlu0 %v8221
        %v8259 = vpop.xlane.xlu0 %8258
        %8260 = vmax.xlane.f32.xlu0 %v8226
        %v8261 = vpop.xlane.xlu0 %8260
        %8262 = vmax.xlane.f32.xlu0 %v8229
        %v8263 = vpop.xlane.xlu0 %8262
        %v8264 = vsub.f32 %v8170, %v8233
        %v8265 = vsub.f32 %v8173, %v8235
        %v8266 = vsub.f32 %v8178, %v8237
        %v8267 = vsub.f32 %v8181, %v8239
        %v8268 = vsub.f32 %v8186, %v8241
        %v8269 = vsub.f32 %v8189, %v8243
        %v8270 = vsub.f32 %v8194, %v8245
        %v8271 = vsub.f32 %v8197, %v8247
        %v8272 = vsub.f32 %v8202, %v8249
        %v8273 = vsub.f32 %v8205, %v8251
        %v8274 = vsub.f32 %v8210, %v8253
        %v8275 = vsub.f32 %v8213, %v8255
        %v8276 = vsub.f32 %v8218, %v8257
        %v8277 = vsub.f32 %v8221, %v8259
        %v8278 = vsub.f32 %v8226, %v8261
        %v8279 = vsub.f32 %v8229, %v8263
        %v8280 = vmul.f32 %v8264, 1.442695
        %v8281 = vpow.pop %v8280
        %v8282 = vmul.f32 %v8265, 1.442695
        %v8283 = vpow.pop %v8282
        %v8284 = vmul.f32 %v8266, 1.442695
        %v8285 = vpow.pop %v8284
        %v8286 = vmul.f32 %v8267, 1.442695
        %v8287 = vpow.pop %v8286
        %v8288 = vmul.f32 %v8268, 1.442695
        %v8289 = vpow.pop %v8288
        %v8290 = vmul.f32 %v8269, 1.442695
        %v8291 = vpow.pop %v8290
        %v8292 = vmul.f32 %v8270, 1.442695
        %v8293 = vpow.pop %v8292
        %v8294 = vmul.f32 %v8271, 1.442695
        %v8295 = vpow.pop %v8294
        %v8296 = vmul.f32 %v8272, 1.442695
        %v8297 = vpow.pop %v8296
        %v8298 = vmul.f32 %v8273, 1.442695
        %v8299 = vpow.pop %v8298
        %v8300 = vmul.f32 %v8274, 1.442695
        %v8301 = vpow.pop %v8300
        %v8302 = vmul.f32 %v8275, 1.442695
        %v8303 = vpow.pop %v8302
        %v8304 = vmul.f32 %v8276, 1.442695
        %v8305 = vpow.pop %v8304
        %v8306 = vmul.f32 %v8277, 1.442695
        %v8307 = vpow.pop %v8306
        %v8308 = vmul.f32 %v8278, 1.442695
        %v8309 = vpow.pop %v8308
        %v8310 = vmul.f32 %v8279, 1.442695
        %v8311 = vpow.pop %v8310
        %8312 = vadd.xlane.f32.xlu0 %v8281
        %v8313 = vpop.xlane.xlu0 %8312
        %8314 = vadd.xlane.f32.xlu0 %v8283
        %v8315 = vpop.xlane.xlu0 %8314
        %8316 = vadd.xlane.f32.xlu0 %v8285
        %v8317 = vpop.xlane.xlu0 %8316
        %8318 = vadd.xlane.f32.xlu0 %v8287
        %v8319 = vpop.xlane.xlu0 %8318
        %8320 = vadd.xlane.f32.xlu0 %v8289
        %v8321 = vpop.xlane.xlu0 %8320
        %8322 = vadd.xlane.f32.xlu0 %v8291
        %v8323 = vpop.xlane.xlu0 %8322
        %8324 = vadd.xlane.f32.xlu0 %v8293
        %v8325 = vpop.xlane.xlu0 %8324
        %8326 = vadd.xlane.f32.xlu0 %v8295
        %v8327 = vpop.xlane.xlu0 %8326
        %8328 = vadd.xlane.f32.xlu0 %v8297
        %v8329 = vpop.xlane.xlu0 %8328
        %8330 = vadd.xlane.f32.xlu0 %v8299
        %v8331 = vpop.xlane.xlu0 %8330
        %8332 = vadd.xlane.f32.xlu0 %v8301
        %v8333 = vpop.xlane.xlu0 %8332
        %8334 = vadd.xlane.f32.xlu0 %v8303
        %v8335 = vpop.xlane.xlu0 %8334
        %8336 = vadd.xlane.f32.xlu0 %v8305
        %v8337 = vpop.xlane.xlu0 %8336
        %8338 = vadd.xlane.f32.xlu0 %v8307
        %v8339 = vpop.xlane.xlu0 %8338
        %8340 = vadd.xlane.f32.xlu0 %v8309
        %v8341 = vpop.xlane.xlu0 %8340
        %8342 = vadd.xlane.f32.xlu0 %v8311
        %v8343 = vpop.xlane.xlu0 %8342
        %v8344 = vrcp.pop %v8313
        %v8345 = vrcp.pop %v8315
        %v8346 = vrcp.pop %v8317
        %v8347 = vrcp.pop %v8319
        %v8348 = vrcp.pop %v8321
        %v8349 = vrcp.pop %v8323
        %v8350 = vrcp.pop %v8325
        %v8351 = vrcp.pop %v8327
        %v8352 = vrcp.pop %v8329
        %v8353 = vrcp.pop %v8331
        %v8354 = vrcp.pop %v8333
        %v8355 = vrcp.pop %v8335
        %v8356 = vrcp.pop %v8337
        %v8357 = vrcp.pop %v8339
        %v8358 = vrcp.pop %v8341
        %v8359 = vrcp.pop %v8343
        %v8360 = vmul.f32 %v8281, %v8344
        %v8361 = vmul.f32 %v8283, %v8345
        %v8362 = vmul.f32 %v8285, %v8346
        %v8363 = vmul.f32 %v8287, %v8347
        %v8364 = vmul.f32 %v8289, %v8348
        %v8365 = vmul.f32 %v8291, %v8349
        %v8366 = vmul.f32 %v8293, %v8350
        %v8367 = vmul.f32 %v8295, %v8351
        %v8368 = vmul.f32 %v8297, %v8352
        %v8369 = vmul.f32 %v8299, %v8353
        %v8370 = vmul.f32 %v8301, %v8354
        %v8371 = vmul.f32 %v8303, %v8355
        %v8372 = vmul.f32 %v8305, %v8356
        %v8373 = vmul.f32 %v8307, %v8357
        %v8374 = vmul.f32 %v8309, %v8358
        %v8375 = vmul.f32 %v8311, %v8359
        %v8376 = vpack.c.bf16 %v8087, %v8086
        %v8377 = vpack.c.bf16 %v8089, %v8088
        %v8378 = vpack.c.bf16 %v8361, %v8360
        %v8379 = vpack.c.bf16 %v8363, %v8362
        %v8380 = vpack.c.bf16 %v8365, %v8364
        %v8381 = vpack.c.bf16 %v8367, %v8366
        %v8382 = vpack.c.bf16 %v8369, %v8368
        %v8383 = vpack.c.bf16 %v8371, %v8370
        %v8384 = vpack.c.bf16 %v8373, %v8372
        %v8385 = vpack.c.bf16 %v8375, %v8374
        %8386 = vmatprep.subr.bf16.mxu0 0
        %8387 = vmatpush1.bf16.msra.mxu0 %v8378
        %8388 = vmatprep.subr.bf16.mxu0 0
        %8389 = vmatpush1.bf16.msra.mxu0 %v8379
        %8390 = vmatprep.subr.bf16.mxu0 0
        %8391 = vmatpush1.bf16.msra.mxu0 %v8380
        %8392 = vmatprep.subr.bf16.mxu0 0
        %8393 = vmatpush1.bf16.msra.mxu0 %v8381
        %8394 = vmatprep.subr.bf16.mxu0 0
        %8395 = vmatpush1.bf16.msra.mxu0 %v8382
        %8396 = vmatprep.subr.bf16.mxu0 0
        %8397 = vmatpush1.bf16.msra.mxu0 %v8383
        %8398 = vmatprep.subr.bf16.mxu0 0
        %8399 = vmatpush1.bf16.msra.mxu0 %v8384
        %8400 = vmatprep.subr.bf16.mxu0 0
        %8401 = vmatpush1.bf16.msra.mxu0 %v8385
        %8402 = vmatprep.subr.bf16.mxu0 0
        %8403 = vmatpush1.bf16.msra.mxu0 0
        %8404 = vmatprep.subr.bf16.mxu0 0
        %8405 = vmatpush1.bf16.msra.mxu0 0
        %8406 = vmatprep.subr.bf16.mxu0 0
        %8407 = vmatpush1.bf16.msra.mxu0 0
        %8408 = vmatprep.subr.bf16.mxu0 0
        %8409 = vmatpush1.bf16.msra.mxu0 0
        %8410 = vmatprep.subr.bf16.mxu0 0
        %8411 = vmatpush1.bf16.msra.mxu0 0
        %8412 = vmatprep.subr.bf16.mxu0 0
        %8413 = vmatpush1.bf16.msra.mxu0 0
        %8414 = vmatprep.subr.bf16.mxu0 0
        %8415 = vmatpush1.bf16.msra.mxu0 0
        %8416 = vmatprep.subr.bf16.mxu0 0
        %8417 = vmatpush1.bf16.msra.mxu0 0
        %8418 = vmatprep.mubr.bf16.mxu0 0
        %8419 = vmatmul.mubr.bf16.gmra.mrb[0].mxu0 %v8376
        %v8420 = vpop.f32.mrb[0].mxu0
        %v8421 = vadd.f32 %v7955, %v8420
        %v8422 = vpop.f32.mrb[0].mxu0
        %v8423 = vpop.f32.mrb[0].mxu0
        %v8424 = vadd.f32 %v7956, %v8423
        %v8425 = vpop.f32.mrb[0].mxu0
        %8426 = vmatprep.mubr.bf16.mxu0 0
        %8427 = vmatmul.mubr.bf16.gmra.mrb[0].mxu0 %v8377
        %v8428 = vpop.f32.mrb[0].mxu0
        %v8429 = vadd.f32 %v7957, %v8428
        %v8430 = vpop.f32.mrb[0].mxu0
        %v8431 = vpop.f32.mrb[0].mxu0
        %v8432 = vadd.f32 %v7958, %v8431
        %v8433 = vpop.f32.mrb[0].mxu0
        %8434 = vdwg.mxu0
        %v8435 = vmul.f32 %v8421, %v454
        %v8436 = vmul.f32 %v8424, %v454
        %v8437 = vmul.f32 %v8429, %v454
        %v8438 = vmul.f32 %v8432, %v454
        %v8439 = vld [vmem:[#allocation17] sm:$0x1]
        %v8440 = vpack.c.bf16 %v8436, %v8435
        %v8441 = vpack.c.bf16 %v8438, %v8437
        %v8442 = vld [vmem:[#allocation4] sm:$0x1]
        %8444 = vset.pattern.permute.xlu0 0
        %8445 = vperm.xlu0 %8444, %v8442
        %v8446 = vpop.permute.xlu0 %8445
        %v8448 = vlaneseq
        %v8449 = vshrl.u32 %v8448, 7
        %v8450 = vsub.s32 0, %v8449
        %v8451 = vrot.slane %v8446, %v8450
        %v8453 = vsel %vm1041, %v8439, 0
        %8455 = vmatprep.subr.bf16.mxu0 0
        %8456 = vmatpush1.bf16.msra.mxu0 %v8440
        %8457 = vmatprep.subr.bf16.mxu0 0
        %8458 = vmatpush1.bf16.msra.mxu0 %v8441
        %8459 = vmatprep.subr.bf16.mxu0 0
        %8460 = vmatpush1.bf16.msra.mxu0 0
        %8461 = vmatprep.subr.bf16.mxu0 0
        %8462 = vmatpush1.bf16.msra.mxu0 0
        %8463 = vmatprep.subr.bf16.mxu0 0
        %8464 = vmatpush1.bf16.msra.mxu0 0
        %8465 = vmatprep.subr.bf16.mxu0 0
        %8466 = vmatpush1.bf16.msra.mxu0 0
        %8467 = vmatprep.subr.bf16.mxu0 0
        %8468 = vmatpush1.bf16.msra.mxu0 0
        %8469 = vmatprep.subr.bf16.mxu0 0
        %8470 = vmatpush1.bf16.msra.mxu0 0
        %8471 = vmatprep.subr.bf16.mxu0 0
        %8472 = vmatpush1.bf16.msra.mxu0 0
        %8473 = vmatprep.subr.bf16.mxu0 0
        %8474 = vmatpush1.bf16.msra.mxu0 0
        %8475 = vmatprep.subr.bf16.mxu0 0
        %8476 = vmatpush1.bf16.msra.mxu0 0
        %8477 = vmatprep.subr.bf16.mxu0 0
        %8478 = vmatpush1.bf16.msra.mxu0 0
        %8479 = vmatprep.subr.bf16.mxu0 0
        %8480 = vmatpush1.bf16.msra.mxu0 0
        %8481 = vmatprep.subr.bf16.mxu0 0
        %8482 = vmatpush1.bf16.msra.mxu0 0
        %8483 = vmatprep.subr.bf16.mxu0 0
        %8484 = vmatpush1.bf16.msra.mxu0 0
        %8485 = vmatprep.subr.bf16.mxu0 0
        %8486 = vmatpush1.bf16.msra.mxu0 0
        %8487 = vmatprep.mubr.bf16.mxu0 0
        %8488 = vmatmul.mubr.bf16.gmra.mrb[0].mxu0 %v8453
        %v8489 = vpop.f32.mrb[0].mxu0
        %v8490 = vadd.f32 %v8451, %v8489
        %v8491 = vpop.f32.mrb[0].mxu0
        %v8492 = vpop.f32.mrb[0].mxu0
        %v8493 = vpop.f32.mrb[0].mxu0
        %8494 = vdwg.mxu0
        %8495 = vst [vmem:[%s448] sm:$0x1] %v8490
        %s8496 = sand.u32 %s234, 1
        %s8497 = scalar_lea.sflag [#allocation7], %s8496
        %s8498 = sand.u32 %s234, 1
        %s8499 = scalar_lea.vmem [#allocation19], %s8498
        // Predicated region
        $region89: #{wavenet_forward.1} parent=55 // pred_check
          %p8500 = pneg %p244
        $region90: #{wavenet_forward.1} parent=55 // pred_check_branch
          %8502 = sbr.rel (%p8500) target = $region92
        $region91: #{wavenet_forward.1} parent=55 // pred_region
          %s8504 = ssub.s32 16, 16
          %8505 = vsyncadd %s8497, %s8504
          %s8506 = smul.addr %s32, 16
          %s8507 = scalar_lea.hbm %s9, %s8506
          %s8509 = sshll.u32 %s8499, 4
          %s8510 = int_to_ptr.vmem [resolvable:$true] %s8509
          %8512 = dma.vmem_to_hbm [thread:$0]  %s8510, 16, %s8507, %s8497
        $region92: #{wavenet_forward.1} parent=55 // pred_fallthru
          _
      $region56: #{wavenet_forward.1} parent=5 // pred_fallthru
        _
      %p8513 = scmp.le.s32.totalorder 2, %s27
      // Predicated region
      $region93: #{wavenet_forward.1} parent=5 // pred_check
        %p8514 = pneg %p8513
      $region94: #{wavenet_forward.1} parent=5 // pred_check_branch
        %8516 = sbr.rel (%p8514) target = $region96
      $region95: #{wavenet_forward.1} parent=5 // pred_region
        %s8517 = ssub.s32 %s27, 2
        // Predicated region
        $region97: #{wavenet_forward.1} parent=95 // pred_check
          %p8518 = pneg %p250
        $region98: #{wavenet_forward.1} parent=95 // pred_check_branch
          %8520 = sbr.rel (%p8518) target = $region100
        $region99: #{wavenet_forward.1} parent=95 // pred_region
          %s8521 = sand.u32 %s235, 1
          %s8522 = scalar_lea.sflag [#allocation7], %s8521
          %s8523 = sand.u32 %s235, 1
          %s8524 = scalar_lea.vmem [#allocation19], %s8523
          %8525 = dma.done %s8522, 16
        $region100: #{wavenet_forward.1} parent=95 // pred_fallthru
          _
      $region96: #{wavenet_forward.1} parent=5 // pred_fallthru
        _
    $region6: #{wavenet_forward.1} parent=1 // loop_footer
      %s31 = sadd.s32 1, %s27
    $region7: #{wavenet_forward.1} parent=1 // loop_footer_branch
      %26 = sbr.rel target = $region3
    $region8: #{wavenet_forward.1} parent=1 // loop_exit
      _
    %8526 = vsyncpa [#allocation6], 1
    %s8527 = scalar_lea.sflag [#allocation6], 1
    %8528 = vsyncpa %s8527, 1
    %8529 = vsyncpa [#allocation9], 1
    %8530 = vsyncpa [#allocation12], 1
    %8531 = vsyncpa [#allocation15], 1
    %8532 = vsyncpa [#allocation18], 1
    %8533 = vsyncpa [#allocation7], 1
    %s8534 = scalar_lea.sflag [#allocation7], 1
    %8535 = vsyncpa %s8534, 1

</llo_original>
